<compile_context>
chip_gen: v7x
topology: tpu7x:2x2x1
jax: 0.10.0
libtpu: 0.0.40
codegen_flags: <defaults>
</compile_context>

<pallas_src>
import functools

import jax
import jax.numpy as jnp
from jax.experimental import pallas as pl
from jax.experimental.pallas import tpu as pltpu

BN_EPS = 1e-5
_HIGH = jax.lax.Precision.HIGHEST


def _dot(a, b):
    return jnp.dot(a, b, preferred_element_type=jnp.float32, precision=_HIGH)


def basic_block_kernel(x_ref, m1_ref, g1_ref, b1_ref, m2_ref, g2_ref, b2_ref,
                       cmap_ref, sup_ref, sdn_ref, out_ref, *, cnt):
    x = x_ref[...]                      # (N*H, W*C) lane-dense folded input
    cmap = cmap_ref[...]                # (W*C, W*C) 0/1 same-channel map
    s_up = sup_ref[...]                 # (N*H, N*H): row r -> row r+1 (0 at image edge)
    s_dn = sdn_ref[...]                 # (N*H, N*H): row r -> row r-1 (0 at image edge)

    def conv3x3(y, m_ref):
        # m_ref[kh] performs the full (kw, ci) -> co contraction for kernel
        # row kh (block-tridiagonal => 'same' padding in w is built in).
        acc = _dot(y, m_ref[1])                       # kh = 1 (dh =  0)
        acc = acc + _dot(_dot(s_dn, y), m_ref[0])     # kh = 0 (dh = -1)
        acc = acc + _dot(_dot(s_up, y), m_ref[2])     # kh = 2 (dh = +1)
        return acc

    def batchnorm(y, g_ref, b_ref):
        # y @ cmap sums every lane of the same channel (result already
        # broadcast back across w); the sublane sum finishes the (N,H,W)
        # reduction. Biased variance, matching PyTorch training-mode BN.
        mu = jnp.sum(_dot(y, cmap), axis=0, keepdims=True) / cnt
        d = y - mu
        var = jnp.sum(_dot(d * d, cmap), axis=0, keepdims=True) / cnt
        return d * jax.lax.rsqrt(var + BN_EPS) * g_ref[...] + b_ref[...]

    out1 = jnp.maximum(batchnorm(conv3x3(x, m1_ref), g1_ref, b1_ref), 0.0)
    out2 = batchnorm(conv3x3(out1, m2_ref), g2_ref, b2_ref)
    # residual (downsample is None, stride=1 -> identity) + relu, lane-dense store
    out_ref[...] = jnp.maximum(out2 + x, 0.0).astype(out_ref.dtype)


def _conv_as_tridiag(w_hwio, W):
    """(3, 3, Cin, Cout) HWIO conv weights -> (3, W*Cin, W*Cout) block-tridiagonal
    matrices M[kh], with M[kh][w'*Cin+ci, w*Cout+co] = W[kh, w'-w+1, ci, co]."""
    _, _, cin, cout = w_hwio.shape
    wp = jnp.arange(W)[:, None]          # source column w'  (matmul contraction index)
    wo = jnp.arange(W)[None, :]          # output column w
    kw = wp - wo + 1                     # kernel-column index per (w', w)
    valid = ((kw >= 0) & (kw <= 2)).astype(w_hwio.dtype)[:, :, None, None]
    kw = jnp.clip(kw, 0, 2)
    mats = []
    for kh in range(3):
        blocks = w_hwio[kh][kw] * valid                       # (W, W, Cin, Cout)
        mats.append(blocks.transpose(0, 2, 1, 3).reshape(W * cin, W * cout))
    return jnp.stack(mats)


def _row_shift_mats(N, H):
    """0/1 matrices so that (S_up @ y)[r] = y[r+1] and (S_dn @ y)[r] = y[r-1],
    zero-filled at image top/bottom rows (which also blocks batch crossover)."""
    NH = N * H
    r = jnp.arange(NH)
    up = ((r[None, :] == r[:, None] + 1) &
          ((r % H) != H - 1)[:, None]).astype(jnp.float32)
    dn = ((r[None, :] == r[:, None] - 1) &
          ((r % H) != 0)[:, None]).astype(jnp.float32)
    return up, dn


def basic_block_forward(x_nchw, params):
    """x_nchw: (N, C, H, W) float32; params = (w1, g1, b1, w2, g2, b2),
    conv weights in HWIO layout (3, 3, C, C), BN params of shape (C,)."""
    w1, g1, b1, w2, g2, b2 = params
    N, C, H, W = x_nchw.shape
    NH, WC = N * H, W * C

    # NCHW -> lane-dense folded (N*H, W*C) layout (layout plumbing only).
    x_fold = (jnp.transpose(x_nchw, (0, 2, 3, 1))
              .astype(jnp.float32).reshape(NH, WC))

    # Weight / constant preprocessing (hoisted out of the kernel).
    m1 = _conv_as_tridiag(w1.astype(jnp.float32), W)          # (3, WC, WC)
    m2 = _conv_as_tridiag(w2.astype(jnp.float32), W)
    lane_c = jnp.arange(WC) % C
    cmap = (lane_c[:, None] == lane_c[None, :]).astype(jnp.float32)   # (WC, WC)
    s_up, s_dn = _row_shift_mats(N, H)                                # (NH, NH)
    g1r = jnp.tile(g1.astype(jnp.float32), W).reshape(1, WC)
    b1r = jnp.tile(b1.astype(jnp.float32), W).reshape(1, WC)
    g2r = jnp.tile(g2.astype(jnp.float32), W).reshape(1, WC)
    b2r = jnp.tile(b2.astype(jnp.float32), W).reshape(1, WC)

    vmem_specs = [pl.BlockSpec(memory_space=pltpu.MemorySpace.VMEM)
                  for _ in range(10)]
    out_fold = pl.pallas_call(
        functools.partial(basic_block_kernel, cnt=float(N * H * W)),
        out_shape=jax.ShapeDtypeStruct((NH, WC), jnp.float32),
        in_specs=vmem_specs,
        out_specs=pl.BlockSpec(memory_space=pltpu.MemorySpace.VMEM),
    )(x_fold, m1, g1r, b1r, m2, g2r, b2r, cmap, s_up, s_dn)

    out = out_fold.reshape(N, H, W, C)
    return jnp.transpose(out, (0, 3, 1, 2))                   # folded -> NCHW


def reference_forward(x_nchw, params):
    """Pure-JAX reference (same math, no Pallas) for validation."""
    w1, g1, b1, w2, g2, b2 = params
    x = jnp.transpose(x_nchw, (0, 2, 3, 1)).astype(jnp.float32)

    def conv(h, w):
        return jax.lax.conv_general_dilated(
            h, w, (1, 1), 'SAME',
            dimension_numbers=('NHWC', 'HWIO', 'NHWC'),
            precision=jax.lax.Precision.HIGHEST)

    def bn(h, g, b):
        mu = jnp.mean(h, axis=(0, 1, 2), keepdims=True)
        var = jnp.mean((h - mu) ** 2, axis=(0, 1, 2), keepdims=True)
        return (h - mu) / jnp.sqrt(var + BN_EPS) * g + b

    out = jnp.maximum(bn(conv(x, w1), g1, b1), 0.0)
    out = bn(conv(out, w2), g2, b2)
    out = jnp.maximum(out + x, 0.0)
    return jnp.transpose(out, (0, 3, 1, 2))


if __name__ == "__main__":
    # BasicBlock(inplanes=8, planes=8, stride=1, downsample=None)
    N, C, H, W = 2, 8, 16, 16           # W * C = 128 -> fully lane-dense folded layout
    key = jax.random.PRNGKey(0)
    k = jax.random.split(key, 7)
    x = jax.random.normal(k[0], (N, C, H, W), jnp.float32)

    fan_in = 3 * 3 * C
    w1 = jax.random.normal(k[1], (3, 3, C, C), jnp.float32) / jnp.sqrt(fan_in)
    w2 = jax.random.normal(k[2], (3, 3, C, C), jnp.float32) / jnp.sqrt(fan_in)
    g1 = 1.0 + 0.1 * jax.random.normal(k[3], (C,), jnp.float32)
    b1 = 0.1 * jax.random.normal(k[4], (C,), jnp.float32)
    g2 = 1.0 + 0.1 * jax.random.normal(k[5], (C,), jnp.float32)
    b2 = 0.1 * jax.random.normal(k[6], (C,), jnp.float32)
    params = (w1, g1, b1, w2, g2, b2)

    out = jax.block_until_ready(basic_block_forward(x, params))
    ref = jax.block_until_ready(reference_forward(x, params))

    assert out.shape == (N, C, H, W), out.shape
    max_err = float(jnp.max(jnp.abs(out - ref)))
    if not jnp.allclose(out, ref, rtol=2e-3, atol=2e-3):
        raise AssertionError(f"mismatch vs reference, max abs err = {max_err:e}")
    print("KERNEL_OK")
</pallas_src>

<mosaic_0001>
module attributes {stable_mosaic.version = 11 : i64} {
  func.func @basic_block_kernel(%arg0: memref<32x128xf32, #tpu.memory_space<vmem>>, %arg1: memref<3x128x128xf32, #tpu.memory_space<vmem>>, %arg2: memref<1x128xf32, #tpu.memory_space<vmem>>, %arg3: memref<1x128xf32, #tpu.memory_space<vmem>>, %arg4: memref<3x128x128xf32, #tpu.memory_space<vmem>>, %arg5: memref<1x128xf32, #tpu.memory_space<vmem>>, %arg6: memref<1x128xf32, #tpu.memory_space<vmem>>, %arg7: memref<128x128xf32, #tpu.memory_space<vmem>>, %arg8: memref<32x32xf32, #tpu.memory_space<vmem>>, %arg9: memref<32x32xf32, #tpu.memory_space<vmem>>, %arg10: memref<32x128xf32, #tpu.memory_space<vmem>>) attributes {dimension_semantics = [], scalar_prefetch = 0 : i64, scratch_operands = 0 : i64, tpu.core_type = #tpu.core_type<tc>} {
    %c0 = arith.constant 0 : index
    %c0_0 = arith.constant 0 : index
    %0 = vector.load %arg0[%c0, %c0_0] : memref<32x128xf32, #tpu.memory_space<vmem>>, vector<32x128xf32>
    %c0_1 = arith.constant 0 : index
    %c0_2 = arith.constant 0 : index
    %1 = vector.load %arg7[%c0_1, %c0_2] : memref<128x128xf32, #tpu.memory_space<vmem>>, vector<128x128xf32>
    %c0_3 = arith.constant 0 : index
    %c0_4 = arith.constant 0 : index
    %2 = vector.load %arg8[%c0_3, %c0_4] : memref<32x32xf32, #tpu.memory_space<vmem>>, vector<32x32xf32>
    %c0_5 = arith.constant 0 : index
    %c0_6 = arith.constant 0 : index
    %3 = vector.load %arg9[%c0_5, %c0_6] : memref<32x32xf32, #tpu.memory_space<vmem>>, vector<32x32xf32>
    %c1 = arith.constant 1 : index
    %c0_7 = arith.constant 0 : index
    %c0_8 = arith.constant 0 : index
    %4 = vector.load %arg1[%c1, %c0_7, %c0_8] : memref<3x128x128xf32, #tpu.memory_space<vmem>>, vector<1x128x128xf32>
    %5 = vector.shape_cast %4 : vector<1x128x128xf32> to vector<128x128xf32>
    %cst = arith.constant dense<0.000000e+00> : vector<32x128xf32>
    %6 = tpu.matmul %0, %5, %cst {dimension_numbers = #tpu.dot_dimension_numbers<[1], [0], [0], [1], [0, 0, 1, 1], [], []>, precision = #tpu.contract_precision<fp32>} : vector<32x128xf32>, vector<128x128xf32>, vector<32x128xf32> -> vector<32x128xf32>
    %cst_9 = arith.constant dense<0.000000e+00> : vector<32x128xf32>
    %7 = tpu.matmul %3, %0, %cst_9 {dimension_numbers = #tpu.dot_dimension_numbers<[1], [0], [0], [1], [0, 0, 1, 1], [], []>, precision = #tpu.contract_precision<fp32>} : vector<32x32xf32>, vector<32x128xf32>, vector<32x128xf32> -> vector<32x128xf32>
    %c0_10 = arith.constant 0 : index
    %c0_11 = arith.constant 0 : index
    %c0_12 = arith.constant 0 : index
    %8 = vector.load %arg1[%c0_10, %c0_11, %c0_12] : memref<3x128x128xf32, #tpu.memory_space<vmem>>, vector<1x128x128xf32>
    %9 = vector.shape_cast %8 : vector<1x128x128xf32> to vector<128x128xf32>
    %cst_13 = arith.constant dense<0.000000e+00> : vector<32x128xf32>
    %10 = tpu.matmul %7, %9, %cst_13 {dimension_numbers = #tpu.dot_dimension_numbers<[1], [0], [0], [1], [0, 0, 1, 1], [], []>, precision = #tpu.contract_precision<fp32>} : vector<32x128xf32>, vector<128x128xf32>, vector<32x128xf32> -> vector<32x128xf32>
    %11 = arith.addf %6, %10 : vector<32x128xf32>
    %cst_14 = arith.constant dense<0.000000e+00> : vector<32x128xf32>
    %12 = tpu.matmul %2, %0, %cst_14 {dimension_numbers = #tpu.dot_dimension_numbers<[1], [0], [0], [1], [0, 0, 1, 1], [], []>, precision = #tpu.contract_precision<fp32>} : vector<32x32xf32>, vector<32x128xf32>, vector<32x128xf32> -> vector<32x128xf32>
    %c2 = arith.constant 2 : index
    %c0_15 = arith.constant 0 : index
    %c0_16 = arith.constant 0 : index
    %13 = vector.load %arg1[%c2, %c0_15, %c0_16] : memref<3x128x128xf32, #tpu.memory_space<vmem>>, vector<1x128x128xf32>
    %14 = vector.shape_cast %13 : vector<1x128x128xf32> to vector<128x128xf32>
    %cst_17 = arith.constant dense<0.000000e+00> : vector<32x128xf32>
    %15 = tpu.matmul %12, %14, %cst_17 {dimension_numbers = #tpu.dot_dimension_numbers<[1], [0], [0], [1], [0, 0, 1, 1], [], []>, precision = #tpu.contract_precision<fp32>} : vector<32x128xf32>, vector<128x128xf32>, vector<32x128xf32> -> vector<32x128xf32>
    %16 = arith.addf %11, %15 : vector<32x128xf32>
    %cst_18 = arith.constant dense<0.000000e+00> : vector<32x128xf32>
    %17 = tpu.matmul %16, %1, %cst_18 {dimension_numbers = #tpu.dot_dimension_numbers<[1], [0], [0], [1], [0, 0, 1, 1], [], []>, precision = #tpu.contract_precision<fp32>} : vector<32x128xf32>, vector<128x128xf32>, vector<32x128xf32> -> vector<32x128xf32>
    %cst_19 = arith.constant dense<0.000000e+00> : vector<128xf32>
    %18 = vector.multi_reduction <add>, %17, %cst_19 [0] : vector<32x128xf32> to vector<128xf32>
    %19 = vector.shape_cast %18 : vector<128xf32> to vector<1x128xf32>
    %cst_20 = arith.constant 5.120000e+02 : f32
    %20 = vector.broadcast %cst_20 : f32 to vector<1x128xf32>
    %21 = arith.divf %19, %20 : vector<1x128xf32>
    %22 = vector.broadcast %21 : vector<1x128xf32> to vector<32x128xf32>
    %23 = arith.subf %16, %22 : vector<32x128xf32>
    %24 = arith.mulf %23, %23 : vector<32x128xf32>
    %cst_21 = arith.constant dense<0.000000e+00> : vector<32x128xf32>
    %25 = tpu.matmul %24, %1, %cst_21 {dimension_numbers = #tpu.dot_dimension_numbers<[1], [0], [0], [1], [0, 0, 1, 1], [], []>, precision = #tpu.contract_precision<fp32>} : vector<32x128xf32>, vector<128x128xf32>, vector<32x128xf32> -> vector<32x128xf32>
    %cst_22 = arith.constant dense<0.000000e+00> : vector<128xf32>
    %26 = vector.multi_reduction <add>, %25, %cst_22 [0] : vector<32x128xf32> to vector<128xf32>
    %27 = vector.shape_cast %26 : vector<128xf32> to vector<1x128xf32>
    %cst_23 = arith.constant 5.120000e+02 : f32
    %28 = vector.broadcast %cst_23 : f32 to vector<1x128xf32>
    %29 = arith.divf %27, %28 : vector<1x128xf32>
    %cst_24 = arith.constant 9.99999974E-6 : f32
    %30 = vector.broadcast %cst_24 : f32 to vector<1x128xf32>
    %31 = arith.addf %29, %30 : vector<1x128xf32>
    %32 = math.rsqrt %31 : vector<1x128xf32>
    %33 = vector.broadcast %32 : vector<1x128xf32> to vector<32x128xf32>
    %34 = arith.mulf %23, %33 : vector<32x128xf32>
    %c0_25 = arith.constant 0 : index
    %c0_26 = arith.constant 0 : index
    %35 = vector.load %arg2[%c0_25, %c0_26] : memref<1x128xf32, #tpu.memory_space<vmem>>, vector<1x128xf32>
    %36 = vector.broadcast %35 : vector<1x128xf32> to vector<32x128xf32>
    %37 = arith.mulf %34, %36 : vector<32x128xf32>
    %c0_27 = arith.constant 0 : index
    %c0_28 = arith.constant 0 : index
    %38 = vector.load %arg3[%c0_27, %c0_28] : memref<1x128xf32, #tpu.memory_space<vmem>>, vector<1x128xf32>
    %39 = vector.broadcast %38 : vector<1x128xf32> to vector<32x128xf32>
    %40 = arith.addf %37, %39 : vector<32x128xf32>
    %cst_29 = arith.constant 0.000000e+00 : f32
    %41 = vector.broadcast %cst_29 : f32 to vector<32x128xf32>
    %42 = arith.maximumf %40, %41 : vector<32x128xf32>
    %c1_30 = arith.constant 1 : index
    %c0_31 = arith.constant 0 : index
    %c0_32 = arith.constant 0 : index
    %43 = vector.load %arg4[%c1_30, %c0_31, %c0_32] : memref<3x128x128xf32, #tpu.memory_space<vmem>>, vector<1x128x128xf32>
    %44 = vector.shape_cast %43 : vector<1x128x128xf32> to vector<128x128xf32>
    %cst_33 = arith.constant dense<0.000000e+00> : vector<32x128xf32>
    %45 = tpu.matmul %42, %44, %cst_33 {dimension_numbers = #tpu.dot_dimension_numbers<[1], [0], [0], [1], [0, 0, 1, 1], [], []>, precision = #tpu.contract_precision<fp32>} : vector<32x128xf32>, vector<128x128xf32>, vector<32x128xf32> -> vector<32x128xf32>
    %cst_34 = arith.constant dense<0.000000e+00> : vector<32x128xf32>
    %46 = tpu.matmul %3, %42, %cst_34 {dimension_numbers = #tpu.dot_dimension_numbers<[1], [0], [0], [1], [0, 0, 1, 1], [], []>, precision = #tpu.contract_precision<fp32>} : vector<32x32xf32>, vector<32x128xf32>, vector<32x128xf32> -> vector<32x128xf32>
    %c0_35 = arith.constant 0 : index
    %c0_36 = arith.constant 0 : index
    %c0_37 = arith.constant 0 : index
    %47 = vector.load %arg4[%c0_35, %c0_36, %c0_37] : memref<3x128x128xf32, #tpu.memory_space<vmem>>, vector<1x128x128xf32>
    %48 = vector.shape_cast %47 : vector<1x128x128xf32> to vector<128x128xf32>
    %cst_38 = arith.constant dense<0.000000e+00> : vector<32x128xf32>
    %49 = tpu.matmul %46, %48, %cst_38 {dimension_numbers = #tpu.dot_dimension_numbers<[1], [0], [0], [1], [0, 0, 1, 1], [], []>, precision = #tpu.contract_precision<fp32>} : vector<32x128xf32>, vector<128x128xf32>, vector<32x128xf32> -> vector<32x128xf32>
    %50 = arith.addf %45, %49 : vector<32x128xf32>
    %cst_39 = arith.constant dense<0.000000e+00> : vector<32x128xf32>
    %51 = tpu.matmul %2, %42, %cst_39 {dimension_numbers = #tpu.dot_dimension_numbers<[1], [0], [0], [1], [0, 0, 1, 1], [], []>, precision = #tpu.contract_precision<fp32>} : vector<32x32xf32>, vector<32x128xf32>, vector<32x128xf32> -> vector<32x128xf32>
    %c2_40 = arith.constant 2 : index
    %c0_41 = arith.constant 0 : index
    %c0_42 = arith.constant 0 : index
    %52 = vector.load %arg4[%c2_40, %c0_41, %c0_42] : memref<3x128x128xf32, #tpu.memory_space<vmem>>, vector<1x128x128xf32>
    %53 = vector.shape_cast %52 : vector<1x128x128xf32> to vector<128x128xf32>
    %cst_43 = arith.constant dense<0.000000e+00> : vector<32x128xf32>
    %54 = tpu.matmul %51, %53, %cst_43 {dimension_numbers = #tpu.dot_dimension_numbers<[1], [0], [0], [1], [0, 0, 1, 1], [], []>, precision = #tpu.contract_precision<fp32>} : vector<32x128xf32>, vector<128x128xf32>, vector<32x128xf32> -> vector<32x128xf32>
    %55 = arith.addf %50, %54 : vector<32x128xf32>
    %cst_44 = arith.constant dense<0.000000e+00> : vector<32x128xf32>
    %56 = tpu.matmul %55, %1, %cst_44 {dimension_numbers = #tpu.dot_dimension_numbers<[1], [0], [0], [1], [0, 0, 1, 1], [], []>, precision = #tpu.contract_precision<fp32>} : vector<32x128xf32>, vector<128x128xf32>, vector<32x128xf32> -> vector<32x128xf32>
    %cst_45 = arith.constant dense<0.000000e+00> : vector<128xf32>
    %57 = vector.multi_reduction <add>, %56, %cst_45 [0] : vector<32x128xf32> to vector<128xf32>
    %58 = vector.shape_cast %57 : vector<128xf32> to vector<1x128xf32>
    %cst_46 = arith.constant 5.120000e+02 : f32
    %59 = vector.broadcast %cst_46 : f32 to vector<1x128xf32>
    %60 = arith.divf %58, %59 : vector<1x128xf32>
    %61 = vector.broadcast %60 : vector<1x128xf32> to vector<32x128xf32>
    %62 = arith.subf %55, %61 : vector<32x128xf32>
    %63 = arith.mulf %62, %62 : vector<32x128xf32>
    %cst_47 = arith.constant dense<0.000000e+00> : vector<32x128xf32>
    %64 = tpu.matmul %63, %1, %cst_47 {dimension_numbers = #tpu.dot_dimension_numbers<[1], [0], [0], [1], [0, 0, 1, 1], [], []>, precision = #tpu.contract_precision<fp32>} : vector<32x128xf32>, vector<128x128xf32>, vector<32x128xf32> -> vector<32x128xf32>
    %cst_48 = arith.constant dense<0.000000e+00> : vector<128xf32>
    %65 = vector.multi_reduction <add>, %64, %cst_48 [0] : vector<32x128xf32> to vector<128xf32>
    %66 = vector.shape_cast %65 : vector<128xf32> to vector<1x128xf32>
    %cst_49 = arith.constant 5.120000e+02 : f32
    %67 = vector.broadcast %cst_49 : f32 to vector<1x128xf32>
    %68 = arith.divf %66, %67 : vector<1x128xf32>
    %cst_50 = arith.constant 9.99999974E-6 : f32
    %69 = vector.broadcast %cst_50 : f32 to vector<1x128xf32>
    %70 = arith.addf %68, %69 : vector<1x128xf32>
    %71 = math.rsqrt %70 : vector<1x128xf32>
    %72 = vector.broadcast %71 : vector<1x128xf32> to vector<32x128xf32>
    %73 = arith.mulf %62, %72 : vector<32x128xf32>
    %c0_51 = arith.constant 0 : index
    %c0_52 = arith.constant 0 : index
    %74 = vector.load %arg5[%c0_51, %c0_52] : memref<1x128xf32, #tpu.memory_space<vmem>>, vector<1x128xf32>
    %75 = vector.broadcast %74 : vector<1x128xf32> to vector<32x128xf32>
    %76 = arith.mulf %73, %75 : vector<32x128xf32>
    %c0_53 = arith.constant 0 : index
    %c0_54 = arith.constant 0 : index
    %77 = vector.load %arg6[%c0_53, %c0_54] : memref<1x128xf32, #tpu.memory_space<vmem>>, vector<1x128xf32>
    %78 = vector.broadcast %77 : vector<1x128xf32> to vector<32x128xf32>
    %79 = arith.addf %76, %78 : vector<32x128xf32>
    %80 = arith.addf %79, %0 : vector<32x128xf32>
    %cst_55 = arith.constant 0.000000e+00 : f32
    %81 = vector.broadcast %cst_55 : f32 to vector<32x128xf32>
    %82 = arith.maximumf %80, %81 : vector<32x128xf32>
    %c0_56 = arith.constant 0 : index
    %c0_57 = arith.constant 0 : index
    %83 = vector.load %arg10[%c0_56, %c0_57] : memref<32x128xf32, #tpu.memory_space<vmem>>, vector<32x128xf32>
    tpu.vector_store %arg10[%c0_56, %c0_57], %82 {strides = array<i32>} : memref<32x128xf32, #tpu.memory_space<vmem>>, vector<32x128xf32>,
    return
  }
}

</mosaic_0001>

<llo_original>
// kernel: tpu_custom_call.1
$region0: #{tpu_custom_call.1}
  #allocation0 [shape = 'u32[]', space=smem, size = 0x4, offset = 0x4, fixed_abs, tag = 'smem constant byte address 0x4 - core index']
  #allocation1 [shape = 'u32[144,128]{1,0:T(1,128)}', space=vmem, size = 0x12000, scoped, tag = 'internal scratch']
  %s0 = inlined_call_operand.hbm [shape: f32[32,128], index: 0, kind: input, shape index: {}]
  %s1 = inlined_call_operand.hbm [shape: f32[3,128,128], index: 1, kind: input, shape index: {}]
  %s2 = inlined_call_operand.vmem [shape: f32[1,128], index: 2, kind: input, shape index: {}]
  %s3 = inlined_call_operand.vmem [shape: f32[1,128], index: 3, kind: input, shape index: {}]
  %s4 = inlined_call_operand.hbm [shape: f32[3,128,128], index: 4, kind: input, shape index: {}]
  %s5 = inlined_call_operand.hbm [shape: f32[1,128], index: 5, kind: input, shape index: {}]
  %s6 = inlined_call_operand.hbm [shape: f32[1,128], index: 6, kind: input, shape index: {}]
  %s7 = inlined_call_operand.hbm [shape: f32[128,128], index: 7, kind: input, shape index: {}]
  %s8 = inlined_call_operand.hbm [shape: f32[32,32], index: 8, kind: input, shape index: {}]
  %s9 = inlined_call_operand.vmem [shape: f32[32,32], index: 9, kind: input, shape index: {}]
  %s10 = inlined_call_operand.hbm [shape: f32[32,128], index: 10, kind: output, shape index: {}]
  %s11 = sld [smem:[#allocation0]]
  $region78: #{tpu_custom_call.1} parent=0
    _
  %s13 = ssub.s32 1, %s11
  %s14 = scalar_select 0, %s13, %s11
  $region1: #{tpu_custom_call.1} parent=0
    #allocation2 [shape = 'u8[16384]{0}', space=vmem, size = 0x4000, scoped, tag = 'input window, operand 0, single buffered']
    #allocation3 [shape = 's32[1]{0}', space=sflag, size = 0x4, scoped, tag = 'scoped memory for tpu_custom_call.1']
    #allocation4 [shape = 's32[1]{0}', space=sflag, size = 0x4, scoped, tag = 'scoped memory for tpu_custom_call.1']
    #allocation5 [shape = 'u8[196608]{0}', space=vmem, size = 0x30000, scoped, tag = 'input window, operand 1, single buffered']
    #allocation6 [shape = 's32[1]{0}', space=sflag, size = 0x4, scoped, tag = 'scoped memory for tpu_custom_call.1']
    #allocation7 [shape = 'u8[196608]{0}', space=vmem, size = 0x30000, scoped, tag = 'input window, operand 4, single buffered']
    #allocation8 [shape = 'u8[512]{0}', space=vmem, size = 0x400, scoped, tag = 'input window, operand 5, single buffered']
    #allocation9 [shape = 's32[1]{0}', space=sflag, size = 0x4, scoped, tag = 'scoped memory for tpu_custom_call.1']
    #allocation10 [shape = 'u8[512]{0}', space=vmem, size = 0x400, scoped, tag = 'input window, operand 6, single buffered']
    #allocation11 [shape = 'u8[65536]{0}', space=vmem, size = 0x10000, scoped, tag = 'input window, operand 7, single buffered']
    #allocation12 [shape = 's32[1]{0}', space=sflag, size = 0x4, scoped, tag = 'scoped memory for tpu_custom_call.1']
    #allocation13 [shape = 'u8[16384]{0}', space=vmem, size = 0x4000, scoped, tag = 'input window, operand 8, single buffered']
    #allocation14 [shape = 'u8[16384]{0}', space=vmem, size = 0x4000, scoped, tag = 'output window, operand 0, single buffered']
    %15 = vsyncpa [#allocation3], 0
    %16 = vsyncpa [#allocation6], 0
    %17 = vsyncpa [#allocation9], 0
    %18 = vsyncpa [#allocation12], 0
    %19 = vsyncpa [#allocation4], 0
    // Predicated region
    $region2: #{tpu_custom_call.1} parent=1 // pred_check
      _
    $region3: #{tpu_custom_call.1} parent=1 // pred_check_branch
      %21 = sbr.rel (0) target = $region5
    $region4: #{tpu_custom_call.1} parent=1 // pred_region
      %s23 = ssub.s32 512, 512
      %24 = vsyncadd [#allocation3], %s23
      %s25 = sshll.u32 [#allocation2], 4
      %s26 = int_to_ptr.vmem [resolvable:$true] %s25
      %31 = dma.hbm_to_vmem [thread:$0]  %s0, 512, %s26, [#allocation3], 128, 128, 8
    $region5: #{tpu_custom_call.1} parent=1 // pred_fallthru
      _
    // Predicated region
    $region6: #{tpu_custom_call.1} parent=1 // pred_check
      _
    $region7: #{tpu_custom_call.1} parent=1 // pred_check_branch
      %33 = sbr.rel (0) target = $region9
    $region8: #{tpu_custom_call.1} parent=1 // pred_region
      %s35 = ssub.s32 6144, 6144
      %36 = vsyncadd [#allocation6], %s35
      %s37 = sshll.u32 [#allocation5], 4
      %s38 = int_to_ptr.vmem [resolvable:$true] %s37
      %43 = dma.hbm_to_vmem [thread:$0]  %s1, 6144, %s38, [#allocation6], 128, 128, 8
    $region9: #{tpu_custom_call.1} parent=1 // pred_fallthru
      _
    // Predicated region
    $region10: #{tpu_custom_call.1} parent=1 // pred_check
      _
    $region11: #{tpu_custom_call.1} parent=1 // pred_check_branch
      %45 = sbr.rel (0) target = $region13
    $region12: #{tpu_custom_call.1} parent=1 // pred_region
      _
    $region13: #{tpu_custom_call.1} parent=1 // pred_fallthru
      _
    // Predicated region
    $region14: #{tpu_custom_call.1} parent=1 // pred_check
      _
    $region15: #{tpu_custom_call.1} parent=1 // pred_check_branch
      %47 = sbr.rel (0) target = $region17
    $region16: #{tpu_custom_call.1} parent=1 // pred_region
      _
    $region17: #{tpu_custom_call.1} parent=1 // pred_fallthru
      _
    // Predicated region
    $region18: #{tpu_custom_call.1} parent=1 // pred_check
      _
    $region19: #{tpu_custom_call.1} parent=1 // pred_check_branch
      %49 = sbr.rel (0) target = $region21
    $region20: #{tpu_custom_call.1} parent=1 // pred_region
      %s51 = ssub.s32 6144, 6144
      %52 = vsyncadd [#allocation6], %s51
      %s53 = sshll.u32 [#allocation7], 4
      %s54 = int_to_ptr.vmem [resolvable:$true] %s53
      %59 = dma.hbm_to_vmem [thread:$0]  %s4, 6144, %s54, [#allocation6], 128, 128, 8
    $region21: #{tpu_custom_call.1} parent=1 // pred_fallthru
      _
    // Predicated region
    $region22: #{tpu_custom_call.1} parent=1 // pred_check
      _
    $region23: #{tpu_custom_call.1} parent=1 // pred_check_branch
      %61 = sbr.rel (0) target = $region25
    $region24: #{tpu_custom_call.1} parent=1 // pred_region
      %s63 = ssub.s32 16, 16
      %64 = vsyncadd [#allocation9], %s63
      %s66 = sshll.u32 [#allocation8], 4
      %s67 = int_to_ptr.vmem [resolvable:$true] %s66
      %69 = dma.hbm_to_vmem [thread:$0]  %s5, 16, %s67, [#allocation9]
    $region25: #{tpu_custom_call.1} parent=1 // pred_fallthru
      _
    // Predicated region
    $region26: #{tpu_custom_call.1} parent=1 // pred_check
      _
    $region27: #{tpu_custom_call.1} parent=1 // pred_check_branch
      %71 = sbr.rel (0) target = $region29
    $region28: #{tpu_custom_call.1} parent=1 // pred_region
      %s73 = ssub.s32 16, 16
      %74 = vsyncadd [#allocation9], %s73
      %s76 = sshll.u32 [#allocation10], 4
      %s77 = int_to_ptr.vmem [resolvable:$true] %s76
      %79 = dma.hbm_to_vmem [thread:$0]  %s6, 16, %s77, [#allocation9]
    $region29: #{tpu_custom_call.1} parent=1 // pred_fallthru
      _
    // Predicated region
    $region30: #{tpu_custom_call.1} parent=1 // pred_check
      _
    $region31: #{tpu_custom_call.1} parent=1 // pred_check_branch
      %81 = sbr.rel (0) target = $region33
    $region32: #{tpu_custom_call.1} parent=1 // pred_region
      %s83 = ssub.s32 2048, 2048
      %84 = vsyncadd [#allocation12], %s83
      %s85 = sshll.u32 [#allocation11], 4
      %s86 = int_to_ptr.vmem [resolvable:$true] %s85
      %91 = dma.hbm_to_vmem [thread:$0]  %s7, 2048, %s86, [#allocation12], 128, 128, 8
    $region33: #{tpu_custom_call.1} parent=1 // pred_fallthru
      _
    // Predicated region
    $region34: #{tpu_custom_call.1} parent=1 // pred_check
      _
    $region35: #{tpu_custom_call.1} parent=1 // pred_check_branch
      %93 = sbr.rel (0) target = $region37
    $region36: #{tpu_custom_call.1} parent=1 // pred_region
      %s95 = ssub.s32 512, 512
      %96 = vsyncadd [#allocation12], %s95
      %s97 = sshll.u32 [#allocation13], 4
      %s98 = int_to_ptr.vmem [resolvable:$true] %s97
      %103 = dma.hbm_to_vmem [thread:$0]  %s8, 512, %s98, [#allocation12], 128, 128, 8
    $region37: #{tpu_custom_call.1} parent=1 // pred_fallthru
      _
    // Predicated region
    $region38: #{tpu_custom_call.1} parent=1 // pred_check
      _
    $region39: #{tpu_custom_call.1} parent=1 // pred_check_branch
      %105 = sbr.rel (0) target = $region41
    $region40: #{tpu_custom_call.1} parent=1 // pred_region
      _
    $region41: #{tpu_custom_call.1} parent=1 // pred_fallthru
      _
    // Predicated region
    $region42: #{tpu_custom_call.1} parent=1 // pred_check
      _
    $region43: #{tpu_custom_call.1} parent=1 // pred_check_branch
      %107 = sbr.rel (0) target = $region45
    $region44: #{tpu_custom_call.1} parent=1 // pred_region
      %108 = dma.done [#allocation3], 512
    $region45: #{tpu_custom_call.1} parent=1 // pred_fallthru
      _
    // Predicated region
    $region46: #{tpu_custom_call.1} parent=1 // pred_check
      _
    $region47: #{tpu_custom_call.1} parent=1 // pred_check_branch
      %110 = sbr.rel (0) target = $region49
    $region48: #{tpu_custom_call.1} parent=1 // pred_region
      %111 = dma.done [#allocation6], 6144
    $region49: #{tpu_custom_call.1} parent=1 // pred_fallthru
      _
    // Predicated region
    $region50: #{tpu_custom_call.1} parent=1 // pred_check
      _
    $region51: #{tpu_custom_call.1} parent=1 // pred_check_branch
      %113 = sbr.rel (0) target = $region53
    $region52: #{tpu_custom_call.1} parent=1 // pred_region
      %114 = dma.done [#allocation6], 6144
    $region53: #{tpu_custom_call.1} parent=1 // pred_fallthru
      _
    // Predicated region
    $region54: #{tpu_custom_call.1} parent=1 // pred_check
      _
    $region55: #{tpu_custom_call.1} parent=1 // pred_check_branch
      %116 = sbr.rel (0) target = $region57
    $region56: #{tpu_custom_call.1} parent=1 // pred_region
      %117 = dma.done [#allocation9], 16
    $region57: #{tpu_custom_call.1} parent=1 // pred_fallthru
      _
    // Predicated region
    $region58: #{tpu_custom_call.1} parent=1 // pred_check
      _
    $region59: #{tpu_custom_call.1} parent=1 // pred_check_branch
      %119 = sbr.rel (0) target = $region61
    $region60: #{tpu_custom_call.1} parent=1 // pred_region
      %120 = dma.done [#allocation9], 16
    $region61: #{tpu_custom_call.1} parent=1 // pred_fallthru
      _
    // Predicated region
    $region62: #{tpu_custom_call.1} parent=1 // pred_check
      _
    $region63: #{tpu_custom_call.1} parent=1 // pred_check_branch
      %122 = sbr.rel (0) target = $region65
    $region64: #{tpu_custom_call.1} parent=1 // pred_region
      %123 = dma.done [#allocation12], 2048
    $region65: #{tpu_custom_call.1} parent=1 // pred_fallthru
      _
    // Predicated region
    $region66: #{tpu_custom_call.1} parent=1 // pred_check
      _
    $region67: #{tpu_custom_call.1} parent=1 // pred_check_branch
      %125 = sbr.rel (0) target = $region69
    $region68: #{tpu_custom_call.1} parent=1 // pred_region
      %126 = dma.done [#allocation12], 512
    $region69: #{tpu_custom_call.1} parent=1 // pred_fallthru
      _
    %v127 = vld [vmem:[#allocation2] sm:$0xff]
    %v128 = vld [vmem:[#allocation2 + $0x8] sm:$0xff]
    %v129 = vld [vmem:[#allocation2 + $0x10] sm:$0xff]
    %v130 = vld [vmem:[#allocation2 + $0x18] sm:$0xff]
    %v131 = vld [vmem:[#allocation11] sm:$0xff]
    %v132 = vld [vmem:[#allocation11 + $0x8] sm:$0xff]
    %v133 = vld [vmem:[#allocation11 + $0x10] sm:$0xff]
    %v134 = vld [vmem:[#allocation11 + $0x18] sm:$0xff]
    %v135 = vld [vmem:[#allocation11 + $0x20] sm:$0xff]
    %v136 = vld [vmem:[#allocation11 + $0x28] sm:$0xff]
    %v137 = vld [vmem:[#allocation11 + $0x30] sm:$0xff]
    %v138 = vld [vmem:[#allocation11 + $0x38] sm:$0xff]
    %v139 = vld [vmem:[#allocation11 + $0x40] sm:$0xff]
    %v140 = vld [vmem:[#allocation11 + $0x48] sm:$0xff]
    %v141 = vld [vmem:[#allocation11 + $0x50] sm:$0xff]
    %v142 = vld [vmem:[#allocation11 + $0x58] sm:$0xff]
    %v143 = vld [vmem:[#allocation11 + $0x60] sm:$0xff]
    %v144 = vld [vmem:[#allocation11 + $0x68] sm:$0xff]
    %v145 = vld [vmem:[#allocation11 + $0x70] sm:$0xff]
    %v146 = vld [vmem:[#allocation11 + $0x78] sm:$0xff]
    %v147 = vld [vmem:[#allocation13] sm:$0xff]
    %v148 = vld [vmem:[#allocation13 + $0x8] sm:$0xff]
    %v149 = vld [vmem:[#allocation13 + $0x10] sm:$0xff]
    %v150 = vld [vmem:[#allocation13 + $0x18] sm:$0xff]
    %v151 = vld [vmem:[%s9] sm:$0xff]
    %v152 = vld [vmem:[%s9 + $0x8] sm:$0xff]
    %v153 = vld [vmem:[%s9 + $0x10] sm:$0xff]
    %v154 = vld [vmem:[%s9 + $0x18] sm:$0xff]
    %s155 = scalar_lea.vmem [#allocation5], 128
    %v156 = vld [vmem:[%s155] sm:$0xff]
    %v157 = vld [vmem:[%s155 + $0x8] sm:$0xff]
    %v158 = vld [vmem:[%s155 + $0x10] sm:$0xff]
    %v159 = vld [vmem:[%s155 + $0x18] sm:$0xff]
    %v160 = vld [vmem:[%s155 + $0x20] sm:$0xff]
    %v161 = vld [vmem:[%s155 + $0x28] sm:$0xff]
    %v162 = vld [vmem:[%s155 + $0x30] sm:$0xff]
    %v163 = vld [vmem:[%s155 + $0x38] sm:$0xff]
    %v164 = vld [vmem:[%s155 + $0x40] sm:$0xff]
    %v165 = vld [vmem:[%s155 + $0x48] sm:$0xff]
    %v166 = vld [vmem:[%s155 + $0x50] sm:$0xff]
    %v167 = vld [vmem:[%s155 + $0x58] sm:$0xff]
    %v168 = vld [vmem:[%s155 + $0x60] sm:$0xff]
    %v169 = vld [vmem:[%s155 + $0x68] sm:$0xff]
    %v170 = vld [vmem:[%s155 + $0x70] sm:$0xff]
    %v171 = vld [vmem:[%s155 + $0x78] sm:$0xff]
    %vm172 = vcmask 261120
    %v174 = vsel %vm172, %v151, 0
    %v177 = vsel %vm172, %v152, 0
    %v180 = vsel %vm172, %v153, 0
    %v183 = vsel %vm172, %v154, 0
    %185 = vmatprep.subr.mxu0 0.0
    %v186 = vand.u32 %v127, 4294901760
    %187 = vmatpush1.msra.mxu0 %v186
    %188 = vmatprep.subr.mxu0 0.0
    %v189 = vand.u32 %v128, 4294901760
    %190 = vmatpush1.msra.mxu0 %v189
    %191 = vmatprep.subr.mxu0 0.0
    %v192 = vand.u32 %v129, 4294901760
    %193 = vmatpush1.msra.mxu0 %v192
    %194 = vmatprep.subr.mxu0 0.0
    %v195 = vand.u32 %v130, 4294901760
    %196 = vmatpush1.msra.mxu0 %v195
    %197 = vmatprep.subr.mxu0 0.0
    %198 = vmatpush1.msra.mxu0 0.0
    %199 = vmatprep.subr.mxu0 0.0
    %200 = vmatpush1.msra.mxu0 0.0
    %201 = vmatprep.subr.mxu0 0.0
    %202 = vmatpush1.msra.mxu0 0.0
    %203 = vmatprep.subr.mxu0 0.0
    %204 = vmatpush1.msra.mxu0 0.0
    %205 = vmatprep.subr.mxu0 0.0
    %206 = vmatpush1.msra.mxu0 0.0
    %207 = vmatprep.subr.mxu0 0.0
    %208 = vmatpush1.msra.mxu0 0.0
    %209 = vmatprep.subr.mxu0 0.0
    %210 = vmatpush1.msra.mxu0 0.0
    %211 = vmatprep.subr.mxu0 0.0
    %212 = vmatpush1.msra.mxu0 0.0
    %213 = vmatprep.subr.mxu0 0.0
    %214 = vmatpush1.msra.mxu0 0.0
    %215 = vmatprep.subr.mxu0 0.0
    %216 = vmatpush1.msra.mxu0 0.0
    %217 = vmatprep.subr.mxu0 0.0
    %218 = vmatpush1.msra.mxu0 0.0
    %219 = vmatprep.subr.mxu0 0.0
    %220 = vmatpush1.msra.mxu0 0.0
    %221 = vmatprep.subr.mxu0 0.0
    %222 = vmatpush1.msra.mxu0 0.0
    %223 = vmatprep.subr.mxu0 0.0
    %224 = vmatpush1.msra.mxu0 0.0
    %225 = vmatprep.subr.mxu0 0.0
    %226 = vmatpush1.msra.mxu0 0.0
    %227 = vmatprep.subr.mxu0 0.0
    %228 = vmatpush1.msra.mxu0 0.0
    %229 = vmatprep.subr.mxu0 0.0
    %230 = vmatpush1.msra.mxu0 0.0
    %231 = vmatprep.subr.mxu0 0.0
    %232 = vmatpush1.msra.mxu0 0.0
    %233 = vmatprep.subr.mxu0 0.0
    %234 = vmatpush1.msra.mxu0 0.0
    %235 = vmatprep.subr.mxu0 0.0
    %236 = vmatpush1.msra.mxu0 0.0
    %237 = vmatprep.subr.mxu0 0.0
    %238 = vmatpush1.msra.mxu0 0.0
    %239 = vmatprep.subr.mxu0 0.0
    %240 = vmatpush1.msra.mxu0 0.0
    %241 = vmatprep.subr.mxu0 0.0
    %242 = vmatpush1.msra.mxu0 0.0
    %243 = vmatprep.subr.mxu0 0.0
    %244 = vmatpush1.msra.mxu0 0.0
    %245 = vmatprep.subr.mxu0 0.0
    %246 = vmatpush1.msra.mxu0 0.0
    %247 = vmatprep.subr.mxu0 0.0
    %248 = vmatpush1.msra.mxu0 0.0
    %249 = vmatprep.subr.mxu0 0.0
    %250 = vmatpush1.msra.mxu0 0.0
    %251 = vmatprep.subr.mxu0 0.0
    %252 = vmatpush1.msra.mxu0 0.0
    %253 = vmatprep.mubr.f32.mxu0 0.0
    %v254 = vand.u32 %v174, 4294901760
    %v255 = vsub.f32 %v174, %v254
    %v256 = vand.u32 %v255, 4294901760
    %v257 = vsub.f32 %v255, %v256
    %v258 = vand.u32 %v257, 4294901760
    %259 = vmatmul.mubr.f32.gmra.mrb[0].mxu0 %v258
    %v260 = vpop.f32.mrb[0].mxu0
    %v261 = vadd.f32 0.0, %v260
    %v262 = vpop.f32.mrb[0].mxu0
    %263 = vmatprep.mubr.f32.mxu0 0.0
    %v264 = vand.u32 %v177, 4294901760
    %v265 = vsub.f32 %v177, %v264
    %v266 = vand.u32 %v265, 4294901760
    %v267 = vsub.f32 %v265, %v266
    %v268 = vand.u32 %v267, 4294901760
    %269 = vmatmul.mubr.f32.gmra.mrb[0].mxu0 %v268
    %v270 = vpop.f32.mrb[0].mxu0
    %v271 = vadd.f32 0.0, %v270
    %v272 = vpop.f32.mrb[0].mxu0
    %273 = vmatprep.mubr.f32.mxu0 0.0
    %v274 = vand.u32 %v180, 4294901760
    %v275 = vsub.f32 %v180, %v274
    %v276 = vand.u32 %v275, 4294901760
    %v277 = vsub.f32 %v275, %v276
    %v278 = vand.u32 %v277, 4294901760
    %279 = vmatmul.mubr.f32.gmra.mrb[0].mxu0 %v278
    %v280 = vpop.f32.mrb[0].mxu0
    %v281 = vadd.f32 0.0, %v280
    %v282 = vpop.f32.mrb[0].mxu0
    %283 = vmatprep.mubr.f32.mxu0 0.0
    %v284 = vand.u32 %v183, 4294901760
    %v285 = vsub.f32 %v183, %v284
    %v286 = vand.u32 %v285, 4294901760
    %v287 = vsub.f32 %v285, %v286
    %v288 = vand.u32 %v287, 4294901760
    %289 = vmatmul.mubr.f32.gmra.mrb[0].mxu0 %v288
    %v290 = vpop.f32.mrb[0].mxu0
    %v291 = vadd.f32 0.0, %v290
    %v292 = vpop.f32.mrb[0].mxu0
    %293 = vdwg.mxu0
    %294 = vmatprep.subr.mxu0 0.0
    %v295 = vand.u32 %v127, 4294901760
    %v296 = vsub.f32 %v127, %v295
    %v297 = vand.u32 %v296, 4294901760
    %v298 = vsub.f32 %v296, %v297
    %v299 = vand.u32 %v298, 4294901760
    %300 = vmatpush1.msra.mxu0 %v299
    %301 = vmatprep.subr.mxu0 0.0
    %v302 = vand.u32 %v128, 4294901760
    %v303 = vsub.f32 %v128, %v302
    %v304 = vand.u32 %v303, 4294901760
    %v305 = vsub.f32 %v303, %v304
    %v306 = vand.u32 %v305, 4294901760
    %307 = vmatpush1.msra.mxu0 %v306
    %308 = vmatprep.subr.mxu0 0.0
    %v309 = vand.u32 %v129, 4294901760
    %v310 = vsub.f32 %v129, %v309
    %v311 = vand.u32 %v310, 4294901760
    %v312 = vsub.f32 %v310, %v311
    %v313 = vand.u32 %v312, 4294901760
    %314 = vmatpush1.msra.mxu0 %v313
    %315 = vmatprep.subr.mxu0 0.0
    %v316 = vand.u32 %v130, 4294901760
    %v317 = vsub.f32 %v130, %v316
    %v318 = vand.u32 %v317, 4294901760
    %v319 = vsub.f32 %v317, %v318
    %v320 = vand.u32 %v319, 4294901760
    %321 = vmatpush1.msra.mxu0 %v320
    %322 = vmatprep.subr.mxu0 0.0
    %323 = vmatpush1.msra.mxu0 0.0
    %324 = vmatprep.subr.mxu0 0.0
    %325 = vmatpush1.msra.mxu0 0.0
    %326 = vmatprep.subr.mxu0 0.0
    %327 = vmatpush1.msra.mxu0 0.0
    %328 = vmatprep.subr.mxu0 0.0
    %329 = vmatpush1.msra.mxu0 0.0
    %330 = vmatprep.subr.mxu0 0.0
    %331 = vmatpush1.msra.mxu0 0.0
    %332 = vmatprep.subr.mxu0 0.0
    %333 = vmatpush1.msra.mxu0 0.0
    %334 = vmatprep.subr.mxu0 0.0
    %335 = vmatpush1.msra.mxu0 0.0
    %336 = vmatprep.subr.mxu0 0.0
    %337 = vmatpush1.msra.mxu0 0.0
    %338 = vmatprep.subr.mxu0 0.0
    %339 = vmatpush1.msra.mxu0 0.0
    %340 = vmatprep.subr.mxu0 0.0
    %341 = vmatpush1.msra.mxu0 0.0
    %342 = vmatprep.subr.mxu0 0.0
    %343 = vmatpush1.msra.mxu0 0.0
    %344 = vmatprep.subr.mxu0 0.0
    %345 = vmatpush1.msra.mxu0 0.0
    %346 = vmatprep.subr.mxu0 0.0
    %347 = vmatpush1.msra.mxu0 0.0
    %348 = vmatprep.subr.mxu0 0.0
    %349 = vmatpush1.msra.mxu0 0.0
    %350 = vmatprep.subr.mxu0 0.0
    %351 = vmatpush1.msra.mxu0 0.0
    %352 = vmatprep.subr.mxu0 0.0
    %353 = vmatpush1.msra.mxu0 0.0
    %354 = vmatprep.subr.mxu0 0.0
    %355 = vmatpush1.msra.mxu0 0.0
    %356 = vmatprep.subr.mxu0 0.0
    %357 = vmatpush1.msra.mxu0 0.0
    %358 = vmatprep.subr.mxu0 0.0
    %359 = vmatpush1.msra.mxu0 0.0
    %360 = vmatprep.subr.mxu0 0.0
    %361 = vmatpush1.msra.mxu0 0.0
    %362 = vmatprep.subr.mxu0 0.0
    %363 = vmatpush1.msra.mxu0 0.0
    %364 = vmatprep.subr.mxu0 0.0
    %365 = vmatpush1.msra.mxu0 0.0
    %366 = vmatprep.subr.mxu0 0.0
    %367 = vmatpush1.msra.mxu0 0.0
    %368 = vmatprep.subr.mxu0 0.0
    %369 = vmatpush1.msra.mxu0 0.0
    %370 = vmatprep.subr.mxu0 0.0
    %371 = vmatpush1.msra.mxu0 0.0
    %372 = vmatprep.subr.mxu0 0.0
    %373 = vmatpush1.msra.mxu0 0.0
    %374 = vmatprep.subr.mxu0 0.0
    %375 = vmatpush1.msra.mxu0 0.0
    %376 = vmatprep.subr.mxu0 0.0
    %377 = vmatpush1.msra.mxu0 0.0
    %378 = vmatprep.mubr.f32.mxu0 0.0
    %v379 = vand.u32 %v174, 4294901760
    %380 = vmatmul.mubr.f32.gmra.mrb[0].mxu0 %v379
    %v381 = vpop.f32.mrb[0].mxu0
    %v382 = vadd.f32 %v261, %v381
    %v383 = vpop.f32.mrb[0].mxu0
    %384 = vmatprep.mubr.f32.mxu0 0.0
    %v385 = vand.u32 %v177, 4294901760
    %386 = vmatmul.mubr.f32.gmra.mrb[0].mxu0 %v385
    %v387 = vpop.f32.mrb[0].mxu0
    %v388 = vadd.f32 %v271, %v387
    %v389 = vpop.f32.mrb[0].mxu0
    %390 = vmatprep.mubr.f32.mxu0 0.0
    %v391 = vand.u32 %v180, 4294901760
    %392 = vmatmul.mubr.f32.gmra.mrb[0].mxu0 %v391
    %v393 = vpop.f32.mrb[0].mxu0
    %v394 = vadd.f32 %v281, %v393
    %v395 = vpop.f32.mrb[0].mxu0
    %396 = vmatprep.mubr.f32.mxu0 0.0
    %v397 = vand.u32 %v183, 4294901760
    %398 = vmatmul.mubr.f32.gmra.mrb[0].mxu0 %v397
    %v399 = vpop.f32.mrb[0].mxu0
    %v400 = vadd.f32 %v291, %v399
    %v401 = vpop.f32.mrb[0].mxu0
    %402 = vdwg.mxu0
    %403 = vmatprep.subr.mxu0 0.0
    %v404 = vand.u32 %v127, 4294901760
    %v405 = vsub.f32 %v127, %v404
    %406 = vmatpush1.msra.mxu0 %v405
    %407 = vmatprep.subr.mxu0 0.0
    %v408 = vand.u32 %v128, 4294901760
    %v409 = vsub.f32 %v128, %v408
    %410 = vmatpush1.msra.mxu0 %v409
    %411 = vmatprep.subr.mxu0 0.0
    %v412 = vand.u32 %v129, 4294901760
    %v413 = vsub.f32 %v129, %v412
    %414 = vmatpush1.msra.mxu0 %v413
    %415 = vmatprep.subr.mxu0 0.0
    %v416 = vand.u32 %v130, 4294901760
    %v417 = vsub.f32 %v130, %v416
    %418 = vmatpush1.msra.mxu0 %v417
    %419 = vmatprep.subr.mxu0 0.0
    %420 = vmatpush1.msra.mxu0 0.0
    %421 = vmatprep.subr.mxu0 0.0
    %422 = vmatpush1.msra.mxu0 0.0
    %423 = vmatprep.subr.mxu0 0.0
    %424 = vmatpush1.msra.mxu0 0.0
    %425 = vmatprep.subr.mxu0 0.0
    %426 = vmatpush1.msra.mxu0 0.0
    %427 = vmatprep.subr.mxu0 0.0
    %428 = vmatpush1.msra.mxu0 0.0
    %429 = vmatprep.subr.mxu0 0.0
    %430 = vmatpush1.msra.mxu0 0.0
    %431 = vmatprep.subr.mxu0 0.0
    %432 = vmatpush1.msra.mxu0 0.0
    %433 = vmatprep.subr.mxu0 0.0
    %434 = vmatpush1.msra.mxu0 0.0
    %435 = vmatprep.subr.mxu0 0.0
    %436 = vmatpush1.msra.mxu0 0.0
    %437 = vmatprep.subr.mxu0 0.0
    %438 = vmatpush1.msra.mxu0 0.0
    %439 = vmatprep.subr.mxu0 0.0
    %440 = vmatpush1.msra.mxu0 0.0
    %441 = vmatprep.subr.mxu0 0.0
    %442 = vmatpush1.msra.mxu0 0.0
    %443 = vmatprep.subr.mxu0 0.0
    %444 = vmatpush1.msra.mxu0 0.0
    %445 = vmatprep.subr.mxu0 0.0
    %446 = vmatpush1.msra.mxu0 0.0
    %447 = vmatprep.subr.mxu0 0.0
    %448 = vmatpush1.msra.mxu0 0.0
    %449 = vmatprep.subr.mxu0 0.0
    %450 = vmatpush1.msra.mxu0 0.0
    %451 = vmatprep.subr.mxu0 0.0
    %452 = vmatpush1.msra.mxu0 0.0
    %453 = vmatprep.subr.mxu0 0.0
    %454 = vmatpush1.msra.mxu0 0.0
    %455 = vmatprep.subr.mxu0 0.0
    %456 = vmatpush1.msra.mxu0 0.0
    %457 = vmatprep.subr.mxu0 0.0
    %458 = vmatpush1.msra.mxu0 0.0
    %459 = vmatprep.subr.mxu0 0.0
    %460 = vmatpush1.msra.mxu0 0.0
    %461 = vmatprep.subr.mxu0 0.0
    %462 = vmatpush1.msra.mxu0 0.0
    %463 = vmatprep.subr.mxu0 0.0
    %464 = vmatpush1.msra.mxu0 0.0
    %465 = vmatprep.subr.mxu0 0.0
    %466 = vmatpush1.msra.mxu0 0.0
    %467 = vmatprep.subr.mxu0 0.0
    %468 = vmatpush1.msra.mxu0 0.0
    %469 = vmatprep.subr.mxu0 0.0
    %470 = vmatpush1.msra.mxu0 0.0
    %471 = vmatprep.subr.mxu0 0.0
    %472 = vmatpush1.msra.mxu0 0.0
    %473 = vmatprep.subr.mxu0 0.0
    %474 = vmatpush1.msra.mxu0 0.0
    %475 = vmatprep.mubr.f32.mxu0 0.0
    %v476 = vand.u32 %v174, 4294901760
    %v477 = vsub.f32 %v174, %v476
    %478 = vmatmul.mubr.f32.gmra.mrb[0].mxu0 %v477
    %v479 = vpop.f32.mrb[0].mxu0
    %v480 = vadd.f32 %v382, %v479
    %v481 = vpop.f32.mrb[0].mxu0
    %482 = vmatprep.mubr.f32.mxu0 0.0
    %v483 = vand.u32 %v177, 4294901760
    %v484 = vsub.f32 %v177, %v483
    %485 = vmatmul.mubr.f32.gmra.mrb[0].mxu0 %v484
    %v486 = vpop.f32.mrb[0].mxu0
    %v487 = vadd.f32 %v388, %v486
    %v488 = vpop.f32.mrb[0].mxu0
    %489 = vmatprep.mubr.f32.mxu0 0.0
    %v490 = vand.u32 %v180, 4294901760
    %v491 = vsub.f32 %v180, %v490
    %492 = vmatmul.mubr.f32.gmra.mrb[0].mxu0 %v491
    %v493 = vpop.f32.mrb[0].mxu0
    %v494 = vadd.f32 %v394, %v493
    %v495 = vpop.f32.mrb[0].mxu0
    %496 = vmatprep.mubr.f32.mxu0 0.0
    %v497 = vand.u32 %v183, 4294901760
    %v498 = vsub.f32 %v183, %v497
    %499 = vmatmul.mubr.f32.gmra.mrb[0].mxu0 %v498
    %v500 = vpop.f32.mrb[0].mxu0
    %v501 = vadd.f32 %v400, %v500
    %v502 = vpop.f32.mrb[0].mxu0
    %503 = vdwg.mxu0
    %504 = vmatprep.subr.mxu0 0.0
    %v505 = vand.u32 %v127, 4294901760
    %506 = vmatpush1.msra.mxu0 %v505
    %507 = vmatprep.subr.mxu0 0.0
    %v508 = vand.u32 %v128, 4294901760
    %509 = vmatpush1.msra.mxu0 %v508
    %510 = vmatprep.subr.mxu0 0.0
    %v511 = vand.u32 %v129, 4294901760
    %512 = vmatpush1.msra.mxu0 %v511
    %513 = vmatprep.subr.mxu0 0.0
    %v514 = vand.u32 %v130, 4294901760
    %515 = vmatpush1.msra.mxu0 %v514
    %516 = vmatprep.subr.mxu0 0.0
    %517 = vmatpush1.msra.mxu0 0.0
    %518 = vmatprep.subr.mxu0 0.0
    %519 = vmatpush1.msra.mxu0 0.0
    %520 = vmatprep.subr.mxu0 0.0
    %521 = vmatpush1.msra.mxu0 0.0
    %522 = vmatprep.subr.mxu0 0.0
    %523 = vmatpush1.msra.mxu0 0.0
    %524 = vmatprep.subr.mxu0 0.0
    %525 = vmatpush1.msra.mxu0 0.0
    %526 = vmatprep.subr.mxu0 0.0
    %527 = vmatpush1.msra.mxu0 0.0
    %528 = vmatprep.subr.mxu0 0.0
    %529 = vmatpush1.msra.mxu0 0.0
    %530 = vmatprep.subr.mxu0 0.0
    %531 = vmatpush1.msra.mxu0 0.0
    %532 = vmatprep.subr.mxu0 0.0
    %533 = vmatpush1.msra.mxu0 0.0
    %534 = vmatprep.subr.mxu0 0.0
    %535 = vmatpush1.msra.mxu0 0.0
    %536 = vmatprep.subr.mxu0 0.0
    %537 = vmatpush1.msra.mxu0 0.0
    %538 = vmatprep.subr.mxu0 0.0
    %539 = vmatpush1.msra.mxu0 0.0
    %540 = vmatprep.subr.mxu0 0.0
    %541 = vmatpush1.msra.mxu0 0.0
    %542 = vmatprep.subr.mxu0 0.0
    %543 = vmatpush1.msra.mxu0 0.0
    %544 = vmatprep.subr.mxu0 0.0
    %545 = vmatpush1.msra.mxu0 0.0
    %546 = vmatprep.subr.mxu0 0.0
    %547 = vmatpush1.msra.mxu0 0.0
    %548 = vmatprep.subr.mxu0 0.0
    %549 = vmatpush1.msra.mxu0 0.0
    %550 = vmatprep.subr.mxu0 0.0
    %551 = vmatpush1.msra.mxu0 0.0
    %552 = vmatprep.subr.mxu0 0.0
    %553 = vmatpush1.msra.mxu0 0.0
    %554 = vmatprep.subr.mxu0 0.0
    %555 = vmatpush1.msra.mxu0 0.0
    %556 = vmatprep.subr.mxu0 0.0
    %557 = vmatpush1.msra.mxu0 0.0
    %558 = vmatprep.subr.mxu0 0.0
    %559 = vmatpush1.msra.mxu0 0.0
    %560 = vmatprep.subr.mxu0 0.0
    %561 = vmatpush1.msra.mxu0 0.0
    %562 = vmatprep.subr.mxu0 0.0
    %563 = vmatpush1.msra.mxu0 0.0
    %564 = vmatprep.subr.mxu0 0.0
    %565 = vmatpush1.msra.mxu0 0.0
    %566 = vmatprep.subr.mxu0 0.0
    %567 = vmatpush1.msra.mxu0 0.0
    %568 = vmatprep.subr.mxu0 0.0
    %569 = vmatpush1.msra.mxu0 0.0
    %570 = vmatprep.subr.mxu0 0.0
    %571 = vmatpush1.msra.mxu0 0.0
    %572 = vmatprep.mubr.f32.mxu0 0.0
    %v573 = vand.u32 %v174, 4294901760
    %v574 = vsub.f32 %v174, %v573
    %v575 = vand.u32 %v574, 4294901760
    %576 = vmatmul.mubr.f32.gmra.mrb[0].mxu0 %v575
    %v577 = vpop.f32.mrb[0].mxu0
    %v578 = vadd.f32 %v480, %v577
    %v579 = vpop.f32.mrb[0].mxu0
    %580 = vmatprep.mubr.f32.mxu0 0.0
    %v581 = vand.u32 %v177, 4294901760
    %v582 = vsub.f32 %v177, %v581
    %v583 = vand.u32 %v582, 4294901760
    %584 = vmatmul.mubr.f32.gmra.mrb[0].mxu0 %v583
    %v585 = vpop.f32.mrb[0].mxu0
    %v586 = vadd.f32 %v487, %v585
    %v587 = vpop.f32.mrb[0].mxu0
    %588 = vmatprep.mubr.f32.mxu0 0.0
    %v589 = vand.u32 %v180, 4294901760
    %v590 = vsub.f32 %v180, %v589
    %v591 = vand.u32 %v590, 4294901760
    %592 = vmatmul.mubr.f32.gmra.mrb[0].mxu0 %v591
    %v593 = vpop.f32.mrb[0].mxu0
    %v594 = vadd.f32 %v494, %v593
    %v595 = vpop.f32.mrb[0].mxu0
    %596 = vmatprep.mubr.f32.mxu0 0.0
    %v597 = vand.u32 %v183, 4294901760
    %v598 = vsub.f32 %v183, %v597
    %v599 = vand.u32 %v598, 4294901760
    %600 = vmatmul.mubr.f32.gmra.mrb[0].mxu0 %v599
    %v601 = vpop.f32.mrb[0].mxu0
    %v602 = vadd.f32 %v501, %v601
    %v603 = vpop.f32.mrb[0].mxu0
    %604 = vdwg.mxu0
    %605 = vmatprep.subr.mxu0 0.0
    %v606 = vand.u32 %v127, 4294901760
    %v607 = vsub.f32 %v127, %v606
    %v608 = vand.u32 %v607, 4294901760
    %609 = vmatpush1.msra.mxu0 %v608
    %610 = vmatprep.subr.mxu0 0.0
    %v611 = vand.u32 %v128, 4294901760
    %v612 = vsub.f32 %v128, %v611
    %v613 = vand.u32 %v612, 4294901760
    %614 = vmatpush1.msra.mxu0 %v613
    %615 = vmatprep.subr.mxu0 0.0
    %v616 = vand.u32 %v129, 4294901760
    %v617 = vsub.f32 %v129, %v616
    %v618 = vand.u32 %v617, 4294901760
    %619 = vmatpush1.msra.mxu0 %v618
    %620 = vmatprep.subr.mxu0 0.0
    %v621 = vand.u32 %v130, 4294901760
    %v622 = vsub.f32 %v130, %v621
    %v623 = vand.u32 %v622, 4294901760
    %624 = vmatpush1.msra.mxu0 %v623
    %625 = vmatprep.subr.mxu0 0.0
    %626 = vmatpush1.msra.mxu0 0.0
    %627 = vmatprep.subr.mxu0 0.0
    %628 = vmatpush1.msra.mxu0 0.0
    %629 = vmatprep.subr.mxu0 0.0
    %630 = vmatpush1.msra.mxu0 0.0
    %631 = vmatprep.subr.mxu0 0.0
    %632 = vmatpush1.msra.mxu0 0.0
    %633 = vmatprep.subr.mxu0 0.0
    %634 = vmatpush1.msra.mxu0 0.0
    %635 = vmatprep.subr.mxu0 0.0
    %636 = vmatpush1.msra.mxu0 0.0
    %637 = vmatprep.subr.mxu0 0.0
    %638 = vmatpush1.msra.mxu0 0.0
    %639 = vmatprep.subr.mxu0 0.0
    %640 = vmatpush1.msra.mxu0 0.0
    %641 = vmatprep.subr.mxu0 0.0
    %642 = vmatpush1.msra.mxu0 0.0
    %643 = vmatprep.subr.mxu0 0.0
    %644 = vmatpush1.msra.mxu0 0.0
    %645 = vmatprep.subr.mxu0 0.0
    %646 = vmatpush1.msra.mxu0 0.0
    %647 = vmatprep.subr.mxu0 0.0
    %648 = vmatpush1.msra.mxu0 0.0
    %649 = vmatprep.subr.mxu0 0.0
    %650 = vmatpush1.msra.mxu0 0.0
    %651 = vmatprep.subr.mxu0 0.0
    %652 = vmatpush1.msra.mxu0 0.0
    %653 = vmatprep.subr.mxu0 0.0
    %654 = vmatpush1.msra.mxu0 0.0
    %655 = vmatprep.subr.mxu0 0.0
    %656 = vmatpush1.msra.mxu0 0.0
    %657 = vmatprep.subr.mxu0 0.0
    %658 = vmatpush1.msra.mxu0 0.0
    %659 = vmatprep.subr.mxu0 0.0
    %660 = vmatpush1.msra.mxu0 0.0
    %661 = vmatprep.subr.mxu0 0.0
    %662 = vmatpush1.msra.mxu0 0.0
    %663 = vmatprep.subr.mxu0 0.0
    %664 = vmatpush1.msra.mxu0 0.0
    %665 = vmatprep.subr.mxu0 0.0
    %666 = vmatpush1.msra.mxu0 0.0
    %667 = vmatprep.subr.mxu0 0.0
    %668 = vmatpush1.msra.mxu0 0.0
    %669 = vmatprep.subr.mxu0 0.0
    %670 = vmatpush1.msra.mxu0 0.0
    %671 = vmatprep.subr.mxu0 0.0
    %672 = vmatpush1.msra.mxu0 0.0
    %673 = vmatprep.subr.mxu0 0.0
    %674 = vmatpush1.msra.mxu0 0.0
    %675 = vmatprep.subr.mxu0 0.0
    %676 = vmatpush1.msra.mxu0 0.0
    %677 = vmatprep.subr.mxu0 0.0
    %678 = vmatpush1.msra.mxu0 0.0
    %679 = vmatprep.subr.mxu0 0.0
    %680 = vmatpush1.msra.mxu0 0.0
    %681 = vmatprep.mubr.f32.mxu0 0.0
    %v682 = vand.u32 %v174, 4294901760
    %683 = vmatmul.mubr.f32.gmra.mrb[0].mxu0 %v682
    %v684 = vpop.f32.mrb[0].mxu0
    %v685 = vadd.f32 %v578, %v684
    %v686 = vpop.f32.mrb[0].mxu0
    %687 = vmatprep.mubr.f32.mxu0 0.0
    %v688 = vand.u32 %v177, 4294901760
    %689 = vmatmul.mubr.f32.gmra.mrb[0].mxu0 %v688
    %v690 = vpop.f32.mrb[0].mxu0
    %v691 = vadd.f32 %v586, %v690
    %v692 = vpop.f32.mrb[0].mxu0
    %693 = vmatprep.mubr.f32.mxu0 0.0
    %v694 = vand.u32 %v180, 4294901760
    %695 = vmatmul.mubr.f32.gmra.mrb[0].mxu0 %v694
    %v696 = vpop.f32.mrb[0].mxu0
    %v697 = vadd.f32 %v594, %v696
    %v698 = vpop.f32.mrb[0].mxu0
    %699 = vmatprep.mubr.f32.mxu0 0.0
    %v700 = vand.u32 %v183, 4294901760
    %701 = vmatmul.mubr.f32.gmra.mrb[0].mxu0 %v700
    %v702 = vpop.f32.mrb[0].mxu0
    %v703 = vadd.f32 %v602, %v702
    %v704 = vpop.f32.mrb[0].mxu0
    %705 = vdwg.mxu0
    %706 = vmatprep.subr.mxu0 0.0
    %v707 = vand.u32 %v127, 4294901760
    %708 = vmatpush1.msra.mxu0 %v707
    %709 = vmatprep.subr.mxu0 0.0
    %v710 = vand.u32 %v128, 4294901760
    %711 = vmatpush1.msra.mxu0 %v710
    %712 = vmatprep.subr.mxu0 0.0
    %v713 = vand.u32 %v129, 4294901760
    %714 = vmatpush1.msra.mxu0 %v713
    %715 = vmatprep.subr.mxu0 0.0
    %v716 = vand.u32 %v130, 4294901760
    %717 = vmatpush1.msra.mxu0 %v716
    %718 = vmatprep.subr.mxu0 0.0
    %719 = vmatpush1.msra.mxu0 0.0
    %720 = vmatprep.subr.mxu0 0.0
    %721 = vmatpush1.msra.mxu0 0.0
    %722 = vmatprep.subr.mxu0 0.0
    %723 = vmatpush1.msra.mxu0 0.0
    %724 = vmatprep.subr.mxu0 0.0
    %725 = vmatpush1.msra.mxu0 0.0
    %726 = vmatprep.subr.mxu0 0.0
    %727 = vmatpush1.msra.mxu0 0.0
    %728 = vmatprep.subr.mxu0 0.0
    %729 = vmatpush1.msra.mxu0 0.0
    %730 = vmatprep.subr.mxu0 0.0
    %731 = vmatpush1.msra.mxu0 0.0
    %732 = vmatprep.subr.mxu0 0.0
    %733 = vmatpush1.msra.mxu0 0.0
    %734 = vmatprep.subr.mxu0 0.0
    %735 = vmatpush1.msra.mxu0 0.0
    %736 = vmatprep.subr.mxu0 0.0
    %737 = vmatpush1.msra.mxu0 0.0
    %738 = vmatprep.subr.mxu0 0.0
    %739 = vmatpush1.msra.mxu0 0.0
    %740 = vmatprep.subr.mxu0 0.0
    %741 = vmatpush1.msra.mxu0 0.0
    %742 = vmatprep.subr.mxu0 0.0
    %743 = vmatpush1.msra.mxu0 0.0
    %744 = vmatprep.subr.mxu0 0.0
    %745 = vmatpush1.msra.mxu0 0.0
    %746 = vmatprep.subr.mxu0 0.0
    %747 = vmatpush1.msra.mxu0 0.0
    %748 = vmatprep.subr.mxu0 0.0
    %749 = vmatpush1.msra.mxu0 0.0
    %750 = vmatprep.subr.mxu0 0.0
    %751 = vmatpush1.msra.mxu0 0.0
    %752 = vmatprep.subr.mxu0 0.0
    %753 = vmatpush1.msra.mxu0 0.0
    %754 = vmatprep.subr.mxu0 0.0
    %755 = vmatpush1.msra.mxu0 0.0
    %756 = vmatprep.subr.mxu0 0.0
    %757 = vmatpush1.msra.mxu0 0.0
    %758 = vmatprep.subr.mxu0 0.0
    %759 = vmatpush1.msra.mxu0 0.0
    %760 = vmatprep.subr.mxu0 0.0
    %761 = vmatpush1.msra.mxu0 0.0
    %762 = vmatprep.subr.mxu0 0.0
    %763 = vmatpush1.msra.mxu0 0.0
    %764 = vmatprep.subr.mxu0 0.0
    %765 = vmatpush1.msra.mxu0 0.0
    %766 = vmatprep.subr.mxu0 0.0
    %767 = vmatpush1.msra.mxu0 0.0
    %768 = vmatprep.subr.mxu0 0.0
    %769 = vmatpush1.msra.mxu0 0.0
    %770 = vmatprep.subr.mxu0 0.0
    %771 = vmatpush1.msra.mxu0 0.0
    %772 = vmatprep.subr.mxu0 0.0
    %773 = vmatpush1.msra.mxu0 0.0
    %774 = vmatprep.mubr.f32.mxu0 0.0
    %v775 = vand.u32 %v174, 4294901760
    %776 = vmatmul.mubr.f32.gmra.mrb[0].mxu0 %v775
    %v777 = vpop.f32.mrb[0].mxu0
    %v778 = vadd.f32 %v685, %v777
    %v779 = vpop.f32.mrb[0].mxu0
    %780 = vmatprep.mubr.f32.mxu0 0.0
    %v781 = vand.u32 %v177, 4294901760
    %782 = vmatmul.mubr.f32.gmra.mrb[0].mxu0 %v781
    %v783 = vpop.f32.mrb[0].mxu0
    %v784 = vadd.f32 %v691, %v783
    %v785 = vpop.f32.mrb[0].mxu0
    %786 = vmatprep.mubr.f32.mxu0 0.0
    %v787 = vand.u32 %v180, 4294901760
    %788 = vmatmul.mubr.f32.gmra.mrb[0].mxu0 %v787
    %v789 = vpop.f32.mrb[0].mxu0
    %v790 = vadd.f32 %v697, %v789
    %v791 = vpop.f32.mrb[0].mxu0
    %792 = vmatprep.mubr.f32.mxu0 0.0
    %v793 = vand.u32 %v183, 4294901760
    %794 = vmatmul.mubr.f32.gmra.mrb[0].mxu0 %v793
    %v795 = vpop.f32.mrb[0].mxu0
    %v796 = vadd.f32 %v703, %v795
    %v797 = vpop.f32.mrb[0].mxu0
    %798 = vdwg.mxu0
    %v799 = vld [vmem:[#allocation5] sm:$0xff]
    %v800 = vld [vmem:[#allocation5 + $0x8] sm:$0xff]
    %v801 = vld [vmem:[#allocation5 + $0x10] sm:$0xff]
    %v802 = vld [vmem:[#allocation5 + $0x18] sm:$0xff]
    %v803 = vld [vmem:[#allocation5 + $0x20] sm:$0xff]
    %v804 = vld [vmem:[#allocation5 + $0x28] sm:$0xff]
    %v805 = vld [vmem:[#allocation5 + $0x30] sm:$0xff]
    %v806 = vld [vmem:[#allocation5 + $0x38] sm:$0xff]
    %v807 = vld [vmem:[#allocation5 + $0x40] sm:$0xff]
    %v808 = vld [vmem:[#allocation5 + $0x48] sm:$0xff]
    %v809 = vld [vmem:[#allocation5 + $0x50] sm:$0xff]
    %v810 = vld [vmem:[#allocation5 + $0x58] sm:$0xff]
    %v811 = vld [vmem:[#allocation5 + $0x60] sm:$0xff]
    %v812 = vld [vmem:[#allocation5 + $0x68] sm:$0xff]
    %v813 = vld [vmem:[#allocation5 + $0x70] sm:$0xff]
    %v814 = vld [vmem:[#allocation5 + $0x78] sm:$0xff]
    %815 = vmatprep.subr.mxu0 0.0
    %v816 = vand.u32 %v799, 4294901760
    %817 = vmatpush1.msra.mxu0 %v816
    %818 = vmatprep.subr.mxu0 0.0
    %v819 = vand.u32 %v800, 4294901760
    %820 = vmatpush1.msra.mxu0 %v819
    %821 = vmatprep.subr.mxu0 0.0
    %v822 = vand.u32 %v801, 4294901760
    %823 = vmatpush1.msra.mxu0 %v822
    %824 = vmatprep.subr.mxu0 0.0
    %v825 = vand.u32 %v802, 4294901760
    %826 = vmatpush1.msra.mxu0 %v825
    %827 = vmatprep.subr.mxu0 0.0
    %v828 = vand.u32 %v803, 4294901760
    %829 = vmatpush1.msra.mxu0 %v828
    %830 = vmatprep.subr.mxu0 0.0
    %v831 = vand.u32 %v804, 4294901760
    %832 = vmatpush1.msra.mxu0 %v831
    %833 = vmatprep.subr.mxu0 0.0
    %v834 = vand.u32 %v805, 4294901760
    %835 = vmatpush1.msra.mxu0 %v834
    %836 = vmatprep.subr.mxu0 0.0
    %v837 = vand.u32 %v806, 4294901760
    %838 = vmatpush1.msra.mxu0 %v837
    %839 = vmatprep.subr.mxu0 0.0
    %v840 = vand.u32 %v807, 4294901760
    %841 = vmatpush1.msra.mxu0 %v840
    %842 = vmatprep.subr.mxu0 0.0
    %v843 = vand.u32 %v808, 4294901760
    %844 = vmatpush1.msra.mxu0 %v843
    %845 = vmatprep.subr.mxu0 0.0
    %v846 = vand.u32 %v809, 4294901760
    %847 = vmatpush1.msra.mxu0 %v846
    %848 = vmatprep.subr.mxu0 0.0
    %v849 = vand.u32 %v810, 4294901760
    %850 = vmatpush1.msra.mxu0 %v849
    %851 = vmatprep.subr.mxu0 0.0
    %v852 = vand.u32 %v811, 4294901760
    %853 = vmatpush1.msra.mxu0 %v852
    %854 = vmatprep.subr.mxu0 0.0
    %v855 = vand.u32 %v812, 4294901760
    %856 = vmatpush1.msra.mxu0 %v855
    %857 = vmatprep.subr.mxu0 0.0
    %v858 = vand.u32 %v813, 4294901760
    %859 = vmatpush1.msra.mxu0 %v858
    %860 = vmatprep.subr.mxu0 0.0
    %v861 = vand.u32 %v814, 4294901760
    %862 = vmatpush1.msra.mxu0 %v861
    %863 = vmatprep.subr.mxu0 0.0
    %864 = vmatpush1.msra.mxu0 0.0
    %865 = vmatprep.subr.mxu0 0.0
    %866 = vmatpush1.msra.mxu0 0.0
    %867 = vmatprep.subr.mxu0 0.0
    %868 = vmatpush1.msra.mxu0 0.0
    %869 = vmatprep.subr.mxu0 0.0
    %870 = vmatpush1.msra.mxu0 0.0
    %871 = vmatprep.subr.mxu0 0.0
    %872 = vmatpush1.msra.mxu0 0.0
    %873 = vmatprep.subr.mxu0 0.0
    %874 = vmatpush1.msra.mxu0 0.0
    %875 = vmatprep.subr.mxu0 0.0
    %876 = vmatpush1.msra.mxu0 0.0
    %877 = vmatprep.subr.mxu0 0.0
    %878 = vmatpush1.msra.mxu0 0.0
    %879 = vmatprep.subr.mxu0 0.0
    %880 = vmatpush1.msra.mxu0 0.0
    %881 = vmatprep.subr.mxu0 0.0
    %882 = vmatpush1.msra.mxu0 0.0
    %883 = vmatprep.subr.mxu0 0.0
    %884 = vmatpush1.msra.mxu0 0.0
    %885 = vmatprep.subr.mxu0 0.0
    %886 = vmatpush1.msra.mxu0 0.0
    %887 = vmatprep.subr.mxu0 0.0
    %888 = vmatpush1.msra.mxu0 0.0
    %889 = vmatprep.subr.mxu0 0.0
    %890 = vmatpush1.msra.mxu0 0.0
    %891 = vmatprep.subr.mxu0 0.0
    %892 = vmatpush1.msra.mxu0 0.0
    %893 = vmatprep.subr.mxu0 0.0
    %894 = vmatpush1.msra.mxu0 0.0
    %895 = vmatprep.mubr.f32.mxu0 0.0
    %v896 = vand.u32 %v778, 4294901760
    %v897 = vsub.f32 %v778, %v896
    %v898 = vand.u32 %v897, 4294901760
    %v899 = vsub.f32 %v897, %v898
    %v900 = vand.u32 %v899, 4294901760
    %901 = vmatmul.mubr.f32.gmra.mrb[0].mxu0 %v900
    %v902 = vpop.f32.mrb[0].mxu0
    %v903 = vadd.f32 0.0, %v902
    %v904 = vpop.f32.mrb[0].mxu0
    %905 = vmatprep.mubr.f32.mxu0 0.0
    %v906 = vand.u32 %v784, 4294901760
    %v907 = vsub.f32 %v784, %v906
    %v908 = vand.u32 %v907, 4294901760
    %v909 = vsub.f32 %v907, %v908
    %v910 = vand.u32 %v909, 4294901760
    %911 = vmatmul.mubr.f32.gmra.mrb[0].mxu0 %v910
    %v912 = vpop.f32.mrb[0].mxu0
    %v913 = vadd.f32 0.0, %v912
    %v914 = vpop.f32.mrb[0].mxu0
    %915 = vmatprep.mubr.f32.mxu0 0.0
    %v916 = vand.u32 %v790, 4294901760
    %v917 = vsub.f32 %v790, %v916
    %v918 = vand.u32 %v917, 4294901760
    %v919 = vsub.f32 %v917, %v918
    %v920 = vand.u32 %v919, 4294901760
    %921 = vmatmul.mubr.f32.gmra.mrb[0].mxu0 %v920
    %v922 = vpop.f32.mrb[0].mxu0
    %v923 = vadd.f32 0.0, %v922
    %v924 = vpop.f32.mrb[0].mxu0
    %925 = vmatprep.mubr.f32.mxu0 0.0
    %v926 = vand.u32 %v796, 4294901760
    %v927 = vsub.f32 %v796, %v926
    %v928 = vand.u32 %v927, 4294901760
    %v929 = vsub.f32 %v927, %v928
    %v930 = vand.u32 %v929, 4294901760
    %931 = vmatmul.mubr.f32.gmra.mrb[0].mxu0 %v930
    %v932 = vpop.f32.mrb[0].mxu0
    %v933 = vadd.f32 0.0, %v932
    %v934 = vpop.f32.mrb[0].mxu0
    %935 = vdwg.mxu0
    %936 = vmatprep.subr.mxu0 0.0
    %v937 = vand.u32 %v799, 4294901760
    %v938 = vsub.f32 %v799, %v937
    %v939 = vand.u32 %v938, 4294901760
    %v940 = vsub.f32 %v938, %v939
    %v941 = vand.u32 %v940, 4294901760
    %942 = vmatpush1.msra.mxu0 %v941
    %943 = vmatprep.subr.mxu0 0.0
    %v944 = vand.u32 %v800, 4294901760
    %v945 = vsub.f32 %v800, %v944
    %v946 = vand.u32 %v945, 4294901760
    %v947 = vsub.f32 %v945, %v946
    %v948 = vand.u32 %v947, 4294901760
    %949 = vmatpush1.msra.mxu0 %v948
    %950 = vmatprep.subr.mxu0 0.0
    %v951 = vand.u32 %v801, 4294901760
    %v952 = vsub.f32 %v801, %v951
    %v953 = vand.u32 %v952, 4294901760
    %v954 = vsub.f32 %v952, %v953
    %v955 = vand.u32 %v954, 4294901760
    %956 = vmatpush1.msra.mxu0 %v955
    %957 = vmatprep.subr.mxu0 0.0
    %v958 = vand.u32 %v802, 4294901760
    %v959 = vsub.f32 %v802, %v958
    %v960 = vand.u32 %v959, 4294901760
    %v961 = vsub.f32 %v959, %v960
    %v962 = vand.u32 %v961, 4294901760
    %963 = vmatpush1.msra.mxu0 %v962
    %964 = vmatprep.subr.mxu0 0.0
    %v965 = vand.u32 %v803, 4294901760
    %v966 = vsub.f32 %v803, %v965
    %v967 = vand.u32 %v966, 4294901760
    %v968 = vsub.f32 %v966, %v967
    %v969 = vand.u32 %v968, 4294901760
    %970 = vmatpush1.msra.mxu0 %v969
    %971 = vmatprep.subr.mxu0 0.0
    %v972 = vand.u32 %v804, 4294901760
    %v973 = vsub.f32 %v804, %v972
    %v974 = vand.u32 %v973, 4294901760
    %v975 = vsub.f32 %v973, %v974
    %v976 = vand.u32 %v975, 4294901760
    %977 = vmatpush1.msra.mxu0 %v976
    %978 = vmatprep.subr.mxu0 0.0
    %v979 = vand.u32 %v805, 4294901760
    %v980 = vsub.f32 %v805, %v979
    %v981 = vand.u32 %v980, 4294901760
    %v982 = vsub.f32 %v980, %v981
    %v983 = vand.u32 %v982, 4294901760
    %984 = vmatpush1.msra.mxu0 %v983
    %985 = vmatprep.subr.mxu0 0.0
    %v986 = vand.u32 %v806, 4294901760
    %v987 = vsub.f32 %v806, %v986
    %v988 = vand.u32 %v987, 4294901760
    %v989 = vsub.f32 %v987, %v988
    %v990 = vand.u32 %v989, 4294901760
    %991 = vmatpush1.msra.mxu0 %v990
    %992 = vmatprep.subr.mxu0 0.0
    %v993 = vand.u32 %v807, 4294901760
    %v994 = vsub.f32 %v807, %v993
    %v995 = vand.u32 %v994, 4294901760
    %v996 = vsub.f32 %v994, %v995
    %v997 = vand.u32 %v996, 4294901760
    %998 = vmatpush1.msra.mxu0 %v997
    %999 = vmatprep.subr.mxu0 0.0
    %v1000 = vand.u32 %v808, 4294901760
    %v1001 = vsub.f32 %v808, %v1000
    %v1002 = vand.u32 %v1001, 4294901760
    %v1003 = vsub.f32 %v1001, %v1002
    %v1004 = vand.u32 %v1003, 4294901760
    %1005 = vmatpush1.msra.mxu0 %v1004
    %1006 = vmatprep.subr.mxu0 0.0
    %v1007 = vand.u32 %v809, 4294901760
    %v1008 = vsub.f32 %v809, %v1007
    %v1009 = vand.u32 %v1008, 4294901760
    %v1010 = vsub.f32 %v1008, %v1009
    %v1011 = vand.u32 %v1010, 4294901760
    %1012 = vmatpush1.msra.mxu0 %v1011
    %1013 = vmatprep.subr.mxu0 0.0
    %v1014 = vand.u32 %v810, 4294901760
    %v1015 = vsub.f32 %v810, %v1014
    %v1016 = vand.u32 %v1015, 4294901760
    %v1017 = vsub.f32 %v1015, %v1016
    %v1018 = vand.u32 %v1017, 4294901760
    %1019 = vmatpush1.msra.mxu0 %v1018
    %1020 = vmatprep.subr.mxu0 0.0
    %v1021 = vand.u32 %v811, 4294901760
    %v1022 = vsub.f32 %v811, %v1021
    %v1023 = vand.u32 %v1022, 4294901760
    %v1024 = vsub.f32 %v1022, %v1023
    %v1025 = vand.u32 %v1024, 4294901760
    %1026 = vmatpush1.msra.mxu0 %v1025
    %1027 = vmatprep.subr.mxu0 0.0
    %v1028 = vand.u32 %v812, 4294901760
    %v1029 = vsub.f32 %v812, %v1028
    %v1030 = vand.u32 %v1029, 4294901760
    %v1031 = vsub.f32 %v1029, %v1030
    %v1032 = vand.u32 %v1031, 4294901760
    %1033 = vmatpush1.msra.mxu0 %v1032
    %1034 = vmatprep.subr.mxu0 0.0
    %v1035 = vand.u32 %v813, 4294901760
    %v1036 = vsub.f32 %v813, %v1035
    %v1037 = vand.u32 %v1036, 4294901760
    %v1038 = vsub.f32 %v1036, %v1037
    %v1039 = vand.u32 %v1038, 4294901760
    %1040 = vmatpush1.msra.mxu0 %v1039
    %1041 = vmatprep.subr.mxu0 0.0
    %v1042 = vand.u32 %v814, 4294901760
    %v1043 = vsub.f32 %v814, %v1042
    %v1044 = vand.u32 %v1043, 4294901760
    %v1045 = vsub.f32 %v1043, %v1044
    %v1046 = vand.u32 %v1045, 4294901760
    %1047 = vmatpush1.msra.mxu0 %v1046
    %1048 = vmatprep.subr.mxu0 0.0
    %1049 = vmatpush1.msra.mxu0 0.0
    %1050 = vmatprep.subr.mxu0 0.0
    %1051 = vmatpush1.msra.mxu0 0.0
    %1052 = vmatprep.subr.mxu0 0.0
    %1053 = vmatpush1.msra.mxu0 0.0
    %1054 = vmatprep.subr.mxu0 0.0
    %1055 = vmatpush1.msra.mxu0 0.0
    %1056 = vmatprep.subr.mxu0 0.0
    %1057 = vmatpush1.msra.mxu0 0.0
    %1058 = vmatprep.subr.mxu0 0.0
    %1059 = vmatpush1.msra.mxu0 0.0
    %1060 = vmatprep.subr.mxu0 0.0
    %1061 = vmatpush1.msra.mxu0 0.0
    %1062 = vmatprep.subr.mxu0 0.0
    %1063 = vmatpush1.msra.mxu0 0.0
    %1064 = vmatprep.subr.mxu0 0.0
    %1065 = vmatpush1.msra.mxu0 0.0
    %1066 = vmatprep.subr.mxu0 0.0
    %1067 = vmatpush1.msra.mxu0 0.0
    %1068 = vmatprep.subr.mxu0 0.0
    %1069 = vmatpush1.msra.mxu0 0.0
    %1070 = vmatprep.subr.mxu0 0.0
    %1071 = vmatpush1.msra.mxu0 0.0
    %1072 = vmatprep.subr.mxu0 0.0
    %1073 = vmatpush1.msra.mxu0 0.0
    %1074 = vmatprep.subr.mxu0 0.0
    %1075 = vmatpush1.msra.mxu0 0.0
    %1076 = vmatprep.subr.mxu0 0.0
    %1077 = vmatpush1.msra.mxu0 0.0
    %1078 = vmatprep.subr.mxu0 0.0
    %1079 = vmatpush1.msra.mxu0 0.0
    %1080 = vmatprep.mubr.f32.mxu0 0.0
    %v1081 = vand.u32 %v778, 4294901760
    %1082 = vmatmul.mubr.f32.gmra.mrb[0].mxu0 %v1081
    %v1083 = vpop.f32.mrb[0].mxu0
    %v1084 = vadd.f32 %v903, %v1083
    %v1085 = vpop.f32.mrb[0].mxu0
    %1086 = vmatprep.mubr.f32.mxu0 0.0
    %v1087 = vand.u32 %v784, 4294901760
    %1088 = vmatmul.mubr.f32.gmra.mrb[0].mxu0 %v1087
    %v1089 = vpop.f32.mrb[0].mxu0
    %v1090 = vadd.f32 %v913, %v1089
    %v1091 = vpop.f32.mrb[0].mxu0
    %1092 = vmatprep.mubr.f32.mxu0 0.0
    %v1093 = vand.u32 %v790, 4294901760
    %1094 = vmatmul.mubr.f32.gmra.mrb[0].mxu0 %v1093
    %v1095 = vpop.f32.mrb[0].mxu0
    %v1096 = vadd.f32 %v923, %v1095
    %v1097 = vpop.f32.mrb[0].mxu0
    %1098 = vmatprep.mubr.f32.mxu0 0.0
    %v1099 = vand.u32 %v796, 4294901760
    %1100 = vmatmul.mubr.f32.gmra.mrb[0].mxu0 %v1099
    %v1101 = vpop.f32.mrb[0].mxu0
    %v1102 = vadd.f32 %v933, %v1101
    %v1103 = vpop.f32.mrb[0].mxu0
    %1104 = vdwg.mxu0
    %1105 = vmatprep.subr.mxu0 0.0
    %v1106 = vand.u32 %v799, 4294901760
    %v1107 = vsub.f32 %v799, %v1106
    %1108 = vmatpush1.msra.mxu0 %v1107
    %1109 = vmatprep.subr.mxu0 0.0
    %v1110 = vand.u32 %v800, 4294901760
    %v1111 = vsub.f32 %v800, %v1110
    %1112 = vmatpush1.msra.mxu0 %v1111
    %1113 = vmatprep.subr.mxu0 0.0
    %v1114 = vand.u32 %v801, 4294901760
    %v1115 = vsub.f32 %v801, %v1114
    %1116 = vmatpush1.msra.mxu0 %v1115
    %1117 = vmatprep.subr.mxu0 0.0
    %v1118 = vand.u32 %v802, 4294901760
    %v1119 = vsub.f32 %v802, %v1118
    %1120 = vmatpush1.msra.mxu0 %v1119
    %1121 = vmatprep.subr.mxu0 0.0
    %v1122 = vand.u32 %v803, 4294901760
    %v1123 = vsub.f32 %v803, %v1122
    %1124 = vmatpush1.msra.mxu0 %v1123
    %1125 = vmatprep.subr.mxu0 0.0
    %v1126 = vand.u32 %v804, 4294901760
    %v1127 = vsub.f32 %v804, %v1126
    %1128 = vmatpush1.msra.mxu0 %v1127
    %1129 = vmatprep.subr.mxu0 0.0
    %v1130 = vand.u32 %v805, 4294901760
    %v1131 = vsub.f32 %v805, %v1130
    %1132 = vmatpush1.msra.mxu0 %v1131
    %1133 = vmatprep.subr.mxu0 0.0
    %v1134 = vand.u32 %v806, 4294901760
    %v1135 = vsub.f32 %v806, %v1134
    %1136 = vmatpush1.msra.mxu0 %v1135
    %1137 = vmatprep.subr.mxu0 0.0
    %v1138 = vand.u32 %v807, 4294901760
    %v1139 = vsub.f32 %v807, %v1138
    %1140 = vmatpush1.msra.mxu0 %v1139
    %1141 = vmatprep.subr.mxu0 0.0
    %v1142 = vand.u32 %v808, 4294901760
    %v1143 = vsub.f32 %v808, %v1142
    %1144 = vmatpush1.msra.mxu0 %v1143
    %1145 = vmatprep.subr.mxu0 0.0
    %v1146 = vand.u32 %v809, 4294901760
    %v1147 = vsub.f32 %v809, %v1146
    %1148 = vmatpush1.msra.mxu0 %v1147
    %1149 = vmatprep.subr.mxu0 0.0
    %v1150 = vand.u32 %v810, 4294901760
    %v1151 = vsub.f32 %v810, %v1150
    %1152 = vmatpush1.msra.mxu0 %v1151
    %1153 = vmatprep.subr.mxu0 0.0
    %v1154 = vand.u32 %v811, 4294901760
    %v1155 = vsub.f32 %v811, %v1154
    %1156 = vmatpush1.msra.mxu0 %v1155
    %1157 = vmatprep.subr.mxu0 0.0
    %v1158 = vand.u32 %v812, 4294901760
    %v1159 = vsub.f32 %v812, %v1158
    %1160 = vmatpush1.msra.mxu0 %v1159
    %1161 = vmatprep.subr.mxu0 0.0
    %v1162 = vand.u32 %v813, 4294901760
    %v1163 = vsub.f32 %v813, %v1162
    %1164 = vmatpush1.msra.mxu0 %v1163
    %1165 = vmatprep.subr.mxu0 0.0
    %v1166 = vand.u32 %v814, 4294901760
    %v1167 = vsub.f32 %v814, %v1166
    %1168 = vmatpush1.msra.mxu0 %v1167
    %1169 = vmatprep.subr.mxu0 0.0
    %1170 = vmatpush1.msra.mxu0 0.0
    %1171 = vmatprep.subr.mxu0 0.0
    %1172 = vmatpush1.msra.mxu0 0.0
    %1173 = vmatprep.subr.mxu0 0.0
    %1174 = vmatpush1.msra.mxu0 0.0
    %1175 = vmatprep.subr.mxu0 0.0
    %1176 = vmatpush1.msra.mxu0 0.0
    %1177 = vmatprep.subr.mxu0 0.0
    %1178 = vmatpush1.msra.mxu0 0.0
    %1179 = vmatprep.subr.mxu0 0.0
    %1180 = vmatpush1.msra.mxu0 0.0
    %1181 = vmatprep.subr.mxu0 0.0
    %1182 = vmatpush1.msra.mxu0 0.0
    %1183 = vmatprep.subr.mxu0 0.0
    %1184 = vmatpush1.msra.mxu0 0.0
    %1185 = vmatprep.subr.mxu0 0.0
    %1186 = vmatpush1.msra.mxu0 0.0
    %1187 = vmatprep.subr.mxu0 0.0
    %1188 = vmatpush1.msra.mxu0 0.0
    %1189 = vmatprep.subr.mxu0 0.0
    %1190 = vmatpush1.msra.mxu0 0.0
    %1191 = vmatprep.subr.mxu0 0.0
    %1192 = vmatpush1.msra.mxu0 0.0
    %1193 = vmatprep.subr.mxu0 0.0
    %1194 = vmatpush1.msra.mxu0 0.0
    %1195 = vmatprep.subr.mxu0 0.0
    %1196 = vmatpush1.msra.mxu0 0.0
    %1197 = vmatprep.subr.mxu0 0.0
    %1198 = vmatpush1.msra.mxu0 0.0
    %1199 = vmatprep.subr.mxu0 0.0
    %1200 = vmatpush1.msra.mxu0 0.0
    %1201 = vmatprep.mubr.f32.mxu0 0.0
    %v1202 = vand.u32 %v778, 4294901760
    %v1203 = vsub.f32 %v778, %v1202
    %1204 = vmatmul.mubr.f32.gmra.mrb[0].mxu0 %v1203
    %v1205 = vpop.f32.mrb[0].mxu0
    %v1206 = vadd.f32 %v1084, %v1205
    %v1207 = vpop.f32.mrb[0].mxu0
    %1208 = vmatprep.mubr.f32.mxu0 0.0
    %v1209 = vand.u32 %v784, 4294901760
    %v1210 = vsub.f32 %v784, %v1209
    %1211 = vmatmul.mubr.f32.gmra.mrb[0].mxu0 %v1210
    %v1212 = vpop.f32.mrb[0].mxu0
    %v1213 = vadd.f32 %v1090, %v1212
    %v1214 = vpop.f32.mrb[0].mxu0
    %1215 = vmatprep.mubr.f32.mxu0 0.0
    %v1216 = vand.u32 %v790, 4294901760
    %v1217 = vsub.f32 %v790, %v1216
    %1218 = vmatmul.mubr.f32.gmra.mrb[0].mxu0 %v1217
    %v1219 = vpop.f32.mrb[0].mxu0
    %v1220 = vadd.f32 %v1096, %v1219
    %v1221 = vpop.f32.mrb[0].mxu0
    %1222 = vmatprep.mubr.f32.mxu0 0.0
    %v1223 = vand.u32 %v796, 4294901760
    %v1224 = vsub.f32 %v796, %v1223
    %1225 = vmatmul.mubr.f32.gmra.mrb[0].mxu0 %v1224
    %v1226 = vpop.f32.mrb[0].mxu0
    %v1227 = vadd.f32 %v1102, %v1226
    %v1228 = vpop.f32.mrb[0].mxu0
    %1229 = vdwg.mxu0
    %1230 = vmatprep.subr.mxu0 0.0
    %v1231 = vand.u32 %v799, 4294901760
    %1232 = vmatpush1.msra.mxu0 %v1231
    %1233 = vmatprep.subr.mxu0 0.0
    %v1234 = vand.u32 %v800, 4294901760
    %1235 = vmatpush1.msra.mxu0 %v1234
    %1236 = vmatprep.subr.mxu0 0.0
    %v1237 = vand.u32 %v801, 4294901760
    %1238 = vmatpush1.msra.mxu0 %v1237
    %1239 = vmatprep.subr.mxu0 0.0
    %v1240 = vand.u32 %v802, 4294901760
    %1241 = vmatpush1.msra.mxu0 %v1240
    %1242 = vmatprep.subr.mxu0 0.0
    %v1243 = vand.u32 %v803, 4294901760
    %1244 = vmatpush1.msra.mxu0 %v1243
    %1245 = vmatprep.subr.mxu0 0.0
    %v1246 = vand.u32 %v804, 4294901760
    %1247 = vmatpush1.msra.mxu0 %v1246
    %1248 = vmatprep.subr.mxu0 0.0
    %v1249 = vand.u32 %v805, 4294901760
    %1250 = vmatpush1.msra.mxu0 %v1249
    %1251 = vmatprep.subr.mxu0 0.0
    %v1252 = vand.u32 %v806, 4294901760
    %1253 = vmatpush1.msra.mxu0 %v1252
    %1254 = vmatprep.subr.mxu0 0.0
    %v1255 = vand.u32 %v807, 4294901760
    %1256 = vmatpush1.msra.mxu0 %v1255
    %1257 = vmatprep.subr.mxu0 0.0
    %v1258 = vand.u32 %v808, 4294901760
    %1259 = vmatpush1.msra.mxu0 %v1258
    %1260 = vmatprep.subr.mxu0 0.0
    %v1261 = vand.u32 %v809, 4294901760
    %1262 = vmatpush1.msra.mxu0 %v1261
    %1263 = vmatprep.subr.mxu0 0.0
    %v1264 = vand.u32 %v810, 4294901760
    %1265 = vmatpush1.msra.mxu0 %v1264
    %1266 = vmatprep.subr.mxu0 0.0
    %v1267 = vand.u32 %v811, 4294901760
    %1268 = vmatpush1.msra.mxu0 %v1267
    %1269 = vmatprep.subr.mxu0 0.0
    %v1270 = vand.u32 %v812, 4294901760
    %1271 = vmatpush1.msra.mxu0 %v1270
    %1272 = vmatprep.subr.mxu0 0.0
    %v1273 = vand.u32 %v813, 4294901760
    %1274 = vmatpush1.msra.mxu0 %v1273
    %1275 = vmatprep.subr.mxu0 0.0
    %v1276 = vand.u32 %v814, 4294901760
    %1277 = vmatpush1.msra.mxu0 %v1276
    %1278 = vmatprep.subr.mxu0 0.0
    %1279 = vmatpush1.msra.mxu0 0.0
    %1280 = vmatprep.subr.mxu0 0.0
    %1281 = vmatpush1.msra.mxu0 0.0
    %1282 = vmatprep.subr.mxu0 0.0
    %1283 = vmatpush1.msra.mxu0 0.0
    %1284 = vmatprep.subr.mxu0 0.0
    %1285 = vmatpush1.msra.mxu0 0.0
    %1286 = vmatprep.subr.mxu0 0.0
    %1287 = vmatpush1.msra.mxu0 0.0
    %1288 = vmatprep.subr.mxu0 0.0
    %1289 = vmatpush1.msra.mxu0 0.0
    %1290 = vmatprep.subr.mxu0 0.0
    %1291 = vmatpush1.msra.mxu0 0.0
    %1292 = vmatprep.subr.mxu0 0.0
    %1293 = vmatpush1.msra.mxu0 0.0
    %1294 = vmatprep.subr.mxu0 0.0
    %1295 = vmatpush1.msra.mxu0 0.0
    %1296 = vmatprep.subr.mxu0 0.0
    %1297 = vmatpush1.msra.mxu0 0.0
    %1298 = vmatprep.subr.mxu0 0.0
    %1299 = vmatpush1.msra.mxu0 0.0
    %1300 = vmatprep.subr.mxu0 0.0
    %1301 = vmatpush1.msra.mxu0 0.0
    %1302 = vmatprep.subr.mxu0 0.0
    %1303 = vmatpush1.msra.mxu0 0.0
    %1304 = vmatprep.subr.mxu0 0.0
    %1305 = vmatpush1.msra.mxu0 0.0
    %1306 = vmatprep.subr.mxu0 0.0
    %1307 = vmatpush1.msra.mxu0 0.0
    %1308 = vmatprep.subr.mxu0 0.0
    %1309 = vmatpush1.msra.mxu0 0.0
    %1310 = vmatprep.mubr.f32.mxu0 0.0
    %v1311 = vand.u32 %v778, 4294901760
    %v1312 = vsub.f32 %v778, %v1311
    %v1313 = vand.u32 %v1312, 4294901760
    %1314 = vmatmul.mubr.f32.gmra.mrb[0].mxu0 %v1313
    %v1315 = vpop.f32.mrb[0].mxu0
    %v1316 = vadd.f32 %v1206, %v1315
    %v1317 = vpop.f32.mrb[0].mxu0
    %1318 = vmatprep.mubr.f32.mxu0 0.0
    %v1319 = vand.u32 %v784, 4294901760
    %v1320 = vsub.f32 %v784, %v1319
    %v1321 = vand.u32 %v1320, 4294901760
    %1322 = vmatmul.mubr.f32.gmra.mrb[0].mxu0 %v1321
    %v1323 = vpop.f32.mrb[0].mxu0
    %v1324 = vadd.f32 %v1213, %v1323
    %v1325 = vpop.f32.mrb[0].mxu0
    %1326 = vmatprep.mubr.f32.mxu0 0.0
    %v1327 = vand.u32 %v790, 4294901760
    %v1328 = vsub.f32 %v790, %v1327
    %v1329 = vand.u32 %v1328, 4294901760
    %1330 = vmatmul.mubr.f32.gmra.mrb[0].mxu0 %v1329
    %v1331 = vpop.f32.mrb[0].mxu0
    %v1332 = vadd.f32 %v1220, %v1331
    %v1333 = vpop.f32.mrb[0].mxu0
    %1334 = vmatprep.mubr.f32.mxu0 0.0
    %v1335 = vand.u32 %v796, 4294901760
    %v1336 = vsub.f32 %v796, %v1335
    %v1337 = vand.u32 %v1336, 4294901760
    %1338 = vmatmul.mubr.f32.gmra.mrb[0].mxu0 %v1337
    %v1339 = vpop.f32.mrb[0].mxu0
    %v1340 = vadd.f32 %v1227, %v1339
    %v1341 = vpop.f32.mrb[0].mxu0
    %1342 = vdwg.mxu0
    %1343 = vmatprep.subr.mxu0 0.0
    %v1344 = vand.u32 %v799, 4294901760
    %v1345 = vsub.f32 %v799, %v1344
    %v1346 = vand.u32 %v1345, 4294901760
    %1347 = vmatpush1.msra.mxu0 %v1346
    %1348 = vmatprep.subr.mxu0 0.0
    %v1349 = vand.u32 %v800, 4294901760
    %v1350 = vsub.f32 %v800, %v1349
    %v1351 = vand.u32 %v1350, 4294901760
    %1352 = vmatpush1.msra.mxu0 %v1351
    %1353 = vmatprep.subr.mxu0 0.0
    %v1354 = vand.u32 %v801, 4294901760
    %v1355 = vsub.f32 %v801, %v1354
    %v1356 = vand.u32 %v1355, 4294901760
    %1357 = vmatpush1.msra.mxu0 %v1356
    %1358 = vmatprep.subr.mxu0 0.0
    %v1359 = vand.u32 %v802, 4294901760
    %v1360 = vsub.f32 %v802, %v1359
    %v1361 = vand.u32 %v1360, 4294901760
    %1362 = vmatpush1.msra.mxu0 %v1361
    %1363 = vmatprep.subr.mxu0 0.0
    %v1364 = vand.u32 %v803, 4294901760
    %v1365 = vsub.f32 %v803, %v1364
    %v1366 = vand.u32 %v1365, 4294901760
    %1367 = vmatpush1.msra.mxu0 %v1366
    %1368 = vmatprep.subr.mxu0 0.0
    %v1369 = vand.u32 %v804, 4294901760
    %v1370 = vsub.f32 %v804, %v1369
    %v1371 = vand.u32 %v1370, 4294901760
    %1372 = vmatpush1.msra.mxu0 %v1371
    %1373 = vmatprep.subr.mxu0 0.0
    %v1374 = vand.u32 %v805, 4294901760
    %v1375 = vsub.f32 %v805, %v1374
    %v1376 = vand.u32 %v1375, 4294901760
    %1377 = vmatpush1.msra.mxu0 %v1376
    %1378 = vmatprep.subr.mxu0 0.0
    %v1379 = vand.u32 %v806, 4294901760
    %v1380 = vsub.f32 %v806, %v1379
    %v1381 = vand.u32 %v1380, 4294901760
    %1382 = vmatpush1.msra.mxu0 %v1381
    %1383 = vmatprep.subr.mxu0 0.0
    %v1384 = vand.u32 %v807, 4294901760
    %v1385 = vsub.f32 %v807, %v1384
    %v1386 = vand.u32 %v1385, 4294901760
    %1387 = vmatpush1.msra.mxu0 %v1386
    %1388 = vmatprep.subr.mxu0 0.0
    %v1389 = vand.u32 %v808, 4294901760
    %v1390 = vsub.f32 %v808, %v1389
    %v1391 = vand.u32 %v1390, 4294901760
    %1392 = vmatpush1.msra.mxu0 %v1391
    %1393 = vmatprep.subr.mxu0 0.0
    %v1394 = vand.u32 %v809, 4294901760
    %v1395 = vsub.f32 %v809, %v1394
    %v1396 = vand.u32 %v1395, 4294901760
    %1397 = vmatpush1.msra.mxu0 %v1396
    %1398 = vmatprep.subr.mxu0 0.0
    %v1399 = vand.u32 %v810, 4294901760
    %v1400 = vsub.f32 %v810, %v1399
    %v1401 = vand.u32 %v1400, 4294901760
    %1402 = vmatpush1.msra.mxu0 %v1401
    %1403 = vmatprep.subr.mxu0 0.0
    %v1404 = vand.u32 %v811, 4294901760
    %v1405 = vsub.f32 %v811, %v1404
    %v1406 = vand.u32 %v1405, 4294901760
    %1407 = vmatpush1.msra.mxu0 %v1406
    %1408 = vmatprep.subr.mxu0 0.0
    %v1409 = vand.u32 %v812, 4294901760
    %v1410 = vsub.f32 %v812, %v1409
    %v1411 = vand.u32 %v1410, 4294901760
    %1412 = vmatpush1.msra.mxu0 %v1411
    %1413 = vmatprep.subr.mxu0 0.0
    %v1414 = vand.u32 %v813, 4294901760
    %v1415 = vsub.f32 %v813, %v1414
    %v1416 = vand.u32 %v1415, 4294901760
    %1417 = vmatpush1.msra.mxu0 %v1416
    %1418 = vmatprep.subr.mxu0 0.0
    %v1419 = vand.u32 %v814, 4294901760
    %v1420 = vsub.f32 %v814, %v1419
    %v1421 = vand.u32 %v1420, 4294901760
    %1422 = vmatpush1.msra.mxu0 %v1421
    %1423 = vmatprep.subr.mxu0 0.0
    %1424 = vmatpush1.msra.mxu0 0.0
    %1425 = vmatprep.subr.mxu0 0.0
    %1426 = vmatpush1.msra.mxu0 0.0
    %1427 = vmatprep.subr.mxu0 0.0
    %1428 = vmatpush1.msra.mxu0 0.0
    %1429 = vmatprep.subr.mxu0 0.0
    %1430 = vmatpush1.msra.mxu0 0.0
    %1431 = vmatprep.subr.mxu0 0.0
    %1432 = vmatpush1.msra.mxu0 0.0
    %1433 = vmatprep.subr.mxu0 0.0
    %1434 = vmatpush1.msra.mxu0 0.0
    %1435 = vmatprep.subr.mxu0 0.0
    %1436 = vmatpush1.msra.mxu0 0.0
    %1437 = vmatprep.subr.mxu0 0.0
    %1438 = vmatpush1.msra.mxu0 0.0
    %1439 = vmatprep.subr.mxu0 0.0
    %1440 = vmatpush1.msra.mxu0 0.0
    %1441 = vmatprep.subr.mxu0 0.0
    %1442 = vmatpush1.msra.mxu0 0.0
    %1443 = vmatprep.subr.mxu0 0.0
    %1444 = vmatpush1.msra.mxu0 0.0
    %1445 = vmatprep.subr.mxu0 0.0
    %1446 = vmatpush1.msra.mxu0 0.0
    %1447 = vmatprep.subr.mxu0 0.0
    %1448 = vmatpush1.msra.mxu0 0.0
    %1449 = vmatprep.subr.mxu0 0.0
    %1450 = vmatpush1.msra.mxu0 0.0
    %1451 = vmatprep.subr.mxu0 0.0
    %1452 = vmatpush1.msra.mxu0 0.0
    %1453 = vmatprep.subr.mxu0 0.0
    %1454 = vmatpush1.msra.mxu0 0.0
    %1455 = vmatprep.mubr.f32.mxu0 0.0
    %v1456 = vand.u32 %v778, 4294901760
    %1457 = vmatmul.mubr.f32.gmra.mrb[0].mxu0 %v1456
    %v1458 = vpop.f32.mrb[0].mxu0
    %v1459 = vadd.f32 %v1316, %v1458
    %v1460 = vpop.f32.mrb[0].mxu0
    %1461 = vmatprep.mubr.f32.mxu0 0.0
    %v1462 = vand.u32 %v784, 4294901760
    %1463 = vmatmul.mubr.f32.gmra.mrb[0].mxu0 %v1462
    %v1464 = vpop.f32.mrb[0].mxu0
    %v1465 = vadd.f32 %v1324, %v1464
    %v1466 = vpop.f32.mrb[0].mxu0
    %1467 = vmatprep.mubr.f32.mxu0 0.0
    %v1468 = vand.u32 %v790, 4294901760
    %1469 = vmatmul.mubr.f32.gmra.mrb[0].mxu0 %v1468
    %v1470 = vpop.f32.mrb[0].mxu0
    %v1471 = vadd.f32 %v1332, %v1470
    %v1472 = vpop.f32.mrb[0].mxu0
    %1473 = vmatprep.mubr.f32.mxu0 0.0
    %v1474 = vand.u32 %v796, 4294901760
    %1475 = vmatmul.mubr.f32.gmra.mrb[0].mxu0 %v1474
    %v1476 = vpop.f32.mrb[0].mxu0
    %v1477 = vadd.f32 %v1340, %v1476
    %v1478 = vpop.f32.mrb[0].mxu0
    %1479 = vdwg.mxu0
    %1480 = vmatprep.subr.mxu0 0.0
    %v1481 = vand.u32 %v799, 4294901760
    %1482 = vmatpush1.msra.mxu0 %v1481
    %1483 = vmatprep.subr.mxu0 0.0
    %v1484 = vand.u32 %v800, 4294901760
    %1485 = vmatpush1.msra.mxu0 %v1484
    %1486 = vmatprep.subr.mxu0 0.0
    %v1487 = vand.u32 %v801, 4294901760
    %1488 = vmatpush1.msra.mxu0 %v1487
    %1489 = vmatprep.subr.mxu0 0.0
    %v1490 = vand.u32 %v802, 4294901760
    %1491 = vmatpush1.msra.mxu0 %v1490
    %1492 = vmatprep.subr.mxu0 0.0
    %v1493 = vand.u32 %v803, 4294901760
    %1494 = vmatpush1.msra.mxu0 %v1493
    %1495 = vmatprep.subr.mxu0 0.0
    %v1496 = vand.u32 %v804, 4294901760
    %1497 = vmatpush1.msra.mxu0 %v1496
    %1498 = vmatprep.subr.mxu0 0.0
    %v1499 = vand.u32 %v805, 4294901760
    %1500 = vmatpush1.msra.mxu0 %v1499
    %1501 = vmatprep.subr.mxu0 0.0
    %v1502 = vand.u32 %v806, 4294901760
    %1503 = vmatpush1.msra.mxu0 %v1502
    %1504 = vmatprep.subr.mxu0 0.0
    %v1505 = vand.u32 %v807, 4294901760
    %1506 = vmatpush1.msra.mxu0 %v1505
    %1507 = vmatprep.subr.mxu0 0.0
    %v1508 = vand.u32 %v808, 4294901760
    %1509 = vmatpush1.msra.mxu0 %v1508
    %1510 = vmatprep.subr.mxu0 0.0
    %v1511 = vand.u32 %v809, 4294901760
    %1512 = vmatpush1.msra.mxu0 %v1511
    %1513 = vmatprep.subr.mxu0 0.0
    %v1514 = vand.u32 %v810, 4294901760
    %1515 = vmatpush1.msra.mxu0 %v1514
    %1516 = vmatprep.subr.mxu0 0.0
    %v1517 = vand.u32 %v811, 4294901760
    %1518 = vmatpush1.msra.mxu0 %v1517
    %1519 = vmatprep.subr.mxu0 0.0
    %v1520 = vand.u32 %v812, 4294901760
    %1521 = vmatpush1.msra.mxu0 %v1520
    %1522 = vmatprep.subr.mxu0 0.0
    %v1523 = vand.u32 %v813, 4294901760
    %1524 = vmatpush1.msra.mxu0 %v1523
    %1525 = vmatprep.subr.mxu0 0.0
    %v1526 = vand.u32 %v814, 4294901760
    %1527 = vmatpush1.msra.mxu0 %v1526
    %1528 = vmatprep.subr.mxu0 0.0
    %1529 = vmatpush1.msra.mxu0 0.0
    %1530 = vmatprep.subr.mxu0 0.0
    %1531 = vmatpush1.msra.mxu0 0.0
    %1532 = vmatprep.subr.mxu0 0.0
    %1533 = vmatpush1.msra.mxu0 0.0
    %1534 = vmatprep.subr.mxu0 0.0
    %1535 = vmatpush1.msra.mxu0 0.0
    %1536 = vmatprep.subr.mxu0 0.0
    %1537 = vmatpush1.msra.mxu0 0.0
    %1538 = vmatprep.subr.mxu0 0.0
    %1539 = vmatpush1.msra.mxu0 0.0
    %1540 = vmatprep.subr.mxu0 0.0
    %1541 = vmatpush1.msra.mxu0 0.0
    %1542 = vmatprep.subr.mxu0 0.0
    %1543 = vmatpush1.msra.mxu0 0.0
    %1544 = vmatprep.subr.mxu0 0.0
    %1545 = vmatpush1.msra.mxu0 0.0
    %1546 = vmatprep.subr.mxu0 0.0
    %1547 = vmatpush1.msra.mxu0 0.0
    %1548 = vmatprep.subr.mxu0 0.0
    %1549 = vmatpush1.msra.mxu0 0.0
    %1550 = vmatprep.subr.mxu0 0.0
    %1551 = vmatpush1.msra.mxu0 0.0
    %1552 = vmatprep.subr.mxu0 0.0
    %1553 = vmatpush1.msra.mxu0 0.0
    %1554 = vmatprep.subr.mxu0 0.0
    %1555 = vmatpush1.msra.mxu0 0.0
    %1556 = vmatprep.subr.mxu0 0.0
    %1557 = vmatpush1.msra.mxu0 0.0
    %1558 = vmatprep.subr.mxu0 0.0
    %1559 = vmatpush1.msra.mxu0 0.0
    %1560 = vmatprep.mubr.f32.mxu0 0.0
    %v1561 = vand.u32 %v778, 4294901760
    %1562 = vmatmul.mubr.f32.gmra.mrb[0].mxu0 %v1561
    %v1563 = vpop.f32.mrb[0].mxu0
    %v1564 = vadd.f32 %v1459, %v1563
    %v1565 = vpop.f32.mrb[0].mxu0
    %1566 = vmatprep.mubr.f32.mxu0 0.0
    %v1567 = vand.u32 %v784, 4294901760
    %1568 = vmatmul.mubr.f32.gmra.mrb[0].mxu0 %v1567
    %v1569 = vpop.f32.mrb[0].mxu0
    %v1570 = vadd.f32 %v1465, %v1569
    %v1571 = vpop.f32.mrb[0].mxu0
    %1572 = vmatprep.mubr.f32.mxu0 0.0
    %v1573 = vand.u32 %v790, 4294901760
    %1574 = vmatmul.mubr.f32.gmra.mrb[0].mxu0 %v1573
    %v1575 = vpop.f32.mrb[0].mxu0
    %v1576 = vadd.f32 %v1471, %v1575
    %v1577 = vpop.f32.mrb[0].mxu0
    %1578 = vmatprep.mubr.f32.mxu0 0.0
    %v1579 = vand.u32 %v796, 4294901760
    %1580 = vmatmul.mubr.f32.gmra.mrb[0].mxu0 %v1579
    %v1581 = vpop.f32.mrb[0].mxu0
    %v1582 = vadd.f32 %v1477, %v1581
    %v1583 = vpop.f32.mrb[0].mxu0
    %1584 = vdwg.mxu0
    %1585 = vmatprep.subr.mxu0 0.0
    %v1586 = vand.u32 %v156, 4294901760
    %1587 = vmatpush1.msra.mxu0 %v1586
    %1588 = vmatprep.subr.mxu0 0.0
    %v1589 = vand.u32 %v157, 4294901760
    %1590 = vmatpush1.msra.mxu0 %v1589
    %1591 = vmatprep.subr.mxu0 0.0
    %v1592 = vand.u32 %v158, 4294901760
    %1593 = vmatpush1.msra.mxu0 %v1592
    %1594 = vmatprep.subr.mxu0 0.0
    %v1595 = vand.u32 %v159, 4294901760
    %1596 = vmatpush1.msra.mxu0 %v1595
    %1597 = vmatprep.subr.mxu0 0.0
    %v1598 = vand.u32 %v160, 4294901760
    %1599 = vmatpush1.msra.mxu0 %v1598
    %1600 = vmatprep.subr.mxu0 0.0
    %v1601 = vand.u32 %v161, 4294901760
    %1602 = vmatpush1.msra.mxu0 %v1601
    %1603 = vmatprep.subr.mxu0 0.0
    %v1604 = vand.u32 %v162, 4294901760
    %1605 = vmatpush1.msra.mxu0 %v1604
    %1606 = vmatprep.subr.mxu0 0.0
    %v1607 = vand.u32 %v163, 4294901760
    %1608 = vmatpush1.msra.mxu0 %v1607
    %1609 = vmatprep.subr.mxu0 0.0
    %v1610 = vand.u32 %v164, 4294901760
    %1611 = vmatpush1.msra.mxu0 %v1610
    %1612 = vmatprep.subr.mxu0 0.0
    %v1613 = vand.u32 %v165, 4294901760
    %1614 = vmatpush1.msra.mxu0 %v1613
    %1615 = vmatprep.subr.mxu0 0.0
    %v1616 = vand.u32 %v166, 4294901760
    %1617 = vmatpush1.msra.mxu0 %v1616
    %1618 = vmatprep.subr.mxu0 0.0
    %v1619 = vand.u32 %v167, 4294901760
    %1620 = vmatpush1.msra.mxu0 %v1619
    %1621 = vmatprep.subr.mxu0 0.0
    %v1622 = vand.u32 %v168, 4294901760
    %1623 = vmatpush1.msra.mxu0 %v1622
    %1624 = vmatprep.subr.mxu0 0.0
    %v1625 = vand.u32 %v169, 4294901760
    %1626 = vmatpush1.msra.mxu0 %v1625
    %1627 = vmatprep.subr.mxu0 0.0
    %v1628 = vand.u32 %v170, 4294901760
    %1629 = vmatpush1.msra.mxu0 %v1628
    %1630 = vmatprep.subr.mxu0 0.0
    %v1631 = vand.u32 %v171, 4294901760
    %1632 = vmatpush1.msra.mxu0 %v1631
    %1633 = vmatprep.subr.mxu0 0.0
    %1634 = vmatpush1.msra.mxu0 0.0
    %1635 = vmatprep.subr.mxu0 0.0
    %1636 = vmatpush1.msra.mxu0 0.0
    %1637 = vmatprep.subr.mxu0 0.0
    %1638 = vmatpush1.msra.mxu0 0.0
    %1639 = vmatprep.subr.mxu0 0.0
    %1640 = vmatpush1.msra.mxu0 0.0
    %1641 = vmatprep.subr.mxu0 0.0
    %1642 = vmatpush1.msra.mxu0 0.0
    %1643 = vmatprep.subr.mxu0 0.0
    %1644 = vmatpush1.msra.mxu0 0.0
    %1645 = vmatprep.subr.mxu0 0.0
    %1646 = vmatpush1.msra.mxu0 0.0
    %1647 = vmatprep.subr.mxu0 0.0
    %1648 = vmatpush1.msra.mxu0 0.0
    %1649 = vmatprep.subr.mxu0 0.0
    %1650 = vmatpush1.msra.mxu0 0.0
    %1651 = vmatprep.subr.mxu0 0.0
    %1652 = vmatpush1.msra.mxu0 0.0
    %1653 = vmatprep.subr.mxu0 0.0
    %1654 = vmatpush1.msra.mxu0 0.0
    %1655 = vmatprep.subr.mxu0 0.0
    %1656 = vmatpush1.msra.mxu0 0.0
    %1657 = vmatprep.subr.mxu0 0.0
    %1658 = vmatpush1.msra.mxu0 0.0
    %1659 = vmatprep.subr.mxu0 0.0
    %1660 = vmatpush1.msra.mxu0 0.0
    %1661 = vmatprep.subr.mxu0 0.0
    %1662 = vmatpush1.msra.mxu0 0.0
    %1663 = vmatprep.subr.mxu0 0.0
    %1664 = vmatpush1.msra.mxu0 0.0
    %1665 = vmatprep.mubr.f32.mxu0 0.0
    %v1666 = vand.u32 %v127, 4294901760
    %v1667 = vsub.f32 %v127, %v1666
    %v1668 = vand.u32 %v1667, 4294901760
    %v1669 = vsub.f32 %v1667, %v1668
    %v1670 = vand.u32 %v1669, 4294901760
    %1671 = vmatmul.mubr.f32.gmra.mrb[0].mxu0 %v1670
    %v1672 = vpop.f32.mrb[0].mxu0
    %v1673 = vadd.f32 %v1564, %v1672
    %v1674 = vpop.f32.mrb[0].mxu0
    %1675 = vmatprep.mubr.f32.mxu0 0.0
    %v1676 = vand.u32 %v128, 4294901760
    %v1677 = vsub.f32 %v128, %v1676
    %v1678 = vand.u32 %v1677, 4294901760
    %v1679 = vsub.f32 %v1677, %v1678
    %v1680 = vand.u32 %v1679, 4294901760
    %1681 = vmatmul.mubr.f32.gmra.mrb[0].mxu0 %v1680
    %v1682 = vpop.f32.mrb[0].mxu0
    %v1683 = vadd.f32 %v1570, %v1682
    %v1684 = vpop.f32.mrb[0].mxu0
    %1685 = vmatprep.mubr.f32.mxu0 0.0
    %v1686 = vand.u32 %v129, 4294901760
    %v1687 = vsub.f32 %v129, %v1686
    %v1688 = vand.u32 %v1687, 4294901760
    %v1689 = vsub.f32 %v1687, %v1688
    %v1690 = vand.u32 %v1689, 4294901760
    %1691 = vmatmul.mubr.f32.gmra.mrb[0].mxu0 %v1690
    %v1692 = vpop.f32.mrb[0].mxu0
    %v1693 = vadd.f32 %v1576, %v1692
    %v1694 = vpop.f32.mrb[0].mxu0
    %1695 = vmatprep.mubr.f32.mxu0 0.0
    %v1696 = vand.u32 %v130, 4294901760
    %v1697 = vsub.f32 %v130, %v1696
    %v1698 = vand.u32 %v1697, 4294901760
    %v1699 = vsub.f32 %v1697, %v1698
    %v1700 = vand.u32 %v1699, 4294901760
    %1701 = vmatmul.mubr.f32.gmra.mrb[0].mxu0 %v1700
    %v1702 = vpop.f32.mrb[0].mxu0
    %v1703 = vadd.f32 %v1582, %v1702
    %v1704 = vpop.f32.mrb[0].mxu0
    %1705 = vdwg.mxu0
    %1706 = vmatprep.subr.mxu0 0.0
    %v1707 = vand.u32 %v156, 4294901760
    %v1708 = vsub.f32 %v156, %v1707
    %v1709 = vand.u32 %v1708, 4294901760
    %v1710 = vsub.f32 %v1708, %v1709
    %v1711 = vand.u32 %v1710, 4294901760
    %1712 = vmatpush1.msra.mxu0 %v1711
    %1713 = vmatprep.subr.mxu0 0.0
    %v1714 = vand.u32 %v157, 4294901760
    %v1715 = vsub.f32 %v157, %v1714
    %v1716 = vand.u32 %v1715, 4294901760
    %v1717 = vsub.f32 %v1715, %v1716
    %v1718 = vand.u32 %v1717, 4294901760
    %1719 = vmatpush1.msra.mxu0 %v1718
    %1720 = vmatprep.subr.mxu0 0.0
    %v1721 = vand.u32 %v158, 4294901760
    %v1722 = vsub.f32 %v158, %v1721
    %v1723 = vand.u32 %v1722, 4294901760
    %v1724 = vsub.f32 %v1722, %v1723
    %v1725 = vand.u32 %v1724, 4294901760
    %1726 = vmatpush1.msra.mxu0 %v1725
    %1727 = vmatprep.subr.mxu0 0.0
    %v1728 = vand.u32 %v159, 4294901760
    %v1729 = vsub.f32 %v159, %v1728
    %v1730 = vand.u32 %v1729, 4294901760
    %v1731 = vsub.f32 %v1729, %v1730
    %v1732 = vand.u32 %v1731, 4294901760
    %1733 = vmatpush1.msra.mxu0 %v1732
    %1734 = vmatprep.subr.mxu0 0.0
    %v1735 = vand.u32 %v160, 4294901760
    %v1736 = vsub.f32 %v160, %v1735
    %v1737 = vand.u32 %v1736, 4294901760
    %v1738 = vsub.f32 %v1736, %v1737
    %v1739 = vand.u32 %v1738, 4294901760
    %1740 = vmatpush1.msra.mxu0 %v1739
    %1741 = vmatprep.subr.mxu0 0.0
    %v1742 = vand.u32 %v161, 4294901760
    %v1743 = vsub.f32 %v161, %v1742
    %v1744 = vand.u32 %v1743, 4294901760
    %v1745 = vsub.f32 %v1743, %v1744
    %v1746 = vand.u32 %v1745, 4294901760
    %1747 = vmatpush1.msra.mxu0 %v1746
    %1748 = vmatprep.subr.mxu0 0.0
    %v1749 = vand.u32 %v162, 4294901760
    %v1750 = vsub.f32 %v162, %v1749
    %v1751 = vand.u32 %v1750, 4294901760
    %v1752 = vsub.f32 %v1750, %v1751
    %v1753 = vand.u32 %v1752, 4294901760
    %1754 = vmatpush1.msra.mxu0 %v1753
    %1755 = vmatprep.subr.mxu0 0.0
    %v1756 = vand.u32 %v163, 4294901760
    %v1757 = vsub.f32 %v163, %v1756
    %v1758 = vand.u32 %v1757, 4294901760
    %v1759 = vsub.f32 %v1757, %v1758
    %v1760 = vand.u32 %v1759, 4294901760
    %1761 = vmatpush1.msra.mxu0 %v1760
    %1762 = vmatprep.subr.mxu0 0.0
    %v1763 = vand.u32 %v164, 4294901760
    %v1764 = vsub.f32 %v164, %v1763
    %v1765 = vand.u32 %v1764, 4294901760
    %v1766 = vsub.f32 %v1764, %v1765
    %v1767 = vand.u32 %v1766, 4294901760
    %1768 = vmatpush1.msra.mxu0 %v1767
    %1769 = vmatprep.subr.mxu0 0.0
    %v1770 = vand.u32 %v165, 4294901760
    %v1771 = vsub.f32 %v165, %v1770
    %v1772 = vand.u32 %v1771, 4294901760
    %v1773 = vsub.f32 %v1771, %v1772
    %v1774 = vand.u32 %v1773, 4294901760
    %1775 = vmatpush1.msra.mxu0 %v1774
    %1776 = vmatprep.subr.mxu0 0.0
    %v1777 = vand.u32 %v166, 4294901760
    %v1778 = vsub.f32 %v166, %v1777
    %v1779 = vand.u32 %v1778, 4294901760
    %v1780 = vsub.f32 %v1778, %v1779
    %v1781 = vand.u32 %v1780, 4294901760
    %1782 = vmatpush1.msra.mxu0 %v1781
    %1783 = vmatprep.subr.mxu0 0.0
    %v1784 = vand.u32 %v167, 4294901760
    %v1785 = vsub.f32 %v167, %v1784
    %v1786 = vand.u32 %v1785, 4294901760
    %v1787 = vsub.f32 %v1785, %v1786
    %v1788 = vand.u32 %v1787, 4294901760
    %1789 = vmatpush1.msra.mxu0 %v1788
    %1790 = vmatprep.subr.mxu0 0.0
    %v1791 = vand.u32 %v168, 4294901760
    %v1792 = vsub.f32 %v168, %v1791
    %v1793 = vand.u32 %v1792, 4294901760
    %v1794 = vsub.f32 %v1792, %v1793
    %v1795 = vand.u32 %v1794, 4294901760
    %1796 = vmatpush1.msra.mxu0 %v1795
    %1797 = vmatprep.subr.mxu0 0.0
    %v1798 = vand.u32 %v169, 4294901760
    %v1799 = vsub.f32 %v169, %v1798
    %v1800 = vand.u32 %v1799, 4294901760
    %v1801 = vsub.f32 %v1799, %v1800
    %v1802 = vand.u32 %v1801, 4294901760
    %1803 = vmatpush1.msra.mxu0 %v1802
    %1804 = vmatprep.subr.mxu0 0.0
    %v1805 = vand.u32 %v170, 4294901760
    %v1806 = vsub.f32 %v170, %v1805
    %v1807 = vand.u32 %v1806, 4294901760
    %v1808 = vsub.f32 %v1806, %v1807
    %v1809 = vand.u32 %v1808, 4294901760
    %1810 = vmatpush1.msra.mxu0 %v1809
    %1811 = vmatprep.subr.mxu0 0.0
    %v1812 = vand.u32 %v171, 4294901760
    %v1813 = vsub.f32 %v171, %v1812
    %v1814 = vand.u32 %v1813, 4294901760
    %v1815 = vsub.f32 %v1813, %v1814
    %v1816 = vand.u32 %v1815, 4294901760
    %1817 = vmatpush1.msra.mxu0 %v1816
    %1818 = vmatprep.subr.mxu0 0.0
    %1819 = vmatpush1.msra.mxu0 0.0
    %1820 = vmatprep.subr.mxu0 0.0
    %1821 = vmatpush1.msra.mxu0 0.0
    %1822 = vmatprep.subr.mxu0 0.0
    %1823 = vmatpush1.msra.mxu0 0.0
    %1824 = vmatprep.subr.mxu0 0.0
    %1825 = vmatpush1.msra.mxu0 0.0
    %1826 = vmatprep.subr.mxu0 0.0
    %1827 = vmatpush1.msra.mxu0 0.0
    %1828 = vmatprep.subr.mxu0 0.0
    %1829 = vmatpush1.msra.mxu0 0.0
    %1830 = vmatprep.subr.mxu0 0.0
    %1831 = vmatpush1.msra.mxu0 0.0
    %1832 = vmatprep.subr.mxu0 0.0
    %1833 = vmatpush1.msra.mxu0 0.0
    %1834 = vmatprep.subr.mxu0 0.0
    %1835 = vmatpush1.msra.mxu0 0.0
    %1836 = vmatprep.subr.mxu0 0.0
    %1837 = vmatpush1.msra.mxu0 0.0
    %1838 = vmatprep.subr.mxu0 0.0
    %1839 = vmatpush1.msra.mxu0 0.0
    %1840 = vmatprep.subr.mxu0 0.0
    %1841 = vmatpush1.msra.mxu0 0.0
    %1842 = vmatprep.subr.mxu0 0.0
    %1843 = vmatpush1.msra.mxu0 0.0
    %1844 = vmatprep.subr.mxu0 0.0
    %1845 = vmatpush1.msra.mxu0 0.0
    %1846 = vmatprep.subr.mxu0 0.0
    %1847 = vmatpush1.msra.mxu0 0.0
    %1848 = vmatprep.subr.mxu0 0.0
    %1849 = vmatpush1.msra.mxu0 0.0
    %1850 = vmatprep.mubr.f32.mxu0 0.0
    %v1851 = vand.u32 %v127, 4294901760
    %1852 = vmatmul.mubr.f32.gmra.mrb[0].mxu0 %v1851
    %v1853 = vpop.f32.mrb[0].mxu0
    %v1854 = vadd.f32 %v1673, %v1853
    %v1855 = vpop.f32.mrb[0].mxu0
    %1856 = vmatprep.mubr.f32.mxu0 0.0
    %v1857 = vand.u32 %v128, 4294901760
    %1858 = vmatmul.mubr.f32.gmra.mrb[0].mxu0 %v1857
    %v1859 = vpop.f32.mrb[0].mxu0
    %v1860 = vadd.f32 %v1683, %v1859
    %v1861 = vpop.f32.mrb[0].mxu0
    %1862 = vmatprep.mubr.f32.mxu0 0.0
    %v1863 = vand.u32 %v129, 4294901760
    %1864 = vmatmul.mubr.f32.gmra.mrb[0].mxu0 %v1863
    %v1865 = vpop.f32.mrb[0].mxu0
    %v1866 = vadd.f32 %v1693, %v1865
    %v1867 = vpop.f32.mrb[0].mxu0
    %1868 = vmatprep.mubr.f32.mxu0 0.0
    %v1869 = vand.u32 %v130, 4294901760
    %1870 = vmatmul.mubr.f32.gmra.mrb[0].mxu0 %v1869
    %v1871 = vpop.f32.mrb[0].mxu0
    %v1872 = vadd.f32 %v1703, %v1871
    %v1873 = vpop.f32.mrb[0].mxu0
    %1874 = vdwg.mxu0
    %1875 = vmatprep.subr.mxu0 0.0
    %v1876 = vand.u32 %v156, 4294901760
    %v1877 = vsub.f32 %v156, %v1876
    %1878 = vmatpush1.msra.mxu0 %v1877
    %1879 = vmatprep.subr.mxu0 0.0
    %v1880 = vand.u32 %v157, 4294901760
    %v1881 = vsub.f32 %v157, %v1880
    %1882 = vmatpush1.msra.mxu0 %v1881
    %1883 = vmatprep.subr.mxu0 0.0
    %v1884 = vand.u32 %v158, 4294901760
    %v1885 = vsub.f32 %v158, %v1884
    %1886 = vmatpush1.msra.mxu0 %v1885
    %1887 = vmatprep.subr.mxu0 0.0
    %v1888 = vand.u32 %v159, 4294901760
    %v1889 = vsub.f32 %v159, %v1888
    %1890 = vmatpush1.msra.mxu0 %v1889
    %1891 = vmatprep.subr.mxu0 0.0
    %v1892 = vand.u32 %v160, 4294901760
    %v1893 = vsub.f32 %v160, %v1892
    %1894 = vmatpush1.msra.mxu0 %v1893
    %1895 = vmatprep.subr.mxu0 0.0
    %v1896 = vand.u32 %v161, 4294901760
    %v1897 = vsub.f32 %v161, %v1896
    %1898 = vmatpush1.msra.mxu0 %v1897
    %1899 = vmatprep.subr.mxu0 0.0
    %v1900 = vand.u32 %v162, 4294901760
    %v1901 = vsub.f32 %v162, %v1900
    %1902 = vmatpush1.msra.mxu0 %v1901
    %1903 = vmatprep.subr.mxu0 0.0
    %v1904 = vand.u32 %v163, 4294901760
    %v1905 = vsub.f32 %v163, %v1904
    %1906 = vmatpush1.msra.mxu0 %v1905
    %1907 = vmatprep.subr.mxu0 0.0
    %v1908 = vand.u32 %v164, 4294901760
    %v1909 = vsub.f32 %v164, %v1908
    %1910 = vmatpush1.msra.mxu0 %v1909
    %1911 = vmatprep.subr.mxu0 0.0
    %v1912 = vand.u32 %v165, 4294901760
    %v1913 = vsub.f32 %v165, %v1912
    %1914 = vmatpush1.msra.mxu0 %v1913
    %1915 = vmatprep.subr.mxu0 0.0
    %v1916 = vand.u32 %v166, 4294901760
    %v1917 = vsub.f32 %v166, %v1916
    %1918 = vmatpush1.msra.mxu0 %v1917
    %1919 = vmatprep.subr.mxu0 0.0
    %v1920 = vand.u32 %v167, 4294901760
    %v1921 = vsub.f32 %v167, %v1920
    %1922 = vmatpush1.msra.mxu0 %v1921
    %1923 = vmatprep.subr.mxu0 0.0
    %v1924 = vand.u32 %v168, 4294901760
    %v1925 = vsub.f32 %v168, %v1924
    %1926 = vmatpush1.msra.mxu0 %v1925
    %1927 = vmatprep.subr.mxu0 0.0
    %v1928 = vand.u32 %v169, 4294901760
    %v1929 = vsub.f32 %v169, %v1928
    %1930 = vmatpush1.msra.mxu0 %v1929
    %1931 = vmatprep.subr.mxu0 0.0
    %v1932 = vand.u32 %v170, 4294901760
    %v1933 = vsub.f32 %v170, %v1932
    %1934 = vmatpush1.msra.mxu0 %v1933
    %1935 = vmatprep.subr.mxu0 0.0
    %v1936 = vand.u32 %v171, 4294901760
    %v1937 = vsub.f32 %v171, %v1936
    %1938 = vmatpush1.msra.mxu0 %v1937
    %1939 = vmatprep.subr.mxu0 0.0
    %1940 = vmatpush1.msra.mxu0 0.0
    %1941 = vmatprep.subr.mxu0 0.0
    %1942 = vmatpush1.msra.mxu0 0.0
    %1943 = vmatprep.subr.mxu0 0.0
    %1944 = vmatpush1.msra.mxu0 0.0
    %1945 = vmatprep.subr.mxu0 0.0
    %1946 = vmatpush1.msra.mxu0 0.0
    %1947 = vmatprep.subr.mxu0 0.0
    %1948 = vmatpush1.msra.mxu0 0.0
    %1949 = vmatprep.subr.mxu0 0.0
    %1950 = vmatpush1.msra.mxu0 0.0
    %1951 = vmatprep.subr.mxu0 0.0
    %1952 = vmatpush1.msra.mxu0 0.0
    %1953 = vmatprep.subr.mxu0 0.0
    %1954 = vmatpush1.msra.mxu0 0.0
    %1955 = vmatprep.subr.mxu0 0.0
    %1956 = vmatpush1.msra.mxu0 0.0
    %1957 = vmatprep.subr.mxu0 0.0
    %1958 = vmatpush1.msra.mxu0 0.0
    %1959 = vmatprep.subr.mxu0 0.0
    %1960 = vmatpush1.msra.mxu0 0.0
    %1961 = vmatprep.subr.mxu0 0.0
    %1962 = vmatpush1.msra.mxu0 0.0
    %1963 = vmatprep.subr.mxu0 0.0
    %1964 = vmatpush1.msra.mxu0 0.0
    %1965 = vmatprep.subr.mxu0 0.0
    %1966 = vmatpush1.msra.mxu0 0.0
    %1967 = vmatprep.subr.mxu0 0.0
    %1968 = vmatpush1.msra.mxu0 0.0
    %1969 = vmatprep.subr.mxu0 0.0
    %1970 = vmatpush1.msra.mxu0 0.0
    %1971 = vmatprep.mubr.f32.mxu0 0.0
    %v1972 = vand.u32 %v127, 4294901760
    %v1973 = vsub.f32 %v127, %v1972
    %1974 = vmatmul.mubr.f32.gmra.mrb[0].mxu0 %v1973
    %v1975 = vpop.f32.mrb[0].mxu0
    %v1976 = vadd.f32 %v1854, %v1975
    %v1977 = vpop.f32.mrb[0].mxu0
    %1978 = vmatprep.mubr.f32.mxu0 0.0
    %v1979 = vand.u32 %v128, 4294901760
    %v1980 = vsub.f32 %v128, %v1979
    %1981 = vmatmul.mubr.f32.gmra.mrb[0].mxu0 %v1980
    %v1982 = vpop.f32.mrb[0].mxu0
    %v1983 = vadd.f32 %v1860, %v1982
    %v1984 = vpop.f32.mrb[0].mxu0
    %1985 = vmatprep.mubr.f32.mxu0 0.0
    %v1986 = vand.u32 %v129, 4294901760
    %v1987 = vsub.f32 %v129, %v1986
    %1988 = vmatmul.mubr.f32.gmra.mrb[0].mxu0 %v1987
    %v1989 = vpop.f32.mrb[0].mxu0
    %v1990 = vadd.f32 %v1866, %v1989
    %v1991 = vpop.f32.mrb[0].mxu0
    %1992 = vmatprep.mubr.f32.mxu0 0.0
    %v1993 = vand.u32 %v130, 4294901760
    %v1994 = vsub.f32 %v130, %v1993
    %1995 = vmatmul.mubr.f32.gmra.mrb[0].mxu0 %v1994
    %v1996 = vpop.f32.mrb[0].mxu0
    %v1997 = vadd.f32 %v1872, %v1996
    %v1998 = vpop.f32.mrb[0].mxu0
    %1999 = vdwg.mxu0
    %2000 = vmatprep.subr.mxu0 0.0
    %v2001 = vand.u32 %v156, 4294901760
    %2002 = vmatpush1.msra.mxu0 %v2001
    %2003 = vmatprep.subr.mxu0 0.0
    %v2004 = vand.u32 %v157, 4294901760
    %2005 = vmatpush1.msra.mxu0 %v2004
    %2006 = vmatprep.subr.mxu0 0.0
    %v2007 = vand.u32 %v158, 4294901760
    %2008 = vmatpush1.msra.mxu0 %v2007
    %2009 = vmatprep.subr.mxu0 0.0
    %v2010 = vand.u32 %v159, 4294901760
    %2011 = vmatpush1.msra.mxu0 %v2010
    %2012 = vmatprep.subr.mxu0 0.0
    %v2013 = vand.u32 %v160, 4294901760
    %2014 = vmatpush1.msra.mxu0 %v2013
    %2015 = vmatprep.subr.mxu0 0.0
    %v2016 = vand.u32 %v161, 4294901760
    %2017 = vmatpush1.msra.mxu0 %v2016
    %2018 = vmatprep.subr.mxu0 0.0
    %v2019 = vand.u32 %v162, 4294901760
    %2020 = vmatpush1.msra.mxu0 %v2019
    %2021 = vmatprep.subr.mxu0 0.0
    %v2022 = vand.u32 %v163, 4294901760
    %2023 = vmatpush1.msra.mxu0 %v2022
    %2024 = vmatprep.subr.mxu0 0.0
    %v2025 = vand.u32 %v164, 4294901760
    %2026 = vmatpush1.msra.mxu0 %v2025
    %2027 = vmatprep.subr.mxu0 0.0
    %v2028 = vand.u32 %v165, 4294901760
    %2029 = vmatpush1.msra.mxu0 %v2028
    %2030 = vmatprep.subr.mxu0 0.0
    %v2031 = vand.u32 %v166, 4294901760
    %2032 = vmatpush1.msra.mxu0 %v2031
    %2033 = vmatprep.subr.mxu0 0.0
    %v2034 = vand.u32 %v167, 4294901760
    %2035 = vmatpush1.msra.mxu0 %v2034
    %2036 = vmatprep.subr.mxu0 0.0
    %v2037 = vand.u32 %v168, 4294901760
    %2038 = vmatpush1.msra.mxu0 %v2037
    %2039 = vmatprep.subr.mxu0 0.0
    %v2040 = vand.u32 %v169, 4294901760
    %2041 = vmatpush1.msra.mxu0 %v2040
    %2042 = vmatprep.subr.mxu0 0.0
    %v2043 = vand.u32 %v170, 4294901760
    %2044 = vmatpush1.msra.mxu0 %v2043
    %2045 = vmatprep.subr.mxu0 0.0
    %v2046 = vand.u32 %v171, 4294901760
    %2047 = vmatpush1.msra.mxu0 %v2046
    %2048 = vmatprep.subr.mxu0 0.0
    %2049 = vmatpush1.msra.mxu0 0.0
    %2050 = vmatprep.subr.mxu0 0.0
    %2051 = vmatpush1.msra.mxu0 0.0
    %2052 = vmatprep.subr.mxu0 0.0
    %2053 = vmatpush1.msra.mxu0 0.0
    %2054 = vmatprep.subr.mxu0 0.0
    %2055 = vmatpush1.msra.mxu0 0.0
    %2056 = vmatprep.subr.mxu0 0.0
    %2057 = vmatpush1.msra.mxu0 0.0
    %2058 = vmatprep.subr.mxu0 0.0
    %2059 = vmatpush1.msra.mxu0 0.0
    %2060 = vmatprep.subr.mxu0 0.0
    %2061 = vmatpush1.msra.mxu0 0.0
    %2062 = vmatprep.subr.mxu0 0.0
    %2063 = vmatpush1.msra.mxu0 0.0
    %2064 = vmatprep.subr.mxu0 0.0
    %2065 = vmatpush1.msra.mxu0 0.0
    %2066 = vmatprep.subr.mxu0 0.0
    %2067 = vmatpush1.msra.mxu0 0.0
    %2068 = vmatprep.subr.mxu0 0.0
    %2069 = vmatpush1.msra.mxu0 0.0
    %2070 = vmatprep.subr.mxu0 0.0
    %2071 = vmatpush1.msra.mxu0 0.0
    %2072 = vmatprep.subr.mxu0 0.0
    %2073 = vmatpush1.msra.mxu0 0.0
    %2074 = vmatprep.subr.mxu0 0.0
    %2075 = vmatpush1.msra.mxu0 0.0
    %2076 = vmatprep.subr.mxu0 0.0
    %2077 = vmatpush1.msra.mxu0 0.0
    %2078 = vmatprep.subr.mxu0 0.0
    %2079 = vmatpush1.msra.mxu0 0.0
    %2080 = vmatprep.mubr.f32.mxu0 0.0
    %v2081 = vand.u32 %v127, 4294901760
    %v2082 = vsub.f32 %v127, %v2081
    %v2083 = vand.u32 %v2082, 4294901760
    %2084 = vmatmul.mubr.f32.gmra.mrb[0].mxu0 %v2083
    %v2085 = vpop.f32.mrb[0].mxu0
    %v2086 = vadd.f32 %v1976, %v2085
    %v2087 = vpop.f32.mrb[0].mxu0
    %2088 = vmatprep.mubr.f32.mxu0 0.0
    %v2089 = vand.u32 %v128, 4294901760
    %v2090 = vsub.f32 %v128, %v2089
    %v2091 = vand.u32 %v2090, 4294901760
    %2092 = vmatmul.mubr.f32.gmra.mrb[0].mxu0 %v2091
    %v2093 = vpop.f32.mrb[0].mxu0
    %v2094 = vadd.f32 %v1983, %v2093
    %v2095 = vpop.f32.mrb[0].mxu0
    %2096 = vmatprep.mubr.f32.mxu0 0.0
    %v2097 = vand.u32 %v129, 4294901760
    %v2098 = vsub.f32 %v129, %v2097
    %v2099 = vand.u32 %v2098, 4294901760
    %2100 = vmatmul.mubr.f32.gmra.mrb[0].mxu0 %v2099
    %v2101 = vpop.f32.mrb[0].mxu0
    %v2102 = vadd.f32 %v1990, %v2101
    %v2103 = vpop.f32.mrb[0].mxu0
    %2104 = vmatprep.mubr.f32.mxu0 0.0
    %v2105 = vand.u32 %v130, 4294901760
    %v2106 = vsub.f32 %v130, %v2105
    %v2107 = vand.u32 %v2106, 4294901760
    %2108 = vmatmul.mubr.f32.gmra.mrb[0].mxu0 %v2107
    %v2109 = vpop.f32.mrb[0].mxu0
    %v2110 = vadd.f32 %v1997, %v2109
    %v2111 = vpop.f32.mrb[0].mxu0
    %2112 = vdwg.mxu0
    %2113 = vmatprep.subr.mxu0 0.0
    %v2114 = vand.u32 %v156, 4294901760
    %v2115 = vsub.f32 %v156, %v2114
    %v2116 = vand.u32 %v2115, 4294901760
    %2117 = vmatpush1.msra.mxu0 %v2116
    %2118 = vmatprep.subr.mxu0 0.0
    %v2119 = vand.u32 %v157, 4294901760
    %v2120 = vsub.f32 %v157, %v2119
    %v2121 = vand.u32 %v2120, 4294901760
    %2122 = vmatpush1.msra.mxu0 %v2121
    %2123 = vmatprep.subr.mxu0 0.0
    %v2124 = vand.u32 %v158, 4294901760
    %v2125 = vsub.f32 %v158, %v2124
    %v2126 = vand.u32 %v2125, 4294901760
    %2127 = vmatpush1.msra.mxu0 %v2126
    %2128 = vmatprep.subr.mxu0 0.0
    %v2129 = vand.u32 %v159, 4294901760
    %v2130 = vsub.f32 %v159, %v2129
    %v2131 = vand.u32 %v2130, 4294901760
    %2132 = vmatpush1.msra.mxu0 %v2131
    %2133 = vmatprep.subr.mxu0 0.0
    %v2134 = vand.u32 %v160, 4294901760
    %v2135 = vsub.f32 %v160, %v2134
    %v2136 = vand.u32 %v2135, 4294901760
    %2137 = vmatpush1.msra.mxu0 %v2136
    %2138 = vmatprep.subr.mxu0 0.0
    %v2139 = vand.u32 %v161, 4294901760
    %v2140 = vsub.f32 %v161, %v2139
    %v2141 = vand.u32 %v2140, 4294901760
    %2142 = vmatpush1.msra.mxu0 %v2141
    %2143 = vmatprep.subr.mxu0 0.0
    %v2144 = vand.u32 %v162, 4294901760
    %v2145 = vsub.f32 %v162, %v2144
    %v2146 = vand.u32 %v2145, 4294901760
    %2147 = vmatpush1.msra.mxu0 %v2146
    %2148 = vmatprep.subr.mxu0 0.0
    %v2149 = vand.u32 %v163, 4294901760
    %v2150 = vsub.f32 %v163, %v2149
    %v2151 = vand.u32 %v2150, 4294901760
    %2152 = vmatpush1.msra.mxu0 %v2151
    %2153 = vmatprep.subr.mxu0 0.0
    %v2154 = vand.u32 %v164, 4294901760
    %v2155 = vsub.f32 %v164, %v2154
    %v2156 = vand.u32 %v2155, 4294901760
    %2157 = vmatpush1.msra.mxu0 %v2156
    %2158 = vmatprep.subr.mxu0 0.0
    %v2159 = vand.u32 %v165, 4294901760
    %v2160 = vsub.f32 %v165, %v2159
    %v2161 = vand.u32 %v2160, 4294901760
    %2162 = vmatpush1.msra.mxu0 %v2161
    %2163 = vmatprep.subr.mxu0 0.0
    %v2164 = vand.u32 %v166, 4294901760
    %v2165 = vsub.f32 %v166, %v2164
    %v2166 = vand.u32 %v2165, 4294901760
    %2167 = vmatpush1.msra.mxu0 %v2166
    %2168 = vmatprep.subr.mxu0 0.0
    %v2169 = vand.u32 %v167, 4294901760
    %v2170 = vsub.f32 %v167, %v2169
    %v2171 = vand.u32 %v2170, 4294901760
    %2172 = vmatpush1.msra.mxu0 %v2171
    %2173 = vmatprep.subr.mxu0 0.0
    %v2174 = vand.u32 %v168, 4294901760
    %v2175 = vsub.f32 %v168, %v2174
    %v2176 = vand.u32 %v2175, 4294901760
    %2177 = vmatpush1.msra.mxu0 %v2176
    %2178 = vmatprep.subr.mxu0 0.0
    %v2179 = vand.u32 %v169, 4294901760
    %v2180 = vsub.f32 %v169, %v2179
    %v2181 = vand.u32 %v2180, 4294901760
    %2182 = vmatpush1.msra.mxu0 %v2181
    %2183 = vmatprep.subr.mxu0 0.0
    %v2184 = vand.u32 %v170, 4294901760
    %v2185 = vsub.f32 %v170, %v2184
    %v2186 = vand.u32 %v2185, 4294901760
    %2187 = vmatpush1.msra.mxu0 %v2186
    %2188 = vmatprep.subr.mxu0 0.0
    %v2189 = vand.u32 %v171, 4294901760
    %v2190 = vsub.f32 %v171, %v2189
    %v2191 = vand.u32 %v2190, 4294901760
    %2192 = vmatpush1.msra.mxu0 %v2191
    %2193 = vmatprep.subr.mxu0 0.0
    %2194 = vmatpush1.msra.mxu0 0.0
    %2195 = vmatprep.subr.mxu0 0.0
    %2196 = vmatpush1.msra.mxu0 0.0
    %2197 = vmatprep.subr.mxu0 0.0
    %2198 = vmatpush1.msra.mxu0 0.0
    %2199 = vmatprep.subr.mxu0 0.0
    %2200 = vmatpush1.msra.mxu0 0.0
    %2201 = vmatprep.subr.mxu0 0.0
    %2202 = vmatpush1.msra.mxu0 0.0
    %2203 = vmatprep.subr.mxu0 0.0
    %2204 = vmatpush1.msra.mxu0 0.0
    %2205 = vmatprep.subr.mxu0 0.0
    %2206 = vmatpush1.msra.mxu0 0.0
    %2207 = vmatprep.subr.mxu0 0.0
    %2208 = vmatpush1.msra.mxu0 0.0
    %2209 = vmatprep.subr.mxu0 0.0
    %2210 = vmatpush1.msra.mxu0 0.0
    %2211 = vmatprep.subr.mxu0 0.0
    %2212 = vmatpush1.msra.mxu0 0.0
    %2213 = vmatprep.subr.mxu0 0.0
    %2214 = vmatpush1.msra.mxu0 0.0
    %2215 = vmatprep.subr.mxu0 0.0
    %2216 = vmatpush1.msra.mxu0 0.0
    %2217 = vmatprep.subr.mxu0 0.0
    %2218 = vmatpush1.msra.mxu0 0.0
    %2219 = vmatprep.subr.mxu0 0.0
    %2220 = vmatpush1.msra.mxu0 0.0
    %2221 = vmatprep.subr.mxu0 0.0
    %2222 = vmatpush1.msra.mxu0 0.0
    %2223 = vmatprep.subr.mxu0 0.0
    %2224 = vmatpush1.msra.mxu0 0.0
    %2225 = vmatprep.mubr.f32.mxu0 0.0
    %v2226 = vand.u32 %v127, 4294901760
    %2227 = vmatmul.mubr.f32.gmra.mrb[0].mxu0 %v2226
    %v2228 = vpop.f32.mrb[0].mxu0
    %v2229 = vadd.f32 %v2086, %v2228
    %v2230 = vpop.f32.mrb[0].mxu0
    %2231 = vmatprep.mubr.f32.mxu0 0.0
    %v2232 = vand.u32 %v128, 4294901760
    %2233 = vmatmul.mubr.f32.gmra.mrb[0].mxu0 %v2232
    %v2234 = vpop.f32.mrb[0].mxu0
    %v2235 = vadd.f32 %v2094, %v2234
    %v2236 = vpop.f32.mrb[0].mxu0
    %2237 = vmatprep.mubr.f32.mxu0 0.0
    %v2238 = vand.u32 %v129, 4294901760
    %2239 = vmatmul.mubr.f32.gmra.mrb[0].mxu0 %v2238
    %v2240 = vpop.f32.mrb[0].mxu0
    %v2241 = vadd.f32 %v2102, %v2240
    %v2242 = vpop.f32.mrb[0].mxu0
    %2243 = vmatprep.mubr.f32.mxu0 0.0
    %v2244 = vand.u32 %v130, 4294901760
    %2245 = vmatmul.mubr.f32.gmra.mrb[0].mxu0 %v2244
    %v2246 = vpop.f32.mrb[0].mxu0
    %v2247 = vadd.f32 %v2110, %v2246
    %v2248 = vpop.f32.mrb[0].mxu0
    %2249 = vdwg.mxu0
    %2250 = vmatprep.subr.mxu0 0.0
    %v2251 = vand.u32 %v156, 4294901760
    %2252 = vmatpush1.msra.mxu0 %v2251
    %2253 = vmatprep.subr.mxu0 0.0
    %v2254 = vand.u32 %v157, 4294901760
    %2255 = vmatpush1.msra.mxu0 %v2254
    %2256 = vmatprep.subr.mxu0 0.0
    %v2257 = vand.u32 %v158, 4294901760
    %2258 = vmatpush1.msra.mxu0 %v2257
    %2259 = vmatprep.subr.mxu0 0.0
    %v2260 = vand.u32 %v159, 4294901760
    %2261 = vmatpush1.msra.mxu0 %v2260
    %2262 = vmatprep.subr.mxu0 0.0
    %v2263 = vand.u32 %v160, 4294901760
    %2264 = vmatpush1.msra.mxu0 %v2263
    %2265 = vmatprep.subr.mxu0 0.0
    %v2266 = vand.u32 %v161, 4294901760
    %2267 = vmatpush1.msra.mxu0 %v2266
    %2268 = vmatprep.subr.mxu0 0.0
    %v2269 = vand.u32 %v162, 4294901760
    %2270 = vmatpush1.msra.mxu0 %v2269
    %2271 = vmatprep.subr.mxu0 0.0
    %v2272 = vand.u32 %v163, 4294901760
    %2273 = vmatpush1.msra.mxu0 %v2272
    %2274 = vmatprep.subr.mxu0 0.0
    %v2275 = vand.u32 %v164, 4294901760
    %2276 = vmatpush1.msra.mxu0 %v2275
    %2277 = vmatprep.subr.mxu0 0.0
    %v2278 = vand.u32 %v165, 4294901760
    %2279 = vmatpush1.msra.mxu0 %v2278
    %2280 = vmatprep.subr.mxu0 0.0
    %v2281 = vand.u32 %v166, 4294901760
    %2282 = vmatpush1.msra.mxu0 %v2281
    %2283 = vmatprep.subr.mxu0 0.0
    %v2284 = vand.u32 %v167, 4294901760
    %2285 = vmatpush1.msra.mxu0 %v2284
    %2286 = vmatprep.subr.mxu0 0.0
    %v2287 = vand.u32 %v168, 4294901760
    %2288 = vmatpush1.msra.mxu0 %v2287
    %2289 = vmatprep.subr.mxu0 0.0
    %v2290 = vand.u32 %v169, 4294901760
    %2291 = vmatpush1.msra.mxu0 %v2290
    %2292 = vmatprep.subr.mxu0 0.0
    %v2293 = vand.u32 %v170, 4294901760
    %2294 = vmatpush1.msra.mxu0 %v2293
    %2295 = vmatprep.subr.mxu0 0.0
    %v2296 = vand.u32 %v171, 4294901760
    %2297 = vmatpush1.msra.mxu0 %v2296
    %2298 = vmatprep.subr.mxu0 0.0
    %2299 = vmatpush1.msra.mxu0 0.0
    %2300 = vmatprep.subr.mxu0 0.0
    %2301 = vmatpush1.msra.mxu0 0.0
    %2302 = vmatprep.subr.mxu0 0.0
    %2303 = vmatpush1.msra.mxu0 0.0
    %2304 = vmatprep.subr.mxu0 0.0
    %2305 = vmatpush1.msra.mxu0 0.0
    %2306 = vmatprep.subr.mxu0 0.0
    %2307 = vmatpush1.msra.mxu0 0.0
    %2308 = vmatprep.subr.mxu0 0.0
    %2309 = vmatpush1.msra.mxu0 0.0
    %2310 = vmatprep.subr.mxu0 0.0
    %2311 = vmatpush1.msra.mxu0 0.0
    %2312 = vmatprep.subr.mxu0 0.0
    %2313 = vmatpush1.msra.mxu0 0.0
    %2314 = vmatprep.subr.mxu0 0.0
    %2315 = vmatpush1.msra.mxu0 0.0
    %2316 = vmatprep.subr.mxu0 0.0
    %2317 = vmatpush1.msra.mxu0 0.0
    %2318 = vmatprep.subr.mxu0 0.0
    %2319 = vmatpush1.msra.mxu0 0.0
    %2320 = vmatprep.subr.mxu0 0.0
    %2321 = vmatpush1.msra.mxu0 0.0
    %2322 = vmatprep.subr.mxu0 0.0
    %2323 = vmatpush1.msra.mxu0 0.0
    %2324 = vmatprep.subr.mxu0 0.0
    %2325 = vmatpush1.msra.mxu0 0.0
    %2326 = vmatprep.subr.mxu0 0.0
    %2327 = vmatpush1.msra.mxu0 0.0
    %2328 = vmatprep.subr.mxu0 0.0
    %2329 = vmatpush1.msra.mxu0 0.0
    %2330 = vmatprep.mubr.f32.mxu0 0.0
    %v2331 = vand.u32 %v127, 4294901760
    %2332 = vmatmul.mubr.f32.gmra.mrb[0].mxu0 %v2331
    %v2333 = vpop.f32.mrb[0].mxu0
    %v2334 = vadd.f32 %v2229, %v2333
    %v2335 = vpop.f32.mrb[0].mxu0
    %2336 = vmatprep.mubr.f32.mxu0 0.0
    %v2337 = vand.u32 %v128, 4294901760
    %2338 = vmatmul.mubr.f32.gmra.mrb[0].mxu0 %v2337
    %v2339 = vpop.f32.mrb[0].mxu0
    %v2340 = vadd.f32 %v2235, %v2339
    %v2341 = vpop.f32.mrb[0].mxu0
    %2342 = vmatprep.mubr.f32.mxu0 0.0
    %v2343 = vand.u32 %v129, 4294901760
    %2344 = vmatmul.mubr.f32.gmra.mrb[0].mxu0 %v2343
    %v2345 = vpop.f32.mrb[0].mxu0
    %v2346 = vadd.f32 %v2241, %v2345
    %v2347 = vpop.f32.mrb[0].mxu0
    %2348 = vmatprep.mubr.f32.mxu0 0.0
    %v2349 = vand.u32 %v130, 4294901760
    %2350 = vmatmul.mubr.f32.gmra.mrb[0].mxu0 %v2349
    %v2351 = vpop.f32.mrb[0].mxu0
    %v2352 = vadd.f32 %v2247, %v2351
    %v2353 = vpop.f32.mrb[0].mxu0
    %2354 = vdwg.mxu0
    %v2356 = vsel %vm172, %v147, 0
    %v2359 = vsel %vm172, %v148, 0
    %v2362 = vsel %vm172, %v149, 0
    %v2365 = vsel %vm172, %v150, 0
    %2367 = vmatprep.subr.mxu0 0.0
    %v2368 = vand.u32 %v127, 4294901760
    %2369 = vmatpush1.msra.mxu0 %v2368
    %2370 = vmatprep.subr.mxu0 0.0
    %v2371 = vand.u32 %v128, 4294901760
    %2372 = vmatpush1.msra.mxu0 %v2371
    %2373 = vmatprep.subr.mxu0 0.0
    %v2374 = vand.u32 %v129, 4294901760
    %2375 = vmatpush1.msra.mxu0 %v2374
    %2376 = vmatprep.subr.mxu0 0.0
    %v2377 = vand.u32 %v130, 4294901760
    %2378 = vmatpush1.msra.mxu0 %v2377
    %2379 = vmatprep.subr.mxu0 0.0
    %2380 = vmatpush1.msra.mxu0 0.0
    %2381 = vmatprep.subr.mxu0 0.0
    %2382 = vmatpush1.msra.mxu0 0.0
    %2383 = vmatprep.subr.mxu0 0.0
    %2384 = vmatpush1.msra.mxu0 0.0
    %2385 = vmatprep.subr.mxu0 0.0
    %2386 = vmatpush1.msra.mxu0 0.0
    %2387 = vmatprep.subr.mxu0 0.0
    %2388 = vmatpush1.msra.mxu0 0.0
    %2389 = vmatprep.subr.mxu0 0.0
    %2390 = vmatpush1.msra.mxu0 0.0
    %2391 = vmatprep.subr.mxu0 0.0
    %2392 = vmatpush1.msra.mxu0 0.0
    %2393 = vmatprep.subr.mxu0 0.0
    %2394 = vmatpush1.msra.mxu0 0.0
    %2395 = vmatprep.subr.mxu0 0.0
    %2396 = vmatpush1.msra.mxu0 0.0
    %2397 = vmatprep.subr.mxu0 0.0
    %2398 = vmatpush1.msra.mxu0 0.0
    %2399 = vmatprep.subr.mxu0 0.0
    %2400 = vmatpush1.msra.mxu0 0.0
    %2401 = vmatprep.subr.mxu0 0.0
    %2402 = vmatpush1.msra.mxu0 0.0
    %2403 = vmatprep.subr.mxu0 0.0
    %2404 = vmatpush1.msra.mxu0 0.0
    %2405 = vmatprep.subr.mxu0 0.0
    %2406 = vmatpush1.msra.mxu0 0.0
    %2407 = vmatprep.subr.mxu0 0.0
    %2408 = vmatpush1.msra.mxu0 0.0
    %2409 = vmatprep.subr.mxu0 0.0
    %2410 = vmatpush1.msra.mxu0 0.0
    %2411 = vmatprep.subr.mxu0 0.0
    %2412 = vmatpush1.msra.mxu0 0.0
    %2413 = vmatprep.subr.mxu0 0.0
    %2414 = vmatpush1.msra.mxu0 0.0
    %2415 = vmatprep.subr.mxu0 0.0
    %2416 = vmatpush1.msra.mxu0 0.0
    %2417 = vmatprep.subr.mxu0 0.0
    %2418 = vmatpush1.msra.mxu0 0.0
    %2419 = vmatprep.subr.mxu0 0.0
    %2420 = vmatpush1.msra.mxu0 0.0
    %2421 = vmatprep.subr.mxu0 0.0
    %2422 = vmatpush1.msra.mxu0 0.0
    %2423 = vmatprep.subr.mxu0 0.0
    %2424 = vmatpush1.msra.mxu0 0.0
    %2425 = vmatprep.subr.mxu0 0.0
    %2426 = vmatpush1.msra.mxu0 0.0
    %2427 = vmatprep.subr.mxu0 0.0
    %2428 = vmatpush1.msra.mxu0 0.0
    %2429 = vmatprep.subr.mxu0 0.0
    %2430 = vmatpush1.msra.mxu0 0.0
    %2431 = vmatprep.subr.mxu0 0.0
    %2432 = vmatpush1.msra.mxu0 0.0
    %2433 = vmatprep.subr.mxu0 0.0
    %2434 = vmatpush1.msra.mxu0 0.0
    %2435 = vmatprep.mubr.f32.mxu0 0.0
    %v2436 = vand.u32 %v2356, 4294901760
    %v2437 = vsub.f32 %v2356, %v2436
    %v2438 = vand.u32 %v2437, 4294901760
    %v2439 = vsub.f32 %v2437, %v2438
    %v2440 = vand.u32 %v2439, 4294901760
    %2441 = vmatmul.mubr.f32.gmra.mrb[0].mxu0 %v2440
    %v2442 = vpop.f32.mrb[0].mxu0
    %v2443 = vadd.f32 0.0, %v2442
    %v2444 = vpop.f32.mrb[0].mxu0
    %2445 = vmatprep.mubr.f32.mxu0 0.0
    %v2446 = vand.u32 %v2359, 4294901760
    %v2447 = vsub.f32 %v2359, %v2446
    %v2448 = vand.u32 %v2447, 4294901760
    %v2449 = vsub.f32 %v2447, %v2448
    %v2450 = vand.u32 %v2449, 4294901760
    %2451 = vmatmul.mubr.f32.gmra.mrb[0].mxu0 %v2450
    %v2452 = vpop.f32.mrb[0].mxu0
    %v2453 = vadd.f32 0.0, %v2452
    %v2454 = vpop.f32.mrb[0].mxu0
    %2455 = vmatprep.mubr.f32.mxu0 0.0
    %v2456 = vand.u32 %v2362, 4294901760
    %v2457 = vsub.f32 %v2362, %v2456
    %v2458 = vand.u32 %v2457, 4294901760
    %v2459 = vsub.f32 %v2457, %v2458
    %v2460 = vand.u32 %v2459, 4294901760
    %2461 = vmatmul.mubr.f32.gmra.mrb[0].mxu0 %v2460
    %v2462 = vpop.f32.mrb[0].mxu0
    %v2463 = vadd.f32 0.0, %v2462
    %v2464 = vpop.f32.mrb[0].mxu0
    %2465 = vmatprep.mubr.f32.mxu0 0.0
    %v2466 = vand.u32 %v2365, 4294901760
    %v2467 = vsub.f32 %v2365, %v2466
    %v2468 = vand.u32 %v2467, 4294901760
    %v2469 = vsub.f32 %v2467, %v2468
    %v2470 = vand.u32 %v2469, 4294901760
    %2471 = vmatmul.mubr.f32.gmra.mrb[0].mxu0 %v2470
    %v2472 = vpop.f32.mrb[0].mxu0
    %v2473 = vadd.f32 0.0, %v2472
    %v2474 = vpop.f32.mrb[0].mxu0
    %2475 = vdwg.mxu0
    %2476 = vmatprep.subr.mxu0 0.0
    %v2477 = vand.u32 %v127, 4294901760
    %v2478 = vsub.f32 %v127, %v2477
    %v2479 = vand.u32 %v2478, 4294901760
    %v2480 = vsub.f32 %v2478, %v2479
    %v2481 = vand.u32 %v2480, 4294901760
    %2482 = vmatpush1.msra.mxu0 %v2481
    %2483 = vmatprep.subr.mxu0 0.0
    %v2484 = vand.u32 %v128, 4294901760
    %v2485 = vsub.f32 %v128, %v2484
    %v2486 = vand.u32 %v2485, 4294901760
    %v2487 = vsub.f32 %v2485, %v2486
    %v2488 = vand.u32 %v2487, 4294901760
    %2489 = vmatpush1.msra.mxu0 %v2488
    %2490 = vmatprep.subr.mxu0 0.0
    %v2491 = vand.u32 %v129, 4294901760
    %v2492 = vsub.f32 %v129, %v2491
    %v2493 = vand.u32 %v2492, 4294901760
    %v2494 = vsub.f32 %v2492, %v2493
    %v2495 = vand.u32 %v2494, 4294901760
    %2496 = vmatpush1.msra.mxu0 %v2495
    %2497 = vmatprep.subr.mxu0 0.0
    %v2498 = vand.u32 %v130, 4294901760
    %v2499 = vsub.f32 %v130, %v2498
    %v2500 = vand.u32 %v2499, 4294901760
    %v2501 = vsub.f32 %v2499, %v2500
    %v2502 = vand.u32 %v2501, 4294901760
    %2503 = vmatpush1.msra.mxu0 %v2502
    %2504 = vmatprep.subr.mxu0 0.0
    %2505 = vmatpush1.msra.mxu0 0.0
    %2506 = vmatprep.subr.mxu0 0.0
    %2507 = vmatpush1.msra.mxu0 0.0
    %2508 = vmatprep.subr.mxu0 0.0
    %2509 = vmatpush1.msra.mxu0 0.0
    %2510 = vmatprep.subr.mxu0 0.0
    %2511 = vmatpush1.msra.mxu0 0.0
    %2512 = vmatprep.subr.mxu0 0.0
    %2513 = vmatpush1.msra.mxu0 0.0
    %2514 = vmatprep.subr.mxu0 0.0
    %2515 = vmatpush1.msra.mxu0 0.0
    %2516 = vmatprep.subr.mxu0 0.0
    %2517 = vmatpush1.msra.mxu0 0.0
    %2518 = vmatprep.subr.mxu0 0.0
    %2519 = vmatpush1.msra.mxu0 0.0
    %2520 = vmatprep.subr.mxu0 0.0
    %2521 = vmatpush1.msra.mxu0 0.0
    %2522 = vmatprep.subr.mxu0 0.0
    %2523 = vmatpush1.msra.mxu0 0.0
    %2524 = vmatprep.subr.mxu0 0.0
    %2525 = vmatpush1.msra.mxu0 0.0
    %2526 = vmatprep.subr.mxu0 0.0
    %2527 = vmatpush1.msra.mxu0 0.0
    %2528 = vmatprep.subr.mxu0 0.0
    %2529 = vmatpush1.msra.mxu0 0.0
    %2530 = vmatprep.subr.mxu0 0.0
    %2531 = vmatpush1.msra.mxu0 0.0
    %2532 = vmatprep.subr.mxu0 0.0
    %2533 = vmatpush1.msra.mxu0 0.0
    %2534 = vmatprep.subr.mxu0 0.0
    %2535 = vmatpush1.msra.mxu0 0.0
    %2536 = vmatprep.subr.mxu0 0.0
    %2537 = vmatpush1.msra.mxu0 0.0
    %2538 = vmatprep.subr.mxu0 0.0
    %2539 = vmatpush1.msra.mxu0 0.0
    %2540 = vmatprep.subr.mxu0 0.0
    %2541 = vmatpush1.msra.mxu0 0.0
    %2542 = vmatprep.subr.mxu0 0.0
    %2543 = vmatpush1.msra.mxu0 0.0
    %2544 = vmatprep.subr.mxu0 0.0
    %2545 = vmatpush1.msra.mxu0 0.0
    %2546 = vmatprep.subr.mxu0 0.0
    %2547 = vmatpush1.msra.mxu0 0.0
    %2548 = vmatprep.subr.mxu0 0.0
    %2549 = vmatpush1.msra.mxu0 0.0
    %2550 = vmatprep.subr.mxu0 0.0
    %2551 = vmatpush1.msra.mxu0 0.0
    %2552 = vmatprep.subr.mxu0 0.0
    %2553 = vmatpush1.msra.mxu0 0.0
    %2554 = vmatprep.subr.mxu0 0.0
    %2555 = vmatpush1.msra.mxu0 0.0
    %2556 = vmatprep.subr.mxu0 0.0
    %2557 = vmatpush1.msra.mxu0 0.0
    %2558 = vmatprep.subr.mxu0 0.0
    %2559 = vmatpush1.msra.mxu0 0.0
    %2560 = vmatprep.mubr.f32.mxu0 0.0
    %v2561 = vand.u32 %v2356, 4294901760
    %2562 = vmatmul.mubr.f32.gmra.mrb[0].mxu0 %v2561
    %v2563 = vpop.f32.mrb[0].mxu0
    %v2564 = vadd.f32 %v2443, %v2563
    %v2565 = vpop.f32.mrb[0].mxu0
    %2566 = vmatprep.mubr.f32.mxu0 0.0
    %v2567 = vand.u32 %v2359, 4294901760
    %2568 = vmatmul.mubr.f32.gmra.mrb[0].mxu0 %v2567
    %v2569 = vpop.f32.mrb[0].mxu0
    %v2570 = vadd.f32 %v2453, %v2569
    %v2571 = vpop.f32.mrb[0].mxu0
    %2572 = vmatprep.mubr.f32.mxu0 0.0
    %v2573 = vand.u32 %v2362, 4294901760
    %2574 = vmatmul.mubr.f32.gmra.mrb[0].mxu0 %v2573
    %v2575 = vpop.f32.mrb[0].mxu0
    %v2576 = vadd.f32 %v2463, %v2575
    %v2577 = vpop.f32.mrb[0].mxu0
    %2578 = vmatprep.mubr.f32.mxu0 0.0
    %v2579 = vand.u32 %v2365, 4294901760
    %2580 = vmatmul.mubr.f32.gmra.mrb[0].mxu0 %v2579
    %v2581 = vpop.f32.mrb[0].mxu0
    %v2582 = vadd.f32 %v2473, %v2581
    %v2583 = vpop.f32.mrb[0].mxu0
    %2584 = vdwg.mxu0
    %2585 = vmatprep.subr.mxu0 0.0
    %v2586 = vand.u32 %v127, 4294901760
    %v2587 = vsub.f32 %v127, %v2586
    %2588 = vmatpush1.msra.mxu0 %v2587
    %2589 = vmatprep.subr.mxu0 0.0
    %v2590 = vand.u32 %v128, 4294901760
    %v2591 = vsub.f32 %v128, %v2590
    %2592 = vmatpush1.msra.mxu0 %v2591
    %2593 = vmatprep.subr.mxu0 0.0
    %v2594 = vand.u32 %v129, 4294901760
    %v2595 = vsub.f32 %v129, %v2594
    %2596 = vmatpush1.msra.mxu0 %v2595
    %2597 = vmatprep.subr.mxu0 0.0
    %v2598 = vand.u32 %v130, 4294901760
    %v2599 = vsub.f32 %v130, %v2598
    %2600 = vmatpush1.msra.mxu0 %v2599
    %2601 = vmatprep.subr.mxu0 0.0
    %2602 = vmatpush1.msra.mxu0 0.0
    %2603 = vmatprep.subr.mxu0 0.0
    %2604 = vmatpush1.msra.mxu0 0.0
    %2605 = vmatprep.subr.mxu0 0.0
    %2606 = vmatpush1.msra.mxu0 0.0
    %2607 = vmatprep.subr.mxu0 0.0
    %2608 = vmatpush1.msra.mxu0 0.0
    %2609 = vmatprep.subr.mxu0 0.0
    %2610 = vmatpush1.msra.mxu0 0.0
    %2611 = vmatprep.subr.mxu0 0.0
    %2612 = vmatpush1.msra.mxu0 0.0
    %2613 = vmatprep.subr.mxu0 0.0
    %2614 = vmatpush1.msra.mxu0 0.0
    %2615 = vmatprep.subr.mxu0 0.0
    %2616 = vmatpush1.msra.mxu0 0.0
    %2617 = vmatprep.subr.mxu0 0.0
    %2618 = vmatpush1.msra.mxu0 0.0
    %2619 = vmatprep.subr.mxu0 0.0
    %2620 = vmatpush1.msra.mxu0 0.0
    %2621 = vmatprep.subr.mxu0 0.0
    %2622 = vmatpush1.msra.mxu0 0.0
    %2623 = vmatprep.subr.mxu0 0.0
    %2624 = vmatpush1.msra.mxu0 0.0
    %2625 = vmatprep.subr.mxu0 0.0
    %2626 = vmatpush1.msra.mxu0 0.0
    %2627 = vmatprep.subr.mxu0 0.0
    %2628 = vmatpush1.msra.mxu0 0.0
    %2629 = vmatprep.subr.mxu0 0.0
    %2630 = vmatpush1.msra.mxu0 0.0
    %2631 = vmatprep.subr.mxu0 0.0
    %2632 = vmatpush1.msra.mxu0 0.0
    %2633 = vmatprep.subr.mxu0 0.0
    %2634 = vmatpush1.msra.mxu0 0.0
    %2635 = vmatprep.subr.mxu0 0.0
    %2636 = vmatpush1.msra.mxu0 0.0
    %2637 = vmatprep.subr.mxu0 0.0
    %2638 = vmatpush1.msra.mxu0 0.0
    %2639 = vmatprep.subr.mxu0 0.0
    %2640 = vmatpush1.msra.mxu0 0.0
    %2641 = vmatprep.subr.mxu0 0.0
    %2642 = vmatpush1.msra.mxu0 0.0
    %2643 = vmatprep.subr.mxu0 0.0
    %2644 = vmatpush1.msra.mxu0 0.0
    %2645 = vmatprep.subr.mxu0 0.0
    %2646 = vmatpush1.msra.mxu0 0.0
    %2647 = vmatprep.subr.mxu0 0.0
    %2648 = vmatpush1.msra.mxu0 0.0
    %2649 = vmatprep.subr.mxu0 0.0
    %2650 = vmatpush1.msra.mxu0 0.0
    %2651 = vmatprep.subr.mxu0 0.0
    %2652 = vmatpush1.msra.mxu0 0.0
    %2653 = vmatprep.subr.mxu0 0.0
    %2654 = vmatpush1.msra.mxu0 0.0
    %2655 = vmatprep.subr.mxu0 0.0
    %2656 = vmatpush1.msra.mxu0 0.0
    %2657 = vmatprep.mubr.f32.mxu0 0.0
    %v2658 = vand.u32 %v2356, 4294901760
    %v2659 = vsub.f32 %v2356, %v2658
    %2660 = vmatmul.mubr.f32.gmra.mrb[0].mxu0 %v2659
    %v2661 = vpop.f32.mrb[0].mxu0
    %v2662 = vadd.f32 %v2564, %v2661
    %v2663 = vpop.f32.mrb[0].mxu0
    %2664 = vmatprep.mubr.f32.mxu0 0.0
    %v2665 = vand.u32 %v2359, 4294901760
    %v2666 = vsub.f32 %v2359, %v2665
    %2667 = vmatmul.mubr.f32.gmra.mrb[0].mxu0 %v2666
    %v2668 = vpop.f32.mrb[0].mxu0
    %v2669 = vadd.f32 %v2570, %v2668
    %v2670 = vpop.f32.mrb[0].mxu0
    %2671 = vmatprep.mubr.f32.mxu0 0.0
    %v2672 = vand.u32 %v2362, 4294901760
    %v2673 = vsub.f32 %v2362, %v2672
    %2674 = vmatmul.mubr.f32.gmra.mrb[0].mxu0 %v2673
    %v2675 = vpop.f32.mrb[0].mxu0
    %v2676 = vadd.f32 %v2576, %v2675
    %v2677 = vpop.f32.mrb[0].mxu0
    %2678 = vmatprep.mubr.f32.mxu0 0.0
    %v2679 = vand.u32 %v2365, 4294901760
    %v2680 = vsub.f32 %v2365, %v2679
    %2681 = vmatmul.mubr.f32.gmra.mrb[0].mxu0 %v2680
    %v2682 = vpop.f32.mrb[0].mxu0
    %v2683 = vadd.f32 %v2582, %v2682
    %v2684 = vpop.f32.mrb[0].mxu0
    %2685 = vdwg.mxu0
    %2686 = vmatprep.subr.mxu0 0.0
    %v2687 = vand.u32 %v127, 4294901760
    %2688 = vmatpush1.msra.mxu0 %v2687
    %2689 = vmatprep.subr.mxu0 0.0
    %v2690 = vand.u32 %v128, 4294901760
    %2691 = vmatpush1.msra.mxu0 %v2690
    %2692 = vmatprep.subr.mxu0 0.0
    %v2693 = vand.u32 %v129, 4294901760
    %2694 = vmatpush1.msra.mxu0 %v2693
    %2695 = vmatprep.subr.mxu0 0.0
    %v2696 = vand.u32 %v130, 4294901760
    %2697 = vmatpush1.msra.mxu0 %v2696
    %2698 = vmatprep.subr.mxu0 0.0
    %2699 = vmatpush1.msra.mxu0 0.0
    %2700 = vmatprep.subr.mxu0 0.0
    %2701 = vmatpush1.msra.mxu0 0.0
    %2702 = vmatprep.subr.mxu0 0.0
    %2703 = vmatpush1.msra.mxu0 0.0
    %2704 = vmatprep.subr.mxu0 0.0
    %2705 = vmatpush1.msra.mxu0 0.0
    %2706 = vmatprep.subr.mxu0 0.0
    %2707 = vmatpush1.msra.mxu0 0.0
    %2708 = vmatprep.subr.mxu0 0.0
    %2709 = vmatpush1.msra.mxu0 0.0
    %2710 = vmatprep.subr.mxu0 0.0
    %2711 = vmatpush1.msra.mxu0 0.0
    %2712 = vmatprep.subr.mxu0 0.0
    %2713 = vmatpush1.msra.mxu0 0.0
    %2714 = vmatprep.subr.mxu0 0.0
    %2715 = vmatpush1.msra.mxu0 0.0
    %2716 = vmatprep.subr.mxu0 0.0
    %2717 = vmatpush1.msra.mxu0 0.0
    %2718 = vmatprep.subr.mxu0 0.0
    %2719 = vmatpush1.msra.mxu0 0.0
    %2720 = vmatprep.subr.mxu0 0.0
    %2721 = vmatpush1.msra.mxu0 0.0
    %2722 = vmatprep.subr.mxu0 0.0
    %2723 = vmatpush1.msra.mxu0 0.0
    %2724 = vmatprep.subr.mxu0 0.0
    %2725 = vmatpush1.msra.mxu0 0.0
    %2726 = vmatprep.subr.mxu0 0.0
    %2727 = vmatpush1.msra.mxu0 0.0
    %2728 = vmatprep.subr.mxu0 0.0
    %2729 = vmatpush1.msra.mxu0 0.0
    %2730 = vmatprep.subr.mxu0 0.0
    %2731 = vmatpush1.msra.mxu0 0.0
    %2732 = vmatprep.subr.mxu0 0.0
    %2733 = vmatpush1.msra.mxu0 0.0
    %2734 = vmatprep.subr.mxu0 0.0
    %2735 = vmatpush1.msra.mxu0 0.0
    %2736 = vmatprep.subr.mxu0 0.0
    %2737 = vmatpush1.msra.mxu0 0.0
    %2738 = vmatprep.subr.mxu0 0.0
    %2739 = vmatpush1.msra.mxu0 0.0
    %2740 = vmatprep.subr.mxu0 0.0
    %2741 = vmatpush1.msra.mxu0 0.0
    %2742 = vmatprep.subr.mxu0 0.0
    %2743 = vmatpush1.msra.mxu0 0.0
    %2744 = vmatprep.subr.mxu0 0.0
    %2745 = vmatpush1.msra.mxu0 0.0
    %2746 = vmatprep.subr.mxu0 0.0
    %2747 = vmatpush1.msra.mxu0 0.0
    %2748 = vmatprep.subr.mxu0 0.0
    %2749 = vmatpush1.msra.mxu0 0.0
    %2750 = vmatprep.subr.mxu0 0.0
    %2751 = vmatpush1.msra.mxu0 0.0
    %2752 = vmatprep.subr.mxu0 0.0
    %2753 = vmatpush1.msra.mxu0 0.0
    %2754 = vmatprep.mubr.f32.mxu0 0.0
    %v2755 = vand.u32 %v2356, 4294901760
    %v2756 = vsub.f32 %v2356, %v2755
    %v2757 = vand.u32 %v2756, 4294901760
    %2758 = vmatmul.mubr.f32.gmra.mrb[0].mxu0 %v2757
    %v2759 = vpop.f32.mrb[0].mxu0
    %v2760 = vadd.f32 %v2662, %v2759
    %v2761 = vpop.f32.mrb[0].mxu0
    %2762 = vmatprep.mubr.f32.mxu0 0.0
    %v2763 = vand.u32 %v2359, 4294901760
    %v2764 = vsub.f32 %v2359, %v2763
    %v2765 = vand.u32 %v2764, 4294901760
    %2766 = vmatmul.mubr.f32.gmra.mrb[0].mxu0 %v2765
    %v2767 = vpop.f32.mrb[0].mxu0
    %v2768 = vadd.f32 %v2669, %v2767
    %v2769 = vpop.f32.mrb[0].mxu0
    %2770 = vmatprep.mubr.f32.mxu0 0.0
    %v2771 = vand.u32 %v2362, 4294901760
    %v2772 = vsub.f32 %v2362, %v2771
    %v2773 = vand.u32 %v2772, 4294901760
    %2774 = vmatmul.mubr.f32.gmra.mrb[0].mxu0 %v2773
    %v2775 = vpop.f32.mrb[0].mxu0
    %v2776 = vadd.f32 %v2676, %v2775
    %v2777 = vpop.f32.mrb[0].mxu0
    %2778 = vmatprep.mubr.f32.mxu0 0.0
    %v2779 = vand.u32 %v2365, 4294901760
    %v2780 = vsub.f32 %v2365, %v2779
    %v2781 = vand.u32 %v2780, 4294901760
    %2782 = vmatmul.mubr.f32.gmra.mrb[0].mxu0 %v2781
    %v2783 = vpop.f32.mrb[0].mxu0
    %v2784 = vadd.f32 %v2683, %v2783
    %v2785 = vpop.f32.mrb[0].mxu0
    %2786 = vdwg.mxu0
    %2787 = vmatprep.subr.mxu0 0.0
    %v2788 = vand.u32 %v127, 4294901760
    %v2789 = vsub.f32 %v127, %v2788
    %v2790 = vand.u32 %v2789, 4294901760
    %2791 = vmatpush1.msra.mxu0 %v2790
    %2792 = vmatprep.subr.mxu0 0.0
    %v2793 = vand.u32 %v128, 4294901760
    %v2794 = vsub.f32 %v128, %v2793
    %v2795 = vand.u32 %v2794, 4294901760
    %2796 = vmatpush1.msra.mxu0 %v2795
    %2797 = vmatprep.subr.mxu0 0.0
    %v2798 = vand.u32 %v129, 4294901760
    %v2799 = vsub.f32 %v129, %v2798
    %v2800 = vand.u32 %v2799, 4294901760
    %2801 = vmatpush1.msra.mxu0 %v2800
    %2802 = vmatprep.subr.mxu0 0.0
    %v2803 = vand.u32 %v130, 4294901760
    %v2804 = vsub.f32 %v130, %v2803
    %v2805 = vand.u32 %v2804, 4294901760
    %2806 = vmatpush1.msra.mxu0 %v2805
    %2807 = vmatprep.subr.mxu0 0.0
    %2808 = vmatpush1.msra.mxu0 0.0
    %2809 = vmatprep.subr.mxu0 0.0
    %2810 = vmatpush1.msra.mxu0 0.0
    %2811 = vmatprep.subr.mxu0 0.0
    %2812 = vmatpush1.msra.mxu0 0.0
    %2813 = vmatprep.subr.mxu0 0.0
    %2814 = vmatpush1.msra.mxu0 0.0
    %2815 = vmatprep.subr.mxu0 0.0
    %2816 = vmatpush1.msra.mxu0 0.0
    %2817 = vmatprep.subr.mxu0 0.0
    %2818 = vmatpush1.msra.mxu0 0.0
    %2819 = vmatprep.subr.mxu0 0.0
    %2820 = vmatpush1.msra.mxu0 0.0
    %2821 = vmatprep.subr.mxu0 0.0
    %2822 = vmatpush1.msra.mxu0 0.0
    %2823 = vmatprep.subr.mxu0 0.0
    %2824 = vmatpush1.msra.mxu0 0.0
    %2825 = vmatprep.subr.mxu0 0.0
    %2826 = vmatpush1.msra.mxu0 0.0
    %2827 = vmatprep.subr.mxu0 0.0
    %2828 = vmatpush1.msra.mxu0 0.0
    %2829 = vmatprep.subr.mxu0 0.0
    %2830 = vmatpush1.msra.mxu0 0.0
    %2831 = vmatprep.subr.mxu0 0.0
    %2832 = vmatpush1.msra.mxu0 0.0
    %2833 = vmatprep.subr.mxu0 0.0
    %2834 = vmatpush1.msra.mxu0 0.0
    %2835 = vmatprep.subr.mxu0 0.0
    %2836 = vmatpush1.msra.mxu0 0.0
    %2837 = vmatprep.subr.mxu0 0.0
    %2838 = vmatpush1.msra.mxu0 0.0
    %2839 = vmatprep.subr.mxu0 0.0
    %2840 = vmatpush1.msra.mxu0 0.0
    %2841 = vmatprep.subr.mxu0 0.0
    %2842 = vmatpush1.msra.mxu0 0.0
    %2843 = vmatprep.subr.mxu0 0.0
    %2844 = vmatpush1.msra.mxu0 0.0
    %2845 = vmatprep.subr.mxu0 0.0
    %2846 = vmatpush1.msra.mxu0 0.0
    %2847 = vmatprep.subr.mxu0 0.0
    %2848 = vmatpush1.msra.mxu0 0.0
    %2849 = vmatprep.subr.mxu0 0.0
    %2850 = vmatpush1.msra.mxu0 0.0
    %2851 = vmatprep.subr.mxu0 0.0
    %2852 = vmatpush1.msra.mxu0 0.0
    %2853 = vmatprep.subr.mxu0 0.0
    %2854 = vmatpush1.msra.mxu0 0.0
    %2855 = vmatprep.subr.mxu0 0.0
    %2856 = vmatpush1.msra.mxu0 0.0
    %2857 = vmatprep.subr.mxu0 0.0
    %2858 = vmatpush1.msra.mxu0 0.0
    %2859 = vmatprep.subr.mxu0 0.0
    %2860 = vmatpush1.msra.mxu0 0.0
    %2861 = vmatprep.subr.mxu0 0.0
    %2862 = vmatpush1.msra.mxu0 0.0
    %2863 = vmatprep.mubr.f32.mxu0 0.0
    %v2864 = vand.u32 %v2356, 4294901760
    %2865 = vmatmul.mubr.f32.gmra.mrb[0].mxu0 %v2864
    %v2866 = vpop.f32.mrb[0].mxu0
    %v2867 = vadd.f32 %v2760, %v2866
    %v2868 = vpop.f32.mrb[0].mxu0
    %2869 = vmatprep.mubr.f32.mxu0 0.0
    %v2870 = vand.u32 %v2359, 4294901760
    %2871 = vmatmul.mubr.f32.gmra.mrb[0].mxu0 %v2870
    %v2872 = vpop.f32.mrb[0].mxu0
    %v2873 = vadd.f32 %v2768, %v2872
    %v2874 = vpop.f32.mrb[0].mxu0
    %2875 = vmatprep.mubr.f32.mxu0 0.0
    %v2876 = vand.u32 %v2362, 4294901760
    %2877 = vmatmul.mubr.f32.gmra.mrb[0].mxu0 %v2876
    %v2878 = vpop.f32.mrb[0].mxu0
    %v2879 = vadd.f32 %v2776, %v2878
    %v2880 = vpop.f32.mrb[0].mxu0
    %2881 = vmatprep.mubr.f32.mxu0 0.0
    %v2882 = vand.u32 %v2365, 4294901760
    %2883 = vmatmul.mubr.f32.gmra.mrb[0].mxu0 %v2882
    %v2884 = vpop.f32.mrb[0].mxu0
    %v2885 = vadd.f32 %v2784, %v2884
    %v2886 = vpop.f32.mrb[0].mxu0
    %2887 = vdwg.mxu0
    %2888 = vmatprep.subr.mxu0 0.0
    %v2889 = vand.u32 %v127, 4294901760
    %2890 = vmatpush1.msra.mxu0 %v2889
    %2891 = vmatprep.subr.mxu0 0.0
    %v2892 = vand.u32 %v128, 4294901760
    %2893 = vmatpush1.msra.mxu0 %v2892
    %2894 = vmatprep.subr.mxu0 0.0
    %v2895 = vand.u32 %v129, 4294901760
    %2896 = vmatpush1.msra.mxu0 %v2895
    %2897 = vmatprep.subr.mxu0 0.0
    %v2898 = vand.u32 %v130, 4294901760
    %2899 = vmatpush1.msra.mxu0 %v2898
    %2900 = vmatprep.subr.mxu0 0.0
    %2901 = vmatpush1.msra.mxu0 0.0
    %2902 = vmatprep.subr.mxu0 0.0
    %2903 = vmatpush1.msra.mxu0 0.0
    %2904 = vmatprep.subr.mxu0 0.0
    %2905 = vmatpush1.msra.mxu0 0.0
    %2906 = vmatprep.subr.mxu0 0.0
    %2907 = vmatpush1.msra.mxu0 0.0
    %2908 = vmatprep.subr.mxu0 0.0
    %2909 = vmatpush1.msra.mxu0 0.0
    %2910 = vmatprep.subr.mxu0 0.0
    %2911 = vmatpush1.msra.mxu0 0.0
    %2912 = vmatprep.subr.mxu0 0.0
    %2913 = vmatpush1.msra.mxu0 0.0
    %2914 = vmatprep.subr.mxu0 0.0
    %2915 = vmatpush1.msra.mxu0 0.0
    %2916 = vmatprep.subr.mxu0 0.0
    %2917 = vmatpush1.msra.mxu0 0.0
    %2918 = vmatprep.subr.mxu0 0.0
    %2919 = vmatpush1.msra.mxu0 0.0
    %2920 = vmatprep.subr.mxu0 0.0
    %2921 = vmatpush1.msra.mxu0 0.0
    %2922 = vmatprep.subr.mxu0 0.0
    %2923 = vmatpush1.msra.mxu0 0.0
    %2924 = vmatprep.subr.mxu0 0.0
    %2925 = vmatpush1.msra.mxu0 0.0
    %2926 = vmatprep.subr.mxu0 0.0
    %2927 = vmatpush1.msra.mxu0 0.0
    %2928 = vmatprep.subr.mxu0 0.0
    %2929 = vmatpush1.msra.mxu0 0.0
    %2930 = vmatprep.subr.mxu0 0.0
    %2931 = vmatpush1.msra.mxu0 0.0
    %2932 = vmatprep.subr.mxu0 0.0
    %2933 = vmatpush1.msra.mxu0 0.0
    %2934 = vmatprep.subr.mxu0 0.0
    %2935 = vmatpush1.msra.mxu0 0.0
    %2936 = vmatprep.subr.mxu0 0.0
    %2937 = vmatpush1.msra.mxu0 0.0
    %2938 = vmatprep.subr.mxu0 0.0
    %2939 = vmatpush1.msra.mxu0 0.0
    %2940 = vmatprep.subr.mxu0 0.0
    %2941 = vmatpush1.msra.mxu0 0.0
    %2942 = vmatprep.subr.mxu0 0.0
    %2943 = vmatpush1.msra.mxu0 0.0
    %2944 = vmatprep.subr.mxu0 0.0
    %2945 = vmatpush1.msra.mxu0 0.0
    %2946 = vmatprep.subr.mxu0 0.0
    %2947 = vmatpush1.msra.mxu0 0.0
    %2948 = vmatprep.subr.mxu0 0.0
    %2949 = vmatpush1.msra.mxu0 0.0
    %2950 = vmatprep.subr.mxu0 0.0
    %2951 = vmatpush1.msra.mxu0 0.0
    %2952 = vmatprep.subr.mxu0 0.0
    %2953 = vmatpush1.msra.mxu0 0.0
    %2954 = vmatprep.subr.mxu0 0.0
    %2955 = vmatpush1.msra.mxu0 0.0
    %2956 = vmatprep.mubr.f32.mxu0 0.0
    %v2957 = vand.u32 %v2356, 4294901760
    %2958 = vmatmul.mubr.f32.gmra.mrb[0].mxu0 %v2957
    %v2959 = vpop.f32.mrb[0].mxu0
    %v2960 = vadd.f32 %v2867, %v2959
    %v2961 = vpop.f32.mrb[0].mxu0
    %2962 = vmatprep.mubr.f32.mxu0 0.0
    %v2963 = vand.u32 %v2359, 4294901760
    %2964 = vmatmul.mubr.f32.gmra.mrb[0].mxu0 %v2963
    %v2965 = vpop.f32.mrb[0].mxu0
    %v2966 = vadd.f32 %v2873, %v2965
    %v2967 = vpop.f32.mrb[0].mxu0
    %2968 = vmatprep.mubr.f32.mxu0 0.0
    %v2969 = vand.u32 %v2362, 4294901760
    %2970 = vmatmul.mubr.f32.gmra.mrb[0].mxu0 %v2969
    %v2971 = vpop.f32.mrb[0].mxu0
    %v2972 = vadd.f32 %v2879, %v2971
    %v2973 = vpop.f32.mrb[0].mxu0
    %2974 = vmatprep.mubr.f32.mxu0 0.0
    %v2975 = vand.u32 %v2365, 4294901760
    %2976 = vmatmul.mubr.f32.gmra.mrb[0].mxu0 %v2975
    %v2977 = vpop.f32.mrb[0].mxu0
    %v2978 = vadd.f32 %v2885, %v2977
    %v2979 = vpop.f32.mrb[0].mxu0
    %2980 = vdwg.mxu0
    %s2981 = scalar_lea.vmem [#allocation5], 256
    %v2982 = vld [vmem:[%s2981] sm:$0xff]
    %v2983 = vld [vmem:[%s2981 + $0x8] sm:$0xff]
    %v2984 = vld [vmem:[%s2981 + $0x10] sm:$0xff]
    %v2985 = vld [vmem:[%s2981 + $0x18] sm:$0xff]
    %v2986 = vld [vmem:[%s2981 + $0x20] sm:$0xff]
    %v2987 = vld [vmem:[%s2981 + $0x28] sm:$0xff]
    %v2988 = vld [vmem:[%s2981 + $0x30] sm:$0xff]
    %v2989 = vld [vmem:[%s2981 + $0x38] sm:$0xff]
    %v2990 = vld [vmem:[%s2981 + $0x40] sm:$0xff]
    %v2991 = vld [vmem:[%s2981 + $0x48] sm:$0xff]
    %v2992 = vld [vmem:[%s2981 + $0x50] sm:$0xff]
    %v2993 = vld [vmem:[%s2981 + $0x58] sm:$0xff]
    %v2994 = vld [vmem:[%s2981 + $0x60] sm:$0xff]
    %v2995 = vld [vmem:[%s2981 + $0x68] sm:$0xff]
    %v2996 = vld [vmem:[%s2981 + $0x70] sm:$0xff]
    %v2997 = vld [vmem:[%s2981 + $0x78] sm:$0xff]
    %2998 = vmatprep.subr.mxu0 0.0
    %v2999 = vand.u32 %v2982, 4294901760
    %3000 = vmatpush1.msra.mxu0 %v2999
    %3001 = vmatprep.subr.mxu0 0.0
    %v3002 = vand.u32 %v2983, 4294901760
    %3003 = vmatpush1.msra.mxu0 %v3002
    %3004 = vmatprep.subr.mxu0 0.0
    %v3005 = vand.u32 %v2984, 4294901760
    %3006 = vmatpush1.msra.mxu0 %v3005
    %3007 = vmatprep.subr.mxu0 0.0
    %v3008 = vand.u32 %v2985, 4294901760
    %3009 = vmatpush1.msra.mxu0 %v3008
    %3010 = vmatprep.subr.mxu0 0.0
    %v3011 = vand.u32 %v2986, 4294901760
    %3012 = vmatpush1.msra.mxu0 %v3011
    %3013 = vmatprep.subr.mxu0 0.0
    %v3014 = vand.u32 %v2987, 4294901760
    %3015 = vmatpush1.msra.mxu0 %v3014
    %3016 = vmatprep.subr.mxu0 0.0
    %v3017 = vand.u32 %v2988, 4294901760
    %3018 = vmatpush1.msra.mxu0 %v3017
    %3019 = vmatprep.subr.mxu0 0.0
    %v3020 = vand.u32 %v2989, 4294901760
    %3021 = vmatpush1.msra.mxu0 %v3020
    %3022 = vmatprep.subr.mxu0 0.0
    %v3023 = vand.u32 %v2990, 4294901760
    %3024 = vmatpush1.msra.mxu0 %v3023
    %3025 = vmatprep.subr.mxu0 0.0
    %v3026 = vand.u32 %v2991, 4294901760
    %3027 = vmatpush1.msra.mxu0 %v3026
    %3028 = vmatprep.subr.mxu0 0.0
    %v3029 = vand.u32 %v2992, 4294901760
    %3030 = vmatpush1.msra.mxu0 %v3029
    %3031 = vmatprep.subr.mxu0 0.0
    %v3032 = vand.u32 %v2993, 4294901760
    %3033 = vmatpush1.msra.mxu0 %v3032
    %3034 = vmatprep.subr.mxu0 0.0
    %v3035 = vand.u32 %v2994, 4294901760
    %3036 = vmatpush1.msra.mxu0 %v3035
    %3037 = vmatprep.subr.mxu0 0.0
    %v3038 = vand.u32 %v2995, 4294901760
    %3039 = vmatpush1.msra.mxu0 %v3038
    %3040 = vmatprep.subr.mxu0 0.0
    %v3041 = vand.u32 %v2996, 4294901760
    %3042 = vmatpush1.msra.mxu0 %v3041
    %3043 = vmatprep.subr.mxu0 0.0
    %v3044 = vand.u32 %v2997, 4294901760
    %3045 = vmatpush1.msra.mxu0 %v3044
    %3046 = vmatprep.subr.mxu0 0.0
    %3047 = vmatpush1.msra.mxu0 0.0
    %3048 = vmatprep.subr.mxu0 0.0
    %3049 = vmatpush1.msra.mxu0 0.0
    %3050 = vmatprep.subr.mxu0 0.0
    %3051 = vmatpush1.msra.mxu0 0.0
    %3052 = vmatprep.subr.mxu0 0.0
    %3053 = vmatpush1.msra.mxu0 0.0
    %3054 = vmatprep.subr.mxu0 0.0
    %3055 = vmatpush1.msra.mxu0 0.0
    %3056 = vmatprep.subr.mxu0 0.0
    %3057 = vmatpush1.msra.mxu0 0.0
    %3058 = vmatprep.subr.mxu0 0.0
    %3059 = vmatpush1.msra.mxu0 0.0
    %3060 = vmatprep.subr.mxu0 0.0
    %3061 = vmatpush1.msra.mxu0 0.0
    %3062 = vmatprep.subr.mxu0 0.0
    %3063 = vmatpush1.msra.mxu0 0.0
    %3064 = vmatprep.subr.mxu0 0.0
    %3065 = vmatpush1.msra.mxu0 0.0
    %3066 = vmatprep.subr.mxu0 0.0
    %3067 = vmatpush1.msra.mxu0 0.0
    %3068 = vmatprep.subr.mxu0 0.0
    %3069 = vmatpush1.msra.mxu0 0.0
    %3070 = vmatprep.subr.mxu0 0.0
    %3071 = vmatpush1.msra.mxu0 0.0
    %3072 = vmatprep.subr.mxu0 0.0
    %3073 = vmatpush1.msra.mxu0 0.0
    %3074 = vmatprep.subr.mxu0 0.0
    %3075 = vmatpush1.msra.mxu0 0.0
    %3076 = vmatprep.subr.mxu0 0.0
    %3077 = vmatpush1.msra.mxu0 0.0
    %3078 = vmatprep.mubr.f32.mxu0 0.0
    %v3079 = vand.u32 %v2960, 4294901760
    %v3080 = vsub.f32 %v2960, %v3079
    %v3081 = vand.u32 %v3080, 4294901760
    %v3082 = vsub.f32 %v3080, %v3081
    %v3083 = vand.u32 %v3082, 4294901760
    %3084 = vmatmul.mubr.f32.gmra.mrb[0].mxu0 %v3083
    %v3085 = vpop.f32.mrb[0].mxu0
    %v3086 = vadd.f32 0.0, %v3085
    %v3087 = vpop.f32.mrb[0].mxu0
    %3088 = vmatprep.mubr.f32.mxu0 0.0
    %v3089 = vand.u32 %v2966, 4294901760
    %v3090 = vsub.f32 %v2966, %v3089
    %v3091 = vand.u32 %v3090, 4294901760
    %v3092 = vsub.f32 %v3090, %v3091
    %v3093 = vand.u32 %v3092, 4294901760
    %3094 = vmatmul.mubr.f32.gmra.mrb[0].mxu0 %v3093
    %v3095 = vpop.f32.mrb[0].mxu0
    %v3096 = vadd.f32 0.0, %v3095
    %v3097 = vpop.f32.mrb[0].mxu0
    %3098 = vmatprep.mubr.f32.mxu0 0.0
    %v3099 = vand.u32 %v2972, 4294901760
    %v3100 = vsub.f32 %v2972, %v3099
    %v3101 = vand.u32 %v3100, 4294901760
    %v3102 = vsub.f32 %v3100, %v3101
    %v3103 = vand.u32 %v3102, 4294901760
    %3104 = vmatmul.mubr.f32.gmra.mrb[0].mxu0 %v3103
    %v3105 = vpop.f32.mrb[0].mxu0
    %v3106 = vadd.f32 0.0, %v3105
    %v3107 = vpop.f32.mrb[0].mxu0
    %3108 = vmatprep.mubr.f32.mxu0 0.0
    %v3109 = vand.u32 %v2978, 4294901760
    %v3110 = vsub.f32 %v2978, %v3109
    %v3111 = vand.u32 %v3110, 4294901760
    %v3112 = vsub.f32 %v3110, %v3111
    %v3113 = vand.u32 %v3112, 4294901760
    %3114 = vmatmul.mubr.f32.gmra.mrb[0].mxu0 %v3113
    %v3115 = vpop.f32.mrb[0].mxu0
    %v3116 = vadd.f32 0.0, %v3115
    %v3117 = vpop.f32.mrb[0].mxu0
    %3118 = vdwg.mxu0
    %3119 = vmatprep.subr.mxu0 0.0
    %v3120 = vand.u32 %v2982, 4294901760
    %v3121 = vsub.f32 %v2982, %v3120
    %v3122 = vand.u32 %v3121, 4294901760
    %v3123 = vsub.f32 %v3121, %v3122
    %v3124 = vand.u32 %v3123, 4294901760
    %3125 = vmatpush1.msra.mxu0 %v3124
    %3126 = vmatprep.subr.mxu0 0.0
    %v3127 = vand.u32 %v2983, 4294901760
    %v3128 = vsub.f32 %v2983, %v3127
    %v3129 = vand.u32 %v3128, 4294901760
    %v3130 = vsub.f32 %v3128, %v3129
    %v3131 = vand.u32 %v3130, 4294901760
    %3132 = vmatpush1.msra.mxu0 %v3131
    %3133 = vmatprep.subr.mxu0 0.0
    %v3134 = vand.u32 %v2984, 4294901760
    %v3135 = vsub.f32 %v2984, %v3134
    %v3136 = vand.u32 %v3135, 4294901760
    %v3137 = vsub.f32 %v3135, %v3136
    %v3138 = vand.u32 %v3137, 4294901760
    %3139 = vmatpush1.msra.mxu0 %v3138
    %3140 = vmatprep.subr.mxu0 0.0
    %v3141 = vand.u32 %v2985, 4294901760
    %v3142 = vsub.f32 %v2985, %v3141
    %v3143 = vand.u32 %v3142, 4294901760
    %v3144 = vsub.f32 %v3142, %v3143
    %v3145 = vand.u32 %v3144, 4294901760
    %3146 = vmatpush1.msra.mxu0 %v3145
    %3147 = vmatprep.subr.mxu0 0.0
    %v3148 = vand.u32 %v2986, 4294901760
    %v3149 = vsub.f32 %v2986, %v3148
    %v3150 = vand.u32 %v3149, 4294901760
    %v3151 = vsub.f32 %v3149, %v3150
    %v3152 = vand.u32 %v3151, 4294901760
    %3153 = vmatpush1.msra.mxu0 %v3152
    %3154 = vmatprep.subr.mxu0 0.0
    %v3155 = vand.u32 %v2987, 4294901760
    %v3156 = vsub.f32 %v2987, %v3155
    %v3157 = vand.u32 %v3156, 4294901760
    %v3158 = vsub.f32 %v3156, %v3157
    %v3159 = vand.u32 %v3158, 4294901760
    %3160 = vmatpush1.msra.mxu0 %v3159
    %3161 = vmatprep.subr.mxu0 0.0
    %v3162 = vand.u32 %v2988, 4294901760
    %v3163 = vsub.f32 %v2988, %v3162
    %v3164 = vand.u32 %v3163, 4294901760
    %v3165 = vsub.f32 %v3163, %v3164
    %v3166 = vand.u32 %v3165, 4294901760
    %3167 = vmatpush1.msra.mxu0 %v3166
    %3168 = vmatprep.subr.mxu0 0.0
    %v3169 = vand.u32 %v2989, 4294901760
    %v3170 = vsub.f32 %v2989, %v3169
    %v3171 = vand.u32 %v3170, 4294901760
    %v3172 = vsub.f32 %v3170, %v3171
    %v3173 = vand.u32 %v3172, 4294901760
    %3174 = vmatpush1.msra.mxu0 %v3173
    %3175 = vmatprep.subr.mxu0 0.0
    %v3176 = vand.u32 %v2990, 4294901760
    %v3177 = vsub.f32 %v2990, %v3176
    %v3178 = vand.u32 %v3177, 4294901760
    %v3179 = vsub.f32 %v3177, %v3178
    %v3180 = vand.u32 %v3179, 4294901760
    %3181 = vmatpush1.msra.mxu0 %v3180
    %3182 = vmatprep.subr.mxu0 0.0
    %v3183 = vand.u32 %v2991, 4294901760
    %v3184 = vsub.f32 %v2991, %v3183
    %v3185 = vand.u32 %v3184, 4294901760
    %v3186 = vsub.f32 %v3184, %v3185
    %v3187 = vand.u32 %v3186, 4294901760
    %3188 = vmatpush1.msra.mxu0 %v3187
    %3189 = vmatprep.subr.mxu0 0.0
    %v3190 = vand.u32 %v2992, 4294901760
    %v3191 = vsub.f32 %v2992, %v3190
    %v3192 = vand.u32 %v3191, 4294901760
    %v3193 = vsub.f32 %v3191, %v3192
    %v3194 = vand.u32 %v3193, 4294901760
    %3195 = vmatpush1.msra.mxu0 %v3194
    %3196 = vmatprep.subr.mxu0 0.0
    %v3197 = vand.u32 %v2993, 4294901760
    %v3198 = vsub.f32 %v2993, %v3197
    %v3199 = vand.u32 %v3198, 4294901760
    %v3200 = vsub.f32 %v3198, %v3199
    %v3201 = vand.u32 %v3200, 4294901760
    %3202 = vmatpush1.msra.mxu0 %v3201
    %3203 = vmatprep.subr.mxu0 0.0
    %v3204 = vand.u32 %v2994, 4294901760
    %v3205 = vsub.f32 %v2994, %v3204
    %v3206 = vand.u32 %v3205, 4294901760
    %v3207 = vsub.f32 %v3205, %v3206
    %v3208 = vand.u32 %v3207, 4294901760
    %3209 = vmatpush1.msra.mxu0 %v3208
    %3210 = vmatprep.subr.mxu0 0.0
    %v3211 = vand.u32 %v2995, 4294901760
    %v3212 = vsub.f32 %v2995, %v3211
    %v3213 = vand.u32 %v3212, 4294901760
    %v3214 = vsub.f32 %v3212, %v3213
    %v3215 = vand.u32 %v3214, 4294901760
    %3216 = vmatpush1.msra.mxu0 %v3215
    %3217 = vmatprep.subr.mxu0 0.0
    %v3218 = vand.u32 %v2996, 4294901760
    %v3219 = vsub.f32 %v2996, %v3218
    %v3220 = vand.u32 %v3219, 4294901760
    %v3221 = vsub.f32 %v3219, %v3220
    %v3222 = vand.u32 %v3221, 4294901760
    %3223 = vmatpush1.msra.mxu0 %v3222
    %3224 = vmatprep.subr.mxu0 0.0
    %v3225 = vand.u32 %v2997, 4294901760
    %v3226 = vsub.f32 %v2997, %v3225
    %v3227 = vand.u32 %v3226, 4294901760
    %v3228 = vsub.f32 %v3226, %v3227
    %v3229 = vand.u32 %v3228, 4294901760
    %3230 = vmatpush1.msra.mxu0 %v3229
    %3231 = vmatprep.subr.mxu0 0.0
    %3232 = vmatpush1.msra.mxu0 0.0
    %3233 = vmatprep.subr.mxu0 0.0
    %3234 = vmatpush1.msra.mxu0 0.0
    %3235 = vmatprep.subr.mxu0 0.0
    %3236 = vmatpush1.msra.mxu0 0.0
    %3237 = vmatprep.subr.mxu0 0.0
    %3238 = vmatpush1.msra.mxu0 0.0
    %3239 = vmatprep.subr.mxu0 0.0
    %3240 = vmatpush1.msra.mxu0 0.0
    %3241 = vmatprep.subr.mxu0 0.0
    %3242 = vmatpush1.msra.mxu0 0.0
    %3243 = vmatprep.subr.mxu0 0.0
    %3244 = vmatpush1.msra.mxu0 0.0
    %3245 = vmatprep.subr.mxu0 0.0
    %3246 = vmatpush1.msra.mxu0 0.0
    %3247 = vmatprep.subr.mxu0 0.0
    %3248 = vmatpush1.msra.mxu0 0.0
    %3249 = vmatprep.subr.mxu0 0.0
    %3250 = vmatpush1.msra.mxu0 0.0
    %3251 = vmatprep.subr.mxu0 0.0
    %3252 = vmatpush1.msra.mxu0 0.0
    %3253 = vmatprep.subr.mxu0 0.0
    %3254 = vmatpush1.msra.mxu0 0.0
    %3255 = vmatprep.subr.mxu0 0.0
    %3256 = vmatpush1.msra.mxu0 0.0
    %3257 = vmatprep.subr.mxu0 0.0
    %3258 = vmatpush1.msra.mxu0 0.0
    %3259 = vmatprep.subr.mxu0 0.0
    %3260 = vmatpush1.msra.mxu0 0.0
    %3261 = vmatprep.subr.mxu0 0.0
    %3262 = vmatpush1.msra.mxu0 0.0
    %3263 = vmatprep.mubr.f32.mxu0 0.0
    %v3264 = vand.u32 %v2960, 4294901760
    %3265 = vmatmul.mubr.f32.gmra.mrb[0].mxu0 %v3264
    %v3266 = vpop.f32.mrb[0].mxu0
    %v3267 = vadd.f32 %v3086, %v3266
    %v3268 = vpop.f32.mrb[0].mxu0
    %3269 = vmatprep.mubr.f32.mxu0 0.0
    %v3270 = vand.u32 %v2966, 4294901760
    %3271 = vmatmul.mubr.f32.gmra.mrb[0].mxu0 %v3270
    %v3272 = vpop.f32.mrb[0].mxu0
    %v3273 = vadd.f32 %v3096, %v3272
    %v3274 = vpop.f32.mrb[0].mxu0
    %3275 = vmatprep.mubr.f32.mxu0 0.0
    %v3276 = vand.u32 %v2972, 4294901760
    %3277 = vmatmul.mubr.f32.gmra.mrb[0].mxu0 %v3276
    %v3278 = vpop.f32.mrb[0].mxu0
    %v3279 = vadd.f32 %v3106, %v3278
    %v3280 = vpop.f32.mrb[0].mxu0
    %3281 = vmatprep.mubr.f32.mxu0 0.0
    %v3282 = vand.u32 %v2978, 4294901760
    %3283 = vmatmul.mubr.f32.gmra.mrb[0].mxu0 %v3282
    %v3284 = vpop.f32.mrb[0].mxu0
    %v3285 = vadd.f32 %v3116, %v3284
    %v3286 = vpop.f32.mrb[0].mxu0
    %3287 = vdwg.mxu0
    %3288 = vmatprep.subr.mxu0 0.0
    %v3289 = vand.u32 %v2982, 4294901760
    %v3290 = vsub.f32 %v2982, %v3289
    %3291 = vmatpush1.msra.mxu0 %v3290
    %3292 = vmatprep.subr.mxu0 0.0
    %v3293 = vand.u32 %v2983, 4294901760
    %v3294 = vsub.f32 %v2983, %v3293
    %3295 = vmatpush1.msra.mxu0 %v3294
    %3296 = vmatprep.subr.mxu0 0.0
    %v3297 = vand.u32 %v2984, 4294901760
    %v3298 = vsub.f32 %v2984, %v3297
    %3299 = vmatpush1.msra.mxu0 %v3298
    %3300 = vmatprep.subr.mxu0 0.0
    %v3301 = vand.u32 %v2985, 4294901760
    %v3302 = vsub.f32 %v2985, %v3301
    %3303 = vmatpush1.msra.mxu0 %v3302
    %3304 = vmatprep.subr.mxu0 0.0
    %v3305 = vand.u32 %v2986, 4294901760
    %v3306 = vsub.f32 %v2986, %v3305
    %3307 = vmatpush1.msra.mxu0 %v3306
    %3308 = vmatprep.subr.mxu0 0.0
    %v3309 = vand.u32 %v2987, 4294901760
    %v3310 = vsub.f32 %v2987, %v3309
    %3311 = vmatpush1.msra.mxu0 %v3310
    %3312 = vmatprep.subr.mxu0 0.0
    %v3313 = vand.u32 %v2988, 4294901760
    %v3314 = vsub.f32 %v2988, %v3313
    %3315 = vmatpush1.msra.mxu0 %v3314
    %3316 = vmatprep.subr.mxu0 0.0
    %v3317 = vand.u32 %v2989, 4294901760
    %v3318 = vsub.f32 %v2989, %v3317
    %3319 = vmatpush1.msra.mxu0 %v3318
    %3320 = vmatprep.subr.mxu0 0.0
    %v3321 = vand.u32 %v2990, 4294901760
    %v3322 = vsub.f32 %v2990, %v3321
    %3323 = vmatpush1.msra.mxu0 %v3322
    %3324 = vmatprep.subr.mxu0 0.0
    %v3325 = vand.u32 %v2991, 4294901760
    %v3326 = vsub.f32 %v2991, %v3325
    %3327 = vmatpush1.msra.mxu0 %v3326
    %3328 = vmatprep.subr.mxu0 0.0
    %v3329 = vand.u32 %v2992, 4294901760
    %v3330 = vsub.f32 %v2992, %v3329
    %3331 = vmatpush1.msra.mxu0 %v3330
    %3332 = vmatprep.subr.mxu0 0.0
    %v3333 = vand.u32 %v2993, 4294901760
    %v3334 = vsub.f32 %v2993, %v3333
    %3335 = vmatpush1.msra.mxu0 %v3334
    %3336 = vmatprep.subr.mxu0 0.0
    %v3337 = vand.u32 %v2994, 4294901760
    %v3338 = vsub.f32 %v2994, %v3337
    %3339 = vmatpush1.msra.mxu0 %v3338
    %3340 = vmatprep.subr.mxu0 0.0
    %v3341 = vand.u32 %v2995, 4294901760
    %v3342 = vsub.f32 %v2995, %v3341
    %3343 = vmatpush1.msra.mxu0 %v3342
    %3344 = vmatprep.subr.mxu0 0.0
    %v3345 = vand.u32 %v2996, 4294901760
    %v3346 = vsub.f32 %v2996, %v3345
    %3347 = vmatpush1.msra.mxu0 %v3346
    %3348 = vmatprep.subr.mxu0 0.0
    %v3349 = vand.u32 %v2997, 4294901760
    %v3350 = vsub.f32 %v2997, %v3349
    %3351 = vmatpush1.msra.mxu0 %v3350
    %3352 = vmatprep.subr.mxu0 0.0
    %3353 = vmatpush1.msra.mxu0 0.0
    %3354 = vmatprep.subr.mxu0 0.0
    %3355 = vmatpush1.msra.mxu0 0.0
    %3356 = vmatprep.subr.mxu0 0.0
    %3357 = vmatpush1.msra.mxu0 0.0
    %3358 = vmatprep.subr.mxu0 0.0
    %3359 = vmatpush1.msra.mxu0 0.0
    %3360 = vmatprep.subr.mxu0 0.0
    %3361 = vmatpush1.msra.mxu0 0.0
    %3362 = vmatprep.subr.mxu0 0.0
    %3363 = vmatpush1.msra.mxu0 0.0
    %3364 = vmatprep.subr.mxu0 0.0
    %3365 = vmatpush1.msra.mxu0 0.0
    %3366 = vmatprep.subr.mxu0 0.0
    %3367 = vmatpush1.msra.mxu0 0.0
    %3368 = vmatprep.subr.mxu0 0.0
    %3369 = vmatpush1.msra.mxu0 0.0
    %3370 = vmatprep.subr.mxu0 0.0
    %3371 = vmatpush1.msra.mxu0 0.0
    %3372 = vmatprep.subr.mxu0 0.0
    %3373 = vmatpush1.msra.mxu0 0.0
    %3374 = vmatprep.subr.mxu0 0.0
    %3375 = vmatpush1.msra.mxu0 0.0
    %3376 = vmatprep.subr.mxu0 0.0
    %3377 = vmatpush1.msra.mxu0 0.0
    %3378 = vmatprep.subr.mxu0 0.0
    %3379 = vmatpush1.msra.mxu0 0.0
    %3380 = vmatprep.subr.mxu0 0.0
    %3381 = vmatpush1.msra.mxu0 0.0
    %3382 = vmatprep.subr.mxu0 0.0
    %3383 = vmatpush1.msra.mxu0 0.0
    %3384 = vmatprep.mubr.f32.mxu0 0.0
    %v3385 = vand.u32 %v2960, 4294901760
    %v3386 = vsub.f32 %v2960, %v3385
    %3387 = vmatmul.mubr.f32.gmra.mrb[0].mxu0 %v3386
    %v3388 = vpop.f32.mrb[0].mxu0
    %v3389 = vadd.f32 %v3267, %v3388
    %v3390 = vpop.f32.mrb[0].mxu0
    %3391 = vmatprep.mubr.f32.mxu0 0.0
    %v3392 = vand.u32 %v2966, 4294901760
    %v3393 = vsub.f32 %v2966, %v3392
    %3394 = vmatmul.mubr.f32.gmra.mrb[0].mxu0 %v3393
    %v3395 = vpop.f32.mrb[0].mxu0
    %v3396 = vadd.f32 %v3273, %v3395
    %v3397 = vpop.f32.mrb[0].mxu0
    %3398 = vmatprep.mubr.f32.mxu0 0.0
    %v3399 = vand.u32 %v2972, 4294901760
    %v3400 = vsub.f32 %v2972, %v3399
    %3401 = vmatmul.mubr.f32.gmra.mrb[0].mxu0 %v3400
    %v3402 = vpop.f32.mrb[0].mxu0
    %v3403 = vadd.f32 %v3279, %v3402
    %v3404 = vpop.f32.mrb[0].mxu0
    %3405 = vmatprep.mubr.f32.mxu0 0.0
    %v3406 = vand.u32 %v2978, 4294901760
    %v3407 = vsub.f32 %v2978, %v3406
    %3408 = vmatmul.mubr.f32.gmra.mrb[0].mxu0 %v3407
    %v3409 = vpop.f32.mrb[0].mxu0
    %v3410 = vadd.f32 %v3285, %v3409
    %v3411 = vpop.f32.mrb[0].mxu0
    %3412 = vdwg.mxu0
    %3413 = vmatprep.subr.mxu0 0.0
    %v3414 = vand.u32 %v2982, 4294901760
    %3415 = vmatpush1.msra.mxu0 %v3414
    %3416 = vmatprep.subr.mxu0 0.0
    %v3417 = vand.u32 %v2983, 4294901760
    %3418 = vmatpush1.msra.mxu0 %v3417
    %3419 = vmatprep.subr.mxu0 0.0
    %v3420 = vand.u32 %v2984, 4294901760
    %3421 = vmatpush1.msra.mxu0 %v3420
    %3422 = vmatprep.subr.mxu0 0.0
    %v3423 = vand.u32 %v2985, 4294901760
    %3424 = vmatpush1.msra.mxu0 %v3423
    %3425 = vmatprep.subr.mxu0 0.0
    %v3426 = vand.u32 %v2986, 4294901760
    %3427 = vmatpush1.msra.mxu0 %v3426
    %3428 = vmatprep.subr.mxu0 0.0
    %v3429 = vand.u32 %v2987, 4294901760
    %3430 = vmatpush1.msra.mxu0 %v3429
    %3431 = vmatprep.subr.mxu0 0.0
    %v3432 = vand.u32 %v2988, 4294901760
    %3433 = vmatpush1.msra.mxu0 %v3432
    %3434 = vmatprep.subr.mxu0 0.0
    %v3435 = vand.u32 %v2989, 4294901760
    %3436 = vmatpush1.msra.mxu0 %v3435
    %3437 = vmatprep.subr.mxu0 0.0
    %v3438 = vand.u32 %v2990, 4294901760
    %3439 = vmatpush1.msra.mxu0 %v3438
    %3440 = vmatprep.subr.mxu0 0.0
    %v3441 = vand.u32 %v2991, 4294901760
    %3442 = vmatpush1.msra.mxu0 %v3441
    %3443 = vmatprep.subr.mxu0 0.0
    %v3444 = vand.u32 %v2992, 4294901760
    %3445 = vmatpush1.msra.mxu0 %v3444
    %3446 = vmatprep.subr.mxu0 0.0
    %v3447 = vand.u32 %v2993, 4294901760
    %3448 = vmatpush1.msra.mxu0 %v3447
    %3449 = vmatprep.subr.mxu0 0.0
    %v3450 = vand.u32 %v2994, 4294901760
    %3451 = vmatpush1.msra.mxu0 %v3450
    %3452 = vmatprep.subr.mxu0 0.0
    %v3453 = vand.u32 %v2995, 4294901760
    %3454 = vmatpush1.msra.mxu0 %v3453
    %3455 = vmatprep.subr.mxu0 0.0
    %v3456 = vand.u32 %v2996, 4294901760
    %3457 = vmatpush1.msra.mxu0 %v3456
    %3458 = vmatprep.subr.mxu0 0.0
    %v3459 = vand.u32 %v2997, 4294901760
    %3460 = vmatpush1.msra.mxu0 %v3459
    %3461 = vmatprep.subr.mxu0 0.0
    %3462 = vmatpush1.msra.mxu0 0.0
    %3463 = vmatprep.subr.mxu0 0.0
    %3464 = vmatpush1.msra.mxu0 0.0
    %3465 = vmatprep.subr.mxu0 0.0
    %3466 = vmatpush1.msra.mxu0 0.0
    %3467 = vmatprep.subr.mxu0 0.0
    %3468 = vmatpush1.msra.mxu0 0.0
    %3469 = vmatprep.subr.mxu0 0.0
    %3470 = vmatpush1.msra.mxu0 0.0
    %3471 = vmatprep.subr.mxu0 0.0
    %3472 = vmatpush1.msra.mxu0 0.0
    %3473 = vmatprep.subr.mxu0 0.0
    %3474 = vmatpush1.msra.mxu0 0.0
    %3475 = vmatprep.subr.mxu0 0.0
    %3476 = vmatpush1.msra.mxu0 0.0
    %3477 = vmatprep.subr.mxu0 0.0
    %3478 = vmatpush1.msra.mxu0 0.0
    %3479 = vmatprep.subr.mxu0 0.0
    %3480 = vmatpush1.msra.mxu0 0.0
    %3481 = vmatprep.subr.mxu0 0.0
    %3482 = vmatpush1.msra.mxu0 0.0
    %3483 = vmatprep.subr.mxu0 0.0
    %3484 = vmatpush1.msra.mxu0 0.0
    %3485 = vmatprep.subr.mxu0 0.0
    %3486 = vmatpush1.msra.mxu0 0.0
    %3487 = vmatprep.subr.mxu0 0.0
    %3488 = vmatpush1.msra.mxu0 0.0
    %3489 = vmatprep.subr.mxu0 0.0
    %3490 = vmatpush1.msra.mxu0 0.0
    %3491 = vmatprep.subr.mxu0 0.0
    %3492 = vmatpush1.msra.mxu0 0.0
    %3493 = vmatprep.mubr.f32.mxu0 0.0
    %v3494 = vand.u32 %v2960, 4294901760
    %v3495 = vsub.f32 %v2960, %v3494
    %v3496 = vand.u32 %v3495, 4294901760
    %3497 = vmatmul.mubr.f32.gmra.mrb[0].mxu0 %v3496
    %v3498 = vpop.f32.mrb[0].mxu0
    %v3499 = vadd.f32 %v3389, %v3498
    %v3500 = vpop.f32.mrb[0].mxu0
    %3501 = vmatprep.mubr.f32.mxu0 0.0
    %v3502 = vand.u32 %v2966, 4294901760
    %v3503 = vsub.f32 %v2966, %v3502
    %v3504 = vand.u32 %v3503, 4294901760
    %3505 = vmatmul.mubr.f32.gmra.mrb[0].mxu0 %v3504
    %v3506 = vpop.f32.mrb[0].mxu0
    %v3507 = vadd.f32 %v3396, %v3506
    %v3508 = vpop.f32.mrb[0].mxu0
    %3509 = vmatprep.mubr.f32.mxu0 0.0
    %v3510 = vand.u32 %v2972, 4294901760
    %v3511 = vsub.f32 %v2972, %v3510
    %v3512 = vand.u32 %v3511, 4294901760
    %3513 = vmatmul.mubr.f32.gmra.mrb[0].mxu0 %v3512
    %v3514 = vpop.f32.mrb[0].mxu0
    %v3515 = vadd.f32 %v3403, %v3514
    %v3516 = vpop.f32.mrb[0].mxu0
    %3517 = vmatprep.mubr.f32.mxu0 0.0
    %v3518 = vand.u32 %v2978, 4294901760
    %v3519 = vsub.f32 %v2978, %v3518
    %v3520 = vand.u32 %v3519, 4294901760
    %3521 = vmatmul.mubr.f32.gmra.mrb[0].mxu0 %v3520
    %v3522 = vpop.f32.mrb[0].mxu0
    %v3523 = vadd.f32 %v3410, %v3522
    %v3524 = vpop.f32.mrb[0].mxu0
    %3525 = vdwg.mxu0
    %3526 = vmatprep.subr.mxu0 0.0
    %v3527 = vand.u32 %v2982, 4294901760
    %v3528 = vsub.f32 %v2982, %v3527
    %v3529 = vand.u32 %v3528, 4294901760
    %3530 = vmatpush1.msra.mxu0 %v3529
    %3531 = vmatprep.subr.mxu0 0.0
    %v3532 = vand.u32 %v2983, 4294901760
    %v3533 = vsub.f32 %v2983, %v3532
    %v3534 = vand.u32 %v3533, 4294901760
    %3535 = vmatpush1.msra.mxu0 %v3534
    %3536 = vmatprep.subr.mxu0 0.0
    %v3537 = vand.u32 %v2984, 4294901760
    %v3538 = vsub.f32 %v2984, %v3537
    %v3539 = vand.u32 %v3538, 4294901760
    %3540 = vmatpush1.msra.mxu0 %v3539
    %3541 = vmatprep.subr.mxu0 0.0
    %v3542 = vand.u32 %v2985, 4294901760
    %v3543 = vsub.f32 %v2985, %v3542
    %v3544 = vand.u32 %v3543, 4294901760
    %3545 = vmatpush1.msra.mxu0 %v3544
    %3546 = vmatprep.subr.mxu0 0.0
    %v3547 = vand.u32 %v2986, 4294901760
    %v3548 = vsub.f32 %v2986, %v3547
    %v3549 = vand.u32 %v3548, 4294901760
    %3550 = vmatpush1.msra.mxu0 %v3549
    %3551 = vmatprep.subr.mxu0 0.0
    %v3552 = vand.u32 %v2987, 4294901760
    %v3553 = vsub.f32 %v2987, %v3552
    %v3554 = vand.u32 %v3553, 4294901760
    %3555 = vmatpush1.msra.mxu0 %v3554
    %3556 = vmatprep.subr.mxu0 0.0
    %v3557 = vand.u32 %v2988, 4294901760
    %v3558 = vsub.f32 %v2988, %v3557
    %v3559 = vand.u32 %v3558, 4294901760
    %3560 = vmatpush1.msra.mxu0 %v3559
    %3561 = vmatprep.subr.mxu0 0.0
    %v3562 = vand.u32 %v2989, 4294901760
    %v3563 = vsub.f32 %v2989, %v3562
    %v3564 = vand.u32 %v3563, 4294901760
    %3565 = vmatpush1.msra.mxu0 %v3564
    %3566 = vmatprep.subr.mxu0 0.0
    %v3567 = vand.u32 %v2990, 4294901760
    %v3568 = vsub.f32 %v2990, %v3567
    %v3569 = vand.u32 %v3568, 4294901760
    %3570 = vmatpush1.msra.mxu0 %v3569
    %3571 = vmatprep.subr.mxu0 0.0
    %v3572 = vand.u32 %v2991, 4294901760
    %v3573 = vsub.f32 %v2991, %v3572
    %v3574 = vand.u32 %v3573, 4294901760
    %3575 = vmatpush1.msra.mxu0 %v3574
    %3576 = vmatprep.subr.mxu0 0.0
    %v3577 = vand.u32 %v2992, 4294901760
    %v3578 = vsub.f32 %v2992, %v3577
    %v3579 = vand.u32 %v3578, 4294901760
    %3580 = vmatpush1.msra.mxu0 %v3579
    %3581 = vmatprep.subr.mxu0 0.0
    %v3582 = vand.u32 %v2993, 4294901760
    %v3583 = vsub.f32 %v2993, %v3582
    %v3584 = vand.u32 %v3583, 4294901760
    %3585 = vmatpush1.msra.mxu0 %v3584
    %3586 = vmatprep.subr.mxu0 0.0
    %v3587 = vand.u32 %v2994, 4294901760
    %v3588 = vsub.f32 %v2994, %v3587
    %v3589 = vand.u32 %v3588, 4294901760
    %3590 = vmatpush1.msra.mxu0 %v3589
    %3591 = vmatprep.subr.mxu0 0.0
    %v3592 = vand.u32 %v2995, 4294901760
    %v3593 = vsub.f32 %v2995, %v3592
    %v3594 = vand.u32 %v3593, 4294901760
    %3595 = vmatpush1.msra.mxu0 %v3594
    %3596 = vmatprep.subr.mxu0 0.0
    %v3597 = vand.u32 %v2996, 4294901760
    %v3598 = vsub.f32 %v2996, %v3597
    %v3599 = vand.u32 %v3598, 4294901760
    %3600 = vmatpush1.msra.mxu0 %v3599
    %3601 = vmatprep.subr.mxu0 0.0
    %v3602 = vand.u32 %v2997, 4294901760
    %v3603 = vsub.f32 %v2997, %v3602
    %v3604 = vand.u32 %v3603, 4294901760
    %3605 = vmatpush1.msra.mxu0 %v3604
    %3606 = vmatprep.subr.mxu0 0.0
    %3607 = vmatpush1.msra.mxu0 0.0
    %3608 = vmatprep.subr.mxu0 0.0
    %3609 = vmatpush1.msra.mxu0 0.0
    %3610 = vmatprep.subr.mxu0 0.0
    %3611 = vmatpush1.msra.mxu0 0.0
    %3612 = vmatprep.subr.mxu0 0.0
    %3613 = vmatpush1.msra.mxu0 0.0
    %3614 = vmatprep.subr.mxu0 0.0
    %3615 = vmatpush1.msra.mxu0 0.0
    %3616 = vmatprep.subr.mxu0 0.0
    %3617 = vmatpush1.msra.mxu0 0.0
    %3618 = vmatprep.subr.mxu0 0.0
    %3619 = vmatpush1.msra.mxu0 0.0
    %3620 = vmatprep.subr.mxu0 0.0
    %3621 = vmatpush1.msra.mxu0 0.0
    %3622 = vmatprep.subr.mxu0 0.0
    %3623 = vmatpush1.msra.mxu0 0.0
    %3624 = vmatprep.subr.mxu0 0.0
    %3625 = vmatpush1.msra.mxu0 0.0
    %3626 = vmatprep.subr.mxu0 0.0
    %3627 = vmatpush1.msra.mxu0 0.0
    %3628 = vmatprep.subr.mxu0 0.0
    %3629 = vmatpush1.msra.mxu0 0.0
    %3630 = vmatprep.subr.mxu0 0.0
    %3631 = vmatpush1.msra.mxu0 0.0
    %3632 = vmatprep.subr.mxu0 0.0
    %3633 = vmatpush1.msra.mxu0 0.0
    %3634 = vmatprep.subr.mxu0 0.0
    %3635 = vmatpush1.msra.mxu0 0.0
    %3636 = vmatprep.subr.mxu0 0.0
    %3637 = vmatpush1.msra.mxu0 0.0
    %3638 = vmatprep.mubr.f32.mxu0 0.0
    %v3639 = vand.u32 %v2960, 4294901760
    %3640 = vmatmul.mubr.f32.gmra.mrb[0].mxu0 %v3639
    %v3641 = vpop.f32.mrb[0].mxu0
    %v3642 = vadd.f32 %v3499, %v3641
    %v3643 = vpop.f32.mrb[0].mxu0
    %3644 = vmatprep.mubr.f32.mxu0 0.0
    %v3645 = vand.u32 %v2966, 4294901760
    %3646 = vmatmul.mubr.f32.gmra.mrb[0].mxu0 %v3645
    %v3647 = vpop.f32.mrb[0].mxu0
    %v3648 = vadd.f32 %v3507, %v3647
    %v3649 = vpop.f32.mrb[0].mxu0
    %3650 = vmatprep.mubr.f32.mxu0 0.0
    %v3651 = vand.u32 %v2972, 4294901760
    %3652 = vmatmul.mubr.f32.gmra.mrb[0].mxu0 %v3651
    %v3653 = vpop.f32.mrb[0].mxu0
    %v3654 = vadd.f32 %v3515, %v3653
    %v3655 = vpop.f32.mrb[0].mxu0
    %3656 = vmatprep.mubr.f32.mxu0 0.0
    %v3657 = vand.u32 %v2978, 4294901760
    %3658 = vmatmul.mubr.f32.gmra.mrb[0].mxu0 %v3657
    %v3659 = vpop.f32.mrb[0].mxu0
    %v3660 = vadd.f32 %v3523, %v3659
    %v3661 = vpop.f32.mrb[0].mxu0
    %3662 = vdwg.mxu0
    %3663 = vmatprep.subr.mxu0 0.0
    %v3664 = vand.u32 %v2982, 4294901760
    %3665 = vmatpush1.msra.mxu0 %v3664
    %3666 = vmatprep.subr.mxu0 0.0
    %v3667 = vand.u32 %v2983, 4294901760
    %3668 = vmatpush1.msra.mxu0 %v3667
    %3669 = vmatprep.subr.mxu0 0.0
    %v3670 = vand.u32 %v2984, 4294901760
    %3671 = vmatpush1.msra.mxu0 %v3670
    %3672 = vmatprep.subr.mxu0 0.0
    %v3673 = vand.u32 %v2985, 4294901760
    %3674 = vmatpush1.msra.mxu0 %v3673
    %3675 = vmatprep.subr.mxu0 0.0
    %v3676 = vand.u32 %v2986, 4294901760
    %3677 = vmatpush1.msra.mxu0 %v3676
    %3678 = vmatprep.subr.mxu0 0.0
    %v3679 = vand.u32 %v2987, 4294901760
    %3680 = vmatpush1.msra.mxu0 %v3679
    %3681 = vmatprep.subr.mxu0 0.0
    %v3682 = vand.u32 %v2988, 4294901760
    %3683 = vmatpush1.msra.mxu0 %v3682
    %3684 = vmatprep.subr.mxu0 0.0
    %v3685 = vand.u32 %v2989, 4294901760
    %3686 = vmatpush1.msra.mxu0 %v3685
    %3687 = vmatprep.subr.mxu0 0.0
    %v3688 = vand.u32 %v2990, 4294901760
    %3689 = vmatpush1.msra.mxu0 %v3688
    %3690 = vmatprep.subr.mxu0 0.0
    %v3691 = vand.u32 %v2991, 4294901760
    %3692 = vmatpush1.msra.mxu0 %v3691
    %3693 = vmatprep.subr.mxu0 0.0
    %v3694 = vand.u32 %v2992, 4294901760
    %3695 = vmatpush1.msra.mxu0 %v3694
    %3696 = vmatprep.subr.mxu0 0.0
    %v3697 = vand.u32 %v2993, 4294901760
    %3698 = vmatpush1.msra.mxu0 %v3697
    %3699 = vmatprep.subr.mxu0 0.0
    %v3700 = vand.u32 %v2994, 4294901760
    %3701 = vmatpush1.msra.mxu0 %v3700
    %3702 = vmatprep.subr.mxu0 0.0
    %v3703 = vand.u32 %v2995, 4294901760
    %3704 = vmatpush1.msra.mxu0 %v3703
    %3705 = vmatprep.subr.mxu0 0.0
    %v3706 = vand.u32 %v2996, 4294901760
    %3707 = vmatpush1.msra.mxu0 %v3706
    %3708 = vmatprep.subr.mxu0 0.0
    %v3709 = vand.u32 %v2997, 4294901760
    %3710 = vmatpush1.msra.mxu0 %v3709
    %3711 = vmatprep.subr.mxu0 0.0
    %3712 = vmatpush1.msra.mxu0 0.0
    %3713 = vmatprep.subr.mxu0 0.0
    %3714 = vmatpush1.msra.mxu0 0.0
    %3715 = vmatprep.subr.mxu0 0.0
    %3716 = vmatpush1.msra.mxu0 0.0
    %3717 = vmatprep.subr.mxu0 0.0
    %3718 = vmatpush1.msra.mxu0 0.0
    %3719 = vmatprep.subr.mxu0 0.0
    %3720 = vmatpush1.msra.mxu0 0.0
    %3721 = vmatprep.subr.mxu0 0.0
    %3722 = vmatpush1.msra.mxu0 0.0
    %3723 = vmatprep.subr.mxu0 0.0
    %3724 = vmatpush1.msra.mxu0 0.0
    %3725 = vmatprep.subr.mxu0 0.0
    %3726 = vmatpush1.msra.mxu0 0.0
    %3727 = vmatprep.subr.mxu0 0.0
    %3728 = vmatpush1.msra.mxu0 0.0
    %3729 = vmatprep.subr.mxu0 0.0
    %3730 = vmatpush1.msra.mxu0 0.0
    %3731 = vmatprep.subr.mxu0 0.0
    %3732 = vmatpush1.msra.mxu0 0.0
    %3733 = vmatprep.subr.mxu0 0.0
    %3734 = vmatpush1.msra.mxu0 0.0
    %3735 = vmatprep.subr.mxu0 0.0
    %3736 = vmatpush1.msra.mxu0 0.0
    %3737 = vmatprep.subr.mxu0 0.0
    %3738 = vmatpush1.msra.mxu0 0.0
    %3739 = vmatprep.subr.mxu0 0.0
    %3740 = vmatpush1.msra.mxu0 0.0
    %3741 = vmatprep.subr.mxu0 0.0
    %3742 = vmatpush1.msra.mxu0 0.0
    %3743 = vmatprep.mubr.f32.mxu0 0.0
    %v3744 = vand.u32 %v2960, 4294901760
    %3745 = vmatmul.mubr.f32.gmra.mrb[0].mxu0 %v3744
    %v3746 = vpop.f32.mrb[0].mxu0
    %v3747 = vadd.f32 %v3642, %v3746
    %v3748 = vpop.f32.mrb[0].mxu0
    %3749 = vmatprep.mubr.f32.mxu0 0.0
    %v3750 = vand.u32 %v2966, 4294901760
    %3751 = vmatmul.mubr.f32.gmra.mrb[0].mxu0 %v3750
    %v3752 = vpop.f32.mrb[0].mxu0
    %v3753 = vadd.f32 %v3648, %v3752
    %v3754 = vpop.f32.mrb[0].mxu0
    %3755 = vmatprep.mubr.f32.mxu0 0.0
    %v3756 = vand.u32 %v2972, 4294901760
    %3757 = vmatmul.mubr.f32.gmra.mrb[0].mxu0 %v3756
    %v3758 = vpop.f32.mrb[0].mxu0
    %v3759 = vadd.f32 %v3654, %v3758
    %v3760 = vpop.f32.mrb[0].mxu0
    %3761 = vmatprep.mubr.f32.mxu0 0.0
    %v3762 = vand.u32 %v2978, 4294901760
    %3763 = vmatmul.mubr.f32.gmra.mrb[0].mxu0 %v3762
    %v3764 = vpop.f32.mrb[0].mxu0
    %v3765 = vadd.f32 %v3660, %v3764
    %v3766 = vpop.f32.mrb[0].mxu0
    %3767 = vdwg.mxu0
    %v3768 = vadd.f32 %v2334, %v3747
    %v3769 = vadd.f32 %v2340, %v3753
    %v3770 = vadd.f32 %v2346, %v3759
    %v3771 = vadd.f32 %v2352, %v3765
    %3772 = vmatprep.subr.mxu0 0.0
    %v3773 = vand.u32 %v131, 4294901760
    %3774 = vmatpush1.msra.mxu0 %v3773
    %3775 = vmatprep.subr.mxu0 0.0
    %v3776 = vand.u32 %v132, 4294901760
    %3777 = vmatpush1.msra.mxu0 %v3776
    %3778 = vmatprep.subr.mxu0 0.0
    %v3779 = vand.u32 %v133, 4294901760
    %3780 = vmatpush1.msra.mxu0 %v3779
    %3781 = vmatprep.subr.mxu0 0.0
    %v3782 = vand.u32 %v134, 4294901760
    %3783 = vmatpush1.msra.mxu0 %v3782
    %3784 = vmatprep.subr.mxu0 0.0
    %v3785 = vand.u32 %v135, 4294901760
    %3786 = vmatpush1.msra.mxu0 %v3785
    %3787 = vmatprep.subr.mxu0 0.0
    %v3788 = vand.u32 %v136, 4294901760
    %3789 = vmatpush1.msra.mxu0 %v3788
    %3790 = vmatprep.subr.mxu0 0.0
    %v3791 = vand.u32 %v137, 4294901760
    %3792 = vmatpush1.msra.mxu0 %v3791
    %3793 = vmatprep.subr.mxu0 0.0
    %v3794 = vand.u32 %v138, 4294901760
    %3795 = vmatpush1.msra.mxu0 %v3794
    %3796 = vmatprep.subr.mxu0 0.0
    %v3797 = vand.u32 %v139, 4294901760
    %3798 = vmatpush1.msra.mxu0 %v3797
    %3799 = vmatprep.subr.mxu0 0.0
    %v3800 = vand.u32 %v140, 4294901760
    %3801 = vmatpush1.msra.mxu0 %v3800
    %3802 = vmatprep.subr.mxu0 0.0
    %v3803 = vand.u32 %v141, 4294901760
    %3804 = vmatpush1.msra.mxu0 %v3803
    %3805 = vmatprep.subr.mxu0 0.0
    %v3806 = vand.u32 %v142, 4294901760
    %3807 = vmatpush1.msra.mxu0 %v3806
    %3808 = vmatprep.subr.mxu0 0.0
    %v3809 = vand.u32 %v143, 4294901760
    %3810 = vmatpush1.msra.mxu0 %v3809
    %3811 = vmatprep.subr.mxu0 0.0
    %v3812 = vand.u32 %v144, 4294901760
    %3813 = vmatpush1.msra.mxu0 %v3812
    %3814 = vmatprep.subr.mxu0 0.0
    %v3815 = vand.u32 %v145, 4294901760
    %3816 = vmatpush1.msra.mxu0 %v3815
    %3817 = vmatprep.subr.mxu0 0.0
    %v3818 = vand.u32 %v146, 4294901760
    %3819 = vmatpush1.msra.mxu0 %v3818
    %3820 = vmatprep.subr.mxu0 0.0
    %3821 = vmatpush1.msra.mxu0 0.0
    %3822 = vmatprep.subr.mxu0 0.0
    %3823 = vmatpush1.msra.mxu0 0.0
    %3824 = vmatprep.subr.mxu0 0.0
    %3825 = vmatpush1.msra.mxu0 0.0
    %3826 = vmatprep.subr.mxu0 0.0
    %3827 = vmatpush1.msra.mxu0 0.0
    %3828 = vmatprep.subr.mxu0 0.0
    %3829 = vmatpush1.msra.mxu0 0.0
    %3830 = vmatprep.subr.mxu0 0.0
    %3831 = vmatpush1.msra.mxu0 0.0
    %3832 = vmatprep.subr.mxu0 0.0
    %3833 = vmatpush1.msra.mxu0 0.0
    %3834 = vmatprep.subr.mxu0 0.0
    %3835 = vmatpush1.msra.mxu0 0.0
    %3836 = vmatprep.subr.mxu0 0.0
    %3837 = vmatpush1.msra.mxu0 0.0
    %3838 = vmatprep.subr.mxu0 0.0
    %3839 = vmatpush1.msra.mxu0 0.0
    %3840 = vmatprep.subr.mxu0 0.0
    %3841 = vmatpush1.msra.mxu0 0.0
    %3842 = vmatprep.subr.mxu0 0.0
    %3843 = vmatpush1.msra.mxu0 0.0
    %3844 = vmatprep.subr.mxu0 0.0
    %3845 = vmatpush1.msra.mxu0 0.0
    %3846 = vmatprep.subr.mxu0 0.0
    %3847 = vmatpush1.msra.mxu0 0.0
    %3848 = vmatprep.subr.mxu0 0.0
    %3849 = vmatpush1.msra.mxu0 0.0
    %3850 = vmatprep.subr.mxu0 0.0
    %3851 = vmatpush1.msra.mxu0 0.0
    %3852 = vmatprep.mubr.f32.mxu0 0.0
    %v3853 = vand.u32 %v3768, 4294901760
    %v3854 = vsub.f32 %v3768, %v3853
    %v3855 = vand.u32 %v3854, 4294901760
    %v3856 = vsub.f32 %v3854, %v3855
    %v3857 = vand.u32 %v3856, 4294901760
    %3858 = vmatmul.mubr.f32.gmra.mrb[0].mxu0 %v3857
    %v3859 = vpop.f32.mrb[0].mxu0
    %v3860 = vadd.f32 0.0, %v3859
    %v3861 = vpop.f32.mrb[0].mxu0
    %3862 = vmatprep.mubr.f32.mxu0 0.0
    %v3863 = vand.u32 %v3769, 4294901760
    %v3864 = vsub.f32 %v3769, %v3863
    %v3865 = vand.u32 %v3864, 4294901760
    %v3866 = vsub.f32 %v3864, %v3865
    %v3867 = vand.u32 %v3866, 4294901760
    %3868 = vmatmul.mubr.f32.gmra.mrb[0].mxu0 %v3867
    %v3869 = vpop.f32.mrb[0].mxu0
    %v3870 = vadd.f32 0.0, %v3869
    %v3871 = vpop.f32.mrb[0].mxu0
    %3872 = vmatprep.mubr.f32.mxu0 0.0
    %v3873 = vand.u32 %v3770, 4294901760
    %v3874 = vsub.f32 %v3770, %v3873
    %v3875 = vand.u32 %v3874, 4294901760
    %v3876 = vsub.f32 %v3874, %v3875
    %v3877 = vand.u32 %v3876, 4294901760
    %3878 = vmatmul.mubr.f32.gmra.mrb[0].mxu0 %v3877
    %v3879 = vpop.f32.mrb[0].mxu0
    %v3880 = vadd.f32 0.0, %v3879
    %v3881 = vpop.f32.mrb[0].mxu0
    %3882 = vmatprep.mubr.f32.mxu0 0.0
    %v3883 = vand.u32 %v3771, 4294901760
    %v3884 = vsub.f32 %v3771, %v3883
    %v3885 = vand.u32 %v3884, 4294901760
    %v3886 = vsub.f32 %v3884, %v3885
    %v3887 = vand.u32 %v3886, 4294901760
    %3888 = vmatmul.mubr.f32.gmra.mrb[0].mxu0 %v3887
    %v3889 = vpop.f32.mrb[0].mxu0
    %v3890 = vadd.f32 0.0, %v3889
    %v3891 = vpop.f32.mrb[0].mxu0
    %3892 = vdwg.mxu0
    %3893 = vmatprep.subr.mxu0 0.0
    %v3894 = vand.u32 %v131, 4294901760
    %v3895 = vsub.f32 %v131, %v3894
    %v3896 = vand.u32 %v3895, 4294901760
    %v3897 = vsub.f32 %v3895, %v3896
    %v3898 = vand.u32 %v3897, 4294901760
    %3899 = vmatpush1.msra.mxu0 %v3898
    %3900 = vmatprep.subr.mxu0 0.0
    %v3901 = vand.u32 %v132, 4294901760
    %v3902 = vsub.f32 %v132, %v3901
    %v3903 = vand.u32 %v3902, 4294901760
    %v3904 = vsub.f32 %v3902, %v3903
    %v3905 = vand.u32 %v3904, 4294901760
    %3906 = vmatpush1.msra.mxu0 %v3905
    %3907 = vmatprep.subr.mxu0 0.0
    %v3908 = vand.u32 %v133, 4294901760
    %v3909 = vsub.f32 %v133, %v3908
    %v3910 = vand.u32 %v3909, 4294901760
    %v3911 = vsub.f32 %v3909, %v3910
    %v3912 = vand.u32 %v3911, 4294901760
    %3913 = vmatpush1.msra.mxu0 %v3912
    %3914 = vmatprep.subr.mxu0 0.0
    %v3915 = vand.u32 %v134, 4294901760
    %v3916 = vsub.f32 %v134, %v3915
    %v3917 = vand.u32 %v3916, 4294901760
    %v3918 = vsub.f32 %v3916, %v3917
    %v3919 = vand.u32 %v3918, 4294901760
    %3920 = vmatpush1.msra.mxu0 %v3919
    %3921 = vmatprep.subr.mxu0 0.0
    %v3922 = vand.u32 %v135, 4294901760
    %v3923 = vsub.f32 %v135, %v3922
    %v3924 = vand.u32 %v3923, 4294901760
    %v3925 = vsub.f32 %v3923, %v3924
    %v3926 = vand.u32 %v3925, 4294901760
    %3927 = vmatpush1.msra.mxu0 %v3926
    %3928 = vmatprep.subr.mxu0 0.0
    %v3929 = vand.u32 %v136, 4294901760
    %v3930 = vsub.f32 %v136, %v3929
    %v3931 = vand.u32 %v3930, 4294901760
    %v3932 = vsub.f32 %v3930, %v3931
    %v3933 = vand.u32 %v3932, 4294901760
    %3934 = vmatpush1.msra.mxu0 %v3933
    %3935 = vmatprep.subr.mxu0 0.0
    %v3936 = vand.u32 %v137, 4294901760
    %v3937 = vsub.f32 %v137, %v3936
    %v3938 = vand.u32 %v3937, 4294901760
    %v3939 = vsub.f32 %v3937, %v3938
    %v3940 = vand.u32 %v3939, 4294901760
    %3941 = vmatpush1.msra.mxu0 %v3940
    %3942 = vmatprep.subr.mxu0 0.0
    %v3943 = vand.u32 %v138, 4294901760
    %v3944 = vsub.f32 %v138, %v3943
    %v3945 = vand.u32 %v3944, 4294901760
    %v3946 = vsub.f32 %v3944, %v3945
    %v3947 = vand.u32 %v3946, 4294901760
    %3948 = vmatpush1.msra.mxu0 %v3947
    %3949 = vmatprep.subr.mxu0 0.0
    %v3950 = vand.u32 %v139, 4294901760
    %v3951 = vsub.f32 %v139, %v3950
    %v3952 = vand.u32 %v3951, 4294901760
    %v3953 = vsub.f32 %v3951, %v3952
    %v3954 = vand.u32 %v3953, 4294901760
    %3955 = vmatpush1.msra.mxu0 %v3954
    %3956 = vmatprep.subr.mxu0 0.0
    %v3957 = vand.u32 %v140, 4294901760
    %v3958 = vsub.f32 %v140, %v3957
    %v3959 = vand.u32 %v3958, 4294901760
    %v3960 = vsub.f32 %v3958, %v3959
    %v3961 = vand.u32 %v3960, 4294901760
    %3962 = vmatpush1.msra.mxu0 %v3961
    %3963 = vmatprep.subr.mxu0 0.0
    %v3964 = vand.u32 %v141, 4294901760
    %v3965 = vsub.f32 %v141, %v3964
    %v3966 = vand.u32 %v3965, 4294901760
    %v3967 = vsub.f32 %v3965, %v3966
    %v3968 = vand.u32 %v3967, 4294901760
    %3969 = vmatpush1.msra.mxu0 %v3968
    %3970 = vmatprep.subr.mxu0 0.0
    %v3971 = vand.u32 %v142, 4294901760
    %v3972 = vsub.f32 %v142, %v3971
    %v3973 = vand.u32 %v3972, 4294901760
    %v3974 = vsub.f32 %v3972, %v3973
    %v3975 = vand.u32 %v3974, 4294901760
    %3976 = vmatpush1.msra.mxu0 %v3975
    %3977 = vmatprep.subr.mxu0 0.0
    %v3978 = vand.u32 %v143, 4294901760
    %v3979 = vsub.f32 %v143, %v3978
    %v3980 = vand.u32 %v3979, 4294901760
    %v3981 = vsub.f32 %v3979, %v3980
    %v3982 = vand.u32 %v3981, 4294901760
    %3983 = vmatpush1.msra.mxu0 %v3982
    %3984 = vmatprep.subr.mxu0 0.0
    %v3985 = vand.u32 %v144, 4294901760
    %v3986 = vsub.f32 %v144, %v3985
    %v3987 = vand.u32 %v3986, 4294901760
    %v3988 = vsub.f32 %v3986, %v3987
    %v3989 = vand.u32 %v3988, 4294901760
    %3990 = vmatpush1.msra.mxu0 %v3989
    %3991 = vmatprep.subr.mxu0 0.0
    %v3992 = vand.u32 %v145, 4294901760
    %v3993 = vsub.f32 %v145, %v3992
    %v3994 = vand.u32 %v3993, 4294901760
    %v3995 = vsub.f32 %v3993, %v3994
    %v3996 = vand.u32 %v3995, 4294901760
    %3997 = vmatpush1.msra.mxu0 %v3996
    %3998 = vmatprep.subr.mxu0 0.0
    %v3999 = vand.u32 %v146, 4294901760
    %v4000 = vsub.f32 %v146, %v3999
    %v4001 = vand.u32 %v4000, 4294901760
    %v4002 = vsub.f32 %v4000, %v4001
    %v4003 = vand.u32 %v4002, 4294901760
    %4004 = vmatpush1.msra.mxu0 %v4003
    %4005 = vmatprep.subr.mxu0 0.0
    %4006 = vmatpush1.msra.mxu0 0.0
    %4007 = vmatprep.subr.mxu0 0.0
    %4008 = vmatpush1.msra.mxu0 0.0
    %4009 = vmatprep.subr.mxu0 0.0
    %4010 = vmatpush1.msra.mxu0 0.0
    %4011 = vmatprep.subr.mxu0 0.0
    %4012 = vmatpush1.msra.mxu0 0.0
    %4013 = vmatprep.subr.mxu0 0.0
    %4014 = vmatpush1.msra.mxu0 0.0
    %4015 = vmatprep.subr.mxu0 0.0
    %4016 = vmatpush1.msra.mxu0 0.0
    %4017 = vmatprep.subr.mxu0 0.0
    %4018 = vmatpush1.msra.mxu0 0.0
    %4019 = vmatprep.subr.mxu0 0.0
    %4020 = vmatpush1.msra.mxu0 0.0
    %4021 = vmatprep.subr.mxu0 0.0
    %4022 = vmatpush1.msra.mxu0 0.0
    %4023 = vmatprep.subr.mxu0 0.0
    %4024 = vmatpush1.msra.mxu0 0.0
    %4025 = vmatprep.subr.mxu0 0.0
    %4026 = vmatpush1.msra.mxu0 0.0
    %4027 = vmatprep.subr.mxu0 0.0
    %4028 = vmatpush1.msra.mxu0 0.0
    %4029 = vmatprep.subr.mxu0 0.0
    %4030 = vmatpush1.msra.mxu0 0.0
    %4031 = vmatprep.subr.mxu0 0.0
    %4032 = vmatpush1.msra.mxu0 0.0
    %4033 = vmatprep.subr.mxu0 0.0
    %4034 = vmatpush1.msra.mxu0 0.0
    %4035 = vmatprep.subr.mxu0 0.0
    %4036 = vmatpush1.msra.mxu0 0.0
    %4037 = vmatprep.mubr.f32.mxu0 0.0
    %v4038 = vand.u32 %v3768, 4294901760
    %4039 = vmatmul.mubr.f32.gmra.mrb[0].mxu0 %v4038
    %v4040 = vpop.f32.mrb[0].mxu0
    %v4041 = vadd.f32 %v3860, %v4040
    %v4042 = vpop.f32.mrb[0].mxu0
    %4043 = vmatprep.mubr.f32.mxu0 0.0
    %v4044 = vand.u32 %v3769, 4294901760
    %4045 = vmatmul.mubr.f32.gmra.mrb[0].mxu0 %v4044
    %v4046 = vpop.f32.mrb[0].mxu0
    %v4047 = vadd.f32 %v3870, %v4046
    %v4048 = vpop.f32.mrb[0].mxu0
    %4049 = vmatprep.mubr.f32.mxu0 0.0
    %v4050 = vand.u32 %v3770, 4294901760
    %4051 = vmatmul.mubr.f32.gmra.mrb[0].mxu0 %v4050
    %v4052 = vpop.f32.mrb[0].mxu0
    %v4053 = vadd.f32 %v3880, %v4052
    %v4054 = vpop.f32.mrb[0].mxu0
    %4055 = vmatprep.mubr.f32.mxu0 0.0
    %v4056 = vand.u32 %v3771, 4294901760
    %4057 = vmatmul.mubr.f32.gmra.mrb[0].mxu0 %v4056
    %v4058 = vpop.f32.mrb[0].mxu0
    %v4059 = vadd.f32 %v3890, %v4058
    %v4060 = vpop.f32.mrb[0].mxu0
    %4061 = vdwg.mxu0
    %4062 = vmatprep.subr.mxu0 0.0
    %v4063 = vand.u32 %v131, 4294901760
    %v4064 = vsub.f32 %v131, %v4063
    %4065 = vmatpush1.msra.mxu0 %v4064
    %4066 = vmatprep.subr.mxu0 0.0
    %v4067 = vand.u32 %v132, 4294901760
    %v4068 = vsub.f32 %v132, %v4067
    %4069 = vmatpush1.msra.mxu0 %v4068
    %4070 = vmatprep.subr.mxu0 0.0
    %v4071 = vand.u32 %v133, 4294901760
    %v4072 = vsub.f32 %v133, %v4071
    %4073 = vmatpush1.msra.mxu0 %v4072
    %4074 = vmatprep.subr.mxu0 0.0
    %v4075 = vand.u32 %v134, 4294901760
    %v4076 = vsub.f32 %v134, %v4075
    %4077 = vmatpush1.msra.mxu0 %v4076
    %4078 = vmatprep.subr.mxu0 0.0
    %v4079 = vand.u32 %v135, 4294901760
    %v4080 = vsub.f32 %v135, %v4079
    %4081 = vmatpush1.msra.mxu0 %v4080
    %4082 = vmatprep.subr.mxu0 0.0
    %v4083 = vand.u32 %v136, 4294901760
    %v4084 = vsub.f32 %v136, %v4083
    %4085 = vmatpush1.msra.mxu0 %v4084
    %4086 = vmatprep.subr.mxu0 0.0
    %v4087 = vand.u32 %v137, 4294901760
    %v4088 = vsub.f32 %v137, %v4087
    %4089 = vmatpush1.msra.mxu0 %v4088
    %4090 = vmatprep.subr.mxu0 0.0
    %v4091 = vand.u32 %v138, 4294901760
    %v4092 = vsub.f32 %v138, %v4091
    %4093 = vmatpush1.msra.mxu0 %v4092
    %4094 = vmatprep.subr.mxu0 0.0
    %v4095 = vand.u32 %v139, 4294901760
    %v4096 = vsub.f32 %v139, %v4095
    %4097 = vmatpush1.msra.mxu0 %v4096
    %4098 = vmatprep.subr.mxu0 0.0
    %v4099 = vand.u32 %v140, 4294901760
    %v4100 = vsub.f32 %v140, %v4099
    %4101 = vmatpush1.msra.mxu0 %v4100
    %4102 = vmatprep.subr.mxu0 0.0
    %v4103 = vand.u32 %v141, 4294901760
    %v4104 = vsub.f32 %v141, %v4103
    %4105 = vmatpush1.msra.mxu0 %v4104
    %4106 = vmatprep.subr.mxu0 0.0
    %v4107 = vand.u32 %v142, 4294901760
    %v4108 = vsub.f32 %v142, %v4107
    %4109 = vmatpush1.msra.mxu0 %v4108
    %4110 = vmatprep.subr.mxu0 0.0
    %v4111 = vand.u32 %v143, 4294901760
    %v4112 = vsub.f32 %v143, %v4111
    %4113 = vmatpush1.msra.mxu0 %v4112
    %4114 = vmatprep.subr.mxu0 0.0
    %v4115 = vand.u32 %v144, 4294901760
    %v4116 = vsub.f32 %v144, %v4115
    %4117 = vmatpush1.msra.mxu0 %v4116
    %4118 = vmatprep.subr.mxu0 0.0
    %v4119 = vand.u32 %v145, 4294901760
    %v4120 = vsub.f32 %v145, %v4119
    %4121 = vmatpush1.msra.mxu0 %v4120
    %4122 = vmatprep.subr.mxu0 0.0
    %v4123 = vand.u32 %v146, 4294901760
    %v4124 = vsub.f32 %v146, %v4123
    %4125 = vmatpush1.msra.mxu0 %v4124
    %4126 = vmatprep.subr.mxu0 0.0
    %4127 = vmatpush1.msra.mxu0 0.0
    %4128 = vmatprep.subr.mxu0 0.0
    %4129 = vmatpush1.msra.mxu0 0.0
    %4130 = vmatprep.subr.mxu0 0.0
    %4131 = vmatpush1.msra.mxu0 0.0
    %4132 = vmatprep.subr.mxu0 0.0
    %4133 = vmatpush1.msra.mxu0 0.0
    %4134 = vmatprep.subr.mxu0 0.0
    %4135 = vmatpush1.msra.mxu0 0.0
    %4136 = vmatprep.subr.mxu0 0.0
    %4137 = vmatpush1.msra.mxu0 0.0
    %4138 = vmatprep.subr.mxu0 0.0
    %4139 = vmatpush1.msra.mxu0 0.0
    %4140 = vmatprep.subr.mxu0 0.0
    %4141 = vmatpush1.msra.mxu0 0.0
    %4142 = vmatprep.subr.mxu0 0.0
    %4143 = vmatpush1.msra.mxu0 0.0
    %4144 = vmatprep.subr.mxu0 0.0
    %4145 = vmatpush1.msra.mxu0 0.0
    %4146 = vmatprep.subr.mxu0 0.0
    %4147 = vmatpush1.msra.mxu0 0.0
    %4148 = vmatprep.subr.mxu0 0.0
    %4149 = vmatpush1.msra.mxu0 0.0
    %4150 = vmatprep.subr.mxu0 0.0
    %4151 = vmatpush1.msra.mxu0 0.0
    %4152 = vmatprep.subr.mxu0 0.0
    %4153 = vmatpush1.msra.mxu0 0.0
    %4154 = vmatprep.subr.mxu0 0.0
    %4155 = vmatpush1.msra.mxu0 0.0
    %4156 = vmatprep.subr.mxu0 0.0
    %4157 = vmatpush1.msra.mxu0 0.0
    %4158 = vmatprep.mubr.f32.mxu0 0.0
    %v4159 = vand.u32 %v3768, 4294901760
    %v4160 = vsub.f32 %v3768, %v4159
    %4161 = vmatmul.mubr.f32.gmra.mrb[0].mxu0 %v4160
    %v4162 = vpop.f32.mrb[0].mxu0
    %v4163 = vadd.f32 %v4041, %v4162
    %v4164 = vpop.f32.mrb[0].mxu0
    %4165 = vmatprep.mubr.f32.mxu0 0.0
    %v4166 = vand.u32 %v3769, 4294901760
    %v4167 = vsub.f32 %v3769, %v4166
    %4168 = vmatmul.mubr.f32.gmra.mrb[0].mxu0 %v4167
    %v4169 = vpop.f32.mrb[0].mxu0
    %v4170 = vadd.f32 %v4047, %v4169
    %v4171 = vpop.f32.mrb[0].mxu0
    %4172 = vmatprep.mubr.f32.mxu0 0.0
    %v4173 = vand.u32 %v3770, 4294901760
    %v4174 = vsub.f32 %v3770, %v4173
    %4175 = vmatmul.mubr.f32.gmra.mrb[0].mxu0 %v4174
    %v4176 = vpop.f32.mrb[0].mxu0
    %v4177 = vadd.f32 %v4053, %v4176
    %v4178 = vpop.f32.mrb[0].mxu0
    %4179 = vmatprep.mubr.f32.mxu0 0.0
    %v4180 = vand.u32 %v3771, 4294901760
    %v4181 = vsub.f32 %v3771, %v4180
    %4182 = vmatmul.mubr.f32.gmra.mrb[0].mxu0 %v4181
    %v4183 = vpop.f32.mrb[0].mxu0
    %v4184 = vadd.f32 %v4059, %v4183
    %v4185 = vpop.f32.mrb[0].mxu0
    %4186 = vdwg.mxu0
    %4187 = vmatprep.subr.mxu0 0.0
    %v4188 = vand.u32 %v131, 4294901760
    %4189 = vmatpush1.msra.mxu0 %v4188
    %4190 = vmatprep.subr.mxu0 0.0
    %v4191 = vand.u32 %v132, 4294901760
    %4192 = vmatpush1.msra.mxu0 %v4191
    %4193 = vmatprep.subr.mxu0 0.0
    %v4194 = vand.u32 %v133, 4294901760
    %4195 = vmatpush1.msra.mxu0 %v4194
    %4196 = vmatprep.subr.mxu0 0.0
    %v4197 = vand.u32 %v134, 4294901760
    %4198 = vmatpush1.msra.mxu0 %v4197
    %4199 = vmatprep.subr.mxu0 0.0
    %v4200 = vand.u32 %v135, 4294901760
    %4201 = vmatpush1.msra.mxu0 %v4200
    %4202 = vmatprep.subr.mxu0 0.0
    %v4203 = vand.u32 %v136, 4294901760
    %4204 = vmatpush1.msra.mxu0 %v4203
    %4205 = vmatprep.subr.mxu0 0.0
    %v4206 = vand.u32 %v137, 4294901760
    %4207 = vmatpush1.msra.mxu0 %v4206
    %4208 = vmatprep.subr.mxu0 0.0
    %v4209 = vand.u32 %v138, 4294901760
    %4210 = vmatpush1.msra.mxu0 %v4209
    %4211 = vmatprep.subr.mxu0 0.0
    %v4212 = vand.u32 %v139, 4294901760
    %4213 = vmatpush1.msra.mxu0 %v4212
    %4214 = vmatprep.subr.mxu0 0.0
    %v4215 = vand.u32 %v140, 4294901760
    %4216 = vmatpush1.msra.mxu0 %v4215
    %4217 = vmatprep.subr.mxu0 0.0
    %v4218 = vand.u32 %v141, 4294901760
    %4219 = vmatpush1.msra.mxu0 %v4218
    %4220 = vmatprep.subr.mxu0 0.0
    %v4221 = vand.u32 %v142, 4294901760
    %4222 = vmatpush1.msra.mxu0 %v4221
    %4223 = vmatprep.subr.mxu0 0.0
    %v4224 = vand.u32 %v143, 4294901760
    %4225 = vmatpush1.msra.mxu0 %v4224
    %4226 = vmatprep.subr.mxu0 0.0
    %v4227 = vand.u32 %v144, 4294901760
    %4228 = vmatpush1.msra.mxu0 %v4227
    %4229 = vmatprep.subr.mxu0 0.0
    %v4230 = vand.u32 %v145, 4294901760
    %4231 = vmatpush1.msra.mxu0 %v4230
    %4232 = vmatprep.subr.mxu0 0.0
    %v4233 = vand.u32 %v146, 4294901760
    %4234 = vmatpush1.msra.mxu0 %v4233
    %4235 = vmatprep.subr.mxu0 0.0
    %4236 = vmatpush1.msra.mxu0 0.0
    %4237 = vmatprep.subr.mxu0 0.0
    %4238 = vmatpush1.msra.mxu0 0.0
    %4239 = vmatprep.subr.mxu0 0.0
    %4240 = vmatpush1.msra.mxu0 0.0
    %4241 = vmatprep.subr.mxu0 0.0
    %4242 = vmatpush1.msra.mxu0 0.0
    %4243 = vmatprep.subr.mxu0 0.0
    %4244 = vmatpush1.msra.mxu0 0.0
    %4245 = vmatprep.subr.mxu0 0.0
    %4246 = vmatpush1.msra.mxu0 0.0
    %4247 = vmatprep.subr.mxu0 0.0
    %4248 = vmatpush1.msra.mxu0 0.0
    %4249 = vmatprep.subr.mxu0 0.0
    %4250 = vmatpush1.msra.mxu0 0.0
    %4251 = vmatprep.subr.mxu0 0.0
    %4252 = vmatpush1.msra.mxu0 0.0
    %4253 = vmatprep.subr.mxu0 0.0
    %4254 = vmatpush1.msra.mxu0 0.0
    %4255 = vmatprep.subr.mxu0 0.0
    %4256 = vmatpush1.msra.mxu0 0.0
    %4257 = vmatprep.subr.mxu0 0.0
    %4258 = vmatpush1.msra.mxu0 0.0
    %4259 = vmatprep.subr.mxu0 0.0
    %4260 = vmatpush1.msra.mxu0 0.0
    %4261 = vmatprep.subr.mxu0 0.0
    %4262 = vmatpush1.msra.mxu0 0.0
    %4263 = vmatprep.subr.mxu0 0.0
    %4264 = vmatpush1.msra.mxu0 0.0
    %4265 = vmatprep.subr.mxu0 0.0
    %4266 = vmatpush1.msra.mxu0 0.0
    %4267 = vmatprep.mubr.f32.mxu0 0.0
    %v4268 = vand.u32 %v3768, 4294901760
    %v4269 = vsub.f32 %v3768, %v4268
    %v4270 = vand.u32 %v4269, 4294901760
    %4271 = vmatmul.mubr.f32.gmra.mrb[0].mxu0 %v4270
    %v4272 = vpop.f32.mrb[0].mxu0
    %v4273 = vadd.f32 %v4163, %v4272
    %v4274 = vpop.f32.mrb[0].mxu0
    %4275 = vmatprep.mubr.f32.mxu0 0.0
    %v4276 = vand.u32 %v3769, 4294901760
    %v4277 = vsub.f32 %v3769, %v4276
    %v4278 = vand.u32 %v4277, 4294901760
    %4279 = vmatmul.mubr.f32.gmra.mrb[0].mxu0 %v4278
    %v4280 = vpop.f32.mrb[0].mxu0
    %v4281 = vadd.f32 %v4170, %v4280
    %v4282 = vpop.f32.mrb[0].mxu0
    %4283 = vmatprep.mubr.f32.mxu0 0.0
    %v4284 = vand.u32 %v3770, 4294901760
    %v4285 = vsub.f32 %v3770, %v4284
    %v4286 = vand.u32 %v4285, 4294901760
    %4287 = vmatmul.mubr.f32.gmra.mrb[0].mxu0 %v4286
    %v4288 = vpop.f32.mrb[0].mxu0
    %v4289 = vadd.f32 %v4177, %v4288
    %v4290 = vpop.f32.mrb[0].mxu0
    %4291 = vmatprep.mubr.f32.mxu0 0.0
    %v4292 = vand.u32 %v3771, 4294901760
    %v4293 = vsub.f32 %v3771, %v4292
    %v4294 = vand.u32 %v4293, 4294901760
    %4295 = vmatmul.mubr.f32.gmra.mrb[0].mxu0 %v4294
    %v4296 = vpop.f32.mrb[0].mxu0
    %v4297 = vadd.f32 %v4184, %v4296
    %v4298 = vpop.f32.mrb[0].mxu0
    %4299 = vdwg.mxu0
    %4300 = vmatprep.subr.mxu0 0.0
    %v4301 = vand.u32 %v131, 4294901760
    %v4302 = vsub.f32 %v131, %v4301
    %v4303 = vand.u32 %v4302, 4294901760
    %4304 = vmatpush1.msra.mxu0 %v4303
    %4305 = vmatprep.subr.mxu0 0.0
    %v4306 = vand.u32 %v132, 4294901760
    %v4307 = vsub.f32 %v132, %v4306
    %v4308 = vand.u32 %v4307, 4294901760
    %4309 = vmatpush1.msra.mxu0 %v4308
    %4310 = vmatprep.subr.mxu0 0.0
    %v4311 = vand.u32 %v133, 4294901760
    %v4312 = vsub.f32 %v133, %v4311
    %v4313 = vand.u32 %v4312, 4294901760
    %4314 = vmatpush1.msra.mxu0 %v4313
    %4315 = vmatprep.subr.mxu0 0.0
    %v4316 = vand.u32 %v134, 4294901760
    %v4317 = vsub.f32 %v134, %v4316
    %v4318 = vand.u32 %v4317, 4294901760
    %4319 = vmatpush1.msra.mxu0 %v4318
    %4320 = vmatprep.subr.mxu0 0.0
    %v4321 = vand.u32 %v135, 4294901760
    %v4322 = vsub.f32 %v135, %v4321
    %v4323 = vand.u32 %v4322, 4294901760
    %4324 = vmatpush1.msra.mxu0 %v4323
    %4325 = vmatprep.subr.mxu0 0.0
    %v4326 = vand.u32 %v136, 4294901760
    %v4327 = vsub.f32 %v136, %v4326
    %v4328 = vand.u32 %v4327, 4294901760
    %4329 = vmatpush1.msra.mxu0 %v4328
    %4330 = vmatprep.subr.mxu0 0.0
    %v4331 = vand.u32 %v137, 4294901760
    %v4332 = vsub.f32 %v137, %v4331
    %v4333 = vand.u32 %v4332, 4294901760
    %4334 = vmatpush1.msra.mxu0 %v4333
    %4335 = vmatprep.subr.mxu0 0.0
    %v4336 = vand.u32 %v138, 4294901760
    %v4337 = vsub.f32 %v138, %v4336
    %v4338 = vand.u32 %v4337, 4294901760
    %4339 = vmatpush1.msra.mxu0 %v4338
    %4340 = vmatprep.subr.mxu0 0.0
    %v4341 = vand.u32 %v139, 4294901760
    %v4342 = vsub.f32 %v139, %v4341
    %v4343 = vand.u32 %v4342, 4294901760
    %4344 = vmatpush1.msra.mxu0 %v4343
    %4345 = vmatprep.subr.mxu0 0.0
    %v4346 = vand.u32 %v140, 4294901760
    %v4347 = vsub.f32 %v140, %v4346
    %v4348 = vand.u32 %v4347, 4294901760
    %4349 = vmatpush1.msra.mxu0 %v4348
    %4350 = vmatprep.subr.mxu0 0.0
    %v4351 = vand.u32 %v141, 4294901760
    %v4352 = vsub.f32 %v141, %v4351
    %v4353 = vand.u32 %v4352, 4294901760
    %4354 = vmatpush1.msra.mxu0 %v4353
    %4355 = vmatprep.subr.mxu0 0.0
    %v4356 = vand.u32 %v142, 4294901760
    %v4357 = vsub.f32 %v142, %v4356
    %v4358 = vand.u32 %v4357, 4294901760
    %4359 = vmatpush1.msra.mxu0 %v4358
    %4360 = vmatprep.subr.mxu0 0.0
    %v4361 = vand.u32 %v143, 4294901760
    %v4362 = vsub.f32 %v143, %v4361
    %v4363 = vand.u32 %v4362, 4294901760
    %4364 = vmatpush1.msra.mxu0 %v4363
    %4365 = vmatprep.subr.mxu0 0.0
    %v4366 = vand.u32 %v144, 4294901760
    %v4367 = vsub.f32 %v144, %v4366
    %v4368 = vand.u32 %v4367, 4294901760
    %4369 = vmatpush1.msra.mxu0 %v4368
    %4370 = vmatprep.subr.mxu0 0.0
    %v4371 = vand.u32 %v145, 4294901760
    %v4372 = vsub.f32 %v145, %v4371
    %v4373 = vand.u32 %v4372, 4294901760
    %4374 = vmatpush1.msra.mxu0 %v4373
    %4375 = vmatprep.subr.mxu0 0.0
    %v4376 = vand.u32 %v146, 4294901760
    %v4377 = vsub.f32 %v146, %v4376
    %v4378 = vand.u32 %v4377, 4294901760
    %4379 = vmatpush1.msra.mxu0 %v4378
    %4380 = vmatprep.subr.mxu0 0.0
    %4381 = vmatpush1.msra.mxu0 0.0
    %4382 = vmatprep.subr.mxu0 0.0
    %4383 = vmatpush1.msra.mxu0 0.0
    %4384 = vmatprep.subr.mxu0 0.0
    %4385 = vmatpush1.msra.mxu0 0.0
    %4386 = vmatprep.subr.mxu0 0.0
    %4387 = vmatpush1.msra.mxu0 0.0
    %4388 = vmatprep.subr.mxu0 0.0
    %4389 = vmatpush1.msra.mxu0 0.0
    %4390 = vmatprep.subr.mxu0 0.0
    %4391 = vmatpush1.msra.mxu0 0.0
    %4392 = vmatprep.subr.mxu0 0.0
    %4393 = vmatpush1.msra.mxu0 0.0
    %4394 = vmatprep.subr.mxu0 0.0
    %4395 = vmatpush1.msra.mxu0 0.0
    %4396 = vmatprep.subr.mxu0 0.0
    %4397 = vmatpush1.msra.mxu0 0.0
    %4398 = vmatprep.subr.mxu0 0.0
    %4399 = vmatpush1.msra.mxu0 0.0
    %4400 = vmatprep.subr.mxu0 0.0
    %4401 = vmatpush1.msra.mxu0 0.0
    %4402 = vmatprep.subr.mxu0 0.0
    %4403 = vmatpush1.msra.mxu0 0.0
    %4404 = vmatprep.subr.mxu0 0.0
    %4405 = vmatpush1.msra.mxu0 0.0
    %4406 = vmatprep.subr.mxu0 0.0
    %4407 = vmatpush1.msra.mxu0 0.0
    %4408 = vmatprep.subr.mxu0 0.0
    %4409 = vmatpush1.msra.mxu0 0.0
    %4410 = vmatprep.subr.mxu0 0.0
    %4411 = vmatpush1.msra.mxu0 0.0
    %4412 = vmatprep.mubr.f32.mxu0 0.0
    %v4413 = vand.u32 %v3768, 4294901760
    %4414 = vmatmul.mubr.f32.gmra.mrb[0].mxu0 %v4413
    %v4415 = vpop.f32.mrb[0].mxu0
    %v4416 = vadd.f32 %v4273, %v4415
    %v4417 = vpop.f32.mrb[0].mxu0
    %4418 = vmatprep.mubr.f32.mxu0 0.0
    %v4419 = vand.u32 %v3769, 4294901760
    %4420 = vmatmul.mubr.f32.gmra.mrb[0].mxu0 %v4419
    %v4421 = vpop.f32.mrb[0].mxu0
    %v4422 = vadd.f32 %v4281, %v4421
    %v4423 = vpop.f32.mrb[0].mxu0
    %4424 = vmatprep.mubr.f32.mxu0 0.0
    %v4425 = vand.u32 %v3770, 4294901760
    %4426 = vmatmul.mubr.f32.gmra.mrb[0].mxu0 %v4425
    %v4427 = vpop.f32.mrb[0].mxu0
    %v4428 = vadd.f32 %v4289, %v4427
    %v4429 = vpop.f32.mrb[0].mxu0
    %4430 = vmatprep.mubr.f32.mxu0 0.0
    %v4431 = vand.u32 %v3771, 4294901760
    %4432 = vmatmul.mubr.f32.gmra.mrb[0].mxu0 %v4431
    %v4433 = vpop.f32.mrb[0].mxu0
    %v4434 = vadd.f32 %v4297, %v4433
    %v4435 = vpop.f32.mrb[0].mxu0
    %4436 = vdwg.mxu0
    %4437 = vmatprep.subr.mxu0 0.0
    %v4438 = vand.u32 %v131, 4294901760
    %4439 = vmatpush1.msra.mxu0 %v4438
    %4440 = vmatprep.subr.mxu0 0.0
    %v4441 = vand.u32 %v132, 4294901760
    %4442 = vmatpush1.msra.mxu0 %v4441
    %4443 = vmatprep.subr.mxu0 0.0
    %v4444 = vand.u32 %v133, 4294901760
    %4445 = vmatpush1.msra.mxu0 %v4444
    %4446 = vmatprep.subr.mxu0 0.0
    %v4447 = vand.u32 %v134, 4294901760
    %4448 = vmatpush1.msra.mxu0 %v4447
    %4449 = vmatprep.subr.mxu0 0.0
    %v4450 = vand.u32 %v135, 4294901760
    %4451 = vmatpush1.msra.mxu0 %v4450
    %4452 = vmatprep.subr.mxu0 0.0
    %v4453 = vand.u32 %v136, 4294901760
    %4454 = vmatpush1.msra.mxu0 %v4453
    %4455 = vmatprep.subr.mxu0 0.0
    %v4456 = vand.u32 %v137, 4294901760
    %4457 = vmatpush1.msra.mxu0 %v4456
    %4458 = vmatprep.subr.mxu0 0.0
    %v4459 = vand.u32 %v138, 4294901760
    %4460 = vmatpush1.msra.mxu0 %v4459
    %4461 = vmatprep.subr.mxu0 0.0
    %v4462 = vand.u32 %v139, 4294901760
    %4463 = vmatpush1.msra.mxu0 %v4462
    %4464 = vmatprep.subr.mxu0 0.0
    %v4465 = vand.u32 %v140, 4294901760
    %4466 = vmatpush1.msra.mxu0 %v4465
    %4467 = vmatprep.subr.mxu0 0.0
    %v4468 = vand.u32 %v141, 4294901760
    %4469 = vmatpush1.msra.mxu0 %v4468
    %4470 = vmatprep.subr.mxu0 0.0
    %v4471 = vand.u32 %v142, 4294901760
    %4472 = vmatpush1.msra.mxu0 %v4471
    %4473 = vmatprep.subr.mxu0 0.0
    %v4474 = vand.u32 %v143, 4294901760
    %4475 = vmatpush1.msra.mxu0 %v4474
    %4476 = vmatprep.subr.mxu0 0.0
    %v4477 = vand.u32 %v144, 4294901760
    %4478 = vmatpush1.msra.mxu0 %v4477
    %4479 = vmatprep.subr.mxu0 0.0
    %v4480 = vand.u32 %v145, 4294901760
    %4481 = vmatpush1.msra.mxu0 %v4480
    %4482 = vmatprep.subr.mxu0 0.0
    %v4483 = vand.u32 %v146, 4294901760
    %4484 = vmatpush1.msra.mxu0 %v4483
    %4485 = vmatprep.subr.mxu0 0.0
    %4486 = vmatpush1.msra.mxu0 0.0
    %4487 = vmatprep.subr.mxu0 0.0
    %4488 = vmatpush1.msra.mxu0 0.0
    %4489 = vmatprep.subr.mxu0 0.0
    %4490 = vmatpush1.msra.mxu0 0.0
    %4491 = vmatprep.subr.mxu0 0.0
    %4492 = vmatpush1.msra.mxu0 0.0
    %4493 = vmatprep.subr.mxu0 0.0
    %4494 = vmatpush1.msra.mxu0 0.0
    %4495 = vmatprep.subr.mxu0 0.0
    %4496 = vmatpush1.msra.mxu0 0.0
    %4497 = vmatprep.subr.mxu0 0.0
    %4498 = vmatpush1.msra.mxu0 0.0
    %4499 = vmatprep.subr.mxu0 0.0
    %4500 = vmatpush1.msra.mxu0 0.0
    %4501 = vmatprep.subr.mxu0 0.0
    %4502 = vmatpush1.msra.mxu0 0.0
    %4503 = vmatprep.subr.mxu0 0.0
    %4504 = vmatpush1.msra.mxu0 0.0
    %4505 = vmatprep.subr.mxu0 0.0
    %4506 = vmatpush1.msra.mxu0 0.0
    %4507 = vmatprep.subr.mxu0 0.0
    %4508 = vmatpush1.msra.mxu0 0.0
    %4509 = vmatprep.subr.mxu0 0.0
    %4510 = vmatpush1.msra.mxu0 0.0
    %4511 = vmatprep.subr.mxu0 0.0
    %4512 = vmatpush1.msra.mxu0 0.0
    %4513 = vmatprep.subr.mxu0 0.0
    %4514 = vmatpush1.msra.mxu0 0.0
    %4515 = vmatprep.subr.mxu0 0.0
    %4516 = vmatpush1.msra.mxu0 0.0
    %4517 = vmatprep.mubr.f32.mxu0 0.0
    %v4518 = vand.u32 %v3768, 4294901760
    %4519 = vmatmul.mubr.f32.gmra.mrb[0].mxu0 %v4518
    %v4520 = vpop.f32.mrb[0].mxu0
    %v4521 = vadd.f32 %v4416, %v4520
    %v4522 = vpop.f32.mrb[0].mxu0
    %4523 = vmatprep.mubr.f32.mxu0 0.0
    %v4524 = vand.u32 %v3769, 4294901760
    %4525 = vmatmul.mubr.f32.gmra.mrb[0].mxu0 %v4524
    %v4526 = vpop.f32.mrb[0].mxu0
    %v4527 = vadd.f32 %v4422, %v4526
    %v4528 = vpop.f32.mrb[0].mxu0
    %4529 = vmatprep.mubr.f32.mxu0 0.0
    %v4530 = vand.u32 %v3770, 4294901760
    %4531 = vmatmul.mubr.f32.gmra.mrb[0].mxu0 %v4530
    %v4532 = vpop.f32.mrb[0].mxu0
    %v4533 = vadd.f32 %v4428, %v4532
    %v4534 = vpop.f32.mrb[0].mxu0
    %4535 = vmatprep.mubr.f32.mxu0 0.0
    %v4536 = vand.u32 %v3771, 4294901760
    %4537 = vmatmul.mubr.f32.gmra.mrb[0].mxu0 %v4536
    %v4538 = vpop.f32.mrb[0].mxu0
    %v4539 = vadd.f32 %v4434, %v4538
    %v4540 = vpop.f32.mrb[0].mxu0
    %4541 = vdwg.mxu0
    %v4542 = vadd.f32 %v4521, %v4527
    %v4543 = vadd.f32 %v4542, %v4533
    %v4544 = vadd.f32 %v4543, %v4539
    %v4545 = vrot.slane %v4544, 4
    %v4546 = vadd.f32 %v4544, %v4545
    %v4547 = vrot.slane %v4546, 2
    %v4548 = vadd.f32 %v4546, %v4547
    %v4549 = vrot.slane %v4548, 1
    %v4550 = vadd.f32 %v4548, %v4549
    %v4551 = vrcp.pop 512.0
    %v4552 = vmul.f32 %v4550, %v4551
    %v4553 = vsub.f32 %v3768, %v4552
    %v4554 = vsub.f32 %v3769, %v4552
    %v4555 = vsub.f32 %v3770, %v4552
    %v4556 = vsub.f32 %v3771, %v4552
    %v4557 = vmul.f32 %v4553, %v4553
    %v4558 = vmul.f32 %v4554, %v4554
    %v4559 = vmul.f32 %v4555, %v4555
    %v4560 = vmul.f32 %v4556, %v4556
    %4561 = vmatprep.subr.mxu0 0.0
    %v4562 = vand.u32 %v131, 4294901760
    %4563 = vmatpush1.msra.mxu0 %v4562
    %4564 = vmatprep.subr.mxu0 0.0
    %v4565 = vand.u32 %v132, 4294901760
    %4566 = vmatpush1.msra.mxu0 %v4565
    %4567 = vmatprep.subr.mxu0 0.0
    %v4568 = vand.u32 %v133, 4294901760
    %4569 = vmatpush1.msra.mxu0 %v4568
    %4570 = vmatprep.subr.mxu0 0.0
    %v4571 = vand.u32 %v134, 4294901760
    %4572 = vmatpush1.msra.mxu0 %v4571
    %4573 = vmatprep.subr.mxu0 0.0
    %v4574 = vand.u32 %v135, 4294901760
    %4575 = vmatpush1.msra.mxu0 %v4574
    %4576 = vmatprep.subr.mxu0 0.0
    %v4577 = vand.u32 %v136, 4294901760
    %4578 = vmatpush1.msra.mxu0 %v4577
    %4579 = vmatprep.subr.mxu0 0.0
    %v4580 = vand.u32 %v137, 4294901760
    %4581 = vmatpush1.msra.mxu0 %v4580
    %4582 = vmatprep.subr.mxu0 0.0
    %v4583 = vand.u32 %v138, 4294901760
    %4584 = vmatpush1.msra.mxu0 %v4583
    %4585 = vmatprep.subr.mxu0 0.0
    %v4586 = vand.u32 %v139, 4294901760
    %4587 = vmatpush1.msra.mxu0 %v4586
    %4588 = vmatprep.subr.mxu0 0.0
    %v4589 = vand.u32 %v140, 4294901760
    %4590 = vmatpush1.msra.mxu0 %v4589
    %4591 = vmatprep.subr.mxu0 0.0
    %v4592 = vand.u32 %v141, 4294901760
    %4593 = vmatpush1.msra.mxu0 %v4592
    %4594 = vmatprep.subr.mxu0 0.0
    %v4595 = vand.u32 %v142, 4294901760
    %4596 = vmatpush1.msra.mxu0 %v4595
    %4597 = vmatprep.subr.mxu0 0.0
    %v4598 = vand.u32 %v143, 4294901760
    %4599 = vmatpush1.msra.mxu0 %v4598
    %4600 = vmatprep.subr.mxu0 0.0
    %v4601 = vand.u32 %v144, 4294901760
    %4602 = vmatpush1.msra.mxu0 %v4601
    %4603 = vmatprep.subr.mxu0 0.0
    %v4604 = vand.u32 %v145, 4294901760
    %4605 = vmatpush1.msra.mxu0 %v4604
    %4606 = vmatprep.subr.mxu0 0.0
    %v4607 = vand.u32 %v146, 4294901760
    %4608 = vmatpush1.msra.mxu0 %v4607
    %4609 = vmatprep.subr.mxu0 0.0
    %4610 = vmatpush1.msra.mxu0 0.0
    %4611 = vmatprep.subr.mxu0 0.0
    %4612 = vmatpush1.msra.mxu0 0.0
    %4613 = vmatprep.subr.mxu0 0.0
    %4614 = vmatpush1.msra.mxu0 0.0
    %4615 = vmatprep.subr.mxu0 0.0
    %4616 = vmatpush1.msra.mxu0 0.0
    %4617 = vmatprep.subr.mxu0 0.0
    %4618 = vmatpush1.msra.mxu0 0.0
    %4619 = vmatprep.subr.mxu0 0.0
    %4620 = vmatpush1.msra.mxu0 0.0
    %4621 = vmatprep.subr.mxu0 0.0
    %4622 = vmatpush1.msra.mxu0 0.0
    %4623 = vmatprep.subr.mxu0 0.0
    %4624 = vmatpush1.msra.mxu0 0.0
    %4625 = vmatprep.subr.mxu0 0.0
    %4626 = vmatpush1.msra.mxu0 0.0
    %4627 = vmatprep.subr.mxu0 0.0
    %4628 = vmatpush1.msra.mxu0 0.0
    %4629 = vmatprep.subr.mxu0 0.0
    %4630 = vmatpush1.msra.mxu0 0.0
    %4631 = vmatprep.subr.mxu0 0.0
    %4632 = vmatpush1.msra.mxu0 0.0
    %4633 = vmatprep.subr.mxu0 0.0
    %4634 = vmatpush1.msra.mxu0 0.0
    %4635 = vmatprep.subr.mxu0 0.0
    %4636 = vmatpush1.msra.mxu0 0.0
    %4637 = vmatprep.subr.mxu0 0.0
    %4638 = vmatpush1.msra.mxu0 0.0
    %4639 = vmatprep.subr.mxu0 0.0
    %4640 = vmatpush1.msra.mxu0 0.0
    %4641 = vmatprep.mubr.f32.mxu0 0.0
    %v4642 = vand.u32 %v4557, 4294901760
    %v4643 = vsub.f32 %v4557, %v4642
    %v4644 = vand.u32 %v4643, 4294901760
    %v4645 = vsub.f32 %v4643, %v4644
    %v4646 = vand.u32 %v4645, 4294901760
    %4647 = vmatmul.mubr.f32.gmra.mrb[0].mxu0 %v4646
    %v4648 = vpop.f32.mrb[0].mxu0
    %v4649 = vadd.f32 0.0, %v4648
    %v4650 = vpop.f32.mrb[0].mxu0
    %4651 = vmatprep.mubr.f32.mxu0 0.0
    %v4652 = vand.u32 %v4558, 4294901760
    %v4653 = vsub.f32 %v4558, %v4652
    %v4654 = vand.u32 %v4653, 4294901760
    %v4655 = vsub.f32 %v4653, %v4654
    %v4656 = vand.u32 %v4655, 4294901760
    %4657 = vmatmul.mubr.f32.gmra.mrb[0].mxu0 %v4656
    %v4658 = vpop.f32.mrb[0].mxu0
    %v4659 = vadd.f32 0.0, %v4658
    %v4660 = vpop.f32.mrb[0].mxu0
    %4661 = vmatprep.mubr.f32.mxu0 0.0
    %v4662 = vand.u32 %v4559, 4294901760
    %v4663 = vsub.f32 %v4559, %v4662
    %v4664 = vand.u32 %v4663, 4294901760
    %v4665 = vsub.f32 %v4663, %v4664
    %v4666 = vand.u32 %v4665, 4294901760
    %4667 = vmatmul.mubr.f32.gmra.mrb[0].mxu0 %v4666
    %v4668 = vpop.f32.mrb[0].mxu0
    %v4669 = vadd.f32 0.0, %v4668
    %v4670 = vpop.f32.mrb[0].mxu0
    %4671 = vmatprep.mubr.f32.mxu0 0.0
    %v4672 = vand.u32 %v4560, 4294901760
    %v4673 = vsub.f32 %v4560, %v4672
    %v4674 = vand.u32 %v4673, 4294901760
    %v4675 = vsub.f32 %v4673, %v4674
    %v4676 = vand.u32 %v4675, 4294901760
    %4677 = vmatmul.mubr.f32.gmra.mrb[0].mxu0 %v4676
    %v4678 = vpop.f32.mrb[0].mxu0
    %v4679 = vadd.f32 0.0, %v4678
    %v4680 = vpop.f32.mrb[0].mxu0
    %4681 = vdwg.mxu0
    %4682 = vmatprep.subr.mxu0 0.0
    %v4683 = vand.u32 %v131, 4294901760
    %v4684 = vsub.f32 %v131, %v4683
    %v4685 = vand.u32 %v4684, 4294901760
    %v4686 = vsub.f32 %v4684, %v4685
    %v4687 = vand.u32 %v4686, 4294901760
    %4688 = vmatpush1.msra.mxu0 %v4687
    %4689 = vmatprep.subr.mxu0 0.0
    %v4690 = vand.u32 %v132, 4294901760
    %v4691 = vsub.f32 %v132, %v4690
    %v4692 = vand.u32 %v4691, 4294901760
    %v4693 = vsub.f32 %v4691, %v4692
    %v4694 = vand.u32 %v4693, 4294901760
    %4695 = vmatpush1.msra.mxu0 %v4694
    %4696 = vmatprep.subr.mxu0 0.0
    %v4697 = vand.u32 %v133, 4294901760
    %v4698 = vsub.f32 %v133, %v4697
    %v4699 = vand.u32 %v4698, 4294901760
    %v4700 = vsub.f32 %v4698, %v4699
    %v4701 = vand.u32 %v4700, 4294901760
    %4702 = vmatpush1.msra.mxu0 %v4701
    %4703 = vmatprep.subr.mxu0 0.0
    %v4704 = vand.u32 %v134, 4294901760
    %v4705 = vsub.f32 %v134, %v4704
    %v4706 = vand.u32 %v4705, 4294901760
    %v4707 = vsub.f32 %v4705, %v4706
    %v4708 = vand.u32 %v4707, 4294901760
    %4709 = vmatpush1.msra.mxu0 %v4708
    %4710 = vmatprep.subr.mxu0 0.0
    %v4711 = vand.u32 %v135, 4294901760
    %v4712 = vsub.f32 %v135, %v4711
    %v4713 = vand.u32 %v4712, 4294901760
    %v4714 = vsub.f32 %v4712, %v4713
    %v4715 = vand.u32 %v4714, 4294901760
    %4716 = vmatpush1.msra.mxu0 %v4715
    %4717 = vmatprep.subr.mxu0 0.0
    %v4718 = vand.u32 %v136, 4294901760
    %v4719 = vsub.f32 %v136, %v4718
    %v4720 = vand.u32 %v4719, 4294901760
    %v4721 = vsub.f32 %v4719, %v4720
    %v4722 = vand.u32 %v4721, 4294901760
    %4723 = vmatpush1.msra.mxu0 %v4722
    %4724 = vmatprep.subr.mxu0 0.0
    %v4725 = vand.u32 %v137, 4294901760
    %v4726 = vsub.f32 %v137, %v4725
    %v4727 = vand.u32 %v4726, 4294901760
    %v4728 = vsub.f32 %v4726, %v4727
    %v4729 = vand.u32 %v4728, 4294901760
    %4730 = vmatpush1.msra.mxu0 %v4729
    %4731 = vmatprep.subr.mxu0 0.0
    %v4732 = vand.u32 %v138, 4294901760
    %v4733 = vsub.f32 %v138, %v4732
    %v4734 = vand.u32 %v4733, 4294901760
    %v4735 = vsub.f32 %v4733, %v4734
    %v4736 = vand.u32 %v4735, 4294901760
    %4737 = vmatpush1.msra.mxu0 %v4736
    %4738 = vmatprep.subr.mxu0 0.0
    %v4739 = vand.u32 %v139, 4294901760
    %v4740 = vsub.f32 %v139, %v4739
    %v4741 = vand.u32 %v4740, 4294901760
    %v4742 = vsub.f32 %v4740, %v4741
    %v4743 = vand.u32 %v4742, 4294901760
    %4744 = vmatpush1.msra.mxu0 %v4743
    %4745 = vmatprep.subr.mxu0 0.0
    %v4746 = vand.u32 %v140, 4294901760
    %v4747 = vsub.f32 %v140, %v4746
    %v4748 = vand.u32 %v4747, 4294901760
    %v4749 = vsub.f32 %v4747, %v4748
    %v4750 = vand.u32 %v4749, 4294901760
    %4751 = vmatpush1.msra.mxu0 %v4750
    %4752 = vmatprep.subr.mxu0 0.0
    %v4753 = vand.u32 %v141, 4294901760
    %v4754 = vsub.f32 %v141, %v4753
    %v4755 = vand.u32 %v4754, 4294901760
    %v4756 = vsub.f32 %v4754, %v4755
    %v4757 = vand.u32 %v4756, 4294901760
    %4758 = vmatpush1.msra.mxu0 %v4757
    %4759 = vmatprep.subr.mxu0 0.0
    %v4760 = vand.u32 %v142, 4294901760
    %v4761 = vsub.f32 %v142, %v4760
    %v4762 = vand.u32 %v4761, 4294901760
    %v4763 = vsub.f32 %v4761, %v4762
    %v4764 = vand.u32 %v4763, 4294901760
    %4765 = vmatpush1.msra.mxu0 %v4764
    %4766 = vmatprep.subr.mxu0 0.0
    %v4767 = vand.u32 %v143, 4294901760
    %v4768 = vsub.f32 %v143, %v4767
    %v4769 = vand.u32 %v4768, 4294901760
    %v4770 = vsub.f32 %v4768, %v4769
    %v4771 = vand.u32 %v4770, 4294901760
    %4772 = vmatpush1.msra.mxu0 %v4771
    %4773 = vmatprep.subr.mxu0 0.0
    %v4774 = vand.u32 %v144, 4294901760
    %v4775 = vsub.f32 %v144, %v4774
    %v4776 = vand.u32 %v4775, 4294901760
    %v4777 = vsub.f32 %v4775, %v4776
    %v4778 = vand.u32 %v4777, 4294901760
    %4779 = vmatpush1.msra.mxu0 %v4778
    %4780 = vmatprep.subr.mxu0 0.0
    %v4781 = vand.u32 %v145, 4294901760
    %v4782 = vsub.f32 %v145, %v4781
    %v4783 = vand.u32 %v4782, 4294901760
    %v4784 = vsub.f32 %v4782, %v4783
    %v4785 = vand.u32 %v4784, 4294901760
    %4786 = vmatpush1.msra.mxu0 %v4785
    %4787 = vmatprep.subr.mxu0 0.0
    %v4788 = vand.u32 %v146, 4294901760
    %v4789 = vsub.f32 %v146, %v4788
    %v4790 = vand.u32 %v4789, 4294901760
    %v4791 = vsub.f32 %v4789, %v4790
    %v4792 = vand.u32 %v4791, 4294901760
    %4793 = vmatpush1.msra.mxu0 %v4792
    %4794 = vmatprep.subr.mxu0 0.0
    %4795 = vmatpush1.msra.mxu0 0.0
    %4796 = vmatprep.subr.mxu0 0.0
    %4797 = vmatpush1.msra.mxu0 0.0
    %4798 = vmatprep.subr.mxu0 0.0
    %4799 = vmatpush1.msra.mxu0 0.0
    %4800 = vmatprep.subr.mxu0 0.0
    %4801 = vmatpush1.msra.mxu0 0.0
    %4802 = vmatprep.subr.mxu0 0.0
    %4803 = vmatpush1.msra.mxu0 0.0
    %4804 = vmatprep.subr.mxu0 0.0
    %4805 = vmatpush1.msra.mxu0 0.0
    %4806 = vmatprep.subr.mxu0 0.0
    %4807 = vmatpush1.msra.mxu0 0.0
    %4808 = vmatprep.subr.mxu0 0.0
    %4809 = vmatpush1.msra.mxu0 0.0
    %4810 = vmatprep.subr.mxu0 0.0
    %4811 = vmatpush1.msra.mxu0 0.0
    %4812 = vmatprep.subr.mxu0 0.0
    %4813 = vmatpush1.msra.mxu0 0.0
    %4814 = vmatprep.subr.mxu0 0.0
    %4815 = vmatpush1.msra.mxu0 0.0
    %4816 = vmatprep.subr.mxu0 0.0
    %4817 = vmatpush1.msra.mxu0 0.0
    %4818 = vmatprep.subr.mxu0 0.0
    %4819 = vmatpush1.msra.mxu0 0.0
    %4820 = vmatprep.subr.mxu0 0.0
    %4821 = vmatpush1.msra.mxu0 0.0
    %4822 = vmatprep.subr.mxu0 0.0
    %4823 = vmatpush1.msra.mxu0 0.0
    %4824 = vmatprep.subr.mxu0 0.0
    %4825 = vmatpush1.msra.mxu0 0.0
    %4826 = vmatprep.mubr.f32.mxu0 0.0
    %v4827 = vand.u32 %v4557, 4294901760
    %4828 = vmatmul.mubr.f32.gmra.mrb[0].mxu0 %v4827
    %v4829 = vpop.f32.mrb[0].mxu0
    %v4830 = vadd.f32 %v4649, %v4829
    %v4831 = vpop.f32.mrb[0].mxu0
    %4832 = vmatprep.mubr.f32.mxu0 0.0
    %v4833 = vand.u32 %v4558, 4294901760
    %4834 = vmatmul.mubr.f32.gmra.mrb[0].mxu0 %v4833
    %v4835 = vpop.f32.mrb[0].mxu0
    %v4836 = vadd.f32 %v4659, %v4835
    %v4837 = vpop.f32.mrb[0].mxu0
    %4838 = vmatprep.mubr.f32.mxu0 0.0
    %v4839 = vand.u32 %v4559, 4294901760
    %4840 = vmatmul.mubr.f32.gmra.mrb[0].mxu0 %v4839
    %v4841 = vpop.f32.mrb[0].mxu0
    %v4842 = vadd.f32 %v4669, %v4841
    %v4843 = vpop.f32.mrb[0].mxu0
    %4844 = vmatprep.mubr.f32.mxu0 0.0
    %v4845 = vand.u32 %v4560, 4294901760
    %4846 = vmatmul.mubr.f32.gmra.mrb[0].mxu0 %v4845
    %v4847 = vpop.f32.mrb[0].mxu0
    %v4848 = vadd.f32 %v4679, %v4847
    %v4849 = vpop.f32.mrb[0].mxu0
    %4850 = vdwg.mxu0
    %4851 = vmatprep.subr.mxu0 0.0
    %v4852 = vand.u32 %v131, 4294901760
    %v4853 = vsub.f32 %v131, %v4852
    %4854 = vmatpush1.msra.mxu0 %v4853
    %4855 = vmatprep.subr.mxu0 0.0
    %v4856 = vand.u32 %v132, 4294901760
    %v4857 = vsub.f32 %v132, %v4856
    %4858 = vmatpush1.msra.mxu0 %v4857
    %4859 = vmatprep.subr.mxu0 0.0
    %v4860 = vand.u32 %v133, 4294901760
    %v4861 = vsub.f32 %v133, %v4860
    %4862 = vmatpush1.msra.mxu0 %v4861
    %4863 = vmatprep.subr.mxu0 0.0
    %v4864 = vand.u32 %v134, 4294901760
    %v4865 = vsub.f32 %v134, %v4864
    %4866 = vmatpush1.msra.mxu0 %v4865
    %4867 = vmatprep.subr.mxu0 0.0
    %v4868 = vand.u32 %v135, 4294901760
    %v4869 = vsub.f32 %v135, %v4868
    %4870 = vmatpush1.msra.mxu0 %v4869
    %4871 = vmatprep.subr.mxu0 0.0
    %v4872 = vand.u32 %v136, 4294901760
    %v4873 = vsub.f32 %v136, %v4872
    %4874 = vmatpush1.msra.mxu0 %v4873
    %4875 = vmatprep.subr.mxu0 0.0
    %v4876 = vand.u32 %v137, 4294901760
    %v4877 = vsub.f32 %v137, %v4876
    %4878 = vmatpush1.msra.mxu0 %v4877
    %4879 = vmatprep.subr.mxu0 0.0
    %v4880 = vand.u32 %v138, 4294901760
    %v4881 = vsub.f32 %v138, %v4880
    %4882 = vmatpush1.msra.mxu0 %v4881
    %4883 = vmatprep.subr.mxu0 0.0
    %v4884 = vand.u32 %v139, 4294901760
    %v4885 = vsub.f32 %v139, %v4884
    %4886 = vmatpush1.msra.mxu0 %v4885
    %4887 = vmatprep.subr.mxu0 0.0
    %v4888 = vand.u32 %v140, 4294901760
    %v4889 = vsub.f32 %v140, %v4888
    %4890 = vmatpush1.msra.mxu0 %v4889
    %4891 = vmatprep.subr.mxu0 0.0
    %v4892 = vand.u32 %v141, 4294901760
    %v4893 = vsub.f32 %v141, %v4892
    %4894 = vmatpush1.msra.mxu0 %v4893
    %4895 = vmatprep.subr.mxu0 0.0
    %v4896 = vand.u32 %v142, 4294901760
    %v4897 = vsub.f32 %v142, %v4896
    %4898 = vmatpush1.msra.mxu0 %v4897
    %4899 = vmatprep.subr.mxu0 0.0
    %v4900 = vand.u32 %v143, 4294901760
    %v4901 = vsub.f32 %v143, %v4900
    %4902 = vmatpush1.msra.mxu0 %v4901
    %4903 = vmatprep.subr.mxu0 0.0
    %v4904 = vand.u32 %v144, 4294901760
    %v4905 = vsub.f32 %v144, %v4904
    %4906 = vmatpush1.msra.mxu0 %v4905
    %4907 = vmatprep.subr.mxu0 0.0
    %v4908 = vand.u32 %v145, 4294901760
    %v4909 = vsub.f32 %v145, %v4908
    %4910 = vmatpush1.msra.mxu0 %v4909
    %4911 = vmatprep.subr.mxu0 0.0
    %v4912 = vand.u32 %v146, 4294901760
    %v4913 = vsub.f32 %v146, %v4912
    %4914 = vmatpush1.msra.mxu0 %v4913
    %4915 = vmatprep.subr.mxu0 0.0
    %4916 = vmatpush1.msra.mxu0 0.0
    %4917 = vmatprep.subr.mxu0 0.0
    %4918 = vmatpush1.msra.mxu0 0.0
    %4919 = vmatprep.subr.mxu0 0.0
    %4920 = vmatpush1.msra.mxu0 0.0
    %4921 = vmatprep.subr.mxu0 0.0
    %4922 = vmatpush1.msra.mxu0 0.0
    %4923 = vmatprep.subr.mxu0 0.0
    %4924 = vmatpush1.msra.mxu0 0.0
    %4925 = vmatprep.subr.mxu0 0.0
    %4926 = vmatpush1.msra.mxu0 0.0
    %4927 = vmatprep.subr.mxu0 0.0
    %4928 = vmatpush1.msra.mxu0 0.0
    %4929 = vmatprep.subr.mxu0 0.0
    %4930 = vmatpush1.msra.mxu0 0.0
    %4931 = vmatprep.subr.mxu0 0.0
    %4932 = vmatpush1.msra.mxu0 0.0
    %4933 = vmatprep.subr.mxu0 0.0
    %4934 = vmatpush1.msra.mxu0 0.0
    %4935 = vmatprep.subr.mxu0 0.0
    %4936 = vmatpush1.msra.mxu0 0.0
    %4937 = vmatprep.subr.mxu0 0.0
    %4938 = vmatpush1.msra.mxu0 0.0
    %4939 = vmatprep.subr.mxu0 0.0
    %4940 = vmatpush1.msra.mxu0 0.0
    %4941 = vmatprep.subr.mxu0 0.0
    %4942 = vmatpush1.msra.mxu0 0.0
    %4943 = vmatprep.subr.mxu0 0.0
    %4944 = vmatpush1.msra.mxu0 0.0
    %4945 = vmatprep.subr.mxu0 0.0
    %4946 = vmatpush1.msra.mxu0 0.0
    %4947 = vmatprep.mubr.f32.mxu0 0.0
    %v4948 = vand.u32 %v4557, 4294901760
    %v4949 = vsub.f32 %v4557, %v4948
    %4950 = vmatmul.mubr.f32.gmra.mrb[0].mxu0 %v4949
    %v4951 = vpop.f32.mrb[0].mxu0
    %v4952 = vadd.f32 %v4830, %v4951
    %v4953 = vpop.f32.mrb[0].mxu0
    %4954 = vmatprep.mubr.f32.mxu0 0.0
    %v4955 = vand.u32 %v4558, 4294901760
    %v4956 = vsub.f32 %v4558, %v4955
    %4957 = vmatmul.mubr.f32.gmra.mrb[0].mxu0 %v4956
    %v4958 = vpop.f32.mrb[0].mxu0
    %v4959 = vadd.f32 %v4836, %v4958
    %v4960 = vpop.f32.mrb[0].mxu0
    %4961 = vmatprep.mubr.f32.mxu0 0.0
    %v4962 = vand.u32 %v4559, 4294901760
    %v4963 = vsub.f32 %v4559, %v4962
    %4964 = vmatmul.mubr.f32.gmra.mrb[0].mxu0 %v4963
    %v4965 = vpop.f32.mrb[0].mxu0
    %v4966 = vadd.f32 %v4842, %v4965
    %v4967 = vpop.f32.mrb[0].mxu0
    %4968 = vmatprep.mubr.f32.mxu0 0.0
    %v4969 = vand.u32 %v4560, 4294901760
    %v4970 = vsub.f32 %v4560, %v4969
    %4971 = vmatmul.mubr.f32.gmra.mrb[0].mxu0 %v4970
    %v4972 = vpop.f32.mrb[0].mxu0
    %v4973 = vadd.f32 %v4848, %v4972
    %v4974 = vpop.f32.mrb[0].mxu0
    %4975 = vdwg.mxu0
    %4976 = vmatprep.subr.mxu0 0.0
    %v4977 = vand.u32 %v131, 4294901760
    %4978 = vmatpush1.msra.mxu0 %v4977
    %4979 = vmatprep.subr.mxu0 0.0
    %v4980 = vand.u32 %v132, 4294901760
    %4981 = vmatpush1.msra.mxu0 %v4980
    %4982 = vmatprep.subr.mxu0 0.0
    %v4983 = vand.u32 %v133, 4294901760
    %4984 = vmatpush1.msra.mxu0 %v4983
    %4985 = vmatprep.subr.mxu0 0.0
    %v4986 = vand.u32 %v134, 4294901760
    %4987 = vmatpush1.msra.mxu0 %v4986
    %4988 = vmatprep.subr.mxu0 0.0
    %v4989 = vand.u32 %v135, 4294901760
    %4990 = vmatpush1.msra.mxu0 %v4989
    %4991 = vmatprep.subr.mxu0 0.0
    %v4992 = vand.u32 %v136, 4294901760
    %4993 = vmatpush1.msra.mxu0 %v4992
    %4994 = vmatprep.subr.mxu0 0.0
    %v4995 = vand.u32 %v137, 4294901760
    %4996 = vmatpush1.msra.mxu0 %v4995
    %4997 = vmatprep.subr.mxu0 0.0
    %v4998 = vand.u32 %v138, 4294901760
    %4999 = vmatpush1.msra.mxu0 %v4998
    %5000 = vmatprep.subr.mxu0 0.0
    %v5001 = vand.u32 %v139, 4294901760
    %5002 = vmatpush1.msra.mxu0 %v5001
    %5003 = vmatprep.subr.mxu0 0.0
    %v5004 = vand.u32 %v140, 4294901760
    %5005 = vmatpush1.msra.mxu0 %v5004
    %5006 = vmatprep.subr.mxu0 0.0
    %v5007 = vand.u32 %v141, 4294901760
    %5008 = vmatpush1.msra.mxu0 %v5007
    %5009 = vmatprep.subr.mxu0 0.0
    %v5010 = vand.u32 %v142, 4294901760
    %5011 = vmatpush1.msra.mxu0 %v5010
    %5012 = vmatprep.subr.mxu0 0.0
    %v5013 = vand.u32 %v143, 4294901760
    %5014 = vmatpush1.msra.mxu0 %v5013
    %5015 = vmatprep.subr.mxu0 0.0
    %v5016 = vand.u32 %v144, 4294901760
    %5017 = vmatpush1.msra.mxu0 %v5016
    %5018 = vmatprep.subr.mxu0 0.0
    %v5019 = vand.u32 %v145, 4294901760
    %5020 = vmatpush1.msra.mxu0 %v5019
    %5021 = vmatprep.subr.mxu0 0.0
    %v5022 = vand.u32 %v146, 4294901760
    %5023 = vmatpush1.msra.mxu0 %v5022
    %5024 = vmatprep.subr.mxu0 0.0
    %5025 = vmatpush1.msra.mxu0 0.0
    %5026 = vmatprep.subr.mxu0 0.0
    %5027 = vmatpush1.msra.mxu0 0.0
    %5028 = vmatprep.subr.mxu0 0.0
    %5029 = vmatpush1.msra.mxu0 0.0
    %5030 = vmatprep.subr.mxu0 0.0
    %5031 = vmatpush1.msra.mxu0 0.0
    %5032 = vmatprep.subr.mxu0 0.0
    %5033 = vmatpush1.msra.mxu0 0.0
    %5034 = vmatprep.subr.mxu0 0.0
    %5035 = vmatpush1.msra.mxu0 0.0
    %5036 = vmatprep.subr.mxu0 0.0
    %5037 = vmatpush1.msra.mxu0 0.0
    %5038 = vmatprep.subr.mxu0 0.0
    %5039 = vmatpush1.msra.mxu0 0.0
    %5040 = vmatprep.subr.mxu0 0.0
    %5041 = vmatpush1.msra.mxu0 0.0
    %5042 = vmatprep.subr.mxu0 0.0
    %5043 = vmatpush1.msra.mxu0 0.0
    %5044 = vmatprep.subr.mxu0 0.0
    %5045 = vmatpush1.msra.mxu0 0.0
    %5046 = vmatprep.subr.mxu0 0.0
    %5047 = vmatpush1.msra.mxu0 0.0
    %5048 = vmatprep.subr.mxu0 0.0
    %5049 = vmatpush1.msra.mxu0 0.0
    %5050 = vmatprep.subr.mxu0 0.0
    %5051 = vmatpush1.msra.mxu0 0.0
    %5052 = vmatprep.subr.mxu0 0.0
    %5053 = vmatpush1.msra.mxu0 0.0
    %5054 = vmatprep.subr.mxu0 0.0
    %5055 = vmatpush1.msra.mxu0 0.0
    %5056 = vmatprep.mubr.f32.mxu0 0.0
    %v5057 = vand.u32 %v4557, 4294901760
    %v5058 = vsub.f32 %v4557, %v5057
    %v5059 = vand.u32 %v5058, 4294901760
    %5060 = vmatmul.mubr.f32.gmra.mrb[0].mxu0 %v5059
    %v5061 = vpop.f32.mrb[0].mxu0
    %v5062 = vadd.f32 %v4952, %v5061
    %v5063 = vpop.f32.mrb[0].mxu0
    %5064 = vmatprep.mubr.f32.mxu0 0.0
    %v5065 = vand.u32 %v4558, 4294901760
    %v5066 = vsub.f32 %v4558, %v5065
    %v5067 = vand.u32 %v5066, 4294901760
    %5068 = vmatmul.mubr.f32.gmra.mrb[0].mxu0 %v5067
    %v5069 = vpop.f32.mrb[0].mxu0
    %v5070 = vadd.f32 %v4959, %v5069
    %v5071 = vpop.f32.mrb[0].mxu0
    %5072 = vmatprep.mubr.f32.mxu0 0.0
    %v5073 = vand.u32 %v4559, 4294901760
    %v5074 = vsub.f32 %v4559, %v5073
    %v5075 = vand.u32 %v5074, 4294901760
    %5076 = vmatmul.mubr.f32.gmra.mrb[0].mxu0 %v5075
    %v5077 = vpop.f32.mrb[0].mxu0
    %v5078 = vadd.f32 %v4966, %v5077
    %v5079 = vpop.f32.mrb[0].mxu0
    %5080 = vmatprep.mubr.f32.mxu0 0.0
    %v5081 = vand.u32 %v4560, 4294901760
    %v5082 = vsub.f32 %v4560, %v5081
    %v5083 = vand.u32 %v5082, 4294901760
    %5084 = vmatmul.mubr.f32.gmra.mrb[0].mxu0 %v5083
    %v5085 = vpop.f32.mrb[0].mxu0
    %v5086 = vadd.f32 %v4973, %v5085
    %v5087 = vpop.f32.mrb[0].mxu0
    %5088 = vdwg.mxu0
    %5089 = vmatprep.subr.mxu0 0.0
    %v5090 = vand.u32 %v131, 4294901760
    %v5091 = vsub.f32 %v131, %v5090
    %v5092 = vand.u32 %v5091, 4294901760
    %5093 = vmatpush1.msra.mxu0 %v5092
    %5094 = vmatprep.subr.mxu0 0.0
    %v5095 = vand.u32 %v132, 4294901760
    %v5096 = vsub.f32 %v132, %v5095
    %v5097 = vand.u32 %v5096, 4294901760
    %5098 = vmatpush1.msra.mxu0 %v5097
    %5099 = vmatprep.subr.mxu0 0.0
    %v5100 = vand.u32 %v133, 4294901760
    %v5101 = vsub.f32 %v133, %v5100
    %v5102 = vand.u32 %v5101, 4294901760
    %5103 = vmatpush1.msra.mxu0 %v5102
    %5104 = vmatprep.subr.mxu0 0.0
    %v5105 = vand.u32 %v134, 4294901760
    %v5106 = vsub.f32 %v134, %v5105
    %v5107 = vand.u32 %v5106, 4294901760
    %5108 = vmatpush1.msra.mxu0 %v5107
    %5109 = vmatprep.subr.mxu0 0.0
    %v5110 = vand.u32 %v135, 4294901760
    %v5111 = vsub.f32 %v135, %v5110
    %v5112 = vand.u32 %v5111, 4294901760
    %5113 = vmatpush1.msra.mxu0 %v5112
    %5114 = vmatprep.subr.mxu0 0.0
    %v5115 = vand.u32 %v136, 4294901760
    %v5116 = vsub.f32 %v136, %v5115
    %v5117 = vand.u32 %v5116, 4294901760
    %5118 = vmatpush1.msra.mxu0 %v5117
    %5119 = vmatprep.subr.mxu0 0.0
    %v5120 = vand.u32 %v137, 4294901760
    %v5121 = vsub.f32 %v137, %v5120
    %v5122 = vand.u32 %v5121, 4294901760
    %5123 = vmatpush1.msra.mxu0 %v5122
    %5124 = vmatprep.subr.mxu0 0.0
    %v5125 = vand.u32 %v138, 4294901760
    %v5126 = vsub.f32 %v138, %v5125
    %v5127 = vand.u32 %v5126, 4294901760
    %5128 = vmatpush1.msra.mxu0 %v5127
    %5129 = vmatprep.subr.mxu0 0.0
    %v5130 = vand.u32 %v139, 4294901760
    %v5131 = vsub.f32 %v139, %v5130
    %v5132 = vand.u32 %v5131, 4294901760
    %5133 = vmatpush1.msra.mxu0 %v5132
    %5134 = vmatprep.subr.mxu0 0.0
    %v5135 = vand.u32 %v140, 4294901760
    %v5136 = vsub.f32 %v140, %v5135
    %v5137 = vand.u32 %v5136, 4294901760
    %5138 = vmatpush1.msra.mxu0 %v5137
    %5139 = vmatprep.subr.mxu0 0.0
    %v5140 = vand.u32 %v141, 4294901760
    %v5141 = vsub.f32 %v141, %v5140
    %v5142 = vand.u32 %v5141, 4294901760
    %5143 = vmatpush1.msra.mxu0 %v5142
    %5144 = vmatprep.subr.mxu0 0.0
    %v5145 = vand.u32 %v142, 4294901760
    %v5146 = vsub.f32 %v142, %v5145
    %v5147 = vand.u32 %v5146, 4294901760
    %5148 = vmatpush1.msra.mxu0 %v5147
    %5149 = vmatprep.subr.mxu0 0.0
    %v5150 = vand.u32 %v143, 4294901760
    %v5151 = vsub.f32 %v143, %v5150
    %v5152 = vand.u32 %v5151, 4294901760
    %5153 = vmatpush1.msra.mxu0 %v5152
    %5154 = vmatprep.subr.mxu0 0.0
    %v5155 = vand.u32 %v144, 4294901760
    %v5156 = vsub.f32 %v144, %v5155
    %v5157 = vand.u32 %v5156, 4294901760
    %5158 = vmatpush1.msra.mxu0 %v5157
    %5159 = vmatprep.subr.mxu0 0.0
    %v5160 = vand.u32 %v145, 4294901760
    %v5161 = vsub.f32 %v145, %v5160
    %v5162 = vand.u32 %v5161, 4294901760
    %5163 = vmatpush1.msra.mxu0 %v5162
    %5164 = vmatprep.subr.mxu0 0.0
    %v5165 = vand.u32 %v146, 4294901760
    %v5166 = vsub.f32 %v146, %v5165
    %v5167 = vand.u32 %v5166, 4294901760
    %5168 = vmatpush1.msra.mxu0 %v5167
    %5169 = vmatprep.subr.mxu0 0.0
    %5170 = vmatpush1.msra.mxu0 0.0
    %5171 = vmatprep.subr.mxu0 0.0
    %5172 = vmatpush1.msra.mxu0 0.0
    %5173 = vmatprep.subr.mxu0 0.0
    %5174 = vmatpush1.msra.mxu0 0.0
    %5175 = vmatprep.subr.mxu0 0.0
    %5176 = vmatpush1.msra.mxu0 0.0
    %5177 = vmatprep.subr.mxu0 0.0
    %5178 = vmatpush1.msra.mxu0 0.0
    %5179 = vmatprep.subr.mxu0 0.0
    %5180 = vmatpush1.msra.mxu0 0.0
    %5181 = vmatprep.subr.mxu0 0.0
    %5182 = vmatpush1.msra.mxu0 0.0
    %5183 = vmatprep.subr.mxu0 0.0
    %5184 = vmatpush1.msra.mxu0 0.0
    %5185 = vmatprep.subr.mxu0 0.0
    %5186 = vmatpush1.msra.mxu0 0.0
    %5187 = vmatprep.subr.mxu0 0.0
    %5188 = vmatpush1.msra.mxu0 0.0
    %5189 = vmatprep.subr.mxu0 0.0
    %5190 = vmatpush1.msra.mxu0 0.0
    %5191 = vmatprep.subr.mxu0 0.0
    %5192 = vmatpush1.msra.mxu0 0.0
    %5193 = vmatprep.subr.mxu0 0.0
    %5194 = vmatpush1.msra.mxu0 0.0
    %5195 = vmatprep.subr.mxu0 0.0
    %5196 = vmatpush1.msra.mxu0 0.0
    %5197 = vmatprep.subr.mxu0 0.0
    %5198 = vmatpush1.msra.mxu0 0.0
    %5199 = vmatprep.subr.mxu0 0.0
    %5200 = vmatpush1.msra.mxu0 0.0
    %5201 = vmatprep.mubr.f32.mxu0 0.0
    %v5202 = vand.u32 %v4557, 4294901760
    %5203 = vmatmul.mubr.f32.gmra.mrb[0].mxu0 %v5202
    %v5204 = vpop.f32.mrb[0].mxu0
    %v5205 = vadd.f32 %v5062, %v5204
    %v5206 = vpop.f32.mrb[0].mxu0
    %5207 = vmatprep.mubr.f32.mxu0 0.0
    %v5208 = vand.u32 %v4558, 4294901760
    %5209 = vmatmul.mubr.f32.gmra.mrb[0].mxu0 %v5208
    %v5210 = vpop.f32.mrb[0].mxu0
    %v5211 = vadd.f32 %v5070, %v5210
    %v5212 = vpop.f32.mrb[0].mxu0
    %5213 = vmatprep.mubr.f32.mxu0 0.0
    %v5214 = vand.u32 %v4559, 4294901760
    %5215 = vmatmul.mubr.f32.gmra.mrb[0].mxu0 %v5214
    %v5216 = vpop.f32.mrb[0].mxu0
    %v5217 = vadd.f32 %v5078, %v5216
    %v5218 = vpop.f32.mrb[0].mxu0
    %5219 = vmatprep.mubr.f32.mxu0 0.0
    %v5220 = vand.u32 %v4560, 4294901760
    %5221 = vmatmul.mubr.f32.gmra.mrb[0].mxu0 %v5220
    %v5222 = vpop.f32.mrb[0].mxu0
    %v5223 = vadd.f32 %v5086, %v5222
    %v5224 = vpop.f32.mrb[0].mxu0
    %5225 = vdwg.mxu0
    %5226 = vmatprep.subr.mxu0 0.0
    %v5227 = vand.u32 %v131, 4294901760
    %5228 = vmatpush1.msra.mxu0 %v5227
    %5229 = vmatprep.subr.mxu0 0.0
    %v5230 = vand.u32 %v132, 4294901760
    %5231 = vmatpush1.msra.mxu0 %v5230
    %5232 = vmatprep.subr.mxu0 0.0
    %v5233 = vand.u32 %v133, 4294901760
    %5234 = vmatpush1.msra.mxu0 %v5233
    %5235 = vmatprep.subr.mxu0 0.0
    %v5236 = vand.u32 %v134, 4294901760
    %5237 = vmatpush1.msra.mxu0 %v5236
    %5238 = vmatprep.subr.mxu0 0.0
    %v5239 = vand.u32 %v135, 4294901760
    %5240 = vmatpush1.msra.mxu0 %v5239
    %5241 = vmatprep.subr.mxu0 0.0
    %v5242 = vand.u32 %v136, 4294901760
    %5243 = vmatpush1.msra.mxu0 %v5242
    %5244 = vmatprep.subr.mxu0 0.0
    %v5245 = vand.u32 %v137, 4294901760
    %5246 = vmatpush1.msra.mxu0 %v5245
    %5247 = vmatprep.subr.mxu0 0.0
    %v5248 = vand.u32 %v138, 4294901760
    %5249 = vmatpush1.msra.mxu0 %v5248
    %5250 = vmatprep.subr.mxu0 0.0
    %v5251 = vand.u32 %v139, 4294901760
    %5252 = vmatpush1.msra.mxu0 %v5251
    %5253 = vmatprep.subr.mxu0 0.0
    %v5254 = vand.u32 %v140, 4294901760
    %5255 = vmatpush1.msra.mxu0 %v5254
    %5256 = vmatprep.subr.mxu0 0.0
    %v5257 = vand.u32 %v141, 4294901760
    %5258 = vmatpush1.msra.mxu0 %v5257
    %5259 = vmatprep.subr.mxu0 0.0
    %v5260 = vand.u32 %v142, 4294901760
    %5261 = vmatpush1.msra.mxu0 %v5260
    %5262 = vmatprep.subr.mxu0 0.0
    %v5263 = vand.u32 %v143, 4294901760
    %5264 = vmatpush1.msra.mxu0 %v5263
    %5265 = vmatprep.subr.mxu0 0.0
    %v5266 = vand.u32 %v144, 4294901760
    %5267 = vmatpush1.msra.mxu0 %v5266
    %5268 = vmatprep.subr.mxu0 0.0
    %v5269 = vand.u32 %v145, 4294901760
    %5270 = vmatpush1.msra.mxu0 %v5269
    %5271 = vmatprep.subr.mxu0 0.0
    %v5272 = vand.u32 %v146, 4294901760
    %5273 = vmatpush1.msra.mxu0 %v5272
    %5274 = vmatprep.subr.mxu0 0.0
    %5275 = vmatpush1.msra.mxu0 0.0
    %5276 = vmatprep.subr.mxu0 0.0
    %5277 = vmatpush1.msra.mxu0 0.0
    %5278 = vmatprep.subr.mxu0 0.0
    %5279 = vmatpush1.msra.mxu0 0.0
    %5280 = vmatprep.subr.mxu0 0.0
    %5281 = vmatpush1.msra.mxu0 0.0
    %5282 = vmatprep.subr.mxu0 0.0
    %5283 = vmatpush1.msra.mxu0 0.0
    %5284 = vmatprep.subr.mxu0 0.0
    %5285 = vmatpush1.msra.mxu0 0.0
    %5286 = vmatprep.subr.mxu0 0.0
    %5287 = vmatpush1.msra.mxu0 0.0
    %5288 = vmatprep.subr.mxu0 0.0
    %5289 = vmatpush1.msra.mxu0 0.0
    %5290 = vmatprep.subr.mxu0 0.0
    %5291 = vmatpush1.msra.mxu0 0.0
    %5292 = vmatprep.subr.mxu0 0.0
    %5293 = vmatpush1.msra.mxu0 0.0
    %5294 = vmatprep.subr.mxu0 0.0
    %5295 = vmatpush1.msra.mxu0 0.0
    %5296 = vmatprep.subr.mxu0 0.0
    %5297 = vmatpush1.msra.mxu0 0.0
    %5298 = vmatprep.subr.mxu0 0.0
    %5299 = vmatpush1.msra.mxu0 0.0
    %5300 = vmatprep.subr.mxu0 0.0
    %5301 = vmatpush1.msra.mxu0 0.0
    %5302 = vmatprep.subr.mxu0 0.0
    %5303 = vmatpush1.msra.mxu0 0.0
    %5304 = vmatprep.subr.mxu0 0.0
    %5305 = vmatpush1.msra.mxu0 0.0
    %5306 = vmatprep.mubr.f32.mxu0 0.0
    %v5307 = vand.u32 %v4557, 4294901760
    %5308 = vmatmul.mubr.f32.gmra.mrb[0].mxu0 %v5307
    %v5309 = vpop.f32.mrb[0].mxu0
    %v5310 = vadd.f32 %v5205, %v5309
    %v5311 = vpop.f32.mrb[0].mxu0
    %5312 = vmatprep.mubr.f32.mxu0 0.0
    %v5313 = vand.u32 %v4558, 4294901760
    %5314 = vmatmul.mubr.f32.gmra.mrb[0].mxu0 %v5313
    %v5315 = vpop.f32.mrb[0].mxu0
    %v5316 = vadd.f32 %v5211, %v5315
    %v5317 = vpop.f32.mrb[0].mxu0
    %5318 = vmatprep.mubr.f32.mxu0 0.0
    %v5319 = vand.u32 %v4559, 4294901760
    %5320 = vmatmul.mubr.f32.gmra.mrb[0].mxu0 %v5319
    %v5321 = vpop.f32.mrb[0].mxu0
    %v5322 = vadd.f32 %v5217, %v5321
    %v5323 = vpop.f32.mrb[0].mxu0
    %5324 = vmatprep.mubr.f32.mxu0 0.0
    %v5325 = vand.u32 %v4560, 4294901760
    %5326 = vmatmul.mubr.f32.gmra.mrb[0].mxu0 %v5325
    %v5327 = vpop.f32.mrb[0].mxu0
    %v5328 = vadd.f32 %v5223, %v5327
    %v5329 = vpop.f32.mrb[0].mxu0
    %5330 = vdwg.mxu0
    %v5331 = vadd.f32 %v5310, %v5316
    %v5332 = vadd.f32 %v5331, %v5322
    %v5333 = vadd.f32 %v5332, %v5328
    %v5334 = vrot.slane %v5333, 4
    %v5335 = vadd.f32 %v5333, %v5334
    %v5336 = vrot.slane %v5335, 2
    %v5337 = vadd.f32 %v5335, %v5336
    %v5338 = vrot.slane %v5337, 1
    %v5339 = vadd.f32 %v5337, %v5338
    %v5340 = vmul.f32 %v5339, %v4551
    %v5341 = vadd.f32 %v5340, 1e-05
    %v5342 = vrsqrt.pop %v5341
    %v5343 = vmul.f32 %v4553, %v5342
    %v5344 = vmul.f32 %v4554, %v5342
    %v5345 = vmul.f32 %v4555, %v5342
    %v5346 = vmul.f32 %v4556, %v5342
    %v5347 = vld [vmem:[%s2] sm:$0x1]
    %v5349 = vlaneseq
    %v5350 = vshrl.u32 %v5349, 7
    %v5351 = vsub.s32 0, %v5350
    %v5352 = vrot.slane %v5347, %v5351
    %v5354 = vmul.f32 %v5343, %v5352
    %v5355 = vmul.f32 %v5344, %v5352
    %v5356 = vmul.f32 %v5345, %v5352
    %v5357 = vmul.f32 %v5346, %v5352
    %v5358 = vld [vmem:[%s3] sm:$0x1]
    %v5360 = vlaneseq
    %v5361 = vshrl.u32 %v5360, 7
    %v5362 = vsub.s32 0, %v5361
    %v5363 = vrot.slane %v5358, %v5362
    %v5365 = vadd.f32 %v5354, %v5363
    %v5366 = vadd.f32 %v5355, %v5363
    %v5367 = vadd.f32 %v5356, %v5363
    %v5368 = vadd.f32 %v5357, %v5363
    %v5369 = vmax.f32 %v5365, 0.0
    %v5370 = vmax.f32 %v5366, 0.0
    %v5371 = vmax.f32 %v5367, 0.0
    %v5372 = vmax.f32 %v5368, 0.0
    %s5373 = scalar_lea.vmem [#allocation7], 128
    %v5374 = vld [vmem:[%s5373] sm:$0xff]
    %v5375 = vld [vmem:[%s5373 + $0x8] sm:$0xff]
    %v5376 = vld [vmem:[%s5373 + $0x10] sm:$0xff]
    %v5377 = vld [vmem:[%s5373 + $0x18] sm:$0xff]
    %v5378 = vld [vmem:[%s5373 + $0x20] sm:$0xff]
    %v5379 = vld [vmem:[%s5373 + $0x28] sm:$0xff]
    %v5380 = vld [vmem:[%s5373 + $0x30] sm:$0xff]
    %v5381 = vld [vmem:[%s5373 + $0x38] sm:$0xff]
    %v5382 = vld [vmem:[%s5373 + $0x40] sm:$0xff]
    %v5383 = vld [vmem:[%s5373 + $0x48] sm:$0xff]
    %v5384 = vld [vmem:[%s5373 + $0x50] sm:$0xff]
    %v5385 = vld [vmem:[%s5373 + $0x58] sm:$0xff]
    %v5386 = vld [vmem:[%s5373 + $0x60] sm:$0xff]
    %v5387 = vld [vmem:[%s5373 + $0x68] sm:$0xff]
    %v5388 = vld [vmem:[%s5373 + $0x70] sm:$0xff]
    %v5389 = vld [vmem:[%s5373 + $0x78] sm:$0xff]
    %5390 = vmatprep.subr.mxu0 0.0
    %v5391 = vand.u32 %v5369, 4294901760
    %5392 = vmatpush1.msra.mxu0 %v5391
    %5393 = vmatprep.subr.mxu0 0.0
    %v5394 = vand.u32 %v5370, 4294901760
    %5395 = vmatpush1.msra.mxu0 %v5394
    %5396 = vmatprep.subr.mxu0 0.0
    %v5397 = vand.u32 %v5371, 4294901760
    %5398 = vmatpush1.msra.mxu0 %v5397
    %5399 = vmatprep.subr.mxu0 0.0
    %v5400 = vand.u32 %v5372, 4294901760
    %5401 = vmatpush1.msra.mxu0 %v5400
    %5402 = vmatprep.subr.mxu0 0.0
    %5403 = vmatpush1.msra.mxu0 0.0
    %5404 = vmatprep.subr.mxu0 0.0
    %5405 = vmatpush1.msra.mxu0 0.0
    %5406 = vmatprep.subr.mxu0 0.0
    %5407 = vmatpush1.msra.mxu0 0.0
    %5408 = vmatprep.subr.mxu0 0.0
    %5409 = vmatpush1.msra.mxu0 0.0
    %5410 = vmatprep.subr.mxu0 0.0
    %5411 = vmatpush1.msra.mxu0 0.0
    %5412 = vmatprep.subr.mxu0 0.0
    %5413 = vmatpush1.msra.mxu0 0.0
    %5414 = vmatprep.subr.mxu0 0.0
    %5415 = vmatpush1.msra.mxu0 0.0
    %5416 = vmatprep.subr.mxu0 0.0
    %5417 = vmatpush1.msra.mxu0 0.0
    %5418 = vmatprep.subr.mxu0 0.0
    %5419 = vmatpush1.msra.mxu0 0.0
    %5420 = vmatprep.subr.mxu0 0.0
    %5421 = vmatpush1.msra.mxu0 0.0
    %5422 = vmatprep.subr.mxu0 0.0
    %5423 = vmatpush1.msra.mxu0 0.0
    %5424 = vmatprep.subr.mxu0 0.0
    %5425 = vmatpush1.msra.mxu0 0.0
    %5426 = vmatprep.subr.mxu0 0.0
    %5427 = vmatpush1.msra.mxu0 0.0
    %5428 = vmatprep.subr.mxu0 0.0
    %5429 = vmatpush1.msra.mxu0 0.0
    %5430 = vmatprep.subr.mxu0 0.0
    %5431 = vmatpush1.msra.mxu0 0.0
    %5432 = vmatprep.subr.mxu0 0.0
    %5433 = vmatpush1.msra.mxu0 0.0
    %5434 = vmatprep.subr.mxu0 0.0
    %5435 = vmatpush1.msra.mxu0 0.0
    %5436 = vmatprep.subr.mxu0 0.0
    %5437 = vmatpush1.msra.mxu0 0.0
    %5438 = vmatprep.subr.mxu0 0.0
    %5439 = vmatpush1.msra.mxu0 0.0
    %5440 = vmatprep.subr.mxu0 0.0
    %5441 = vmatpush1.msra.mxu0 0.0
    %5442 = vmatprep.subr.mxu0 0.0
    %5443 = vmatpush1.msra.mxu0 0.0
    %5444 = vmatprep.subr.mxu0 0.0
    %5445 = vmatpush1.msra.mxu0 0.0
    %5446 = vmatprep.subr.mxu0 0.0
    %5447 = vmatpush1.msra.mxu0 0.0
    %5448 = vmatprep.subr.mxu0 0.0
    %5449 = vmatpush1.msra.mxu0 0.0
    %5450 = vmatprep.subr.mxu0 0.0
    %5451 = vmatpush1.msra.mxu0 0.0
    %5452 = vmatprep.subr.mxu0 0.0
    %5453 = vmatpush1.msra.mxu0 0.0
    %5454 = vmatprep.subr.mxu0 0.0
    %5455 = vmatpush1.msra.mxu0 0.0
    %5456 = vmatprep.subr.mxu0 0.0
    %5457 = vmatpush1.msra.mxu0 0.0
    %5458 = vmatprep.mubr.f32.mxu0 0.0
    %v5459 = vand.u32 %v174, 4294901760
    %v5460 = vsub.f32 %v174, %v5459
    %v5461 = vand.u32 %v5460, 4294901760
    %v5462 = vsub.f32 %v5460, %v5461
    %v5463 = vand.u32 %v5462, 4294901760
    %5464 = vmatmul.mubr.f32.gmra.mrb[0].mxu0 %v5463
    %v5465 = vpop.f32.mrb[0].mxu0
    %v5466 = vadd.f32 0.0, %v5465
    %v5467 = vpop.f32.mrb[0].mxu0
    %5468 = vmatprep.mubr.f32.mxu0 0.0
    %v5469 = vand.u32 %v177, 4294901760
    %v5470 = vsub.f32 %v177, %v5469
    %v5471 = vand.u32 %v5470, 4294901760
    %v5472 = vsub.f32 %v5470, %v5471
    %v5473 = vand.u32 %v5472, 4294901760
    %5474 = vmatmul.mubr.f32.gmra.mrb[0].mxu0 %v5473
    %v5475 = vpop.f32.mrb[0].mxu0
    %v5476 = vadd.f32 0.0, %v5475
    %v5477 = vpop.f32.mrb[0].mxu0
    %5478 = vmatprep.mubr.f32.mxu0 0.0
    %v5479 = vand.u32 %v180, 4294901760
    %v5480 = vsub.f32 %v180, %v5479
    %v5481 = vand.u32 %v5480, 4294901760
    %v5482 = vsub.f32 %v5480, %v5481
    %v5483 = vand.u32 %v5482, 4294901760
    %5484 = vmatmul.mubr.f32.gmra.mrb[0].mxu0 %v5483
    %v5485 = vpop.f32.mrb[0].mxu0
    %v5486 = vadd.f32 0.0, %v5485
    %v5487 = vpop.f32.mrb[0].mxu0
    %5488 = vmatprep.mubr.f32.mxu0 0.0
    %v5489 = vand.u32 %v183, 4294901760
    %v5490 = vsub.f32 %v183, %v5489
    %v5491 = vand.u32 %v5490, 4294901760
    %v5492 = vsub.f32 %v5490, %v5491
    %v5493 = vand.u32 %v5492, 4294901760
    %5494 = vmatmul.mubr.f32.gmra.mrb[0].mxu0 %v5493
    %v5495 = vpop.f32.mrb[0].mxu0
    %v5496 = vadd.f32 0.0, %v5495
    %v5497 = vpop.f32.mrb[0].mxu0
    %5498 = vdwg.mxu0
    %5499 = vmatprep.subr.mxu0 0.0
    %v5500 = vand.u32 %v5369, 4294901760
    %v5501 = vsub.f32 %v5369, %v5500
    %v5502 = vand.u32 %v5501, 4294901760
    %v5503 = vsub.f32 %v5501, %v5502
    %v5504 = vand.u32 %v5503, 4294901760
    %5505 = vmatpush1.msra.mxu0 %v5504
    %5506 = vmatprep.subr.mxu0 0.0
    %v5507 = vand.u32 %v5370, 4294901760
    %v5508 = vsub.f32 %v5370, %v5507
    %v5509 = vand.u32 %v5508, 4294901760
    %v5510 = vsub.f32 %v5508, %v5509
    %v5511 = vand.u32 %v5510, 4294901760
    %5512 = vmatpush1.msra.mxu0 %v5511
    %5513 = vmatprep.subr.mxu0 0.0
    %v5514 = vand.u32 %v5371, 4294901760
    %v5515 = vsub.f32 %v5371, %v5514
    %v5516 = vand.u32 %v5515, 4294901760
    %v5517 = vsub.f32 %v5515, %v5516
    %v5518 = vand.u32 %v5517, 4294901760
    %5519 = vmatpush1.msra.mxu0 %v5518
    %5520 = vmatprep.subr.mxu0 0.0
    %v5521 = vand.u32 %v5372, 4294901760
    %v5522 = vsub.f32 %v5372, %v5521
    %v5523 = vand.u32 %v5522, 4294901760
    %v5524 = vsub.f32 %v5522, %v5523
    %v5525 = vand.u32 %v5524, 4294901760
    %5526 = vmatpush1.msra.mxu0 %v5525
    %5527 = vmatprep.subr.mxu0 0.0
    %5528 = vmatpush1.msra.mxu0 0.0
    %5529 = vmatprep.subr.mxu0 0.0
    %5530 = vmatpush1.msra.mxu0 0.0
    %5531 = vmatprep.subr.mxu0 0.0
    %5532 = vmatpush1.msra.mxu0 0.0
    %5533 = vmatprep.subr.mxu0 0.0
    %5534 = vmatpush1.msra.mxu0 0.0
    %5535 = vmatprep.subr.mxu0 0.0
    %5536 = vmatpush1.msra.mxu0 0.0
    %5537 = vmatprep.subr.mxu0 0.0
    %5538 = vmatpush1.msra.mxu0 0.0
    %5539 = vmatprep.subr.mxu0 0.0
    %5540 = vmatpush1.msra.mxu0 0.0
    %5541 = vmatprep.subr.mxu0 0.0
    %5542 = vmatpush1.msra.mxu0 0.0
    %5543 = vmatprep.subr.mxu0 0.0
    %5544 = vmatpush1.msra.mxu0 0.0
    %5545 = vmatprep.subr.mxu0 0.0
    %5546 = vmatpush1.msra.mxu0 0.0
    %5547 = vmatprep.subr.mxu0 0.0
    %5548 = vmatpush1.msra.mxu0 0.0
    %5549 = vmatprep.subr.mxu0 0.0
    %5550 = vmatpush1.msra.mxu0 0.0
    %5551 = vmatprep.subr.mxu0 0.0
    %5552 = vmatpush1.msra.mxu0 0.0
    %5553 = vmatprep.subr.mxu0 0.0
    %5554 = vmatpush1.msra.mxu0 0.0
    %5555 = vmatprep.subr.mxu0 0.0
    %5556 = vmatpush1.msra.mxu0 0.0
    %5557 = vmatprep.subr.mxu0 0.0
    %5558 = vmatpush1.msra.mxu0 0.0
    %5559 = vmatprep.subr.mxu0 0.0
    %5560 = vmatpush1.msra.mxu0 0.0
    %5561 = vmatprep.subr.mxu0 0.0
    %5562 = vmatpush1.msra.mxu0 0.0
    %5563 = vmatprep.subr.mxu0 0.0
    %5564 = vmatpush1.msra.mxu0 0.0
    %5565 = vmatprep.subr.mxu0 0.0
    %5566 = vmatpush1.msra.mxu0 0.0
    %5567 = vmatprep.subr.mxu0 0.0
    %5568 = vmatpush1.msra.mxu0 0.0
    %5569 = vmatprep.subr.mxu0 0.0
    %5570 = vmatpush1.msra.mxu0 0.0
    %5571 = vmatprep.subr.mxu0 0.0
    %5572 = vmatpush1.msra.mxu0 0.0
    %5573 = vmatprep.subr.mxu0 0.0
    %5574 = vmatpush1.msra.mxu0 0.0
    %5575 = vmatprep.subr.mxu0 0.0
    %5576 = vmatpush1.msra.mxu0 0.0
    %5577 = vmatprep.subr.mxu0 0.0
    %5578 = vmatpush1.msra.mxu0 0.0
    %5579 = vmatprep.subr.mxu0 0.0
    %5580 = vmatpush1.msra.mxu0 0.0
    %5581 = vmatprep.subr.mxu0 0.0
    %5582 = vmatpush1.msra.mxu0 0.0
    %5583 = vmatprep.mubr.f32.mxu0 0.0
    %v5584 = vand.u32 %v174, 4294901760
    %5585 = vmatmul.mubr.f32.gmra.mrb[0].mxu0 %v5584
    %v5586 = vpop.f32.mrb[0].mxu0
    %v5587 = vadd.f32 %v5466, %v5586
    %v5588 = vpop.f32.mrb[0].mxu0
    %5589 = vmatprep.mubr.f32.mxu0 0.0
    %v5590 = vand.u32 %v177, 4294901760
    %5591 = vmatmul.mubr.f32.gmra.mrb[0].mxu0 %v5590
    %v5592 = vpop.f32.mrb[0].mxu0
    %v5593 = vadd.f32 %v5476, %v5592
    %v5594 = vpop.f32.mrb[0].mxu0
    %5595 = vmatprep.mubr.f32.mxu0 0.0
    %v5596 = vand.u32 %v180, 4294901760
    %5597 = vmatmul.mubr.f32.gmra.mrb[0].mxu0 %v5596
    %v5598 = vpop.f32.mrb[0].mxu0
    %v5599 = vadd.f32 %v5486, %v5598
    %v5600 = vpop.f32.mrb[0].mxu0
    %5601 = vmatprep.mubr.f32.mxu0 0.0
    %v5602 = vand.u32 %v183, 4294901760
    %5603 = vmatmul.mubr.f32.gmra.mrb[0].mxu0 %v5602
    %v5604 = vpop.f32.mrb[0].mxu0
    %v5605 = vadd.f32 %v5496, %v5604
    %v5606 = vpop.f32.mrb[0].mxu0
    %5607 = vdwg.mxu0
    %5608 = vmatprep.subr.mxu0 0.0
    %v5609 = vand.u32 %v5369, 4294901760
    %v5610 = vsub.f32 %v5369, %v5609
    %5611 = vmatpush1.msra.mxu0 %v5610
    %5612 = vmatprep.subr.mxu0 0.0
    %v5613 = vand.u32 %v5370, 4294901760
    %v5614 = vsub.f32 %v5370, %v5613
    %5615 = vmatpush1.msra.mxu0 %v5614
    %5616 = vmatprep.subr.mxu0 0.0
    %v5617 = vand.u32 %v5371, 4294901760
    %v5618 = vsub.f32 %v5371, %v5617
    %5619 = vmatpush1.msra.mxu0 %v5618
    %5620 = vmatprep.subr.mxu0 0.0
    %v5621 = vand.u32 %v5372, 4294901760
    %v5622 = vsub.f32 %v5372, %v5621
    %5623 = vmatpush1.msra.mxu0 %v5622
    %5624 = vmatprep.subr.mxu0 0.0
    %5625 = vmatpush1.msra.mxu0 0.0
    %5626 = vmatprep.subr.mxu0 0.0
    %5627 = vmatpush1.msra.mxu0 0.0
    %5628 = vmatprep.subr.mxu0 0.0
    %5629 = vmatpush1.msra.mxu0 0.0
    %5630 = vmatprep.subr.mxu0 0.0
    %5631 = vmatpush1.msra.mxu0 0.0
    %5632 = vmatprep.subr.mxu0 0.0
    %5633 = vmatpush1.msra.mxu0 0.0
    %5634 = vmatprep.subr.mxu0 0.0
    %5635 = vmatpush1.msra.mxu0 0.0
    %5636 = vmatprep.subr.mxu0 0.0
    %5637 = vmatpush1.msra.mxu0 0.0
    %5638 = vmatprep.subr.mxu0 0.0
    %5639 = vmatpush1.msra.mxu0 0.0
    %5640 = vmatprep.subr.mxu0 0.0
    %5641 = vmatpush1.msra.mxu0 0.0
    %5642 = vmatprep.subr.mxu0 0.0
    %5643 = vmatpush1.msra.mxu0 0.0
    %5644 = vmatprep.subr.mxu0 0.0
    %5645 = vmatpush1.msra.mxu0 0.0
    %5646 = vmatprep.subr.mxu0 0.0
    %5647 = vmatpush1.msra.mxu0 0.0
    %5648 = vmatprep.subr.mxu0 0.0
    %5649 = vmatpush1.msra.mxu0 0.0
    %5650 = vmatprep.subr.mxu0 0.0
    %5651 = vmatpush1.msra.mxu0 0.0
    %5652 = vmatprep.subr.mxu0 0.0
    %5653 = vmatpush1.msra.mxu0 0.0
    %5654 = vmatprep.subr.mxu0 0.0
    %5655 = vmatpush1.msra.mxu0 0.0
    %5656 = vmatprep.subr.mxu0 0.0
    %5657 = vmatpush1.msra.mxu0 0.0
    %5658 = vmatprep.subr.mxu0 0.0
    %5659 = vmatpush1.msra.mxu0 0.0
    %5660 = vmatprep.subr.mxu0 0.0
    %5661 = vmatpush1.msra.mxu0 0.0
    %5662 = vmatprep.subr.mxu0 0.0
    %5663 = vmatpush1.msra.mxu0 0.0
    %5664 = vmatprep.subr.mxu0 0.0
    %5665 = vmatpush1.msra.mxu0 0.0
    %5666 = vmatprep.subr.mxu0 0.0
    %5667 = vmatpush1.msra.mxu0 0.0
    %5668 = vmatprep.subr.mxu0 0.0
    %5669 = vmatpush1.msra.mxu0 0.0
    %5670 = vmatprep.subr.mxu0 0.0
    %5671 = vmatpush1.msra.mxu0 0.0
    %5672 = vmatprep.subr.mxu0 0.0
    %5673 = vmatpush1.msra.mxu0 0.0
    %5674 = vmatprep.subr.mxu0 0.0
    %5675 = vmatpush1.msra.mxu0 0.0
    %5676 = vmatprep.subr.mxu0 0.0
    %5677 = vmatpush1.msra.mxu0 0.0
    %5678 = vmatprep.subr.mxu0 0.0
    %5679 = vmatpush1.msra.mxu0 0.0
    %5680 = vmatprep.mubr.f32.mxu0 0.0
    %v5681 = vand.u32 %v174, 4294901760
    %v5682 = vsub.f32 %v174, %v5681
    %5683 = vmatmul.mubr.f32.gmra.mrb[0].mxu0 %v5682
    %v5684 = vpop.f32.mrb[0].mxu0
    %v5685 = vadd.f32 %v5587, %v5684
    %v5686 = vpop.f32.mrb[0].mxu0
    %5687 = vmatprep.mubr.f32.mxu0 0.0
    %v5688 = vand.u32 %v177, 4294901760
    %v5689 = vsub.f32 %v177, %v5688
    %5690 = vmatmul.mubr.f32.gmra.mrb[0].mxu0 %v5689
    %v5691 = vpop.f32.mrb[0].mxu0
    %v5692 = vadd.f32 %v5593, %v5691
    %v5693 = vpop.f32.mrb[0].mxu0
    %5694 = vmatprep.mubr.f32.mxu0 0.0
    %v5695 = vand.u32 %v180, 4294901760
    %v5696 = vsub.f32 %v180, %v5695
    %5697 = vmatmul.mubr.f32.gmra.mrb[0].mxu0 %v5696
    %v5698 = vpop.f32.mrb[0].mxu0
    %v5699 = vadd.f32 %v5599, %v5698
    %v5700 = vpop.f32.mrb[0].mxu0
    %5701 = vmatprep.mubr.f32.mxu0 0.0
    %v5702 = vand.u32 %v183, 4294901760
    %v5703 = vsub.f32 %v183, %v5702
    %5704 = vmatmul.mubr.f32.gmra.mrb[0].mxu0 %v5703
    %v5705 = vpop.f32.mrb[0].mxu0
    %v5706 = vadd.f32 %v5605, %v5705
    %v5707 = vpop.f32.mrb[0].mxu0
    %5708 = vdwg.mxu0
    %5709 = vmatprep.subr.mxu0 0.0
    %v5710 = vand.u32 %v5369, 4294901760
    %5711 = vmatpush1.msra.mxu0 %v5710
    %5712 = vmatprep.subr.mxu0 0.0
    %v5713 = vand.u32 %v5370, 4294901760
    %5714 = vmatpush1.msra.mxu0 %v5713
    %5715 = vmatprep.subr.mxu0 0.0
    %v5716 = vand.u32 %v5371, 4294901760
    %5717 = vmatpush1.msra.mxu0 %v5716
    %5718 = vmatprep.subr.mxu0 0.0
    %v5719 = vand.u32 %v5372, 4294901760
    %5720 = vmatpush1.msra.mxu0 %v5719
    %5721 = vmatprep.subr.mxu0 0.0
    %5722 = vmatpush1.msra.mxu0 0.0
    %5723 = vmatprep.subr.mxu0 0.0
    %5724 = vmatpush1.msra.mxu0 0.0
    %5725 = vmatprep.subr.mxu0 0.0
    %5726 = vmatpush1.msra.mxu0 0.0
    %5727 = vmatprep.subr.mxu0 0.0
    %5728 = vmatpush1.msra.mxu0 0.0
    %5729 = vmatprep.subr.mxu0 0.0
    %5730 = vmatpush1.msra.mxu0 0.0
    %5731 = vmatprep.subr.mxu0 0.0
    %5732 = vmatpush1.msra.mxu0 0.0
    %5733 = vmatprep.subr.mxu0 0.0
    %5734 = vmatpush1.msra.mxu0 0.0
    %5735 = vmatprep.subr.mxu0 0.0
    %5736 = vmatpush1.msra.mxu0 0.0
    %5737 = vmatprep.subr.mxu0 0.0
    %5738 = vmatpush1.msra.mxu0 0.0
    %5739 = vmatprep.subr.mxu0 0.0
    %5740 = vmatpush1.msra.mxu0 0.0
    %5741 = vmatprep.subr.mxu0 0.0
    %5742 = vmatpush1.msra.mxu0 0.0
    %5743 = vmatprep.subr.mxu0 0.0
    %5744 = vmatpush1.msra.mxu0 0.0
    %5745 = vmatprep.subr.mxu0 0.0
    %5746 = vmatpush1.msra.mxu0 0.0
    %5747 = vmatprep.subr.mxu0 0.0
    %5748 = vmatpush1.msra.mxu0 0.0
    %5749 = vmatprep.subr.mxu0 0.0
    %5750 = vmatpush1.msra.mxu0 0.0
    %5751 = vmatprep.subr.mxu0 0.0
    %5752 = vmatpush1.msra.mxu0 0.0
    %5753 = vmatprep.subr.mxu0 0.0
    %5754 = vmatpush1.msra.mxu0 0.0
    %5755 = vmatprep.subr.mxu0 0.0
    %5756 = vmatpush1.msra.mxu0 0.0
    %5757 = vmatprep.subr.mxu0 0.0
    %5758 = vmatpush1.msra.mxu0 0.0
    %5759 = vmatprep.subr.mxu0 0.0
    %5760 = vmatpush1.msra.mxu0 0.0
    %5761 = vmatprep.subr.mxu0 0.0
    %5762 = vmatpush1.msra.mxu0 0.0
    %5763 = vmatprep.subr.mxu0 0.0
    %5764 = vmatpush1.msra.mxu0 0.0
    %5765 = vmatprep.subr.mxu0 0.0
    %5766 = vmatpush1.msra.mxu0 0.0
    %5767 = vmatprep.subr.mxu0 0.0
    %5768 = vmatpush1.msra.mxu0 0.0
    %5769 = vmatprep.subr.mxu0 0.0
    %5770 = vmatpush1.msra.mxu0 0.0
    %5771 = vmatprep.subr.mxu0 0.0
    %5772 = vmatpush1.msra.mxu0 0.0
    %5773 = vmatprep.subr.mxu0 0.0
    %5774 = vmatpush1.msra.mxu0 0.0
    %5775 = vmatprep.subr.mxu0 0.0
    %5776 = vmatpush1.msra.mxu0 0.0
    %5777 = vmatprep.mubr.f32.mxu0 0.0
    %v5778 = vand.u32 %v174, 4294901760
    %v5779 = vsub.f32 %v174, %v5778
    %v5780 = vand.u32 %v5779, 4294901760
    %5781 = vmatmul.mubr.f32.gmra.mrb[0].mxu0 %v5780
    %v5782 = vpop.f32.mrb[0].mxu0
    %v5783 = vadd.f32 %v5685, %v5782
    %v5784 = vpop.f32.mrb[0].mxu0
    %5785 = vmatprep.mubr.f32.mxu0 0.0
    %v5786 = vand.u32 %v177, 4294901760
    %v5787 = vsub.f32 %v177, %v5786
    %v5788 = vand.u32 %v5787, 4294901760
    %5789 = vmatmul.mubr.f32.gmra.mrb[0].mxu0 %v5788
    %v5790 = vpop.f32.mrb[0].mxu0
    %v5791 = vadd.f32 %v5692, %v5790
    %v5792 = vpop.f32.mrb[0].mxu0
    %5793 = vmatprep.mubr.f32.mxu0 0.0
    %v5794 = vand.u32 %v180, 4294901760
    %v5795 = vsub.f32 %v180, %v5794
    %v5796 = vand.u32 %v5795, 4294901760
    %5797 = vmatmul.mubr.f32.gmra.mrb[0].mxu0 %v5796
    %v5798 = vpop.f32.mrb[0].mxu0
    %v5799 = vadd.f32 %v5699, %v5798
    %v5800 = vpop.f32.mrb[0].mxu0
    %5801 = vmatprep.mubr.f32.mxu0 0.0
    %v5802 = vand.u32 %v183, 4294901760
    %v5803 = vsub.f32 %v183, %v5802
    %v5804 = vand.u32 %v5803, 4294901760
    %5805 = vmatmul.mubr.f32.gmra.mrb[0].mxu0 %v5804
    %v5806 = vpop.f32.mrb[0].mxu0
    %v5807 = vadd.f32 %v5706, %v5806
    %v5808 = vpop.f32.mrb[0].mxu0
    %5809 = vdwg.mxu0
    %5810 = vmatprep.subr.mxu0 0.0
    %v5811 = vand.u32 %v5369, 4294901760
    %v5812 = vsub.f32 %v5369, %v5811
    %v5813 = vand.u32 %v5812, 4294901760
    %5814 = vmatpush1.msra.mxu0 %v5813
    %5815 = vmatprep.subr.mxu0 0.0
    %v5816 = vand.u32 %v5370, 4294901760
    %v5817 = vsub.f32 %v5370, %v5816
    %v5818 = vand.u32 %v5817, 4294901760
    %5819 = vmatpush1.msra.mxu0 %v5818
    %5820 = vmatprep.subr.mxu0 0.0
    %v5821 = vand.u32 %v5371, 4294901760
    %v5822 = vsub.f32 %v5371, %v5821
    %v5823 = vand.u32 %v5822, 4294901760
    %5824 = vmatpush1.msra.mxu0 %v5823
    %5825 = vmatprep.subr.mxu0 0.0
    %v5826 = vand.u32 %v5372, 4294901760
    %v5827 = vsub.f32 %v5372, %v5826
    %v5828 = vand.u32 %v5827, 4294901760
    %5829 = vmatpush1.msra.mxu0 %v5828
    %5830 = vmatprep.subr.mxu0 0.0
    %5831 = vmatpush1.msra.mxu0 0.0
    %5832 = vmatprep.subr.mxu0 0.0
    %5833 = vmatpush1.msra.mxu0 0.0
    %5834 = vmatprep.subr.mxu0 0.0
    %5835 = vmatpush1.msra.mxu0 0.0
    %5836 = vmatprep.subr.mxu0 0.0
    %5837 = vmatpush1.msra.mxu0 0.0
    %5838 = vmatprep.subr.mxu0 0.0
    %5839 = vmatpush1.msra.mxu0 0.0
    %5840 = vmatprep.subr.mxu0 0.0
    %5841 = vmatpush1.msra.mxu0 0.0
    %5842 = vmatprep.subr.mxu0 0.0
    %5843 = vmatpush1.msra.mxu0 0.0
    %5844 = vmatprep.subr.mxu0 0.0
    %5845 = vmatpush1.msra.mxu0 0.0
    %5846 = vmatprep.subr.mxu0 0.0
    %5847 = vmatpush1.msra.mxu0 0.0
    %5848 = vmatprep.subr.mxu0 0.0
    %5849 = vmatpush1.msra.mxu0 0.0
    %5850 = vmatprep.subr.mxu0 0.0
    %5851 = vmatpush1.msra.mxu0 0.0
    %5852 = vmatprep.subr.mxu0 0.0
    %5853 = vmatpush1.msra.mxu0 0.0
    %5854 = vmatprep.subr.mxu0 0.0
    %5855 = vmatpush1.msra.mxu0 0.0
    %5856 = vmatprep.subr.mxu0 0.0
    %5857 = vmatpush1.msra.mxu0 0.0
    %5858 = vmatprep.subr.mxu0 0.0
    %5859 = vmatpush1.msra.mxu0 0.0
    %5860 = vmatprep.subr.mxu0 0.0
    %5861 = vmatpush1.msra.mxu0 0.0
    %5862 = vmatprep.subr.mxu0 0.0
    %5863 = vmatpush1.msra.mxu0 0.0
    %5864 = vmatprep.subr.mxu0 0.0
    %5865 = vmatpush1.msra.mxu0 0.0
    %5866 = vmatprep.subr.mxu0 0.0
    %5867 = vmatpush1.msra.mxu0 0.0
    %5868 = vmatprep.subr.mxu0 0.0
    %5869 = vmatpush1.msra.mxu0 0.0
    %5870 = vmatprep.subr.mxu0 0.0
    %5871 = vmatpush1.msra.mxu0 0.0
    %5872 = vmatprep.subr.mxu0 0.0
    %5873 = vmatpush1.msra.mxu0 0.0
    %5874 = vmatprep.subr.mxu0 0.0
    %5875 = vmatpush1.msra.mxu0 0.0
    %5876 = vmatprep.subr.mxu0 0.0
    %5877 = vmatpush1.msra.mxu0 0.0
    %5878 = vmatprep.subr.mxu0 0.0
    %5879 = vmatpush1.msra.mxu0 0.0
    %5880 = vmatprep.subr.mxu0 0.0
    %5881 = vmatpush1.msra.mxu0 0.0
    %5882 = vmatprep.subr.mxu0 0.0
    %5883 = vmatpush1.msra.mxu0 0.0
    %5884 = vmatprep.subr.mxu0 0.0
    %5885 = vmatpush1.msra.mxu0 0.0
    %5886 = vmatprep.mubr.f32.mxu0 0.0
    %v5887 = vand.u32 %v174, 4294901760
    %5888 = vmatmul.mubr.f32.gmra.mrb[0].mxu0 %v5887
    %v5889 = vpop.f32.mrb[0].mxu0
    %v5890 = vadd.f32 %v5783, %v5889
    %v5891 = vpop.f32.mrb[0].mxu0
    %5892 = vmatprep.mubr.f32.mxu0 0.0
    %v5893 = vand.u32 %v177, 4294901760
    %5894 = vmatmul.mubr.f32.gmra.mrb[0].mxu0 %v5893
    %v5895 = vpop.f32.mrb[0].mxu0
    %v5896 = vadd.f32 %v5791, %v5895
    %v5897 = vpop.f32.mrb[0].mxu0
    %5898 = vmatprep.mubr.f32.mxu0 0.0
    %v5899 = vand.u32 %v180, 4294901760
    %5900 = vmatmul.mubr.f32.gmra.mrb[0].mxu0 %v5899
    %v5901 = vpop.f32.mrb[0].mxu0
    %v5902 = vadd.f32 %v5799, %v5901
    %v5903 = vpop.f32.mrb[0].mxu0
    %5904 = vmatprep.mubr.f32.mxu0 0.0
    %v5905 = vand.u32 %v183, 4294901760
    %5906 = vmatmul.mubr.f32.gmra.mrb[0].mxu0 %v5905
    %v5907 = vpop.f32.mrb[0].mxu0
    %v5908 = vadd.f32 %v5807, %v5907
    %v5909 = vpop.f32.mrb[0].mxu0
    %5910 = vdwg.mxu0
    %5911 = vmatprep.subr.mxu0 0.0
    %v5912 = vand.u32 %v5369, 4294901760
    %5913 = vmatpush1.msra.mxu0 %v5912
    %5914 = vmatprep.subr.mxu0 0.0
    %v5915 = vand.u32 %v5370, 4294901760
    %5916 = vmatpush1.msra.mxu0 %v5915
    %5917 = vmatprep.subr.mxu0 0.0
    %v5918 = vand.u32 %v5371, 4294901760
    %5919 = vmatpush1.msra.mxu0 %v5918
    %5920 = vmatprep.subr.mxu0 0.0
    %v5921 = vand.u32 %v5372, 4294901760
    %5922 = vmatpush1.msra.mxu0 %v5921
    %5923 = vmatprep.subr.mxu0 0.0
    %5924 = vmatpush1.msra.mxu0 0.0
    %5925 = vmatprep.subr.mxu0 0.0
    %5926 = vmatpush1.msra.mxu0 0.0
    %5927 = vmatprep.subr.mxu0 0.0
    %5928 = vmatpush1.msra.mxu0 0.0
    %5929 = vmatprep.subr.mxu0 0.0
    %5930 = vmatpush1.msra.mxu0 0.0
    %5931 = vmatprep.subr.mxu0 0.0
    %5932 = vmatpush1.msra.mxu0 0.0
    %5933 = vmatprep.subr.mxu0 0.0
    %5934 = vmatpush1.msra.mxu0 0.0
    %5935 = vmatprep.subr.mxu0 0.0
    %5936 = vmatpush1.msra.mxu0 0.0
    %5937 = vmatprep.subr.mxu0 0.0
    %5938 = vmatpush1.msra.mxu0 0.0
    %5939 = vmatprep.subr.mxu0 0.0
    %5940 = vmatpush1.msra.mxu0 0.0
    %5941 = vmatprep.subr.mxu0 0.0
    %5942 = vmatpush1.msra.mxu0 0.0
    %5943 = vmatprep.subr.mxu0 0.0
    %5944 = vmatpush1.msra.mxu0 0.0
    %5945 = vmatprep.subr.mxu0 0.0
    %5946 = vmatpush1.msra.mxu0 0.0
    %5947 = vmatprep.subr.mxu0 0.0
    %5948 = vmatpush1.msra.mxu0 0.0
    %5949 = vmatprep.subr.mxu0 0.0
    %5950 = vmatpush1.msra.mxu0 0.0
    %5951 = vmatprep.subr.mxu0 0.0
    %5952 = vmatpush1.msra.mxu0 0.0
    %5953 = vmatprep.subr.mxu0 0.0
    %5954 = vmatpush1.msra.mxu0 0.0
    %5955 = vmatprep.subr.mxu0 0.0
    %5956 = vmatpush1.msra.mxu0 0.0
    %5957 = vmatprep.subr.mxu0 0.0
    %5958 = vmatpush1.msra.mxu0 0.0
    %5959 = vmatprep.subr.mxu0 0.0
    %5960 = vmatpush1.msra.mxu0 0.0
    %5961 = vmatprep.subr.mxu0 0.0
    %5962 = vmatpush1.msra.mxu0 0.0
    %5963 = vmatprep.subr.mxu0 0.0
    %5964 = vmatpush1.msra.mxu0 0.0
    %5965 = vmatprep.subr.mxu0 0.0
    %5966 = vmatpush1.msra.mxu0 0.0
    %5967 = vmatprep.subr.mxu0 0.0
    %5968 = vmatpush1.msra.mxu0 0.0
    %5969 = vmatprep.subr.mxu0 0.0
    %5970 = vmatpush1.msra.mxu0 0.0
    %5971 = vmatprep.subr.mxu0 0.0
    %5972 = vmatpush1.msra.mxu0 0.0
    %5973 = vmatprep.subr.mxu0 0.0
    %5974 = vmatpush1.msra.mxu0 0.0
    %5975 = vmatprep.subr.mxu0 0.0
    %5976 = vmatpush1.msra.mxu0 0.0
    %5977 = vmatprep.subr.mxu0 0.0
    %5978 = vmatpush1.msra.mxu0 0.0
    %5979 = vmatprep.mubr.f32.mxu0 0.0
    %v5980 = vand.u32 %v174, 4294901760
    %5981 = vmatmul.mubr.f32.gmra.mrb[0].mxu0 %v5980
    %v5982 = vpop.f32.mrb[0].mxu0
    %v5983 = vadd.f32 %v5890, %v5982
    %v5984 = vpop.f32.mrb[0].mxu0
    %5985 = vmatprep.mubr.f32.mxu0 0.0
    %v5986 = vand.u32 %v177, 4294901760
    %5987 = vmatmul.mubr.f32.gmra.mrb[0].mxu0 %v5986
    %v5988 = vpop.f32.mrb[0].mxu0
    %v5989 = vadd.f32 %v5896, %v5988
    %v5990 = vpop.f32.mrb[0].mxu0
    %5991 = vmatprep.mubr.f32.mxu0 0.0
    %v5992 = vand.u32 %v180, 4294901760
    %5993 = vmatmul.mubr.f32.gmra.mrb[0].mxu0 %v5992
    %v5994 = vpop.f32.mrb[0].mxu0
    %v5995 = vadd.f32 %v5902, %v5994
    %v5996 = vpop.f32.mrb[0].mxu0
    %5997 = vmatprep.mubr.f32.mxu0 0.0
    %v5998 = vand.u32 %v183, 4294901760
    %5999 = vmatmul.mubr.f32.gmra.mrb[0].mxu0 %v5998
    %v6000 = vpop.f32.mrb[0].mxu0
    %v6001 = vadd.f32 %v5908, %v6000
    %v6002 = vpop.f32.mrb[0].mxu0
    %6003 = vdwg.mxu0
    %v6004 = vld [vmem:[#allocation7] sm:$0xff]
    %v6005 = vld [vmem:[#allocation7 + $0x8] sm:$0xff]
    %v6006 = vld [vmem:[#allocation7 + $0x10] sm:$0xff]
    %v6007 = vld [vmem:[#allocation7 + $0x18] sm:$0xff]
    %v6008 = vld [vmem:[#allocation7 + $0x20] sm:$0xff]
    %v6009 = vld [vmem:[#allocation7 + $0x28] sm:$0xff]
    %v6010 = vld [vmem:[#allocation7 + $0x30] sm:$0xff]
    %v6011 = vld [vmem:[#allocation7 + $0x38] sm:$0xff]
    %v6012 = vld [vmem:[#allocation7 + $0x40] sm:$0xff]
    %v6013 = vld [vmem:[#allocation7 + $0x48] sm:$0xff]
    %v6014 = vld [vmem:[#allocation7 + $0x50] sm:$0xff]
    %v6015 = vld [vmem:[#allocation7 + $0x58] sm:$0xff]
    %v6016 = vld [vmem:[#allocation7 + $0x60] sm:$0xff]
    %v6017 = vld [vmem:[#allocation7 + $0x68] sm:$0xff]
    %v6018 = vld [vmem:[#allocation7 + $0x70] sm:$0xff]
    %v6019 = vld [vmem:[#allocation7 + $0x78] sm:$0xff]
    %6020 = vmatprep.subr.mxu0 0.0
    %v6021 = vand.u32 %v6004, 4294901760
    %6022 = vmatpush1.msra.mxu0 %v6021
    %6023 = vmatprep.subr.mxu0 0.0
    %v6024 = vand.u32 %v6005, 4294901760
    %6025 = vmatpush1.msra.mxu0 %v6024
    %6026 = vmatprep.subr.mxu0 0.0
    %v6027 = vand.u32 %v6006, 4294901760
    %6028 = vmatpush1.msra.mxu0 %v6027
    %6029 = vmatprep.subr.mxu0 0.0
    %v6030 = vand.u32 %v6007, 4294901760
    %6031 = vmatpush1.msra.mxu0 %v6030
    %6032 = vmatprep.subr.mxu0 0.0
    %v6033 = vand.u32 %v6008, 4294901760
    %6034 = vmatpush1.msra.mxu0 %v6033
    %6035 = vmatprep.subr.mxu0 0.0
    %v6036 = vand.u32 %v6009, 4294901760
    %6037 = vmatpush1.msra.mxu0 %v6036
    %6038 = vmatprep.subr.mxu0 0.0
    %v6039 = vand.u32 %v6010, 4294901760
    %6040 = vmatpush1.msra.mxu0 %v6039
    %6041 = vmatprep.subr.mxu0 0.0
    %v6042 = vand.u32 %v6011, 4294901760
    %6043 = vmatpush1.msra.mxu0 %v6042
    %6044 = vmatprep.subr.mxu0 0.0
    %v6045 = vand.u32 %v6012, 4294901760
    %6046 = vmatpush1.msra.mxu0 %v6045
    %6047 = vmatprep.subr.mxu0 0.0
    %v6048 = vand.u32 %v6013, 4294901760
    %6049 = vmatpush1.msra.mxu0 %v6048
    %6050 = vmatprep.subr.mxu0 0.0
    %v6051 = vand.u32 %v6014, 4294901760
    %6052 = vmatpush1.msra.mxu0 %v6051
    %6053 = vmatprep.subr.mxu0 0.0
    %v6054 = vand.u32 %v6015, 4294901760
    %6055 = vmatpush1.msra.mxu0 %v6054
    %6056 = vmatprep.subr.mxu0 0.0
    %v6057 = vand.u32 %v6016, 4294901760
    %6058 = vmatpush1.msra.mxu0 %v6057
    %6059 = vmatprep.subr.mxu0 0.0
    %v6060 = vand.u32 %v6017, 4294901760
    %6061 = vmatpush1.msra.mxu0 %v6060
    %6062 = vmatprep.subr.mxu0 0.0
    %v6063 = vand.u32 %v6018, 4294901760
    %6064 = vmatpush1.msra.mxu0 %v6063
    %6065 = vmatprep.subr.mxu0 0.0
    %v6066 = vand.u32 %v6019, 4294901760
    %6067 = vmatpush1.msra.mxu0 %v6066
    %6068 = vmatprep.subr.mxu0 0.0
    %6069 = vmatpush1.msra.mxu0 0.0
    %6070 = vmatprep.subr.mxu0 0.0
    %6071 = vmatpush1.msra.mxu0 0.0
    %6072 = vmatprep.subr.mxu0 0.0
    %6073 = vmatpush1.msra.mxu0 0.0
    %6074 = vmatprep.subr.mxu0 0.0
    %6075 = vmatpush1.msra.mxu0 0.0
    %6076 = vmatprep.subr.mxu0 0.0
    %6077 = vmatpush1.msra.mxu0 0.0
    %6078 = vmatprep.subr.mxu0 0.0
    %6079 = vmatpush1.msra.mxu0 0.0
    %6080 = vmatprep.subr.mxu0 0.0
    %6081 = vmatpush1.msra.mxu0 0.0
    %6082 = vmatprep.subr.mxu0 0.0
    %6083 = vmatpush1.msra.mxu0 0.0
    %6084 = vmatprep.subr.mxu0 0.0
    %6085 = vmatpush1.msra.mxu0 0.0
    %6086 = vmatprep.subr.mxu0 0.0
    %6087 = vmatpush1.msra.mxu0 0.0
    %6088 = vmatprep.subr.mxu0 0.0
    %6089 = vmatpush1.msra.mxu0 0.0
    %6090 = vmatprep.subr.mxu0 0.0
    %6091 = vmatpush1.msra.mxu0 0.0
    %6092 = vmatprep.subr.mxu0 0.0
    %6093 = vmatpush1.msra.mxu0 0.0
    %6094 = vmatprep.subr.mxu0 0.0
    %6095 = vmatpush1.msra.mxu0 0.0
    %6096 = vmatprep.subr.mxu0 0.0
    %6097 = vmatpush1.msra.mxu0 0.0
    %6098 = vmatprep.subr.mxu0 0.0
    %6099 = vmatpush1.msra.mxu0 0.0
    %6100 = vmatprep.mubr.f32.mxu0 0.0
    %v6101 = vand.u32 %v5983, 4294901760
    %v6102 = vsub.f32 %v5983, %v6101
    %v6103 = vand.u32 %v6102, 4294901760
    %v6104 = vsub.f32 %v6102, %v6103
    %v6105 = vand.u32 %v6104, 4294901760
    %6106 = vmatmul.mubr.f32.gmra.mrb[0].mxu0 %v6105
    %v6107 = vpop.f32.mrb[0].mxu0
    %v6108 = vadd.f32 0.0, %v6107
    %v6109 = vpop.f32.mrb[0].mxu0
    %6110 = vmatprep.mubr.f32.mxu0 0.0
    %v6111 = vand.u32 %v5989, 4294901760
    %v6112 = vsub.f32 %v5989, %v6111
    %v6113 = vand.u32 %v6112, 4294901760
    %v6114 = vsub.f32 %v6112, %v6113
    %v6115 = vand.u32 %v6114, 4294901760
    %6116 = vmatmul.mubr.f32.gmra.mrb[0].mxu0 %v6115
    %v6117 = vpop.f32.mrb[0].mxu0
    %v6118 = vadd.f32 0.0, %v6117
    %v6119 = vpop.f32.mrb[0].mxu0
    %6120 = vmatprep.mubr.f32.mxu0 0.0
    %v6121 = vand.u32 %v5995, 4294901760
    %v6122 = vsub.f32 %v5995, %v6121
    %v6123 = vand.u32 %v6122, 4294901760
    %v6124 = vsub.f32 %v6122, %v6123
    %v6125 = vand.u32 %v6124, 4294901760
    %6126 = vmatmul.mubr.f32.gmra.mrb[0].mxu0 %v6125
    %v6127 = vpop.f32.mrb[0].mxu0
    %v6128 = vadd.f32 0.0, %v6127
    %v6129 = vpop.f32.mrb[0].mxu0
    %6130 = vmatprep.mubr.f32.mxu0 0.0
    %v6131 = vand.u32 %v6001, 4294901760
    %v6132 = vsub.f32 %v6001, %v6131
    %v6133 = vand.u32 %v6132, 4294901760
    %v6134 = vsub.f32 %v6132, %v6133
    %v6135 = vand.u32 %v6134, 4294901760
    %6136 = vmatmul.mubr.f32.gmra.mrb[0].mxu0 %v6135
    %v6137 = vpop.f32.mrb[0].mxu0
    %v6138 = vadd.f32 0.0, %v6137
    %v6139 = vpop.f32.mrb[0].mxu0
    %6140 = vdwg.mxu0
    %6141 = vmatprep.subr.mxu0 0.0
    %v6142 = vand.u32 %v6004, 4294901760
    %v6143 = vsub.f32 %v6004, %v6142
    %v6144 = vand.u32 %v6143, 4294901760
    %v6145 = vsub.f32 %v6143, %v6144
    %v6146 = vand.u32 %v6145, 4294901760
    %6147 = vmatpush1.msra.mxu0 %v6146
    %6148 = vmatprep.subr.mxu0 0.0
    %v6149 = vand.u32 %v6005, 4294901760
    %v6150 = vsub.f32 %v6005, %v6149
    %v6151 = vand.u32 %v6150, 4294901760
    %v6152 = vsub.f32 %v6150, %v6151
    %v6153 = vand.u32 %v6152, 4294901760
    %6154 = vmatpush1.msra.mxu0 %v6153
    %6155 = vmatprep.subr.mxu0 0.0
    %v6156 = vand.u32 %v6006, 4294901760
    %v6157 = vsub.f32 %v6006, %v6156
    %v6158 = vand.u32 %v6157, 4294901760
    %v6159 = vsub.f32 %v6157, %v6158
    %v6160 = vand.u32 %v6159, 4294901760
    %6161 = vmatpush1.msra.mxu0 %v6160
    %6162 = vmatprep.subr.mxu0 0.0
    %v6163 = vand.u32 %v6007, 4294901760
    %v6164 = vsub.f32 %v6007, %v6163
    %v6165 = vand.u32 %v6164, 4294901760
    %v6166 = vsub.f32 %v6164, %v6165
    %v6167 = vand.u32 %v6166, 4294901760
    %6168 = vmatpush1.msra.mxu0 %v6167
    %6169 = vmatprep.subr.mxu0 0.0
    %v6170 = vand.u32 %v6008, 4294901760
    %v6171 = vsub.f32 %v6008, %v6170
    %v6172 = vand.u32 %v6171, 4294901760
    %v6173 = vsub.f32 %v6171, %v6172
    %v6174 = vand.u32 %v6173, 4294901760
    %6175 = vmatpush1.msra.mxu0 %v6174
    %6176 = vmatprep.subr.mxu0 0.0
    %v6177 = vand.u32 %v6009, 4294901760
    %v6178 = vsub.f32 %v6009, %v6177
    %v6179 = vand.u32 %v6178, 4294901760
    %v6180 = vsub.f32 %v6178, %v6179
    %v6181 = vand.u32 %v6180, 4294901760
    %6182 = vmatpush1.msra.mxu0 %v6181
    %6183 = vmatprep.subr.mxu0 0.0
    %v6184 = vand.u32 %v6010, 4294901760
    %v6185 = vsub.f32 %v6010, %v6184
    %v6186 = vand.u32 %v6185, 4294901760
    %v6187 = vsub.f32 %v6185, %v6186
    %v6188 = vand.u32 %v6187, 4294901760
    %6189 = vmatpush1.msra.mxu0 %v6188
    %6190 = vmatprep.subr.mxu0 0.0
    %v6191 = vand.u32 %v6011, 4294901760
    %v6192 = vsub.f32 %v6011, %v6191
    %v6193 = vand.u32 %v6192, 4294901760
    %v6194 = vsub.f32 %v6192, %v6193
    %v6195 = vand.u32 %v6194, 4294901760
    %6196 = vmatpush1.msra.mxu0 %v6195
    %6197 = vmatprep.subr.mxu0 0.0
    %v6198 = vand.u32 %v6012, 4294901760
    %v6199 = vsub.f32 %v6012, %v6198
    %v6200 = vand.u32 %v6199, 4294901760
    %v6201 = vsub.f32 %v6199, %v6200
    %v6202 = vand.u32 %v6201, 4294901760
    %6203 = vmatpush1.msra.mxu0 %v6202
    %6204 = vmatprep.subr.mxu0 0.0
    %v6205 = vand.u32 %v6013, 4294901760
    %v6206 = vsub.f32 %v6013, %v6205
    %v6207 = vand.u32 %v6206, 4294901760
    %v6208 = vsub.f32 %v6206, %v6207
    %v6209 = vand.u32 %v6208, 4294901760
    %6210 = vmatpush1.msra.mxu0 %v6209
    %6211 = vmatprep.subr.mxu0 0.0
    %v6212 = vand.u32 %v6014, 4294901760
    %v6213 = vsub.f32 %v6014, %v6212
    %v6214 = vand.u32 %v6213, 4294901760
    %v6215 = vsub.f32 %v6213, %v6214
    %v6216 = vand.u32 %v6215, 4294901760
    %6217 = vmatpush1.msra.mxu0 %v6216
    %6218 = vmatprep.subr.mxu0 0.0
    %v6219 = vand.u32 %v6015, 4294901760
    %v6220 = vsub.f32 %v6015, %v6219
    %v6221 = vand.u32 %v6220, 4294901760
    %v6222 = vsub.f32 %v6220, %v6221
    %v6223 = vand.u32 %v6222, 4294901760
    %6224 = vmatpush1.msra.mxu0 %v6223
    %6225 = vmatprep.subr.mxu0 0.0
    %v6226 = vand.u32 %v6016, 4294901760
    %v6227 = vsub.f32 %v6016, %v6226
    %v6228 = vand.u32 %v6227, 4294901760
    %v6229 = vsub.f32 %v6227, %v6228
    %v6230 = vand.u32 %v6229, 4294901760
    %6231 = vmatpush1.msra.mxu0 %v6230
    %6232 = vmatprep.subr.mxu0 0.0
    %v6233 = vand.u32 %v6017, 4294901760
    %v6234 = vsub.f32 %v6017, %v6233
    %v6235 = vand.u32 %v6234, 4294901760
    %v6236 = vsub.f32 %v6234, %v6235
    %v6237 = vand.u32 %v6236, 4294901760
    %6238 = vmatpush1.msra.mxu0 %v6237
    %6239 = vmatprep.subr.mxu0 0.0
    %v6240 = vand.u32 %v6018, 4294901760
    %v6241 = vsub.f32 %v6018, %v6240
    %v6242 = vand.u32 %v6241, 4294901760
    %v6243 = vsub.f32 %v6241, %v6242
    %v6244 = vand.u32 %v6243, 4294901760
    %6245 = vmatpush1.msra.mxu0 %v6244
    %6246 = vmatprep.subr.mxu0 0.0
    %v6247 = vand.u32 %v6019, 4294901760
    %v6248 = vsub.f32 %v6019, %v6247
    %v6249 = vand.u32 %v6248, 4294901760
    %v6250 = vsub.f32 %v6248, %v6249
    %v6251 = vand.u32 %v6250, 4294901760
    %6252 = vmatpush1.msra.mxu0 %v6251
    %6253 = vmatprep.subr.mxu0 0.0
    %6254 = vmatpush1.msra.mxu0 0.0
    %6255 = vmatprep.subr.mxu0 0.0
    %6256 = vmatpush1.msra.mxu0 0.0
    %6257 = vmatprep.subr.mxu0 0.0
    %6258 = vmatpush1.msra.mxu0 0.0
    %6259 = vmatprep.subr.mxu0 0.0
    %6260 = vmatpush1.msra.mxu0 0.0
    %6261 = vmatprep.subr.mxu0 0.0
    %6262 = vmatpush1.msra.mxu0 0.0
    %6263 = vmatprep.subr.mxu0 0.0
    %6264 = vmatpush1.msra.mxu0 0.0
    %6265 = vmatprep.subr.mxu0 0.0
    %6266 = vmatpush1.msra.mxu0 0.0
    %6267 = vmatprep.subr.mxu0 0.0
    %6268 = vmatpush1.msra.mxu0 0.0
    %6269 = vmatprep.subr.mxu0 0.0
    %6270 = vmatpush1.msra.mxu0 0.0
    %6271 = vmatprep.subr.mxu0 0.0
    %6272 = vmatpush1.msra.mxu0 0.0
    %6273 = vmatprep.subr.mxu0 0.0
    %6274 = vmatpush1.msra.mxu0 0.0
    %6275 = vmatprep.subr.mxu0 0.0
    %6276 = vmatpush1.msra.mxu0 0.0
    %6277 = vmatprep.subr.mxu0 0.0
    %6278 = vmatpush1.msra.mxu0 0.0
    %6279 = vmatprep.subr.mxu0 0.0
    %6280 = vmatpush1.msra.mxu0 0.0
    %6281 = vmatprep.subr.mxu0 0.0
    %6282 = vmatpush1.msra.mxu0 0.0
    %6283 = vmatprep.subr.mxu0 0.0
    %6284 = vmatpush1.msra.mxu0 0.0
    %6285 = vmatprep.mubr.f32.mxu0 0.0
    %v6286 = vand.u32 %v5983, 4294901760
    %6287 = vmatmul.mubr.f32.gmra.mrb[0].mxu0 %v6286
    %v6288 = vpop.f32.mrb[0].mxu0
    %v6289 = vadd.f32 %v6108, %v6288
    %v6290 = vpop.f32.mrb[0].mxu0
    %6291 = vmatprep.mubr.f32.mxu0 0.0
    %v6292 = vand.u32 %v5989, 4294901760
    %6293 = vmatmul.mubr.f32.gmra.mrb[0].mxu0 %v6292
    %v6294 = vpop.f32.mrb[0].mxu0
    %v6295 = vadd.f32 %v6118, %v6294
    %v6296 = vpop.f32.mrb[0].mxu0
    %6297 = vmatprep.mubr.f32.mxu0 0.0
    %v6298 = vand.u32 %v5995, 4294901760
    %6299 = vmatmul.mubr.f32.gmra.mrb[0].mxu0 %v6298
    %v6300 = vpop.f32.mrb[0].mxu0
    %v6301 = vadd.f32 %v6128, %v6300
    %v6302 = vpop.f32.mrb[0].mxu0
    %6303 = vmatprep.mubr.f32.mxu0 0.0
    %v6304 = vand.u32 %v6001, 4294901760
    %6305 = vmatmul.mubr.f32.gmra.mrb[0].mxu0 %v6304
    %v6306 = vpop.f32.mrb[0].mxu0
    %v6307 = vadd.f32 %v6138, %v6306
    %v6308 = vpop.f32.mrb[0].mxu0
    %6309 = vdwg.mxu0
    %6310 = vmatprep.subr.mxu0 0.0
    %v6311 = vand.u32 %v6004, 4294901760
    %v6312 = vsub.f32 %v6004, %v6311
    %6313 = vmatpush1.msra.mxu0 %v6312
    %6314 = vmatprep.subr.mxu0 0.0
    %v6315 = vand.u32 %v6005, 4294901760
    %v6316 = vsub.f32 %v6005, %v6315
    %6317 = vmatpush1.msra.mxu0 %v6316
    %6318 = vmatprep.subr.mxu0 0.0
    %v6319 = vand.u32 %v6006, 4294901760
    %v6320 = vsub.f32 %v6006, %v6319
    %6321 = vmatpush1.msra.mxu0 %v6320
    %6322 = vmatprep.subr.mxu0 0.0
    %v6323 = vand.u32 %v6007, 4294901760
    %v6324 = vsub.f32 %v6007, %v6323
    %6325 = vmatpush1.msra.mxu0 %v6324
    %6326 = vmatprep.subr.mxu0 0.0
    %v6327 = vand.u32 %v6008, 4294901760
    %v6328 = vsub.f32 %v6008, %v6327
    %6329 = vmatpush1.msra.mxu0 %v6328
    %6330 = vmatprep.subr.mxu0 0.0
    %v6331 = vand.u32 %v6009, 4294901760
    %v6332 = vsub.f32 %v6009, %v6331
    %6333 = vmatpush1.msra.mxu0 %v6332
    %6334 = vmatprep.subr.mxu0 0.0
    %v6335 = vand.u32 %v6010, 4294901760
    %v6336 = vsub.f32 %v6010, %v6335
    %6337 = vmatpush1.msra.mxu0 %v6336
    %6338 = vmatprep.subr.mxu0 0.0
    %v6339 = vand.u32 %v6011, 4294901760
    %v6340 = vsub.f32 %v6011, %v6339
    %6341 = vmatpush1.msra.mxu0 %v6340
    %6342 = vmatprep.subr.mxu0 0.0
    %v6343 = vand.u32 %v6012, 4294901760
    %v6344 = vsub.f32 %v6012, %v6343
    %6345 = vmatpush1.msra.mxu0 %v6344
    %6346 = vmatprep.subr.mxu0 0.0
    %v6347 = vand.u32 %v6013, 4294901760
    %v6348 = vsub.f32 %v6013, %v6347
    %6349 = vmatpush1.msra.mxu0 %v6348
    %6350 = vmatprep.subr.mxu0 0.0
    %v6351 = vand.u32 %v6014, 4294901760
    %v6352 = vsub.f32 %v6014, %v6351
    %6353 = vmatpush1.msra.mxu0 %v6352
    %6354 = vmatprep.subr.mxu0 0.0
    %v6355 = vand.u32 %v6015, 4294901760
    %v6356 = vsub.f32 %v6015, %v6355
    %6357 = vmatpush1.msra.mxu0 %v6356
    %6358 = vmatprep.subr.mxu0 0.0
    %v6359 = vand.u32 %v6016, 4294901760
    %v6360 = vsub.f32 %v6016, %v6359
    %6361 = vmatpush1.msra.mxu0 %v6360
    %6362 = vmatprep.subr.mxu0 0.0
    %v6363 = vand.u32 %v6017, 4294901760
    %v6364 = vsub.f32 %v6017, %v6363
    %6365 = vmatpush1.msra.mxu0 %v6364
    %6366 = vmatprep.subr.mxu0 0.0
    %v6367 = vand.u32 %v6018, 4294901760
    %v6368 = vsub.f32 %v6018, %v6367
    %6369 = vmatpush1.msra.mxu0 %v6368
    %6370 = vmatprep.subr.mxu0 0.0
    %v6371 = vand.u32 %v6019, 4294901760
    %v6372 = vsub.f32 %v6019, %v6371
    %6373 = vmatpush1.msra.mxu0 %v6372
    %6374 = vmatprep.subr.mxu0 0.0
    %6375 = vmatpush1.msra.mxu0 0.0
    %6376 = vmatprep.subr.mxu0 0.0
    %6377 = vmatpush1.msra.mxu0 0.0
    %6378 = vmatprep.subr.mxu0 0.0
    %6379 = vmatpush1.msra.mxu0 0.0
    %6380 = vmatprep.subr.mxu0 0.0
    %6381 = vmatpush1.msra.mxu0 0.0
    %6382 = vmatprep.subr.mxu0 0.0
    %6383 = vmatpush1.msra.mxu0 0.0
    %6384 = vmatprep.subr.mxu0 0.0
    %6385 = vmatpush1.msra.mxu0 0.0
    %6386 = vmatprep.subr.mxu0 0.0
    %6387 = vmatpush1.msra.mxu0 0.0
    %6388 = vmatprep.subr.mxu0 0.0
    %6389 = vmatpush1.msra.mxu0 0.0
    %6390 = vmatprep.subr.mxu0 0.0
    %6391 = vmatpush1.msra.mxu0 0.0
    %6392 = vmatprep.subr.mxu0 0.0
    %6393 = vmatpush1.msra.mxu0 0.0
    %6394 = vmatprep.subr.mxu0 0.0
    %6395 = vmatpush1.msra.mxu0 0.0
    %6396 = vmatprep.subr.mxu0 0.0
    %6397 = vmatpush1.msra.mxu0 0.0
    %6398 = vmatprep.subr.mxu0 0.0
    %6399 = vmatpush1.msra.mxu0 0.0
    %6400 = vmatprep.subr.mxu0 0.0
    %6401 = vmatpush1.msra.mxu0 0.0
    %6402 = vmatprep.subr.mxu0 0.0
    %6403 = vmatpush1.msra.mxu0 0.0
    %6404 = vmatprep.subr.mxu0 0.0
    %6405 = vmatpush1.msra.mxu0 0.0
    %6406 = vmatprep.mubr.f32.mxu0 0.0
    %v6407 = vand.u32 %v5983, 4294901760
    %v6408 = vsub.f32 %v5983, %v6407
    %6409 = vmatmul.mubr.f32.gmra.mrb[0].mxu0 %v6408
    %v6410 = vpop.f32.mrb[0].mxu0
    %v6411 = vadd.f32 %v6289, %v6410
    %v6412 = vpop.f32.mrb[0].mxu0
    %6413 = vmatprep.mubr.f32.mxu0 0.0
    %v6414 = vand.u32 %v5989, 4294901760
    %v6415 = vsub.f32 %v5989, %v6414
    %6416 = vmatmul.mubr.f32.gmra.mrb[0].mxu0 %v6415
    %v6417 = vpop.f32.mrb[0].mxu0
    %v6418 = vadd.f32 %v6295, %v6417
    %v6419 = vpop.f32.mrb[0].mxu0
    %6420 = vmatprep.mubr.f32.mxu0 0.0
    %v6421 = vand.u32 %v5995, 4294901760
    %v6422 = vsub.f32 %v5995, %v6421
    %6423 = vmatmul.mubr.f32.gmra.mrb[0].mxu0 %v6422
    %v6424 = vpop.f32.mrb[0].mxu0
    %v6425 = vadd.f32 %v6301, %v6424
    %v6426 = vpop.f32.mrb[0].mxu0
    %6427 = vmatprep.mubr.f32.mxu0 0.0
    %v6428 = vand.u32 %v6001, 4294901760
    %v6429 = vsub.f32 %v6001, %v6428
    %6430 = vmatmul.mubr.f32.gmra.mrb[0].mxu0 %v6429
    %v6431 = vpop.f32.mrb[0].mxu0
    %v6432 = vadd.f32 %v6307, %v6431
    %v6433 = vpop.f32.mrb[0].mxu0
    %6434 = vdwg.mxu0
    %6435 = vmatprep.subr.mxu0 0.0
    %v6436 = vand.u32 %v6004, 4294901760
    %6437 = vmatpush1.msra.mxu0 %v6436
    %6438 = vmatprep.subr.mxu0 0.0
    %v6439 = vand.u32 %v6005, 4294901760
    %6440 = vmatpush1.msra.mxu0 %v6439
    %6441 = vmatprep.subr.mxu0 0.0
    %v6442 = vand.u32 %v6006, 4294901760
    %6443 = vmatpush1.msra.mxu0 %v6442
    %6444 = vmatprep.subr.mxu0 0.0
    %v6445 = vand.u32 %v6007, 4294901760
    %6446 = vmatpush1.msra.mxu0 %v6445
    %6447 = vmatprep.subr.mxu0 0.0
    %v6448 = vand.u32 %v6008, 4294901760
    %6449 = vmatpush1.msra.mxu0 %v6448
    %6450 = vmatprep.subr.mxu0 0.0
    %v6451 = vand.u32 %v6009, 4294901760
    %6452 = vmatpush1.msra.mxu0 %v6451
    %6453 = vmatprep.subr.mxu0 0.0
    %v6454 = vand.u32 %v6010, 4294901760
    %6455 = vmatpush1.msra.mxu0 %v6454
    %6456 = vmatprep.subr.mxu0 0.0
    %v6457 = vand.u32 %v6011, 4294901760
    %6458 = vmatpush1.msra.mxu0 %v6457
    %6459 = vmatprep.subr.mxu0 0.0
    %v6460 = vand.u32 %v6012, 4294901760
    %6461 = vmatpush1.msra.mxu0 %v6460
    %6462 = vmatprep.subr.mxu0 0.0
    %v6463 = vand.u32 %v6013, 4294901760
    %6464 = vmatpush1.msra.mxu0 %v6463
    %6465 = vmatprep.subr.mxu0 0.0
    %v6466 = vand.u32 %v6014, 4294901760
    %6467 = vmatpush1.msra.mxu0 %v6466
    %6468 = vmatprep.subr.mxu0 0.0
    %v6469 = vand.u32 %v6015, 4294901760
    %6470 = vmatpush1.msra.mxu0 %v6469
    %6471 = vmatprep.subr.mxu0 0.0
    %v6472 = vand.u32 %v6016, 4294901760
    %6473 = vmatpush1.msra.mxu0 %v6472
    %6474 = vmatprep.subr.mxu0 0.0
    %v6475 = vand.u32 %v6017, 4294901760
    %6476 = vmatpush1.msra.mxu0 %v6475
    %6477 = vmatprep.subr.mxu0 0.0
    %v6478 = vand.u32 %v6018, 4294901760
    %6479 = vmatpush1.msra.mxu0 %v6478
    %6480 = vmatprep.subr.mxu0 0.0
    %v6481 = vand.u32 %v6019, 4294901760
    %6482 = vmatpush1.msra.mxu0 %v6481
    %6483 = vmatprep.subr.mxu0 0.0
    %6484 = vmatpush1.msra.mxu0 0.0
    %6485 = vmatprep.subr.mxu0 0.0
    %6486 = vmatpush1.msra.mxu0 0.0
    %6487 = vmatprep.subr.mxu0 0.0
    %6488 = vmatpush1.msra.mxu0 0.0
    %6489 = vmatprep.subr.mxu0 0.0
    %6490 = vmatpush1.msra.mxu0 0.0
    %6491 = vmatprep.subr.mxu0 0.0
    %6492 = vmatpush1.msra.mxu0 0.0
    %6493 = vmatprep.subr.mxu0 0.0
    %6494 = vmatpush1.msra.mxu0 0.0
    %6495 = vmatprep.subr.mxu0 0.0
    %6496 = vmatpush1.msra.mxu0 0.0
    %6497 = vmatprep.subr.mxu0 0.0
    %6498 = vmatpush1.msra.mxu0 0.0
    %6499 = vmatprep.subr.mxu0 0.0
    %6500 = vmatpush1.msra.mxu0 0.0
    %6501 = vmatprep.subr.mxu0 0.0
    %6502 = vmatpush1.msra.mxu0 0.0
    %6503 = vmatprep.subr.mxu0 0.0
    %6504 = vmatpush1.msra.mxu0 0.0
    %6505 = vmatprep.subr.mxu0 0.0
    %6506 = vmatpush1.msra.mxu0 0.0
    %6507 = vmatprep.subr.mxu0 0.0
    %6508 = vmatpush1.msra.mxu0 0.0
    %6509 = vmatprep.subr.mxu0 0.0
    %6510 = vmatpush1.msra.mxu0 0.0
    %6511 = vmatprep.subr.mxu0 0.0
    %6512 = vmatpush1.msra.mxu0 0.0
    %6513 = vmatprep.subr.mxu0 0.0
    %6514 = vmatpush1.msra.mxu0 0.0
    %6515 = vmatprep.mubr.f32.mxu0 0.0
    %v6516 = vand.u32 %v5983, 4294901760
    %v6517 = vsub.f32 %v5983, %v6516
    %v6518 = vand.u32 %v6517, 4294901760
    %6519 = vmatmul.mubr.f32.gmra.mrb[0].mxu0 %v6518
    %v6520 = vpop.f32.mrb[0].mxu0
    %v6521 = vadd.f32 %v6411, %v6520
    %v6522 = vpop.f32.mrb[0].mxu0
    %6523 = vmatprep.mubr.f32.mxu0 0.0
    %v6524 = vand.u32 %v5989, 4294901760
    %v6525 = vsub.f32 %v5989, %v6524
    %v6526 = vand.u32 %v6525, 4294901760
    %6527 = vmatmul.mubr.f32.gmra.mrb[0].mxu0 %v6526
    %v6528 = vpop.f32.mrb[0].mxu0
    %v6529 = vadd.f32 %v6418, %v6528
    %v6530 = vpop.f32.mrb[0].mxu0
    %6531 = vmatprep.mubr.f32.mxu0 0.0
    %v6532 = vand.u32 %v5995, 4294901760
    %v6533 = vsub.f32 %v5995, %v6532
    %v6534 = vand.u32 %v6533, 4294901760
    %6535 = vmatmul.mubr.f32.gmra.mrb[0].mxu0 %v6534
    %v6536 = vpop.f32.mrb[0].mxu0
    %v6537 = vadd.f32 %v6425, %v6536
    %v6538 = vpop.f32.mrb[0].mxu0
    %6539 = vmatprep.mubr.f32.mxu0 0.0
    %v6540 = vand.u32 %v6001, 4294901760
    %v6541 = vsub.f32 %v6001, %v6540
    %v6542 = vand.u32 %v6541, 4294901760
    %6543 = vmatmul.mubr.f32.gmra.mrb[0].mxu0 %v6542
    %v6544 = vpop.f32.mrb[0].mxu0
    %v6545 = vadd.f32 %v6432, %v6544
    %v6546 = vpop.f32.mrb[0].mxu0
    %6547 = vdwg.mxu0
    %6548 = vmatprep.subr.mxu0 0.0
    %v6549 = vand.u32 %v6004, 4294901760
    %v6550 = vsub.f32 %v6004, %v6549
    %v6551 = vand.u32 %v6550, 4294901760
    %6552 = vmatpush1.msra.mxu0 %v6551
    %6553 = vmatprep.subr.mxu0 0.0
    %v6554 = vand.u32 %v6005, 4294901760
    %v6555 = vsub.f32 %v6005, %v6554
    %v6556 = vand.u32 %v6555, 4294901760
    %6557 = vmatpush1.msra.mxu0 %v6556
    %6558 = vmatprep.subr.mxu0 0.0
    %v6559 = vand.u32 %v6006, 4294901760
    %v6560 = vsub.f32 %v6006, %v6559
    %v6561 = vand.u32 %v6560, 4294901760
    %6562 = vmatpush1.msra.mxu0 %v6561
    %6563 = vmatprep.subr.mxu0 0.0
    %v6564 = vand.u32 %v6007, 4294901760
    %v6565 = vsub.f32 %v6007, %v6564
    %v6566 = vand.u32 %v6565, 4294901760
    %6567 = vmatpush1.msra.mxu0 %v6566
    %6568 = vmatprep.subr.mxu0 0.0
    %v6569 = vand.u32 %v6008, 4294901760
    %v6570 = vsub.f32 %v6008, %v6569
    %v6571 = vand.u32 %v6570, 4294901760
    %6572 = vmatpush1.msra.mxu0 %v6571
    %6573 = vmatprep.subr.mxu0 0.0
    %v6574 = vand.u32 %v6009, 4294901760
    %v6575 = vsub.f32 %v6009, %v6574
    %v6576 = vand.u32 %v6575, 4294901760
    %6577 = vmatpush1.msra.mxu0 %v6576
    %6578 = vmatprep.subr.mxu0 0.0
    %v6579 = vand.u32 %v6010, 4294901760
    %v6580 = vsub.f32 %v6010, %v6579
    %v6581 = vand.u32 %v6580, 4294901760
    %6582 = vmatpush1.msra.mxu0 %v6581
    %6583 = vmatprep.subr.mxu0 0.0
    %v6584 = vand.u32 %v6011, 4294901760
    %v6585 = vsub.f32 %v6011, %v6584
    %v6586 = vand.u32 %v6585, 4294901760
    %6587 = vmatpush1.msra.mxu0 %v6586
    %6588 = vmatprep.subr.mxu0 0.0
    %v6589 = vand.u32 %v6012, 4294901760
    %v6590 = vsub.f32 %v6012, %v6589
    %v6591 = vand.u32 %v6590, 4294901760
    %6592 = vmatpush1.msra.mxu0 %v6591
    %6593 = vmatprep.subr.mxu0 0.0
    %v6594 = vand.u32 %v6013, 4294901760
    %v6595 = vsub.f32 %v6013, %v6594
    %v6596 = vand.u32 %v6595, 4294901760
    %6597 = vmatpush1.msra.mxu0 %v6596
    %6598 = vmatprep.subr.mxu0 0.0
    %v6599 = vand.u32 %v6014, 4294901760
    %v6600 = vsub.f32 %v6014, %v6599
    %v6601 = vand.u32 %v6600, 4294901760
    %6602 = vmatpush1.msra.mxu0 %v6601
    %6603 = vmatprep.subr.mxu0 0.0
    %v6604 = vand.u32 %v6015, 4294901760
    %v6605 = vsub.f32 %v6015, %v6604
    %v6606 = vand.u32 %v6605, 4294901760
    %6607 = vmatpush1.msra.mxu0 %v6606
    %6608 = vmatprep.subr.mxu0 0.0
    %v6609 = vand.u32 %v6016, 4294901760
    %v6610 = vsub.f32 %v6016, %v6609
    %v6611 = vand.u32 %v6610, 4294901760
    %6612 = vmatpush1.msra.mxu0 %v6611
    %6613 = vmatprep.subr.mxu0 0.0
    %v6614 = vand.u32 %v6017, 4294901760
    %v6615 = vsub.f32 %v6017, %v6614
    %v6616 = vand.u32 %v6615, 4294901760
    %6617 = vmatpush1.msra.mxu0 %v6616
    %6618 = vmatprep.subr.mxu0 0.0
    %v6619 = vand.u32 %v6018, 4294901760
    %v6620 = vsub.f32 %v6018, %v6619
    %v6621 = vand.u32 %v6620, 4294901760
    %6622 = vmatpush1.msra.mxu0 %v6621
    %6623 = vmatprep.subr.mxu0 0.0
    %v6624 = vand.u32 %v6019, 4294901760
    %v6625 = vsub.f32 %v6019, %v6624
    %v6626 = vand.u32 %v6625, 4294901760
    %6627 = vmatpush1.msra.mxu0 %v6626
    %6628 = vmatprep.subr.mxu0 0.0
    %6629 = vmatpush1.msra.mxu0 0.0
    %6630 = vmatprep.subr.mxu0 0.0
    %6631 = vmatpush1.msra.mxu0 0.0
    %6632 = vmatprep.subr.mxu0 0.0
    %6633 = vmatpush1.msra.mxu0 0.0
    %6634 = vmatprep.subr.mxu0 0.0
    %6635 = vmatpush1.msra.mxu0 0.0
    %6636 = vmatprep.subr.mxu0 0.0
    %6637 = vmatpush1.msra.mxu0 0.0
    %6638 = vmatprep.subr.mxu0 0.0
    %6639 = vmatpush1.msra.mxu0 0.0
    %6640 = vmatprep.subr.mxu0 0.0
    %6641 = vmatpush1.msra.mxu0 0.0
    %6642 = vmatprep.subr.mxu0 0.0
    %6643 = vmatpush1.msra.mxu0 0.0
    %6644 = vmatprep.subr.mxu0 0.0
    %6645 = vmatpush1.msra.mxu0 0.0
    %6646 = vmatprep.subr.mxu0 0.0
    %6647 = vmatpush1.msra.mxu0 0.0
    %6648 = vmatprep.subr.mxu0 0.0
    %6649 = vmatpush1.msra.mxu0 0.0
    %6650 = vmatprep.subr.mxu0 0.0
    %6651 = vmatpush1.msra.mxu0 0.0
    %6652 = vmatprep.subr.mxu0 0.0
    %6653 = vmatpush1.msra.mxu0 0.0
    %6654 = vmatprep.subr.mxu0 0.0
    %6655 = vmatpush1.msra.mxu0 0.0
    %6656 = vmatprep.subr.mxu0 0.0
    %6657 = vmatpush1.msra.mxu0 0.0
    %6658 = vmatprep.subr.mxu0 0.0
    %6659 = vmatpush1.msra.mxu0 0.0
    %6660 = vmatprep.mubr.f32.mxu0 0.0
    %v6661 = vand.u32 %v5983, 4294901760
    %6662 = vmatmul.mubr.f32.gmra.mrb[0].mxu0 %v6661
    %v6663 = vpop.f32.mrb[0].mxu0
    %v6664 = vadd.f32 %v6521, %v6663
    %v6665 = vpop.f32.mrb[0].mxu0
    %6666 = vmatprep.mubr.f32.mxu0 0.0
    %v6667 = vand.u32 %v5989, 4294901760
    %6668 = vmatmul.mubr.f32.gmra.mrb[0].mxu0 %v6667
    %v6669 = vpop.f32.mrb[0].mxu0
    %v6670 = vadd.f32 %v6529, %v6669
    %v6671 = vpop.f32.mrb[0].mxu0
    %6672 = vmatprep.mubr.f32.mxu0 0.0
    %v6673 = vand.u32 %v5995, 4294901760
    %6674 = vmatmul.mubr.f32.gmra.mrb[0].mxu0 %v6673
    %v6675 = vpop.f32.mrb[0].mxu0
    %v6676 = vadd.f32 %v6537, %v6675
    %v6677 = vpop.f32.mrb[0].mxu0
    %6678 = vmatprep.mubr.f32.mxu0 0.0
    %v6679 = vand.u32 %v6001, 4294901760
    %6680 = vmatmul.mubr.f32.gmra.mrb[0].mxu0 %v6679
    %v6681 = vpop.f32.mrb[0].mxu0
    %v6682 = vadd.f32 %v6545, %v6681
    %v6683 = vpop.f32.mrb[0].mxu0
    %6684 = vdwg.mxu0
    %6685 = vmatprep.subr.mxu0 0.0
    %v6686 = vand.u32 %v6004, 4294901760
    %6687 = vmatpush1.msra.mxu0 %v6686
    %6688 = vmatprep.subr.mxu0 0.0
    %v6689 = vand.u32 %v6005, 4294901760
    %6690 = vmatpush1.msra.mxu0 %v6689
    %6691 = vmatprep.subr.mxu0 0.0
    %v6692 = vand.u32 %v6006, 4294901760
    %6693 = vmatpush1.msra.mxu0 %v6692
    %6694 = vmatprep.subr.mxu0 0.0
    %v6695 = vand.u32 %v6007, 4294901760
    %6696 = vmatpush1.msra.mxu0 %v6695
    %6697 = vmatprep.subr.mxu0 0.0
    %v6698 = vand.u32 %v6008, 4294901760
    %6699 = vmatpush1.msra.mxu0 %v6698
    %6700 = vmatprep.subr.mxu0 0.0
    %v6701 = vand.u32 %v6009, 4294901760
    %6702 = vmatpush1.msra.mxu0 %v6701
    %6703 = vmatprep.subr.mxu0 0.0
    %v6704 = vand.u32 %v6010, 4294901760
    %6705 = vmatpush1.msra.mxu0 %v6704
    %6706 = vmatprep.subr.mxu0 0.0
    %v6707 = vand.u32 %v6011, 4294901760
    %6708 = vmatpush1.msra.mxu0 %v6707
    %6709 = vmatprep.subr.mxu0 0.0
    %v6710 = vand.u32 %v6012, 4294901760
    %6711 = vmatpush1.msra.mxu0 %v6710
    %6712 = vmatprep.subr.mxu0 0.0
    %v6713 = vand.u32 %v6013, 4294901760
    %6714 = vmatpush1.msra.mxu0 %v6713
    %6715 = vmatprep.subr.mxu0 0.0
    %v6716 = vand.u32 %v6014, 4294901760
    %6717 = vmatpush1.msra.mxu0 %v6716
    %6718 = vmatprep.subr.mxu0 0.0
    %v6719 = vand.u32 %v6015, 4294901760
    %6720 = vmatpush1.msra.mxu0 %v6719
    %6721 = vmatprep.subr.mxu0 0.0
    %v6722 = vand.u32 %v6016, 4294901760
    %6723 = vmatpush1.msra.mxu0 %v6722
    %6724 = vmatprep.subr.mxu0 0.0
    %v6725 = vand.u32 %v6017, 4294901760
    %6726 = vmatpush1.msra.mxu0 %v6725
    %6727 = vmatprep.subr.mxu0 0.0
    %v6728 = vand.u32 %v6018, 4294901760
    %6729 = vmatpush1.msra.mxu0 %v6728
    %6730 = vmatprep.subr.mxu0 0.0
    %v6731 = vand.u32 %v6019, 4294901760
    %6732 = vmatpush1.msra.mxu0 %v6731
    %6733 = vmatprep.subr.mxu0 0.0
    %6734 = vmatpush1.msra.mxu0 0.0
    %6735 = vmatprep.subr.mxu0 0.0
    %6736 = vmatpush1.msra.mxu0 0.0
    %6737 = vmatprep.subr.mxu0 0.0
    %6738 = vmatpush1.msra.mxu0 0.0
    %6739 = vmatprep.subr.mxu0 0.0
    %6740 = vmatpush1.msra.mxu0 0.0
    %6741 = vmatprep.subr.mxu0 0.0
    %6742 = vmatpush1.msra.mxu0 0.0
    %6743 = vmatprep.subr.mxu0 0.0
    %6744 = vmatpush1.msra.mxu0 0.0
    %6745 = vmatprep.subr.mxu0 0.0
    %6746 = vmatpush1.msra.mxu0 0.0
    %6747 = vmatprep.subr.mxu0 0.0
    %6748 = vmatpush1.msra.mxu0 0.0
    %6749 = vmatprep.subr.mxu0 0.0
    %6750 = vmatpush1.msra.mxu0 0.0
    %6751 = vmatprep.subr.mxu0 0.0
    %6752 = vmatpush1.msra.mxu0 0.0
    %6753 = vmatprep.subr.mxu0 0.0
    %6754 = vmatpush1.msra.mxu0 0.0
    %6755 = vmatprep.subr.mxu0 0.0
    %6756 = vmatpush1.msra.mxu0 0.0
    %6757 = vmatprep.subr.mxu0 0.0
    %6758 = vmatpush1.msra.mxu0 0.0
    %6759 = vmatprep.subr.mxu0 0.0
    %6760 = vmatpush1.msra.mxu0 0.0
    %6761 = vmatprep.subr.mxu0 0.0
    %6762 = vmatpush1.msra.mxu0 0.0
    %6763 = vmatprep.subr.mxu0 0.0
    %6764 = vmatpush1.msra.mxu0 0.0
    %6765 = vmatprep.mubr.f32.mxu0 0.0
    %v6766 = vand.u32 %v5983, 4294901760
    %6767 = vmatmul.mubr.f32.gmra.mrb[0].mxu0 %v6766
    %v6768 = vpop.f32.mrb[0].mxu0
    %v6769 = vadd.f32 %v6664, %v6768
    %v6770 = vpop.f32.mrb[0].mxu0
    %6771 = vmatprep.mubr.f32.mxu0 0.0
    %v6772 = vand.u32 %v5989, 4294901760
    %6773 = vmatmul.mubr.f32.gmra.mrb[0].mxu0 %v6772
    %v6774 = vpop.f32.mrb[0].mxu0
    %v6775 = vadd.f32 %v6670, %v6774
    %v6776 = vpop.f32.mrb[0].mxu0
    %6777 = vmatprep.mubr.f32.mxu0 0.0
    %v6778 = vand.u32 %v5995, 4294901760
    %6779 = vmatmul.mubr.f32.gmra.mrb[0].mxu0 %v6778
    %v6780 = vpop.f32.mrb[0].mxu0
    %v6781 = vadd.f32 %v6676, %v6780
    %v6782 = vpop.f32.mrb[0].mxu0
    %6783 = vmatprep.mubr.f32.mxu0 0.0
    %v6784 = vand.u32 %v6001, 4294901760
    %6785 = vmatmul.mubr.f32.gmra.mrb[0].mxu0 %v6784
    %v6786 = vpop.f32.mrb[0].mxu0
    %v6787 = vadd.f32 %v6682, %v6786
    %v6788 = vpop.f32.mrb[0].mxu0
    %6789 = vdwg.mxu0
    %6790 = vmatprep.subr.mxu0 0.0
    %v6791 = vand.u32 %v5374, 4294901760
    %6792 = vmatpush1.msra.mxu0 %v6791
    %6793 = vmatprep.subr.mxu0 0.0
    %v6794 = vand.u32 %v5375, 4294901760
    %6795 = vmatpush1.msra.mxu0 %v6794
    %6796 = vmatprep.subr.mxu0 0.0
    %v6797 = vand.u32 %v5376, 4294901760
    %6798 = vmatpush1.msra.mxu0 %v6797
    %6799 = vmatprep.subr.mxu0 0.0
    %v6800 = vand.u32 %v5377, 4294901760
    %6801 = vmatpush1.msra.mxu0 %v6800
    %6802 = vmatprep.subr.mxu0 0.0
    %v6803 = vand.u32 %v5378, 4294901760
    %6804 = vmatpush1.msra.mxu0 %v6803
    %6805 = vmatprep.subr.mxu0 0.0
    %v6806 = vand.u32 %v5379, 4294901760
    %6807 = vmatpush1.msra.mxu0 %v6806
    %6808 = vmatprep.subr.mxu0 0.0
    %v6809 = vand.u32 %v5380, 4294901760
    %6810 = vmatpush1.msra.mxu0 %v6809
    %6811 = vmatprep.subr.mxu0 0.0
    %v6812 = vand.u32 %v5381, 4294901760
    %6813 = vmatpush1.msra.mxu0 %v6812
    %6814 = vmatprep.subr.mxu0 0.0
    %v6815 = vand.u32 %v5382, 4294901760
    %6816 = vmatpush1.msra.mxu0 %v6815
    %6817 = vmatprep.subr.mxu0 0.0
    %v6818 = vand.u32 %v5383, 4294901760
    %6819 = vmatpush1.msra.mxu0 %v6818
    %6820 = vmatprep.subr.mxu0 0.0
    %v6821 = vand.u32 %v5384, 4294901760
    %6822 = vmatpush1.msra.mxu0 %v6821
    %6823 = vmatprep.subr.mxu0 0.0
    %v6824 = vand.u32 %v5385, 4294901760
    %6825 = vmatpush1.msra.mxu0 %v6824
    %6826 = vmatprep.subr.mxu0 0.0
    %v6827 = vand.u32 %v5386, 4294901760
    %6828 = vmatpush1.msra.mxu0 %v6827
    %6829 = vmatprep.subr.mxu0 0.0
    %v6830 = vand.u32 %v5387, 4294901760
    %6831 = vmatpush1.msra.mxu0 %v6830
    %6832 = vmatprep.subr.mxu0 0.0
    %v6833 = vand.u32 %v5388, 4294901760
    %6834 = vmatpush1.msra.mxu0 %v6833
    %6835 = vmatprep.subr.mxu0 0.0
    %v6836 = vand.u32 %v5389, 4294901760
    %6837 = vmatpush1.msra.mxu0 %v6836
    %6838 = vmatprep.subr.mxu0 0.0
    %6839 = vmatpush1.msra.mxu0 0.0
    %6840 = vmatprep.subr.mxu0 0.0
    %6841 = vmatpush1.msra.mxu0 0.0
    %6842 = vmatprep.subr.mxu0 0.0
    %6843 = vmatpush1.msra.mxu0 0.0
    %6844 = vmatprep.subr.mxu0 0.0
    %6845 = vmatpush1.msra.mxu0 0.0
    %6846 = vmatprep.subr.mxu0 0.0
    %6847 = vmatpush1.msra.mxu0 0.0
    %6848 = vmatprep.subr.mxu0 0.0
    %6849 = vmatpush1.msra.mxu0 0.0
    %6850 = vmatprep.subr.mxu0 0.0
    %6851 = vmatpush1.msra.mxu0 0.0
    %6852 = vmatprep.subr.mxu0 0.0
    %6853 = vmatpush1.msra.mxu0 0.0
    %6854 = vmatprep.subr.mxu0 0.0
    %6855 = vmatpush1.msra.mxu0 0.0
    %6856 = vmatprep.subr.mxu0 0.0
    %6857 = vmatpush1.msra.mxu0 0.0
    %6858 = vmatprep.subr.mxu0 0.0
    %6859 = vmatpush1.msra.mxu0 0.0
    %6860 = vmatprep.subr.mxu0 0.0
    %6861 = vmatpush1.msra.mxu0 0.0
    %6862 = vmatprep.subr.mxu0 0.0
    %6863 = vmatpush1.msra.mxu0 0.0
    %6864 = vmatprep.subr.mxu0 0.0
    %6865 = vmatpush1.msra.mxu0 0.0
    %6866 = vmatprep.subr.mxu0 0.0
    %6867 = vmatpush1.msra.mxu0 0.0
    %6868 = vmatprep.subr.mxu0 0.0
    %6869 = vmatpush1.msra.mxu0 0.0
    %6870 = vmatprep.mubr.f32.mxu0 0.0
    %v6871 = vand.u32 %v5369, 4294901760
    %v6872 = vsub.f32 %v5369, %v6871
    %v6873 = vand.u32 %v6872, 4294901760
    %v6874 = vsub.f32 %v6872, %v6873
    %v6875 = vand.u32 %v6874, 4294901760
    %6876 = vmatmul.mubr.f32.gmra.mrb[0].mxu0 %v6875
    %v6877 = vpop.f32.mrb[0].mxu0
    %v6878 = vadd.f32 %v6769, %v6877
    %v6879 = vpop.f32.mrb[0].mxu0
    %6880 = vmatprep.mubr.f32.mxu0 0.0
    %v6881 = vand.u32 %v5370, 4294901760
    %v6882 = vsub.f32 %v5370, %v6881
    %v6883 = vand.u32 %v6882, 4294901760
    %v6884 = vsub.f32 %v6882, %v6883
    %v6885 = vand.u32 %v6884, 4294901760
    %6886 = vmatmul.mubr.f32.gmra.mrb[0].mxu0 %v6885
    %v6887 = vpop.f32.mrb[0].mxu0
    %v6888 = vadd.f32 %v6775, %v6887
    %v6889 = vpop.f32.mrb[0].mxu0
    %6890 = vmatprep.mubr.f32.mxu0 0.0
    %v6891 = vand.u32 %v5371, 4294901760
    %v6892 = vsub.f32 %v5371, %v6891
    %v6893 = vand.u32 %v6892, 4294901760
    %v6894 = vsub.f32 %v6892, %v6893
    %v6895 = vand.u32 %v6894, 4294901760
    %6896 = vmatmul.mubr.f32.gmra.mrb[0].mxu0 %v6895
    %v6897 = vpop.f32.mrb[0].mxu0
    %v6898 = vadd.f32 %v6781, %v6897
    %v6899 = vpop.f32.mrb[0].mxu0
    %6900 = vmatprep.mubr.f32.mxu0 0.0
    %v6901 = vand.u32 %v5372, 4294901760
    %v6902 = vsub.f32 %v5372, %v6901
    %v6903 = vand.u32 %v6902, 4294901760
    %v6904 = vsub.f32 %v6902, %v6903
    %v6905 = vand.u32 %v6904, 4294901760
    %6906 = vmatmul.mubr.f32.gmra.mrb[0].mxu0 %v6905
    %v6907 = vpop.f32.mrb[0].mxu0
    %v6908 = vadd.f32 %v6787, %v6907
    %v6909 = vpop.f32.mrb[0].mxu0
    %6910 = vdwg.mxu0
    %6911 = vmatprep.subr.mxu0 0.0
    %v6912 = vand.u32 %v5374, 4294901760
    %v6913 = vsub.f32 %v5374, %v6912
    %v6914 = vand.u32 %v6913, 4294901760
    %v6915 = vsub.f32 %v6913, %v6914
    %v6916 = vand.u32 %v6915, 4294901760
    %6917 = vmatpush1.msra.mxu0 %v6916
    %6918 = vmatprep.subr.mxu0 0.0
    %v6919 = vand.u32 %v5375, 4294901760
    %v6920 = vsub.f32 %v5375, %v6919
    %v6921 = vand.u32 %v6920, 4294901760
    %v6922 = vsub.f32 %v6920, %v6921
    %v6923 = vand.u32 %v6922, 4294901760
    %6924 = vmatpush1.msra.mxu0 %v6923
    %6925 = vmatprep.subr.mxu0 0.0
    %v6926 = vand.u32 %v5376, 4294901760
    %v6927 = vsub.f32 %v5376, %v6926
    %v6928 = vand.u32 %v6927, 4294901760
    %v6929 = vsub.f32 %v6927, %v6928
    %v6930 = vand.u32 %v6929, 4294901760
    %6931 = vmatpush1.msra.mxu0 %v6930
    %6932 = vmatprep.subr.mxu0 0.0
    %v6933 = vand.u32 %v5377, 4294901760
    %v6934 = vsub.f32 %v5377, %v6933
    %v6935 = vand.u32 %v6934, 4294901760
    %v6936 = vsub.f32 %v6934, %v6935
    %v6937 = vand.u32 %v6936, 4294901760
    %6938 = vmatpush1.msra.mxu0 %v6937
    %6939 = vmatprep.subr.mxu0 0.0
    %v6940 = vand.u32 %v5378, 4294901760
    %v6941 = vsub.f32 %v5378, %v6940
    %v6942 = vand.u32 %v6941, 4294901760
    %v6943 = vsub.f32 %v6941, %v6942
    %v6944 = vand.u32 %v6943, 4294901760
    %6945 = vmatpush1.msra.mxu0 %v6944
    %6946 = vmatprep.subr.mxu0 0.0
    %v6947 = vand.u32 %v5379, 4294901760
    %v6948 = vsub.f32 %v5379, %v6947
    %v6949 = vand.u32 %v6948, 4294901760
    %v6950 = vsub.f32 %v6948, %v6949
    %v6951 = vand.u32 %v6950, 4294901760
    %6952 = vmatpush1.msra.mxu0 %v6951
    %6953 = vmatprep.subr.mxu0 0.0
    %v6954 = vand.u32 %v5380, 4294901760
    %v6955 = vsub.f32 %v5380, %v6954
    %v6956 = vand.u32 %v6955, 4294901760
    %v6957 = vsub.f32 %v6955, %v6956
    %v6958 = vand.u32 %v6957, 4294901760
    %6959 = vmatpush1.msra.mxu0 %v6958
    %6960 = vmatprep.subr.mxu0 0.0
    %v6961 = vand.u32 %v5381, 4294901760
    %v6962 = vsub.f32 %v5381, %v6961
    %v6963 = vand.u32 %v6962, 4294901760
    %v6964 = vsub.f32 %v6962, %v6963
    %v6965 = vand.u32 %v6964, 4294901760
    %6966 = vmatpush1.msra.mxu0 %v6965
    %6967 = vmatprep.subr.mxu0 0.0
    %v6968 = vand.u32 %v5382, 4294901760
    %v6969 = vsub.f32 %v5382, %v6968
    %v6970 = vand.u32 %v6969, 4294901760
    %v6971 = vsub.f32 %v6969, %v6970
    %v6972 = vand.u32 %v6971, 4294901760
    %6973 = vmatpush1.msra.mxu0 %v6972
    %6974 = vmatprep.subr.mxu0 0.0
    %v6975 = vand.u32 %v5383, 4294901760
    %v6976 = vsub.f32 %v5383, %v6975
    %v6977 = vand.u32 %v6976, 4294901760
    %v6978 = vsub.f32 %v6976, %v6977
    %v6979 = vand.u32 %v6978, 4294901760
    %6980 = vmatpush1.msra.mxu0 %v6979
    %6981 = vmatprep.subr.mxu0 0.0
    %v6982 = vand.u32 %v5384, 4294901760
    %v6983 = vsub.f32 %v5384, %v6982
    %v6984 = vand.u32 %v6983, 4294901760
    %v6985 = vsub.f32 %v6983, %v6984
    %v6986 = vand.u32 %v6985, 4294901760
    %6987 = vmatpush1.msra.mxu0 %v6986
    %6988 = vmatprep.subr.mxu0 0.0
    %v6989 = vand.u32 %v5385, 4294901760
    %v6990 = vsub.f32 %v5385, %v6989
    %v6991 = vand.u32 %v6990, 4294901760
    %v6992 = vsub.f32 %v6990, %v6991
    %v6993 = vand.u32 %v6992, 4294901760
    %6994 = vmatpush1.msra.mxu0 %v6993
    %6995 = vmatprep.subr.mxu0 0.0
    %v6996 = vand.u32 %v5386, 4294901760
    %v6997 = vsub.f32 %v5386, %v6996
    %v6998 = vand.u32 %v6997, 4294901760
    %v6999 = vsub.f32 %v6997, %v6998
    %v7000 = vand.u32 %v6999, 4294901760
    %7001 = vmatpush1.msra.mxu0 %v7000
    %7002 = vmatprep.subr.mxu0 0.0
    %v7003 = vand.u32 %v5387, 4294901760
    %v7004 = vsub.f32 %v5387, %v7003
    %v7005 = vand.u32 %v7004, 4294901760
    %v7006 = vsub.f32 %v7004, %v7005
    %v7007 = vand.u32 %v7006, 4294901760
    %7008 = vmatpush1.msra.mxu0 %v7007
    %7009 = vmatprep.subr.mxu0 0.0
    %v7010 = vand.u32 %v5388, 4294901760
    %v7011 = vsub.f32 %v5388, %v7010
    %v7012 = vand.u32 %v7011, 4294901760
    %v7013 = vsub.f32 %v7011, %v7012
    %v7014 = vand.u32 %v7013, 4294901760
    %7015 = vmatpush1.msra.mxu0 %v7014
    %7016 = vmatprep.subr.mxu0 0.0
    %v7017 = vand.u32 %v5389, 4294901760
    %v7018 = vsub.f32 %v5389, %v7017
    %v7019 = vand.u32 %v7018, 4294901760
    %v7020 = vsub.f32 %v7018, %v7019
    %v7021 = vand.u32 %v7020, 4294901760
    %7022 = vmatpush1.msra.mxu0 %v7021
    %7023 = vmatprep.subr.mxu0 0.0
    %7024 = vmatpush1.msra.mxu0 0.0
    %7025 = vmatprep.subr.mxu0 0.0
    %7026 = vmatpush1.msra.mxu0 0.0
    %7027 = vmatprep.subr.mxu0 0.0
    %7028 = vmatpush1.msra.mxu0 0.0
    %7029 = vmatprep.subr.mxu0 0.0
    %7030 = vmatpush1.msra.mxu0 0.0
    %7031 = vmatprep.subr.mxu0 0.0
    %7032 = vmatpush1.msra.mxu0 0.0
    %7033 = vmatprep.subr.mxu0 0.0
    %7034 = vmatpush1.msra.mxu0 0.0
    %7035 = vmatprep.subr.mxu0 0.0
    %7036 = vmatpush1.msra.mxu0 0.0
    %7037 = vmatprep.subr.mxu0 0.0
    %7038 = vmatpush1.msra.mxu0 0.0
    %7039 = vmatprep.subr.mxu0 0.0
    %7040 = vmatpush1.msra.mxu0 0.0
    %7041 = vmatprep.subr.mxu0 0.0
    %7042 = vmatpush1.msra.mxu0 0.0
    %7043 = vmatprep.subr.mxu0 0.0
    %7044 = vmatpush1.msra.mxu0 0.0
    %7045 = vmatprep.subr.mxu0 0.0
    %7046 = vmatpush1.msra.mxu0 0.0
    %7047 = vmatprep.subr.mxu0 0.0
    %7048 = vmatpush1.msra.mxu0 0.0
    %7049 = vmatprep.subr.mxu0 0.0
    %7050 = vmatpush1.msra.mxu0 0.0
    %7051 = vmatprep.subr.mxu0 0.0
    %7052 = vmatpush1.msra.mxu0 0.0
    %7053 = vmatprep.subr.mxu0 0.0
    %7054 = vmatpush1.msra.mxu0 0.0
    %7055 = vmatprep.mubr.f32.mxu0 0.0
    %v7056 = vand.u32 %v5369, 4294901760
    %7057 = vmatmul.mubr.f32.gmra.mrb[0].mxu0 %v7056
    %v7058 = vpop.f32.mrb[0].mxu0
    %v7059 = vadd.f32 %v6878, %v7058
    %v7060 = vpop.f32.mrb[0].mxu0
    %7061 = vmatprep.mubr.f32.mxu0 0.0
    %v7062 = vand.u32 %v5370, 4294901760
    %7063 = vmatmul.mubr.f32.gmra.mrb[0].mxu0 %v7062
    %v7064 = vpop.f32.mrb[0].mxu0
    %v7065 = vadd.f32 %v6888, %v7064
    %v7066 = vpop.f32.mrb[0].mxu0
    %7067 = vmatprep.mubr.f32.mxu0 0.0
    %v7068 = vand.u32 %v5371, 4294901760
    %7069 = vmatmul.mubr.f32.gmra.mrb[0].mxu0 %v7068
    %v7070 = vpop.f32.mrb[0].mxu0
    %v7071 = vadd.f32 %v6898, %v7070
    %v7072 = vpop.f32.mrb[0].mxu0
    %7073 = vmatprep.mubr.f32.mxu0 0.0
    %v7074 = vand.u32 %v5372, 4294901760
    %7075 = vmatmul.mubr.f32.gmra.mrb[0].mxu0 %v7074
    %v7076 = vpop.f32.mrb[0].mxu0
    %v7077 = vadd.f32 %v6908, %v7076
    %v7078 = vpop.f32.mrb[0].mxu0
    %7079 = vdwg.mxu0
    %7080 = vmatprep.subr.mxu0 0.0
    %v7081 = vand.u32 %v5374, 4294901760
    %v7082 = vsub.f32 %v5374, %v7081
    %7083 = vmatpush1.msra.mxu0 %v7082
    %7084 = vmatprep.subr.mxu0 0.0
    %v7085 = vand.u32 %v5375, 4294901760
    %v7086 = vsub.f32 %v5375, %v7085
    %7087 = vmatpush1.msra.mxu0 %v7086
    %7088 = vmatprep.subr.mxu0 0.0
    %v7089 = vand.u32 %v5376, 4294901760
    %v7090 = vsub.f32 %v5376, %v7089
    %7091 = vmatpush1.msra.mxu0 %v7090
    %7092 = vmatprep.subr.mxu0 0.0
    %v7093 = vand.u32 %v5377, 4294901760
    %v7094 = vsub.f32 %v5377, %v7093
    %7095 = vmatpush1.msra.mxu0 %v7094
    %7096 = vmatprep.subr.mxu0 0.0
    %v7097 = vand.u32 %v5378, 4294901760
    %v7098 = vsub.f32 %v5378, %v7097
    %7099 = vmatpush1.msra.mxu0 %v7098
    %7100 = vmatprep.subr.mxu0 0.0
    %v7101 = vand.u32 %v5379, 4294901760
    %v7102 = vsub.f32 %v5379, %v7101
    %7103 = vmatpush1.msra.mxu0 %v7102
    %7104 = vmatprep.subr.mxu0 0.0
    %v7105 = vand.u32 %v5380, 4294901760
    %v7106 = vsub.f32 %v5380, %v7105
    %7107 = vmatpush1.msra.mxu0 %v7106
    %7108 = vmatprep.subr.mxu0 0.0
    %v7109 = vand.u32 %v5381, 4294901760
    %v7110 = vsub.f32 %v5381, %v7109
    %7111 = vmatpush1.msra.mxu0 %v7110
    %7112 = vmatprep.subr.mxu0 0.0
    %v7113 = vand.u32 %v5382, 4294901760
    %v7114 = vsub.f32 %v5382, %v7113
    %7115 = vmatpush1.msra.mxu0 %v7114
    %7116 = vmatprep.subr.mxu0 0.0
    %v7117 = vand.u32 %v5383, 4294901760
    %v7118 = vsub.f32 %v5383, %v7117
    %7119 = vmatpush1.msra.mxu0 %v7118
    %7120 = vmatprep.subr.mxu0 0.0
    %v7121 = vand.u32 %v5384, 4294901760
    %v7122 = vsub.f32 %v5384, %v7121
    %7123 = vmatpush1.msra.mxu0 %v7122
    %7124 = vmatprep.subr.mxu0 0.0
    %v7125 = vand.u32 %v5385, 4294901760
    %v7126 = vsub.f32 %v5385, %v7125
    %7127 = vmatpush1.msra.mxu0 %v7126
    %7128 = vmatprep.subr.mxu0 0.0
    %v7129 = vand.u32 %v5386, 4294901760
    %v7130 = vsub.f32 %v5386, %v7129
    %7131 = vmatpush1.msra.mxu0 %v7130
    %7132 = vmatprep.subr.mxu0 0.0
    %v7133 = vand.u32 %v5387, 4294901760
    %v7134 = vsub.f32 %v5387, %v7133
    %7135 = vmatpush1.msra.mxu0 %v7134
    %7136 = vmatprep.subr.mxu0 0.0
    %v7137 = vand.u32 %v5388, 4294901760
    %v7138 = vsub.f32 %v5388, %v7137
    %7139 = vmatpush1.msra.mxu0 %v7138
    %7140 = vmatprep.subr.mxu0 0.0
    %v7141 = vand.u32 %v5389, 4294901760
    %v7142 = vsub.f32 %v5389, %v7141
    %7143 = vmatpush1.msra.mxu0 %v7142
    %7144 = vmatprep.subr.mxu0 0.0
    %7145 = vmatpush1.msra.mxu0 0.0
    %7146 = vmatprep.subr.mxu0 0.0
    %7147 = vmatpush1.msra.mxu0 0.0
    %7148 = vmatprep.subr.mxu0 0.0
    %7149 = vmatpush1.msra.mxu0 0.0
    %7150 = vmatprep.subr.mxu0 0.0
    %7151 = vmatpush1.msra.mxu0 0.0
    %7152 = vmatprep.subr.mxu0 0.0
    %7153 = vmatpush1.msra.mxu0 0.0
    %7154 = vmatprep.subr.mxu0 0.0
    %7155 = vmatpush1.msra.mxu0 0.0
    %7156 = vmatprep.subr.mxu0 0.0
    %7157 = vmatpush1.msra.mxu0 0.0
    %7158 = vmatprep.subr.mxu0 0.0
    %7159 = vmatpush1.msra.mxu0 0.0
    %7160 = vmatprep.subr.mxu0 0.0
    %7161 = vmatpush1.msra.mxu0 0.0
    %7162 = vmatprep.subr.mxu0 0.0
    %7163 = vmatpush1.msra.mxu0 0.0
    %7164 = vmatprep.subr.mxu0 0.0
    %7165 = vmatpush1.msra.mxu0 0.0
    %7166 = vmatprep.subr.mxu0 0.0
    %7167 = vmatpush1.msra.mxu0 0.0
    %7168 = vmatprep.subr.mxu0 0.0
    %7169 = vmatpush1.msra.mxu0 0.0
    %7170 = vmatprep.subr.mxu0 0.0
    %7171 = vmatpush1.msra.mxu0 0.0
    %7172 = vmatprep.subr.mxu0 0.0
    %7173 = vmatpush1.msra.mxu0 0.0
    %7174 = vmatprep.subr.mxu0 0.0
    %7175 = vmatpush1.msra.mxu0 0.0
    %7176 = vmatprep.mubr.f32.mxu0 0.0
    %v7177 = vand.u32 %v5369, 4294901760
    %v7178 = vsub.f32 %v5369, %v7177
    %7179 = vmatmul.mubr.f32.gmra.mrb[0].mxu0 %v7178
    %v7180 = vpop.f32.mrb[0].mxu0
    %v7181 = vadd.f32 %v7059, %v7180
    %v7182 = vpop.f32.mrb[0].mxu0
    %7183 = vmatprep.mubr.f32.mxu0 0.0
    %v7184 = vand.u32 %v5370, 4294901760
    %v7185 = vsub.f32 %v5370, %v7184
    %7186 = vmatmul.mubr.f32.gmra.mrb[0].mxu0 %v7185
    %v7187 = vpop.f32.mrb[0].mxu0
    %v7188 = vadd.f32 %v7065, %v7187
    %v7189 = vpop.f32.mrb[0].mxu0
    %7190 = vmatprep.mubr.f32.mxu0 0.0
    %v7191 = vand.u32 %v5371, 4294901760
    %v7192 = vsub.f32 %v5371, %v7191
    %7193 = vmatmul.mubr.f32.gmra.mrb[0].mxu0 %v7192
    %v7194 = vpop.f32.mrb[0].mxu0
    %v7195 = vadd.f32 %v7071, %v7194
    %v7196 = vpop.f32.mrb[0].mxu0
    %7197 = vmatprep.mubr.f32.mxu0 0.0
    %v7198 = vand.u32 %v5372, 4294901760
    %v7199 = vsub.f32 %v5372, %v7198
    %7200 = vmatmul.mubr.f32.gmra.mrb[0].mxu0 %v7199
    %v7201 = vpop.f32.mrb[0].mxu0
    %v7202 = vadd.f32 %v7077, %v7201
    %v7203 = vpop.f32.mrb[0].mxu0
    %7204 = vdwg.mxu0
    %7205 = vmatprep.subr.mxu0 0.0
    %v7206 = vand.u32 %v5374, 4294901760
    %7207 = vmatpush1.msra.mxu0 %v7206
    %7208 = vmatprep.subr.mxu0 0.0
    %v7209 = vand.u32 %v5375, 4294901760
    %7210 = vmatpush1.msra.mxu0 %v7209
    %7211 = vmatprep.subr.mxu0 0.0
    %v7212 = vand.u32 %v5376, 4294901760
    %7213 = vmatpush1.msra.mxu0 %v7212
    %7214 = vmatprep.subr.mxu0 0.0
    %v7215 = vand.u32 %v5377, 4294901760
    %7216 = vmatpush1.msra.mxu0 %v7215
    %7217 = vmatprep.subr.mxu0 0.0
    %v7218 = vand.u32 %v5378, 4294901760
    %7219 = vmatpush1.msra.mxu0 %v7218
    %7220 = vmatprep.subr.mxu0 0.0
    %v7221 = vand.u32 %v5379, 4294901760
    %7222 = vmatpush1.msra.mxu0 %v7221
    %7223 = vmatprep.subr.mxu0 0.0
    %v7224 = vand.u32 %v5380, 4294901760
    %7225 = vmatpush1.msra.mxu0 %v7224
    %7226 = vmatprep.subr.mxu0 0.0
    %v7227 = vand.u32 %v5381, 4294901760
    %7228 = vmatpush1.msra.mxu0 %v7227
    %7229 = vmatprep.subr.mxu0 0.0
    %v7230 = vand.u32 %v5382, 4294901760
    %7231 = vmatpush1.msra.mxu0 %v7230
    %7232 = vmatprep.subr.mxu0 0.0
    %v7233 = vand.u32 %v5383, 4294901760
    %7234 = vmatpush1.msra.mxu0 %v7233
    %7235 = vmatprep.subr.mxu0 0.0
    %v7236 = vand.u32 %v5384, 4294901760
    %7237 = vmatpush1.msra.mxu0 %v7236
    %7238 = vmatprep.subr.mxu0 0.0
    %v7239 = vand.u32 %v5385, 4294901760
    %7240 = vmatpush1.msra.mxu0 %v7239
    %7241 = vmatprep.subr.mxu0 0.0
    %v7242 = vand.u32 %v5386, 4294901760
    %7243 = vmatpush1.msra.mxu0 %v7242
    %7244 = vmatprep.subr.mxu0 0.0
    %v7245 = vand.u32 %v5387, 4294901760
    %7246 = vmatpush1.msra.mxu0 %v7245
    %7247 = vmatprep.subr.mxu0 0.0
    %v7248 = vand.u32 %v5388, 4294901760
    %7249 = vmatpush1.msra.mxu0 %v7248
    %7250 = vmatprep.subr.mxu0 0.0
    %v7251 = vand.u32 %v5389, 4294901760
    %7252 = vmatpush1.msra.mxu0 %v7251
    %7253 = vmatprep.subr.mxu0 0.0
    %7254 = vmatpush1.msra.mxu0 0.0
    %7255 = vmatprep.subr.mxu0 0.0
    %7256 = vmatpush1.msra.mxu0 0.0
    %7257 = vmatprep.subr.mxu0 0.0
    %7258 = vmatpush1.msra.mxu0 0.0
    %7259 = vmatprep.subr.mxu0 0.0
    %7260 = vmatpush1.msra.mxu0 0.0
    %7261 = vmatprep.subr.mxu0 0.0
    %7262 = vmatpush1.msra.mxu0 0.0
    %7263 = vmatprep.subr.mxu0 0.0
    %7264 = vmatpush1.msra.mxu0 0.0
    %7265 = vmatprep.subr.mxu0 0.0
    %7266 = vmatpush1.msra.mxu0 0.0
    %7267 = vmatprep.subr.mxu0 0.0
    %7268 = vmatpush1.msra.mxu0 0.0
    %7269 = vmatprep.subr.mxu0 0.0
    %7270 = vmatpush1.msra.mxu0 0.0
    %7271 = vmatprep.subr.mxu0 0.0
    %7272 = vmatpush1.msra.mxu0 0.0
    %7273 = vmatprep.subr.mxu0 0.0
    %7274 = vmatpush1.msra.mxu0 0.0
    %7275 = vmatprep.subr.mxu0 0.0
    %7276 = vmatpush1.msra.mxu0 0.0
    %7277 = vmatprep.subr.mxu0 0.0
    %7278 = vmatpush1.msra.mxu0 0.0
    %7279 = vmatprep.subr.mxu0 0.0
    %7280 = vmatpush1.msra.mxu0 0.0
    %7281 = vmatprep.subr.mxu0 0.0
    %7282 = vmatpush1.msra.mxu0 0.0
    %7283 = vmatprep.subr.mxu0 0.0
    %7284 = vmatpush1.msra.mxu0 0.0
    %7285 = vmatprep.mubr.f32.mxu0 0.0
    %v7286 = vand.u32 %v5369, 4294901760
    %v7287 = vsub.f32 %v5369, %v7286
    %v7288 = vand.u32 %v7287, 4294901760
    %7289 = vmatmul.mubr.f32.gmra.mrb[0].mxu0 %v7288
    %v7290 = vpop.f32.mrb[0].mxu0
    %v7291 = vadd.f32 %v7181, %v7290
    %v7292 = vpop.f32.mrb[0].mxu0
    %7293 = vmatprep.mubr.f32.mxu0 0.0
    %v7294 = vand.u32 %v5370, 4294901760
    %v7295 = vsub.f32 %v5370, %v7294
    %v7296 = vand.u32 %v7295, 4294901760
    %7297 = vmatmul.mubr.f32.gmra.mrb[0].mxu0 %v7296
    %v7298 = vpop.f32.mrb[0].mxu0
    %v7299 = vadd.f32 %v7188, %v7298
    %v7300 = vpop.f32.mrb[0].mxu0
    %7301 = vmatprep.mubr.f32.mxu0 0.0
    %v7302 = vand.u32 %v5371, 4294901760
    %v7303 = vsub.f32 %v5371, %v7302
    %v7304 = vand.u32 %v7303, 4294901760
    %7305 = vmatmul.mubr.f32.gmra.mrb[0].mxu0 %v7304
    %v7306 = vpop.f32.mrb[0].mxu0
    %v7307 = vadd.f32 %v7195, %v7306
    %v7308 = vpop.f32.mrb[0].mxu0
    %7309 = vmatprep.mubr.f32.mxu0 0.0
    %v7310 = vand.u32 %v5372, 4294901760
    %v7311 = vsub.f32 %v5372, %v7310
    %v7312 = vand.u32 %v7311, 4294901760
    %7313 = vmatmul.mubr.f32.gmra.mrb[0].mxu0 %v7312
    %v7314 = vpop.f32.mrb[0].mxu0
    %v7315 = vadd.f32 %v7202, %v7314
    %v7316 = vpop.f32.mrb[0].mxu0
    %7317 = vdwg.mxu0
    %7318 = vmatprep.subr.mxu0 0.0
    %v7319 = vand.u32 %v5374, 4294901760
    %v7320 = vsub.f32 %v5374, %v7319
    %v7321 = vand.u32 %v7320, 4294901760
    %7322 = vmatpush1.msra.mxu0 %v7321
    %7323 = vmatprep.subr.mxu0 0.0
    %v7324 = vand.u32 %v5375, 4294901760
    %v7325 = vsub.f32 %v5375, %v7324
    %v7326 = vand.u32 %v7325, 4294901760
    %7327 = vmatpush1.msra.mxu0 %v7326
    %7328 = vmatprep.subr.mxu0 0.0
    %v7329 = vand.u32 %v5376, 4294901760
    %v7330 = vsub.f32 %v5376, %v7329
    %v7331 = vand.u32 %v7330, 4294901760
    %7332 = vmatpush1.msra.mxu0 %v7331
    %7333 = vmatprep.subr.mxu0 0.0
    %v7334 = vand.u32 %v5377, 4294901760
    %v7335 = vsub.f32 %v5377, %v7334
    %v7336 = vand.u32 %v7335, 4294901760
    %7337 = vmatpush1.msra.mxu0 %v7336
    %7338 = vmatprep.subr.mxu0 0.0
    %v7339 = vand.u32 %v5378, 4294901760
    %v7340 = vsub.f32 %v5378, %v7339
    %v7341 = vand.u32 %v7340, 4294901760
    %7342 = vmatpush1.msra.mxu0 %v7341
    %7343 = vmatprep.subr.mxu0 0.0
    %v7344 = vand.u32 %v5379, 4294901760
    %v7345 = vsub.f32 %v5379, %v7344
    %v7346 = vand.u32 %v7345, 4294901760
    %7347 = vmatpush1.msra.mxu0 %v7346
    %7348 = vmatprep.subr.mxu0 0.0
    %v7349 = vand.u32 %v5380, 4294901760
    %v7350 = vsub.f32 %v5380, %v7349
    %v7351 = vand.u32 %v7350, 4294901760
    %7352 = vmatpush1.msra.mxu0 %v7351
    %7353 = vmatprep.subr.mxu0 0.0
    %v7354 = vand.u32 %v5381, 4294901760
    %v7355 = vsub.f32 %v5381, %v7354
    %v7356 = vand.u32 %v7355, 4294901760
    %7357 = vmatpush1.msra.mxu0 %v7356
    %7358 = vmatprep.subr.mxu0 0.0
    %v7359 = vand.u32 %v5382, 4294901760
    %v7360 = vsub.f32 %v5382, %v7359
    %v7361 = vand.u32 %v7360, 4294901760
    %7362 = vmatpush1.msra.mxu0 %v7361
    %7363 = vmatprep.subr.mxu0 0.0
    %v7364 = vand.u32 %v5383, 4294901760
    %v7365 = vsub.f32 %v5383, %v7364
    %v7366 = vand.u32 %v7365, 4294901760
    %7367 = vmatpush1.msra.mxu0 %v7366
    %7368 = vmatprep.subr.mxu0 0.0
    %v7369 = vand.u32 %v5384, 4294901760
    %v7370 = vsub.f32 %v5384, %v7369
    %v7371 = vand.u32 %v7370, 4294901760
    %7372 = vmatpush1.msra.mxu0 %v7371
    %7373 = vmatprep.subr.mxu0 0.0
    %v7374 = vand.u32 %v5385, 4294901760
    %v7375 = vsub.f32 %v5385, %v7374
    %v7376 = vand.u32 %v7375, 4294901760
    %7377 = vmatpush1.msra.mxu0 %v7376
    %7378 = vmatprep.subr.mxu0 0.0
    %v7379 = vand.u32 %v5386, 4294901760
    %v7380 = vsub.f32 %v5386, %v7379
    %v7381 = vand.u32 %v7380, 4294901760
    %7382 = vmatpush1.msra.mxu0 %v7381
    %7383 = vmatprep.subr.mxu0 0.0
    %v7384 = vand.u32 %v5387, 4294901760
    %v7385 = vsub.f32 %v5387, %v7384
    %v7386 = vand.u32 %v7385, 4294901760
    %7387 = vmatpush1.msra.mxu0 %v7386
    %7388 = vmatprep.subr.mxu0 0.0
    %v7389 = vand.u32 %v5388, 4294901760
    %v7390 = vsub.f32 %v5388, %v7389
    %v7391 = vand.u32 %v7390, 4294901760
    %7392 = vmatpush1.msra.mxu0 %v7391
    %7393 = vmatprep.subr.mxu0 0.0
    %v7394 = vand.u32 %v5389, 4294901760
    %v7395 = vsub.f32 %v5389, %v7394
    %v7396 = vand.u32 %v7395, 4294901760
    %7397 = vmatpush1.msra.mxu0 %v7396
    %7398 = vmatprep.subr.mxu0 0.0
    %7399 = vmatpush1.msra.mxu0 0.0
    %7400 = vmatprep.subr.mxu0 0.0
    %7401 = vmatpush1.msra.mxu0 0.0
    %7402 = vmatprep.subr.mxu0 0.0
    %7403 = vmatpush1.msra.mxu0 0.0
    %7404 = vmatprep.subr.mxu0 0.0
    %7405 = vmatpush1.msra.mxu0 0.0
    %7406 = vmatprep.subr.mxu0 0.0
    %7407 = vmatpush1.msra.mxu0 0.0
    %7408 = vmatprep.subr.mxu0 0.0
    %7409 = vmatpush1.msra.mxu0 0.0
    %7410 = vmatprep.subr.mxu0 0.0
    %7411 = vmatpush1.msra.mxu0 0.0
    %7412 = vmatprep.subr.mxu0 0.0
    %7413 = vmatpush1.msra.mxu0 0.0
    %7414 = vmatprep.subr.mxu0 0.0
    %7415 = vmatpush1.msra.mxu0 0.0
    %7416 = vmatprep.subr.mxu0 0.0
    %7417 = vmatpush1.msra.mxu0 0.0
    %7418 = vmatprep.subr.mxu0 0.0
    %7419 = vmatpush1.msra.mxu0 0.0
    %7420 = vmatprep.subr.mxu0 0.0
    %7421 = vmatpush1.msra.mxu0 0.0
    %7422 = vmatprep.subr.mxu0 0.0
    %7423 = vmatpush1.msra.mxu0 0.0
    %7424 = vmatprep.subr.mxu0 0.0
    %7425 = vmatpush1.msra.mxu0 0.0
    %7426 = vmatprep.subr.mxu0 0.0
    %7427 = vmatpush1.msra.mxu0 0.0
    %7428 = vmatprep.subr.mxu0 0.0
    %7429 = vmatpush1.msra.mxu0 0.0
    %7430 = vmatprep.mubr.f32.mxu0 0.0
    %v7431 = vand.u32 %v5369, 4294901760
    %7432 = vmatmul.mubr.f32.gmra.mrb[0].mxu0 %v7431
    %v7433 = vpop.f32.mrb[0].mxu0
    %v7434 = vadd.f32 %v7291, %v7433
    %v7435 = vpop.f32.mrb[0].mxu0
    %7436 = vmatprep.mubr.f32.mxu0 0.0
    %v7437 = vand.u32 %v5370, 4294901760
    %7438 = vmatmul.mubr.f32.gmra.mrb[0].mxu0 %v7437
    %v7439 = vpop.f32.mrb[0].mxu0
    %v7440 = vadd.f32 %v7299, %v7439
    %v7441 = vpop.f32.mrb[0].mxu0
    %7442 = vmatprep.mubr.f32.mxu0 0.0
    %v7443 = vand.u32 %v5371, 4294901760
    %7444 = vmatmul.mubr.f32.gmra.mrb[0].mxu0 %v7443
    %v7445 = vpop.f32.mrb[0].mxu0
    %v7446 = vadd.f32 %v7307, %v7445
    %v7447 = vpop.f32.mrb[0].mxu0
    %7448 = vmatprep.mubr.f32.mxu0 0.0
    %v7449 = vand.u32 %v5372, 4294901760
    %7450 = vmatmul.mubr.f32.gmra.mrb[0].mxu0 %v7449
    %v7451 = vpop.f32.mrb[0].mxu0
    %v7452 = vadd.f32 %v7315, %v7451
    %v7453 = vpop.f32.mrb[0].mxu0
    %7454 = vdwg.mxu0
    %7455 = vmatprep.subr.mxu0 0.0
    %v7456 = vand.u32 %v5374, 4294901760
    %7457 = vmatpush1.msra.mxu0 %v7456
    %7458 = vmatprep.subr.mxu0 0.0
    %v7459 = vand.u32 %v5375, 4294901760
    %7460 = vmatpush1.msra.mxu0 %v7459
    %7461 = vmatprep.subr.mxu0 0.0
    %v7462 = vand.u32 %v5376, 4294901760
    %7463 = vmatpush1.msra.mxu0 %v7462
    %7464 = vmatprep.subr.mxu0 0.0
    %v7465 = vand.u32 %v5377, 4294901760
    %7466 = vmatpush1.msra.mxu0 %v7465
    %7467 = vmatprep.subr.mxu0 0.0
    %v7468 = vand.u32 %v5378, 4294901760
    %7469 = vmatpush1.msra.mxu0 %v7468
    %7470 = vmatprep.subr.mxu0 0.0
    %v7471 = vand.u32 %v5379, 4294901760
    %7472 = vmatpush1.msra.mxu0 %v7471
    %7473 = vmatprep.subr.mxu0 0.0
    %v7474 = vand.u32 %v5380, 4294901760
    %7475 = vmatpush1.msra.mxu0 %v7474
    %7476 = vmatprep.subr.mxu0 0.0
    %v7477 = vand.u32 %v5381, 4294901760
    %7478 = vmatpush1.msra.mxu0 %v7477
    %7479 = vmatprep.subr.mxu0 0.0
    %v7480 = vand.u32 %v5382, 4294901760
    %7481 = vmatpush1.msra.mxu0 %v7480
    %7482 = vmatprep.subr.mxu0 0.0
    %v7483 = vand.u32 %v5383, 4294901760
    %7484 = vmatpush1.msra.mxu0 %v7483
    %7485 = vmatprep.subr.mxu0 0.0
    %v7486 = vand.u32 %v5384, 4294901760
    %7487 = vmatpush1.msra.mxu0 %v7486
    %7488 = vmatprep.subr.mxu0 0.0
    %v7489 = vand.u32 %v5385, 4294901760
    %7490 = vmatpush1.msra.mxu0 %v7489
    %7491 = vmatprep.subr.mxu0 0.0
    %v7492 = vand.u32 %v5386, 4294901760
    %7493 = vmatpush1.msra.mxu0 %v7492
    %7494 = vmatprep.subr.mxu0 0.0
    %v7495 = vand.u32 %v5387, 4294901760
    %7496 = vmatpush1.msra.mxu0 %v7495
    %7497 = vmatprep.subr.mxu0 0.0
    %v7498 = vand.u32 %v5388, 4294901760
    %7499 = vmatpush1.msra.mxu0 %v7498
    %7500 = vmatprep.subr.mxu0 0.0
    %v7501 = vand.u32 %v5389, 4294901760
    %7502 = vmatpush1.msra.mxu0 %v7501
    %7503 = vmatprep.subr.mxu0 0.0
    %7504 = vmatpush1.msra.mxu0 0.0
    %7505 = vmatprep.subr.mxu0 0.0
    %7506 = vmatpush1.msra.mxu0 0.0
    %7507 = vmatprep.subr.mxu0 0.0
    %7508 = vmatpush1.msra.mxu0 0.0
    %7509 = vmatprep.subr.mxu0 0.0
    %7510 = vmatpush1.msra.mxu0 0.0
    %7511 = vmatprep.subr.mxu0 0.0
    %7512 = vmatpush1.msra.mxu0 0.0
    %7513 = vmatprep.subr.mxu0 0.0
    %7514 = vmatpush1.msra.mxu0 0.0
    %7515 = vmatprep.subr.mxu0 0.0
    %7516 = vmatpush1.msra.mxu0 0.0
    %7517 = vmatprep.subr.mxu0 0.0
    %7518 = vmatpush1.msra.mxu0 0.0
    %7519 = vmatprep.subr.mxu0 0.0
    %7520 = vmatpush1.msra.mxu0 0.0
    %7521 = vmatprep.subr.mxu0 0.0
    %7522 = vmatpush1.msra.mxu0 0.0
    %7523 = vmatprep.subr.mxu0 0.0
    %7524 = vmatpush1.msra.mxu0 0.0
    %7525 = vmatprep.subr.mxu0 0.0
    %7526 = vmatpush1.msra.mxu0 0.0
    %7527 = vmatprep.subr.mxu0 0.0
    %7528 = vmatpush1.msra.mxu0 0.0
    %7529 = vmatprep.subr.mxu0 0.0
    %7530 = vmatpush1.msra.mxu0 0.0
    %7531 = vmatprep.subr.mxu0 0.0
    %7532 = vmatpush1.msra.mxu0 0.0
    %7533 = vmatprep.subr.mxu0 0.0
    %7534 = vmatpush1.msra.mxu0 0.0
    %7535 = vmatprep.mubr.f32.mxu0 0.0
    %v7536 = vand.u32 %v5369, 4294901760
    %7537 = vmatmul.mubr.f32.gmra.mrb[0].mxu0 %v7536
    %v7538 = vpop.f32.mrb[0].mxu0
    %v7539 = vadd.f32 %v7434, %v7538
    %v7540 = vpop.f32.mrb[0].mxu0
    %7541 = vmatprep.mubr.f32.mxu0 0.0
    %v7542 = vand.u32 %v5370, 4294901760
    %7543 = vmatmul.mubr.f32.gmra.mrb[0].mxu0 %v7542
    %v7544 = vpop.f32.mrb[0].mxu0
    %v7545 = vadd.f32 %v7440, %v7544
    %v7546 = vpop.f32.mrb[0].mxu0
    %7547 = vmatprep.mubr.f32.mxu0 0.0
    %v7548 = vand.u32 %v5371, 4294901760
    %7549 = vmatmul.mubr.f32.gmra.mrb[0].mxu0 %v7548
    %v7550 = vpop.f32.mrb[0].mxu0
    %v7551 = vadd.f32 %v7446, %v7550
    %v7552 = vpop.f32.mrb[0].mxu0
    %7553 = vmatprep.mubr.f32.mxu0 0.0
    %v7554 = vand.u32 %v5372, 4294901760
    %7555 = vmatmul.mubr.f32.gmra.mrb[0].mxu0 %v7554
    %v7556 = vpop.f32.mrb[0].mxu0
    %v7557 = vadd.f32 %v7452, %v7556
    %v7558 = vpop.f32.mrb[0].mxu0
    %7559 = vdwg.mxu0
    %7560 = vmatprep.subr.mxu0 0.0
    %v7561 = vand.u32 %v5369, 4294901760
    %7562 = vmatpush1.msra.mxu0 %v7561
    %7563 = vmatprep.subr.mxu0 0.0
    %v7564 = vand.u32 %v5370, 4294901760
    %7565 = vmatpush1.msra.mxu0 %v7564
    %7566 = vmatprep.subr.mxu0 0.0
    %v7567 = vand.u32 %v5371, 4294901760
    %7568 = vmatpush1.msra.mxu0 %v7567
    %7569 = vmatprep.subr.mxu0 0.0
    %v7570 = vand.u32 %v5372, 4294901760
    %7571 = vmatpush1.msra.mxu0 %v7570
    %7572 = vmatprep.subr.mxu0 0.0
    %7573 = vmatpush1.msra.mxu0 0.0
    %7574 = vmatprep.subr.mxu0 0.0
    %7575 = vmatpush1.msra.mxu0 0.0
    %7576 = vmatprep.subr.mxu0 0.0
    %7577 = vmatpush1.msra.mxu0 0.0
    %7578 = vmatprep.subr.mxu0 0.0
    %7579 = vmatpush1.msra.mxu0 0.0
    %7580 = vmatprep.subr.mxu0 0.0
    %7581 = vmatpush1.msra.mxu0 0.0
    %7582 = vmatprep.subr.mxu0 0.0
    %7583 = vmatpush1.msra.mxu0 0.0
    %7584 = vmatprep.subr.mxu0 0.0
    %7585 = vmatpush1.msra.mxu0 0.0
    %7586 = vmatprep.subr.mxu0 0.0
    %7587 = vmatpush1.msra.mxu0 0.0
    %7588 = vmatprep.subr.mxu0 0.0
    %7589 = vmatpush1.msra.mxu0 0.0
    %7590 = vmatprep.subr.mxu0 0.0
    %7591 = vmatpush1.msra.mxu0 0.0
    %7592 = vmatprep.subr.mxu0 0.0
    %7593 = vmatpush1.msra.mxu0 0.0
    %7594 = vmatprep.subr.mxu0 0.0
    %7595 = vmatpush1.msra.mxu0 0.0
    %7596 = vmatprep.subr.mxu0 0.0
    %7597 = vmatpush1.msra.mxu0 0.0
    %7598 = vmatprep.subr.mxu0 0.0
    %7599 = vmatpush1.msra.mxu0 0.0
    %7600 = vmatprep.subr.mxu0 0.0
    %7601 = vmatpush1.msra.mxu0 0.0
    %7602 = vmatprep.subr.mxu0 0.0
    %7603 = vmatpush1.msra.mxu0 0.0
    %7604 = vmatprep.subr.mxu0 0.0
    %7605 = vmatpush1.msra.mxu0 0.0
    %7606 = vmatprep.subr.mxu0 0.0
    %7607 = vmatpush1.msra.mxu0 0.0
    %7608 = vmatprep.subr.mxu0 0.0
    %7609 = vmatpush1.msra.mxu0 0.0
    %7610 = vmatprep.subr.mxu0 0.0
    %7611 = vmatpush1.msra.mxu0 0.0
    %7612 = vmatprep.subr.mxu0 0.0
    %7613 = vmatpush1.msra.mxu0 0.0
    %7614 = vmatprep.subr.mxu0 0.0
    %7615 = vmatpush1.msra.mxu0 0.0
    %7616 = vmatprep.subr.mxu0 0.0
    %7617 = vmatpush1.msra.mxu0 0.0
    %7618 = vmatprep.subr.mxu0 0.0
    %7619 = vmatpush1.msra.mxu0 0.0
    %7620 = vmatprep.subr.mxu0 0.0
    %7621 = vmatpush1.msra.mxu0 0.0
    %7622 = vmatprep.subr.mxu0 0.0
    %7623 = vmatpush1.msra.mxu0 0.0
    %7624 = vmatprep.subr.mxu0 0.0
    %7625 = vmatpush1.msra.mxu0 0.0
    %7626 = vmatprep.subr.mxu0 0.0
    %7627 = vmatpush1.msra.mxu0 0.0
    %7628 = vmatprep.mubr.f32.mxu0 0.0
    %v7629 = vand.u32 %v2356, 4294901760
    %v7630 = vsub.f32 %v2356, %v7629
    %v7631 = vand.u32 %v7630, 4294901760
    %v7632 = vsub.f32 %v7630, %v7631
    %v7633 = vand.u32 %v7632, 4294901760
    %7634 = vmatmul.mubr.f32.gmra.mrb[0].mxu0 %v7633
    %v7635 = vpop.f32.mrb[0].mxu0
    %v7636 = vadd.f32 0.0, %v7635
    %v7637 = vpop.f32.mrb[0].mxu0
    %7638 = vmatprep.mubr.f32.mxu0 0.0
    %v7639 = vand.u32 %v2359, 4294901760
    %v7640 = vsub.f32 %v2359, %v7639
    %v7641 = vand.u32 %v7640, 4294901760
    %v7642 = vsub.f32 %v7640, %v7641
    %v7643 = vand.u32 %v7642, 4294901760
    %7644 = vmatmul.mubr.f32.gmra.mrb[0].mxu0 %v7643
    %v7645 = vpop.f32.mrb[0].mxu0
    %v7646 = vadd.f32 0.0, %v7645
    %v7647 = vpop.f32.mrb[0].mxu0
    %7648 = vmatprep.mubr.f32.mxu0 0.0
    %v7649 = vand.u32 %v2362, 4294901760
    %v7650 = vsub.f32 %v2362, %v7649
    %v7651 = vand.u32 %v7650, 4294901760
    %v7652 = vsub.f32 %v7650, %v7651
    %v7653 = vand.u32 %v7652, 4294901760
    %7654 = vmatmul.mubr.f32.gmra.mrb[0].mxu0 %v7653
    %v7655 = vpop.f32.mrb[0].mxu0
    %v7656 = vadd.f32 0.0, %v7655
    %v7657 = vpop.f32.mrb[0].mxu0
    %7658 = vmatprep.mubr.f32.mxu0 0.0
    %v7659 = vand.u32 %v2365, 4294901760
    %v7660 = vsub.f32 %v2365, %v7659
    %v7661 = vand.u32 %v7660, 4294901760
    %v7662 = vsub.f32 %v7660, %v7661
    %v7663 = vand.u32 %v7662, 4294901760
    %7664 = vmatmul.mubr.f32.gmra.mrb[0].mxu0 %v7663
    %v7665 = vpop.f32.mrb[0].mxu0
    %v7666 = vadd.f32 0.0, %v7665
    %v7667 = vpop.f32.mrb[0].mxu0
    %7668 = vdwg.mxu0
    %7669 = vmatprep.subr.mxu0 0.0
    %v7670 = vand.u32 %v5369, 4294901760
    %v7671 = vsub.f32 %v5369, %v7670
    %v7672 = vand.u32 %v7671, 4294901760
    %v7673 = vsub.f32 %v7671, %v7672
    %v7674 = vand.u32 %v7673, 4294901760
    %7675 = vmatpush1.msra.mxu0 %v7674
    %7676 = vmatprep.subr.mxu0 0.0
    %v7677 = vand.u32 %v5370, 4294901760
    %v7678 = vsub.f32 %v5370, %v7677
    %v7679 = vand.u32 %v7678, 4294901760
    %v7680 = vsub.f32 %v7678, %v7679
    %v7681 = vand.u32 %v7680, 4294901760
    %7682 = vmatpush1.msra.mxu0 %v7681
    %7683 = vmatprep.subr.mxu0 0.0
    %v7684 = vand.u32 %v5371, 4294901760
    %v7685 = vsub.f32 %v5371, %v7684
    %v7686 = vand.u32 %v7685, 4294901760
    %v7687 = vsub.f32 %v7685, %v7686
    %v7688 = vand.u32 %v7687, 4294901760
    %7689 = vmatpush1.msra.mxu0 %v7688
    %7690 = vmatprep.subr.mxu0 0.0
    %v7691 = vand.u32 %v5372, 4294901760
    %v7692 = vsub.f32 %v5372, %v7691
    %v7693 = vand.u32 %v7692, 4294901760
    %v7694 = vsub.f32 %v7692, %v7693
    %v7695 = vand.u32 %v7694, 4294901760
    %7696 = vmatpush1.msra.mxu0 %v7695
    %7697 = vmatprep.subr.mxu0 0.0
    %7698 = vmatpush1.msra.mxu0 0.0
    %7699 = vmatprep.subr.mxu0 0.0
    %7700 = vmatpush1.msra.mxu0 0.0
    %7701 = vmatprep.subr.mxu0 0.0
    %7702 = vmatpush1.msra.mxu0 0.0
    %7703 = vmatprep.subr.mxu0 0.0
    %7704 = vmatpush1.msra.mxu0 0.0
    %7705 = vmatprep.subr.mxu0 0.0
    %7706 = vmatpush1.msra.mxu0 0.0
    %7707 = vmatprep.subr.mxu0 0.0
    %7708 = vmatpush1.msra.mxu0 0.0
    %7709 = vmatprep.subr.mxu0 0.0
    %7710 = vmatpush1.msra.mxu0 0.0
    %7711 = vmatprep.subr.mxu0 0.0
    %7712 = vmatpush1.msra.mxu0 0.0
    %7713 = vmatprep.subr.mxu0 0.0
    %7714 = vmatpush1.msra.mxu0 0.0
    %7715 = vmatprep.subr.mxu0 0.0
    %7716 = vmatpush1.msra.mxu0 0.0
    %7717 = vmatprep.subr.mxu0 0.0
    %7718 = vmatpush1.msra.mxu0 0.0
    %7719 = vmatprep.subr.mxu0 0.0
    %7720 = vmatpush1.msra.mxu0 0.0
    %7721 = vmatprep.subr.mxu0 0.0
    %7722 = vmatpush1.msra.mxu0 0.0
    %7723 = vmatprep.subr.mxu0 0.0
    %7724 = vmatpush1.msra.mxu0 0.0
    %7725 = vmatprep.subr.mxu0 0.0
    %7726 = vmatpush1.msra.mxu0 0.0
    %7727 = vmatprep.subr.mxu0 0.0
    %7728 = vmatpush1.msra.mxu0 0.0
    %7729 = vmatprep.subr.mxu0 0.0
    %7730 = vmatpush1.msra.mxu0 0.0
    %7731 = vmatprep.subr.mxu0 0.0
    %7732 = vmatpush1.msra.mxu0 0.0
    %7733 = vmatprep.subr.mxu0 0.0
    %7734 = vmatpush1.msra.mxu0 0.0
    %7735 = vmatprep.subr.mxu0 0.0
    %7736 = vmatpush1.msra.mxu0 0.0
    %7737 = vmatprep.subr.mxu0 0.0
    %7738 = vmatpush1.msra.mxu0 0.0
    %7739 = vmatprep.subr.mxu0 0.0
    %7740 = vmatpush1.msra.mxu0 0.0
    %7741 = vmatprep.subr.mxu0 0.0
    %7742 = vmatpush1.msra.mxu0 0.0
    %7743 = vmatprep.subr.mxu0 0.0
    %7744 = vmatpush1.msra.mxu0 0.0
    %7745 = vmatprep.subr.mxu0 0.0
    %7746 = vmatpush1.msra.mxu0 0.0
    %7747 = vmatprep.subr.mxu0 0.0
    %7748 = vmatpush1.msra.mxu0 0.0
    %7749 = vmatprep.subr.mxu0 0.0
    %7750 = vmatpush1.msra.mxu0 0.0
    %7751 = vmatprep.subr.mxu0 0.0
    %7752 = vmatpush1.msra.mxu0 0.0
    %7753 = vmatprep.mubr.f32.mxu0 0.0
    %v7754 = vand.u32 %v2356, 4294901760
    %7755 = vmatmul.mubr.f32.gmra.mrb[0].mxu0 %v7754
    %v7756 = vpop.f32.mrb[0].mxu0
    %v7757 = vadd.f32 %v7636, %v7756
    %v7758 = vpop.f32.mrb[0].mxu0
    %7759 = vmatprep.mubr.f32.mxu0 0.0
    %v7760 = vand.u32 %v2359, 4294901760
    %7761 = vmatmul.mubr.f32.gmra.mrb[0].mxu0 %v7760
    %v7762 = vpop.f32.mrb[0].mxu0
    %v7763 = vadd.f32 %v7646, %v7762
    %v7764 = vpop.f32.mrb[0].mxu0
    %7765 = vmatprep.mubr.f32.mxu0 0.0
    %v7766 = vand.u32 %v2362, 4294901760
    %7767 = vmatmul.mubr.f32.gmra.mrb[0].mxu0 %v7766
    %v7768 = vpop.f32.mrb[0].mxu0
    %v7769 = vadd.f32 %v7656, %v7768
    %v7770 = vpop.f32.mrb[0].mxu0
    %7771 = vmatprep.mubr.f32.mxu0 0.0
    %v7772 = vand.u32 %v2365, 4294901760
    %7773 = vmatmul.mubr.f32.gmra.mrb[0].mxu0 %v7772
    %v7774 = vpop.f32.mrb[0].mxu0
    %v7775 = vadd.f32 %v7666, %v7774
    %v7776 = vpop.f32.mrb[0].mxu0
    %7777 = vdwg.mxu0
    %7778 = vmatprep.subr.mxu0 0.0
    %v7779 = vand.u32 %v5369, 4294901760
    %v7780 = vsub.f32 %v5369, %v7779
    %7781 = vmatpush1.msra.mxu0 %v7780
    %7782 = vmatprep.subr.mxu0 0.0
    %v7783 = vand.u32 %v5370, 4294901760
    %v7784 = vsub.f32 %v5370, %v7783
    %7785 = vmatpush1.msra.mxu0 %v7784
    %7786 = vmatprep.subr.mxu0 0.0
    %v7787 = vand.u32 %v5371, 4294901760
    %v7788 = vsub.f32 %v5371, %v7787
    %7789 = vmatpush1.msra.mxu0 %v7788
    %7790 = vmatprep.subr.mxu0 0.0
    %v7791 = vand.u32 %v5372, 4294901760
    %v7792 = vsub.f32 %v5372, %v7791
    %7793 = vmatpush1.msra.mxu0 %v7792
    %7794 = vmatprep.subr.mxu0 0.0
    %7795 = vmatpush1.msra.mxu0 0.0
    %7796 = vmatprep.subr.mxu0 0.0
    %7797 = vmatpush1.msra.mxu0 0.0
    %7798 = vmatprep.subr.mxu0 0.0
    %7799 = vmatpush1.msra.mxu0 0.0
    %7800 = vmatprep.subr.mxu0 0.0
    %7801 = vmatpush1.msra.mxu0 0.0
    %7802 = vmatprep.subr.mxu0 0.0
    %7803 = vmatpush1.msra.mxu0 0.0
    %7804 = vmatprep.subr.mxu0 0.0
    %7805 = vmatpush1.msra.mxu0 0.0
    %7806 = vmatprep.subr.mxu0 0.0
    %7807 = vmatpush1.msra.mxu0 0.0
    %7808 = vmatprep.subr.mxu0 0.0
    %7809 = vmatpush1.msra.mxu0 0.0
    %7810 = vmatprep.subr.mxu0 0.0
    %7811 = vmatpush1.msra.mxu0 0.0
    %7812 = vmatprep.subr.mxu0 0.0
    %7813 = vmatpush1.msra.mxu0 0.0
    %7814 = vmatprep.subr.mxu0 0.0
    %7815 = vmatpush1.msra.mxu0 0.0
    %7816 = vmatprep.subr.mxu0 0.0
    %7817 = vmatpush1.msra.mxu0 0.0
    %7818 = vmatprep.subr.mxu0 0.0
    %7819 = vmatpush1.msra.mxu0 0.0
    %7820 = vmatprep.subr.mxu0 0.0
    %7821 = vmatpush1.msra.mxu0 0.0
    %7822 = vmatprep.subr.mxu0 0.0
    %7823 = vmatpush1.msra.mxu0 0.0
    %7824 = vmatprep.subr.mxu0 0.0
    %7825 = vmatpush1.msra.mxu0 0.0
    %7826 = vmatprep.subr.mxu0 0.0
    %7827 = vmatpush1.msra.mxu0 0.0
    %7828 = vmatprep.subr.mxu0 0.0
    %7829 = vmatpush1.msra.mxu0 0.0
    %7830 = vmatprep.subr.mxu0 0.0
    %7831 = vmatpush1.msra.mxu0 0.0
    %7832 = vmatprep.subr.mxu0 0.0
    %7833 = vmatpush1.msra.mxu0 0.0
    %7834 = vmatprep.subr.mxu0 0.0
    %7835 = vmatpush1.msra.mxu0 0.0
    %7836 = vmatprep.subr.mxu0 0.0
    %7837 = vmatpush1.msra.mxu0 0.0
    %7838 = vmatprep.subr.mxu0 0.0
    %7839 = vmatpush1.msra.mxu0 0.0
    %7840 = vmatprep.subr.mxu0 0.0
    %7841 = vmatpush1.msra.mxu0 0.0
    %7842 = vmatprep.subr.mxu0 0.0
    %7843 = vmatpush1.msra.mxu0 0.0
    %7844 = vmatprep.subr.mxu0 0.0
    %7845 = vmatpush1.msra.mxu0 0.0
    %7846 = vmatprep.subr.mxu0 0.0
    %7847 = vmatpush1.msra.mxu0 0.0
    %7848 = vmatprep.subr.mxu0 0.0
    %7849 = vmatpush1.msra.mxu0 0.0
    %7850 = vmatprep.mubr.f32.mxu0 0.0
    %v7851 = vand.u32 %v2356, 4294901760
    %v7852 = vsub.f32 %v2356, %v7851
    %7853 = vmatmul.mubr.f32.gmra.mrb[0].mxu0 %v7852
    %v7854 = vpop.f32.mrb[0].mxu0
    %v7855 = vadd.f32 %v7757, %v7854
    %v7856 = vpop.f32.mrb[0].mxu0
    %7857 = vmatprep.mubr.f32.mxu0 0.0
    %v7858 = vand.u32 %v2359, 4294901760
    %v7859 = vsub.f32 %v2359, %v7858
    %7860 = vmatmul.mubr.f32.gmra.mrb[0].mxu0 %v7859
    %v7861 = vpop.f32.mrb[0].mxu0
    %v7862 = vadd.f32 %v7763, %v7861
    %v7863 = vpop.f32.mrb[0].mxu0
    %7864 = vmatprep.mubr.f32.mxu0 0.0
    %v7865 = vand.u32 %v2362, 4294901760
    %v7866 = vsub.f32 %v2362, %v7865
    %7867 = vmatmul.mubr.f32.gmra.mrb[0].mxu0 %v7866
    %v7868 = vpop.f32.mrb[0].mxu0
    %v7869 = vadd.f32 %v7769, %v7868
    %v7870 = vpop.f32.mrb[0].mxu0
    %7871 = vmatprep.mubr.f32.mxu0 0.0
    %v7872 = vand.u32 %v2365, 4294901760
    %v7873 = vsub.f32 %v2365, %v7872
    %7874 = vmatmul.mubr.f32.gmra.mrb[0].mxu0 %v7873
    %v7875 = vpop.f32.mrb[0].mxu0
    %v7876 = vadd.f32 %v7775, %v7875
    %v7877 = vpop.f32.mrb[0].mxu0
    %7878 = vdwg.mxu0
    %7879 = vmatprep.subr.mxu0 0.0
    %v7880 = vand.u32 %v5369, 4294901760
    %7881 = vmatpush1.msra.mxu0 %v7880
    %7882 = vmatprep.subr.mxu0 0.0
    %v7883 = vand.u32 %v5370, 4294901760
    %7884 = vmatpush1.msra.mxu0 %v7883
    %7885 = vmatprep.subr.mxu0 0.0
    %v7886 = vand.u32 %v5371, 4294901760
    %7887 = vmatpush1.msra.mxu0 %v7886
    %7888 = vmatprep.subr.mxu0 0.0
    %v7889 = vand.u32 %v5372, 4294901760
    %7890 = vmatpush1.msra.mxu0 %v7889
    %7891 = vmatprep.subr.mxu0 0.0
    %7892 = vmatpush1.msra.mxu0 0.0
    %7893 = vmatprep.subr.mxu0 0.0
    %7894 = vmatpush1.msra.mxu0 0.0
    %7895 = vmatprep.subr.mxu0 0.0
    %7896 = vmatpush1.msra.mxu0 0.0
    %7897 = vmatprep.subr.mxu0 0.0
    %7898 = vmatpush1.msra.mxu0 0.0
    %7899 = vmatprep.subr.mxu0 0.0
    %7900 = vmatpush1.msra.mxu0 0.0
    %7901 = vmatprep.subr.mxu0 0.0
    %7902 = vmatpush1.msra.mxu0 0.0
    %7903 = vmatprep.subr.mxu0 0.0
    %7904 = vmatpush1.msra.mxu0 0.0
    %7905 = vmatprep.subr.mxu0 0.0
    %7906 = vmatpush1.msra.mxu0 0.0
    %7907 = vmatprep.subr.mxu0 0.0
    %7908 = vmatpush1.msra.mxu0 0.0
    %7909 = vmatprep.subr.mxu0 0.0
    %7910 = vmatpush1.msra.mxu0 0.0
    %7911 = vmatprep.subr.mxu0 0.0
    %7912 = vmatpush1.msra.mxu0 0.0
    %7913 = vmatprep.subr.mxu0 0.0
    %7914 = vmatpush1.msra.mxu0 0.0
    %7915 = vmatprep.subr.mxu0 0.0
    %7916 = vmatpush1.msra.mxu0 0.0
    %7917 = vmatprep.subr.mxu0 0.0
    %7918 = vmatpush1.msra.mxu0 0.0
    %7919 = vmatprep.subr.mxu0 0.0
    %7920 = vmatpush1.msra.mxu0 0.0
    %7921 = vmatprep.subr.mxu0 0.0
    %7922 = vmatpush1.msra.mxu0 0.0
    %7923 = vmatprep.subr.mxu0 0.0
    %7924 = vmatpush1.msra.mxu0 0.0
    %7925 = vmatprep.subr.mxu0 0.0
    %7926 = vmatpush1.msra.mxu0 0.0
    %7927 = vmatprep.subr.mxu0 0.0
    %7928 = vmatpush1.msra.mxu0 0.0
    %7929 = vmatprep.subr.mxu0 0.0
    %7930 = vmatpush1.msra.mxu0 0.0
    %7931 = vmatprep.subr.mxu0 0.0
    %7932 = vmatpush1.msra.mxu0 0.0
    %7933 = vmatprep.subr.mxu0 0.0
    %7934 = vmatpush1.msra.mxu0 0.0
    %7935 = vmatprep.subr.mxu0 0.0
    %7936 = vmatpush1.msra.mxu0 0.0
    %7937 = vmatprep.subr.mxu0 0.0
    %7938 = vmatpush1.msra.mxu0 0.0
    %7939 = vmatprep.subr.mxu0 0.0
    %7940 = vmatpush1.msra.mxu0 0.0
    %7941 = vmatprep.subr.mxu0 0.0
    %7942 = vmatpush1.msra.mxu0 0.0
    %7943 = vmatprep.subr.mxu0 0.0
    %7944 = vmatpush1.msra.mxu0 0.0
    %7945 = vmatprep.subr.mxu0 0.0
    %7946 = vmatpush1.msra.mxu0 0.0
    %7947 = vmatprep.mubr.f32.mxu0 0.0
    %v7948 = vand.u32 %v2356, 4294901760
    %v7949 = vsub.f32 %v2356, %v7948
    %v7950 = vand.u32 %v7949, 4294901760
    %7951 = vmatmul.mubr.f32.gmra.mrb[0].mxu0 %v7950
    %v7952 = vpop.f32.mrb[0].mxu0
    %v7953 = vadd.f32 %v7855, %v7952
    %v7954 = vpop.f32.mrb[0].mxu0
    %7955 = vmatprep.mubr.f32.mxu0 0.0
    %v7956 = vand.u32 %v2359, 4294901760
    %v7957 = vsub.f32 %v2359, %v7956
    %v7958 = vand.u32 %v7957, 4294901760
    %7959 = vmatmul.mubr.f32.gmra.mrb[0].mxu0 %v7958
    %v7960 = vpop.f32.mrb[0].mxu0
    %v7961 = vadd.f32 %v7862, %v7960
    %v7962 = vpop.f32.mrb[0].mxu0
    %7963 = vmatprep.mubr.f32.mxu0 0.0
    %v7964 = vand.u32 %v2362, 4294901760
    %v7965 = vsub.f32 %v2362, %v7964
    %v7966 = vand.u32 %v7965, 4294901760
    %7967 = vmatmul.mubr.f32.gmra.mrb[0].mxu0 %v7966
    %v7968 = vpop.f32.mrb[0].mxu0
    %v7969 = vadd.f32 %v7869, %v7968
    %v7970 = vpop.f32.mrb[0].mxu0
    %7971 = vmatprep.mubr.f32.mxu0 0.0
    %v7972 = vand.u32 %v2365, 4294901760
    %v7973 = vsub.f32 %v2365, %v7972
    %v7974 = vand.u32 %v7973, 4294901760
    %7975 = vmatmul.mubr.f32.gmra.mrb[0].mxu0 %v7974
    %v7976 = vpop.f32.mrb[0].mxu0
    %v7977 = vadd.f32 %v7876, %v7976
    %v7978 = vpop.f32.mrb[0].mxu0
    %7979 = vdwg.mxu0
    %7980 = vmatprep.subr.mxu0 0.0
    %v7981 = vand.u32 %v5369, 4294901760
    %v7982 = vsub.f32 %v5369, %v7981
    %v7983 = vand.u32 %v7982, 4294901760
    %7984 = vmatpush1.msra.mxu0 %v7983
    %7985 = vmatprep.subr.mxu0 0.0
    %v7986 = vand.u32 %v5370, 4294901760
    %v7987 = vsub.f32 %v5370, %v7986
    %v7988 = vand.u32 %v7987, 4294901760
    %7989 = vmatpush1.msra.mxu0 %v7988
    %7990 = vmatprep.subr.mxu0 0.0
    %v7991 = vand.u32 %v5371, 4294901760
    %v7992 = vsub.f32 %v5371, %v7991
    %v7993 = vand.u32 %v7992, 4294901760
    %7994 = vmatpush1.msra.mxu0 %v7993
    %7995 = vmatprep.subr.mxu0 0.0
    %v7996 = vand.u32 %v5372, 4294901760
    %v7997 = vsub.f32 %v5372, %v7996
    %v7998 = vand.u32 %v7997, 4294901760
    %7999 = vmatpush1.msra.mxu0 %v7998
    %8000 = vmatprep.subr.mxu0 0.0
    %8001 = vmatpush1.msra.mxu0 0.0
    %8002 = vmatprep.subr.mxu0 0.0
    %8003 = vmatpush1.msra.mxu0 0.0
    %8004 = vmatprep.subr.mxu0 0.0
    %8005 = vmatpush1.msra.mxu0 0.0
    %8006 = vmatprep.subr.mxu0 0.0
    %8007 = vmatpush1.msra.mxu0 0.0
    %8008 = vmatprep.subr.mxu0 0.0
    %8009 = vmatpush1.msra.mxu0 0.0
    %8010 = vmatprep.subr.mxu0 0.0
    %8011 = vmatpush1.msra.mxu0 0.0
    %8012 = vmatprep.subr.mxu0 0.0
    %8013 = vmatpush1.msra.mxu0 0.0
    %8014 = vmatprep.subr.mxu0 0.0
    %8015 = vmatpush1.msra.mxu0 0.0
    %8016 = vmatprep.subr.mxu0 0.0
    %8017 = vmatpush1.msra.mxu0 0.0
    %8018 = vmatprep.subr.mxu0 0.0
    %8019 = vmatpush1.msra.mxu0 0.0
    %8020 = vmatprep.subr.mxu0 0.0
    %8021 = vmatpush1.msra.mxu0 0.0
    %8022 = vmatprep.subr.mxu0 0.0
    %8023 = vmatpush1.msra.mxu0 0.0
    %8024 = vmatprep.subr.mxu0 0.0
    %8025 = vmatpush1.msra.mxu0 0.0
    %8026 = vmatprep.subr.mxu0 0.0
    %8027 = vmatpush1.msra.mxu0 0.0
    %8028 = vmatprep.subr.mxu0 0.0
    %8029 = vmatpush1.msra.mxu0 0.0
    %8030 = vmatprep.subr.mxu0 0.0
    %8031 = vmatpush1.msra.mxu0 0.0
    %8032 = vmatprep.subr.mxu0 0.0
    %8033 = vmatpush1.msra.mxu0 0.0
    %8034 = vmatprep.subr.mxu0 0.0
    %8035 = vmatpush1.msra.mxu0 0.0
    %8036 = vmatprep.subr.mxu0 0.0
    %8037 = vmatpush1.msra.mxu0 0.0
    %8038 = vmatprep.subr.mxu0 0.0
    %8039 = vmatpush1.msra.mxu0 0.0
    %8040 = vmatprep.subr.mxu0 0.0
    %8041 = vmatpush1.msra.mxu0 0.0
    %8042 = vmatprep.subr.mxu0 0.0
    %8043 = vmatpush1.msra.mxu0 0.0
    %8044 = vmatprep.subr.mxu0 0.0
    %8045 = vmatpush1.msra.mxu0 0.0
    %8046 = vmatprep.subr.mxu0 0.0
    %8047 = vmatpush1.msra.mxu0 0.0
    %8048 = vmatprep.subr.mxu0 0.0
    %8049 = vmatpush1.msra.mxu0 0.0
    %8050 = vmatprep.subr.mxu0 0.0
    %8051 = vmatpush1.msra.mxu0 0.0
    %8052 = vmatprep.subr.mxu0 0.0
    %8053 = vmatpush1.msra.mxu0 0.0
    %8054 = vmatprep.subr.mxu0 0.0
    %8055 = vmatpush1.msra.mxu0 0.0
    %8056 = vmatprep.mubr.f32.mxu0 0.0
    %v8057 = vand.u32 %v2356, 4294901760
    %8058 = vmatmul.mubr.f32.gmra.mrb[0].mxu0 %v8057
    %v8059 = vpop.f32.mrb[0].mxu0
    %v8060 = vadd.f32 %v7953, %v8059
    %v8061 = vpop.f32.mrb[0].mxu0
    %8062 = vmatprep.mubr.f32.mxu0 0.0
    %v8063 = vand.u32 %v2359, 4294901760
    %8064 = vmatmul.mubr.f32.gmra.mrb[0].mxu0 %v8063
    %v8065 = vpop.f32.mrb[0].mxu0
    %v8066 = vadd.f32 %v7961, %v8065
    %v8067 = vpop.f32.mrb[0].mxu0
    %8068 = vmatprep.mubr.f32.mxu0 0.0
    %v8069 = vand.u32 %v2362, 4294901760
    %8070 = vmatmul.mubr.f32.gmra.mrb[0].mxu0 %v8069
    %v8071 = vpop.f32.mrb[0].mxu0
    %v8072 = vadd.f32 %v7969, %v8071
    %v8073 = vpop.f32.mrb[0].mxu0
    %8074 = vmatprep.mubr.f32.mxu0 0.0
    %v8075 = vand.u32 %v2365, 4294901760
    %8076 = vmatmul.mubr.f32.gmra.mrb[0].mxu0 %v8075
    %v8077 = vpop.f32.mrb[0].mxu0
    %v8078 = vadd.f32 %v7977, %v8077
    %v8079 = vpop.f32.mrb[0].mxu0
    %8080 = vdwg.mxu0
    %8081 = vmatprep.subr.mxu0 0.0
    %v8082 = vand.u32 %v5369, 4294901760
    %8083 = vmatpush1.msra.mxu0 %v8082
    %8084 = vmatprep.subr.mxu0 0.0
    %v8085 = vand.u32 %v5370, 4294901760
    %8086 = vmatpush1.msra.mxu0 %v8085
    %8087 = vmatprep.subr.mxu0 0.0
    %v8088 = vand.u32 %v5371, 4294901760
    %8089 = vmatpush1.msra.mxu0 %v8088
    %8090 = vmatprep.subr.mxu0 0.0
    %v8091 = vand.u32 %v5372, 4294901760
    %8092 = vmatpush1.msra.mxu0 %v8091
    %8093 = vmatprep.subr.mxu0 0.0
    %8094 = vmatpush1.msra.mxu0 0.0
    %8095 = vmatprep.subr.mxu0 0.0
    %8096 = vmatpush1.msra.mxu0 0.0
    %8097 = vmatprep.subr.mxu0 0.0
    %8098 = vmatpush1.msra.mxu0 0.0
    %8099 = vmatprep.subr.mxu0 0.0
    %8100 = vmatpush1.msra.mxu0 0.0
    %8101 = vmatprep.subr.mxu0 0.0
    %8102 = vmatpush1.msra.mxu0 0.0
    %8103 = vmatprep.subr.mxu0 0.0
    %8104 = vmatpush1.msra.mxu0 0.0
    %8105 = vmatprep.subr.mxu0 0.0
    %8106 = vmatpush1.msra.mxu0 0.0
    %8107 = vmatprep.subr.mxu0 0.0
    %8108 = vmatpush1.msra.mxu0 0.0
    %8109 = vmatprep.subr.mxu0 0.0
    %8110 = vmatpush1.msra.mxu0 0.0
    %8111 = vmatprep.subr.mxu0 0.0
    %8112 = vmatpush1.msra.mxu0 0.0
    %8113 = vmatprep.subr.mxu0 0.0
    %8114 = vmatpush1.msra.mxu0 0.0
    %8115 = vmatprep.subr.mxu0 0.0
    %8116 = vmatpush1.msra.mxu0 0.0
    %8117 = vmatprep.subr.mxu0 0.0
    %8118 = vmatpush1.msra.mxu0 0.0
    %8119 = vmatprep.subr.mxu0 0.0
    %8120 = vmatpush1.msra.mxu0 0.0
    %8121 = vmatprep.subr.mxu0 0.0
    %8122 = vmatpush1.msra.mxu0 0.0
    %8123 = vmatprep.subr.mxu0 0.0
    %8124 = vmatpush1.msra.mxu0 0.0
    %8125 = vmatprep.subr.mxu0 0.0
    %8126 = vmatpush1.msra.mxu0 0.0
    %8127 = vmatprep.subr.mxu0 0.0
    %8128 = vmatpush1.msra.mxu0 0.0
    %8129 = vmatprep.subr.mxu0 0.0
    %8130 = vmatpush1.msra.mxu0 0.0
    %8131 = vmatprep.subr.mxu0 0.0
    %8132 = vmatpush1.msra.mxu0 0.0
    %8133 = vmatprep.subr.mxu0 0.0
    %8134 = vmatpush1.msra.mxu0 0.0
    %8135 = vmatprep.subr.mxu0 0.0
    %8136 = vmatpush1.msra.mxu0 0.0
    %8137 = vmatprep.subr.mxu0 0.0
    %8138 = vmatpush1.msra.mxu0 0.0
    %8139 = vmatprep.subr.mxu0 0.0
    %8140 = vmatpush1.msra.mxu0 0.0
    %8141 = vmatprep.subr.mxu0 0.0
    %8142 = vmatpush1.msra.mxu0 0.0
    %8143 = vmatprep.subr.mxu0 0.0
    %8144 = vmatpush1.msra.mxu0 0.0
    %8145 = vmatprep.subr.mxu0 0.0
    %8146 = vmatpush1.msra.mxu0 0.0
    %8147 = vmatprep.subr.mxu0 0.0
    %8148 = vmatpush1.msra.mxu0 0.0
    %8149 = vmatprep.mubr.f32.mxu0 0.0
    %v8150 = vand.u32 %v2356, 4294901760
    %8151 = vmatmul.mubr.f32.gmra.mrb[0].mxu0 %v8150
    %v8152 = vpop.f32.mrb[0].mxu0
    %v8153 = vadd.f32 %v8060, %v8152
    %v8154 = vpop.f32.mrb[0].mxu0
    %8155 = vmatprep.mubr.f32.mxu0 0.0
    %v8156 = vand.u32 %v2359, 4294901760
    %8157 = vmatmul.mubr.f32.gmra.mrb[0].mxu0 %v8156
    %v8158 = vpop.f32.mrb[0].mxu0
    %v8159 = vadd.f32 %v8066, %v8158
    %v8160 = vpop.f32.mrb[0].mxu0
    %8161 = vmatprep.mubr.f32.mxu0 0.0
    %v8162 = vand.u32 %v2362, 4294901760
    %8163 = vmatmul.mubr.f32.gmra.mrb[0].mxu0 %v8162
    %v8164 = vpop.f32.mrb[0].mxu0
    %v8165 = vadd.f32 %v8072, %v8164
    %v8166 = vpop.f32.mrb[0].mxu0
    %8167 = vmatprep.mubr.f32.mxu0 0.0
    %v8168 = vand.u32 %v2365, 4294901760
    %8169 = vmatmul.mubr.f32.gmra.mrb[0].mxu0 %v8168
    %v8170 = vpop.f32.mrb[0].mxu0
    %v8171 = vadd.f32 %v8078, %v8170
    %v8172 = vpop.f32.mrb[0].mxu0
    %8173 = vdwg.mxu0
    %s8174 = scalar_lea.vmem [#allocation7], 256
    %v8175 = vld [vmem:[%s8174] sm:$0xff]
    %v8176 = vld [vmem:[%s8174 + $0x8] sm:$0xff]
    %v8177 = vld [vmem:[%s8174 + $0x10] sm:$0xff]
    %v8178 = vld [vmem:[%s8174 + $0x18] sm:$0xff]
    %v8179 = vld [vmem:[%s8174 + $0x20] sm:$0xff]
    %v8180 = vld [vmem:[%s8174 + $0x28] sm:$0xff]
    %v8181 = vld [vmem:[%s8174 + $0x30] sm:$0xff]
    %v8182 = vld [vmem:[%s8174 + $0x38] sm:$0xff]
    %v8183 = vld [vmem:[%s8174 + $0x40] sm:$0xff]
    %v8184 = vld [vmem:[%s8174 + $0x48] sm:$0xff]
    %v8185 = vld [vmem:[%s8174 + $0x50] sm:$0xff]
    %v8186 = vld [vmem:[%s8174 + $0x58] sm:$0xff]
    %v8187 = vld [vmem:[%s8174 + $0x60] sm:$0xff]
    %v8188 = vld [vmem:[%s8174 + $0x68] sm:$0xff]
    %v8189 = vld [vmem:[%s8174 + $0x70] sm:$0xff]
    %v8190 = vld [vmem:[%s8174 + $0x78] sm:$0xff]
    %8191 = vmatprep.subr.mxu0 0.0
    %v8192 = vand.u32 %v8175, 4294901760
    %8193 = vmatpush1.msra.mxu0 %v8192
    %8194 = vmatprep.subr.mxu0 0.0
    %v8195 = vand.u32 %v8176, 4294901760
    %8196 = vmatpush1.msra.mxu0 %v8195
    %8197 = vmatprep.subr.mxu0 0.0
    %v8198 = vand.u32 %v8177, 4294901760
    %8199 = vmatpush1.msra.mxu0 %v8198
    %8200 = vmatprep.subr.mxu0 0.0
    %v8201 = vand.u32 %v8178, 4294901760
    %8202 = vmatpush1.msra.mxu0 %v8201
    %8203 = vmatprep.subr.mxu0 0.0
    %v8204 = vand.u32 %v8179, 4294901760
    %8205 = vmatpush1.msra.mxu0 %v8204
    %8206 = vmatprep.subr.mxu0 0.0
    %v8207 = vand.u32 %v8180, 4294901760
    %8208 = vmatpush1.msra.mxu0 %v8207
    %8209 = vmatprep.subr.mxu0 0.0
    %v8210 = vand.u32 %v8181, 4294901760
    %8211 = vmatpush1.msra.mxu0 %v8210
    %8212 = vmatprep.subr.mxu0 0.0
    %v8213 = vand.u32 %v8182, 4294901760
    %8214 = vmatpush1.msra.mxu0 %v8213
    %8215 = vmatprep.subr.mxu0 0.0
    %v8216 = vand.u32 %v8183, 4294901760
    %8217 = vmatpush1.msra.mxu0 %v8216
    %8218 = vmatprep.subr.mxu0 0.0
    %v8219 = vand.u32 %v8184, 4294901760
    %8220 = vmatpush1.msra.mxu0 %v8219
    %8221 = vmatprep.subr.mxu0 0.0
    %v8222 = vand.u32 %v8185, 4294901760
    %8223 = vmatpush1.msra.mxu0 %v8222
    %8224 = vmatprep.subr.mxu0 0.0
    %v8225 = vand.u32 %v8186, 4294901760
    %8226 = vmatpush1.msra.mxu0 %v8225
    %8227 = vmatprep.subr.mxu0 0.0
    %v8228 = vand.u32 %v8187, 4294901760
    %8229 = vmatpush1.msra.mxu0 %v8228
    %8230 = vmatprep.subr.mxu0 0.0
    %v8231 = vand.u32 %v8188, 4294901760
    %8232 = vmatpush1.msra.mxu0 %v8231
    %8233 = vmatprep.subr.mxu0 0.0
    %v8234 = vand.u32 %v8189, 4294901760
    %8235 = vmatpush1.msra.mxu0 %v8234
    %8236 = vmatprep.subr.mxu0 0.0
    %v8237 = vand.u32 %v8190, 4294901760
    %8238 = vmatpush1.msra.mxu0 %v8237
    %8239 = vmatprep.subr.mxu0 0.0
    %8240 = vmatpush1.msra.mxu0 0.0
    %8241 = vmatprep.subr.mxu0 0.0
    %8242 = vmatpush1.msra.mxu0 0.0
    %8243 = vmatprep.subr.mxu0 0.0
    %8244 = vmatpush1.msra.mxu0 0.0
    %8245 = vmatprep.subr.mxu0 0.0
    %8246 = vmatpush1.msra.mxu0 0.0
    %8247 = vmatprep.subr.mxu0 0.0
    %8248 = vmatpush1.msra.mxu0 0.0
    %8249 = vmatprep.subr.mxu0 0.0
    %8250 = vmatpush1.msra.mxu0 0.0
    %8251 = vmatprep.subr.mxu0 0.0
    %8252 = vmatpush1.msra.mxu0 0.0
    %8253 = vmatprep.subr.mxu0 0.0
    %8254 = vmatpush1.msra.mxu0 0.0
    %8255 = vmatprep.subr.mxu0 0.0
    %8256 = vmatpush1.msra.mxu0 0.0
    %8257 = vmatprep.subr.mxu0 0.0
    %8258 = vmatpush1.msra.mxu0 0.0
    %8259 = vmatprep.subr.mxu0 0.0
    %8260 = vmatpush1.msra.mxu0 0.0
    %8261 = vmatprep.subr.mxu0 0.0
    %8262 = vmatpush1.msra.mxu0 0.0
    %8263 = vmatprep.subr.mxu0 0.0
    %8264 = vmatpush1.msra.mxu0 0.0
    %8265 = vmatprep.subr.mxu0 0.0
    %8266 = vmatpush1.msra.mxu0 0.0
    %8267 = vmatprep.subr.mxu0 0.0
    %8268 = vmatpush1.msra.mxu0 0.0
    %8269 = vmatprep.subr.mxu0 0.0
    %8270 = vmatpush1.msra.mxu0 0.0
    %8271 = vmatprep.mubr.f32.mxu0 0.0
    %v8272 = vand.u32 %v8153, 4294901760
    %v8273 = vsub.f32 %v8153, %v8272
    %v8274 = vand.u32 %v8273, 4294901760
    %v8275 = vsub.f32 %v8273, %v8274
    %v8276 = vand.u32 %v8275, 4294901760
    %8277 = vmatmul.mubr.f32.gmra.mrb[0].mxu0 %v8276
    %v8278 = vpop.f32.mrb[0].mxu0
    %v8279 = vadd.f32 0.0, %v8278
    %v8280 = vpop.f32.mrb[0].mxu0
    %8281 = vmatprep.mubr.f32.mxu0 0.0
    %v8282 = vand.u32 %v8159, 4294901760
    %v8283 = vsub.f32 %v8159, %v8282
    %v8284 = vand.u32 %v8283, 4294901760
    %v8285 = vsub.f32 %v8283, %v8284
    %v8286 = vand.u32 %v8285, 4294901760
    %8287 = vmatmul.mubr.f32.gmra.mrb[0].mxu0 %v8286
    %v8288 = vpop.f32.mrb[0].mxu0
    %v8289 = vadd.f32 0.0, %v8288
    %v8290 = vpop.f32.mrb[0].mxu0
    %8291 = vmatprep.mubr.f32.mxu0 0.0
    %v8292 = vand.u32 %v8165, 4294901760
    %v8293 = vsub.f32 %v8165, %v8292
    %v8294 = vand.u32 %v8293, 4294901760
    %v8295 = vsub.f32 %v8293, %v8294
    %v8296 = vand.u32 %v8295, 4294901760
    %8297 = vmatmul.mubr.f32.gmra.mrb[0].mxu0 %v8296
    %v8298 = vpop.f32.mrb[0].mxu0
    %v8299 = vadd.f32 0.0, %v8298
    %v8300 = vpop.f32.mrb[0].mxu0
    %8301 = vmatprep.mubr.f32.mxu0 0.0
    %v8302 = vand.u32 %v8171, 4294901760
    %v8303 = vsub.f32 %v8171, %v8302
    %v8304 = vand.u32 %v8303, 4294901760
    %v8305 = vsub.f32 %v8303, %v8304
    %v8306 = vand.u32 %v8305, 4294901760
    %8307 = vmatmul.mubr.f32.gmra.mrb[0].mxu0 %v8306
    %v8308 = vpop.f32.mrb[0].mxu0
    %v8309 = vadd.f32 0.0, %v8308
    %v8310 = vpop.f32.mrb[0].mxu0
    %8311 = vdwg.mxu0
    %8312 = vmatprep.subr.mxu0 0.0
    %v8313 = vand.u32 %v8175, 4294901760
    %v8314 = vsub.f32 %v8175, %v8313
    %v8315 = vand.u32 %v8314, 4294901760
    %v8316 = vsub.f32 %v8314, %v8315
    %v8317 = vand.u32 %v8316, 4294901760
    %8318 = vmatpush1.msra.mxu0 %v8317
    %8319 = vmatprep.subr.mxu0 0.0
    %v8320 = vand.u32 %v8176, 4294901760
    %v8321 = vsub.f32 %v8176, %v8320
    %v8322 = vand.u32 %v8321, 4294901760
    %v8323 = vsub.f32 %v8321, %v8322
    %v8324 = vand.u32 %v8323, 4294901760
    %8325 = vmatpush1.msra.mxu0 %v8324
    %8326 = vmatprep.subr.mxu0 0.0
    %v8327 = vand.u32 %v8177, 4294901760
    %v8328 = vsub.f32 %v8177, %v8327
    %v8329 = vand.u32 %v8328, 4294901760
    %v8330 = vsub.f32 %v8328, %v8329
    %v8331 = vand.u32 %v8330, 4294901760
    %8332 = vmatpush1.msra.mxu0 %v8331
    %8333 = vmatprep.subr.mxu0 0.0
    %v8334 = vand.u32 %v8178, 4294901760
    %v8335 = vsub.f32 %v8178, %v8334
    %v8336 = vand.u32 %v8335, 4294901760
    %v8337 = vsub.f32 %v8335, %v8336
    %v8338 = vand.u32 %v8337, 4294901760
    %8339 = vmatpush1.msra.mxu0 %v8338
    %8340 = vmatprep.subr.mxu0 0.0
    %v8341 = vand.u32 %v8179, 4294901760
    %v8342 = vsub.f32 %v8179, %v8341
    %v8343 = vand.u32 %v8342, 4294901760
    %v8344 = vsub.f32 %v8342, %v8343
    %v8345 = vand.u32 %v8344, 4294901760
    %8346 = vmatpush1.msra.mxu0 %v8345
    %8347 = vmatprep.subr.mxu0 0.0
    %v8348 = vand.u32 %v8180, 4294901760
    %v8349 = vsub.f32 %v8180, %v8348
    %v8350 = vand.u32 %v8349, 4294901760
    %v8351 = vsub.f32 %v8349, %v8350
    %v8352 = vand.u32 %v8351, 4294901760
    %8353 = vmatpush1.msra.mxu0 %v8352
    %8354 = vmatprep.subr.mxu0 0.0
    %v8355 = vand.u32 %v8181, 4294901760
    %v8356 = vsub.f32 %v8181, %v8355
    %v8357 = vand.u32 %v8356, 4294901760
    %v8358 = vsub.f32 %v8356, %v8357
    %v8359 = vand.u32 %v8358, 4294901760
    %8360 = vmatpush1.msra.mxu0 %v8359
    %8361 = vmatprep.subr.mxu0 0.0
    %v8362 = vand.u32 %v8182, 4294901760
    %v8363 = vsub.f32 %v8182, %v8362
    %v8364 = vand.u32 %v8363, 4294901760
    %v8365 = vsub.f32 %v8363, %v8364
    %v8366 = vand.u32 %v8365, 4294901760
    %8367 = vmatpush1.msra.mxu0 %v8366
    %8368 = vmatprep.subr.mxu0 0.0
    %v8369 = vand.u32 %v8183, 4294901760
    %v8370 = vsub.f32 %v8183, %v8369
    %v8371 = vand.u32 %v8370, 4294901760
    %v8372 = vsub.f32 %v8370, %v8371
    %v8373 = vand.u32 %v8372, 4294901760
    %8374 = vmatpush1.msra.mxu0 %v8373
    %8375 = vmatprep.subr.mxu0 0.0
    %v8376 = vand.u32 %v8184, 4294901760
    %v8377 = vsub.f32 %v8184, %v8376
    %v8378 = vand.u32 %v8377, 4294901760
    %v8379 = vsub.f32 %v8377, %v8378
    %v8380 = vand.u32 %v8379, 4294901760
    %8381 = vmatpush1.msra.mxu0 %v8380
    %8382 = vmatprep.subr.mxu0 0.0
    %v8383 = vand.u32 %v8185, 4294901760
    %v8384 = vsub.f32 %v8185, %v8383
    %v8385 = vand.u32 %v8384, 4294901760
    %v8386 = vsub.f32 %v8384, %v8385
    %v8387 = vand.u32 %v8386, 4294901760
    %8388 = vmatpush1.msra.mxu0 %v8387
    %8389 = vmatprep.subr.mxu0 0.0
    %v8390 = vand.u32 %v8186, 4294901760
    %v8391 = vsub.f32 %v8186, %v8390
    %v8392 = vand.u32 %v8391, 4294901760
    %v8393 = vsub.f32 %v8391, %v8392
    %v8394 = vand.u32 %v8393, 4294901760
    %8395 = vmatpush1.msra.mxu0 %v8394
    %8396 = vmatprep.subr.mxu0 0.0
    %v8397 = vand.u32 %v8187, 4294901760
    %v8398 = vsub.f32 %v8187, %v8397
    %v8399 = vand.u32 %v8398, 4294901760
    %v8400 = vsub.f32 %v8398, %v8399
    %v8401 = vand.u32 %v8400, 4294901760
    %8402 = vmatpush1.msra.mxu0 %v8401
    %8403 = vmatprep.subr.mxu0 0.0
    %v8404 = vand.u32 %v8188, 4294901760
    %v8405 = vsub.f32 %v8188, %v8404
    %v8406 = vand.u32 %v8405, 4294901760
    %v8407 = vsub.f32 %v8405, %v8406
    %v8408 = vand.u32 %v8407, 4294901760
    %8409 = vmatpush1.msra.mxu0 %v8408
    %8410 = vmatprep.subr.mxu0 0.0
    %v8411 = vand.u32 %v8189, 4294901760
    %v8412 = vsub.f32 %v8189, %v8411
    %v8413 = vand.u32 %v8412, 4294901760
    %v8414 = vsub.f32 %v8412, %v8413
    %v8415 = vand.u32 %v8414, 4294901760
    %8416 = vmatpush1.msra.mxu0 %v8415
    %8417 = vmatprep.subr.mxu0 0.0
    %v8418 = vand.u32 %v8190, 4294901760
    %v8419 = vsub.f32 %v8190, %v8418
    %v8420 = vand.u32 %v8419, 4294901760
    %v8421 = vsub.f32 %v8419, %v8420
    %v8422 = vand.u32 %v8421, 4294901760
    %8423 = vmatpush1.msra.mxu0 %v8422
    %8424 = vmatprep.subr.mxu0 0.0
    %8425 = vmatpush1.msra.mxu0 0.0
    %8426 = vmatprep.subr.mxu0 0.0
    %8427 = vmatpush1.msra.mxu0 0.0
    %8428 = vmatprep.subr.mxu0 0.0
    %8429 = vmatpush1.msra.mxu0 0.0
    %8430 = vmatprep.subr.mxu0 0.0
    %8431 = vmatpush1.msra.mxu0 0.0
    %8432 = vmatprep.subr.mxu0 0.0
    %8433 = vmatpush1.msra.mxu0 0.0
    %8434 = vmatprep.subr.mxu0 0.0
    %8435 = vmatpush1.msra.mxu0 0.0
    %8436 = vmatprep.subr.mxu0 0.0
    %8437 = vmatpush1.msra.mxu0 0.0
    %8438 = vmatprep.subr.mxu0 0.0
    %8439 = vmatpush1.msra.mxu0 0.0
    %8440 = vmatprep.subr.mxu0 0.0
    %8441 = vmatpush1.msra.mxu0 0.0
    %8442 = vmatprep.subr.mxu0 0.0
    %8443 = vmatpush1.msra.mxu0 0.0
    %8444 = vmatprep.subr.mxu0 0.0
    %8445 = vmatpush1.msra.mxu0 0.0
    %8446 = vmatprep.subr.mxu0 0.0
    %8447 = vmatpush1.msra.mxu0 0.0
    %8448 = vmatprep.subr.mxu0 0.0
    %8449 = vmatpush1.msra.mxu0 0.0
    %8450 = vmatprep.subr.mxu0 0.0
    %8451 = vmatpush1.msra.mxu0 0.0
    %8452 = vmatprep.subr.mxu0 0.0
    %8453 = vmatpush1.msra.mxu0 0.0
    %8454 = vmatprep.subr.mxu0 0.0
    %8455 = vmatpush1.msra.mxu0 0.0
    %8456 = vmatprep.mubr.f32.mxu0 0.0
    %v8457 = vand.u32 %v8153, 4294901760
    %8458 = vmatmul.mubr.f32.gmra.mrb[0].mxu0 %v8457
    %v8459 = vpop.f32.mrb[0].mxu0
    %v8460 = vadd.f32 %v8279, %v8459
    %v8461 = vpop.f32.mrb[0].mxu0
    %8462 = vmatprep.mubr.f32.mxu0 0.0
    %v8463 = vand.u32 %v8159, 4294901760
    %8464 = vmatmul.mubr.f32.gmra.mrb[0].mxu0 %v8463
    %v8465 = vpop.f32.mrb[0].mxu0
    %v8466 = vadd.f32 %v8289, %v8465
    %v8467 = vpop.f32.mrb[0].mxu0
    %8468 = vmatprep.mubr.f32.mxu0 0.0
    %v8469 = vand.u32 %v8165, 4294901760
    %8470 = vmatmul.mubr.f32.gmra.mrb[0].mxu0 %v8469
    %v8471 = vpop.f32.mrb[0].mxu0
    %v8472 = vadd.f32 %v8299, %v8471
    %v8473 = vpop.f32.mrb[0].mxu0
    %8474 = vmatprep.mubr.f32.mxu0 0.0
    %v8475 = vand.u32 %v8171, 4294901760
    %8476 = vmatmul.mubr.f32.gmra.mrb[0].mxu0 %v8475
    %v8477 = vpop.f32.mrb[0].mxu0
    %v8478 = vadd.f32 %v8309, %v8477
    %v8479 = vpop.f32.mrb[0].mxu0
    %8480 = vdwg.mxu0
    %8481 = vmatprep.subr.mxu0 0.0
    %v8482 = vand.u32 %v8175, 4294901760
    %v8483 = vsub.f32 %v8175, %v8482
    %8484 = vmatpush1.msra.mxu0 %v8483
    %8485 = vmatprep.subr.mxu0 0.0
    %v8486 = vand.u32 %v8176, 4294901760
    %v8487 = vsub.f32 %v8176, %v8486
    %8488 = vmatpush1.msra.mxu0 %v8487
    %8489 = vmatprep.subr.mxu0 0.0
    %v8490 = vand.u32 %v8177, 4294901760
    %v8491 = vsub.f32 %v8177, %v8490
    %8492 = vmatpush1.msra.mxu0 %v8491
    %8493 = vmatprep.subr.mxu0 0.0
    %v8494 = vand.u32 %v8178, 4294901760
    %v8495 = vsub.f32 %v8178, %v8494
    %8496 = vmatpush1.msra.mxu0 %v8495
    %8497 = vmatprep.subr.mxu0 0.0
    %v8498 = vand.u32 %v8179, 4294901760
    %v8499 = vsub.f32 %v8179, %v8498
    %8500 = vmatpush1.msra.mxu0 %v8499
    %8501 = vmatprep.subr.mxu0 0.0
    %v8502 = vand.u32 %v8180, 4294901760
    %v8503 = vsub.f32 %v8180, %v8502
    %8504 = vmatpush1.msra.mxu0 %v8503
    %8505 = vmatprep.subr.mxu0 0.0
    %v8506 = vand.u32 %v8181, 4294901760
    %v8507 = vsub.f32 %v8181, %v8506
    %8508 = vmatpush1.msra.mxu0 %v8507
    %8509 = vmatprep.subr.mxu0 0.0
    %v8510 = vand.u32 %v8182, 4294901760
    %v8511 = vsub.f32 %v8182, %v8510
    %8512 = vmatpush1.msra.mxu0 %v8511
    %8513 = vmatprep.subr.mxu0 0.0
    %v8514 = vand.u32 %v8183, 4294901760
    %v8515 = vsub.f32 %v8183, %v8514
    %8516 = vmatpush1.msra.mxu0 %v8515
    %8517 = vmatprep.subr.mxu0 0.0
    %v8518 = vand.u32 %v8184, 4294901760
    %v8519 = vsub.f32 %v8184, %v8518
    %8520 = vmatpush1.msra.mxu0 %v8519
    %8521 = vmatprep.subr.mxu0 0.0
    %v8522 = vand.u32 %v8185, 4294901760
    %v8523 = vsub.f32 %v8185, %v8522
    %8524 = vmatpush1.msra.mxu0 %v8523
    %8525 = vmatprep.subr.mxu0 0.0
    %v8526 = vand.u32 %v8186, 4294901760
    %v8527 = vsub.f32 %v8186, %v8526
    %8528 = vmatpush1.msra.mxu0 %v8527
    %8529 = vmatprep.subr.mxu0 0.0
    %v8530 = vand.u32 %v8187, 4294901760
    %v8531 = vsub.f32 %v8187, %v8530
    %8532 = vmatpush1.msra.mxu0 %v8531
    %8533 = vmatprep.subr.mxu0 0.0
    %v8534 = vand.u32 %v8188, 4294901760
    %v8535 = vsub.f32 %v8188, %v8534
    %8536 = vmatpush1.msra.mxu0 %v8535
    %8537 = vmatprep.subr.mxu0 0.0
    %v8538 = vand.u32 %v8189, 4294901760
    %v8539 = vsub.f32 %v8189, %v8538
    %8540 = vmatpush1.msra.mxu0 %v8539
    %8541 = vmatprep.subr.mxu0 0.0
    %v8542 = vand.u32 %v8190, 4294901760
    %v8543 = vsub.f32 %v8190, %v8542
    %8544 = vmatpush1.msra.mxu0 %v8543
    %8545 = vmatprep.subr.mxu0 0.0
    %8546 = vmatpush1.msra.mxu0 0.0
    %8547 = vmatprep.subr.mxu0 0.0
    %8548 = vmatpush1.msra.mxu0 0.0
    %8549 = vmatprep.subr.mxu0 0.0
    %8550 = vmatpush1.msra.mxu0 0.0
    %8551 = vmatprep.subr.mxu0 0.0
    %8552 = vmatpush1.msra.mxu0 0.0
    %8553 = vmatprep.subr.mxu0 0.0
    %8554 = vmatpush1.msra.mxu0 0.0
    %8555 = vmatprep.subr.mxu0 0.0
    %8556 = vmatpush1.msra.mxu0 0.0
    %8557 = vmatprep.subr.mxu0 0.0
    %8558 = vmatpush1.msra.mxu0 0.0
    %8559 = vmatprep.subr.mxu0 0.0
    %8560 = vmatpush1.msra.mxu0 0.0
    %8561 = vmatprep.subr.mxu0 0.0
    %8562 = vmatpush1.msra.mxu0 0.0
    %8563 = vmatprep.subr.mxu0 0.0
    %8564 = vmatpush1.msra.mxu0 0.0
    %8565 = vmatprep.subr.mxu0 0.0
    %8566 = vmatpush1.msra.mxu0 0.0
    %8567 = vmatprep.subr.mxu0 0.0
    %8568 = vmatpush1.msra.mxu0 0.0
    %8569 = vmatprep.subr.mxu0 0.0
    %8570 = vmatpush1.msra.mxu0 0.0
    %8571 = vmatprep.subr.mxu0 0.0
    %8572 = vmatpush1.msra.mxu0 0.0
    %8573 = vmatprep.subr.mxu0 0.0
    %8574 = vmatpush1.msra.mxu0 0.0
    %8575 = vmatprep.subr.mxu0 0.0
    %8576 = vmatpush1.msra.mxu0 0.0
    %8577 = vmatprep.mubr.f32.mxu0 0.0
    %v8578 = vand.u32 %v8153, 4294901760
    %v8579 = vsub.f32 %v8153, %v8578
    %8580 = vmatmul.mubr.f32.gmra.mrb[0].mxu0 %v8579
    %v8581 = vpop.f32.mrb[0].mxu0
    %v8582 = vadd.f32 %v8460, %v8581
    %v8583 = vpop.f32.mrb[0].mxu0
    %8584 = vmatprep.mubr.f32.mxu0 0.0
    %v8585 = vand.u32 %v8159, 4294901760
    %v8586 = vsub.f32 %v8159, %v8585
    %8587 = vmatmul.mubr.f32.gmra.mrb[0].mxu0 %v8586
    %v8588 = vpop.f32.mrb[0].mxu0
    %v8589 = vadd.f32 %v8466, %v8588
    %v8590 = vpop.f32.mrb[0].mxu0
    %8591 = vmatprep.mubr.f32.mxu0 0.0
    %v8592 = vand.u32 %v8165, 4294901760
    %v8593 = vsub.f32 %v8165, %v8592
    %8594 = vmatmul.mubr.f32.gmra.mrb[0].mxu0 %v8593
    %v8595 = vpop.f32.mrb[0].mxu0
    %v8596 = vadd.f32 %v8472, %v8595
    %v8597 = vpop.f32.mrb[0].mxu0
    %8598 = vmatprep.mubr.f32.mxu0 0.0
    %v8599 = vand.u32 %v8171, 4294901760
    %v8600 = vsub.f32 %v8171, %v8599
    %8601 = vmatmul.mubr.f32.gmra.mrb[0].mxu0 %v8600
    %v8602 = vpop.f32.mrb[0].mxu0
    %v8603 = vadd.f32 %v8478, %v8602
    %v8604 = vpop.f32.mrb[0].mxu0
    %8605 = vdwg.mxu0
    %8606 = vmatprep.subr.mxu0 0.0
    %v8607 = vand.u32 %v8175, 4294901760
    %8608 = vmatpush1.msra.mxu0 %v8607
    %8609 = vmatprep.subr.mxu0 0.0
    %v8610 = vand.u32 %v8176, 4294901760
    %8611 = vmatpush1.msra.mxu0 %v8610
    %8612 = vmatprep.subr.mxu0 0.0
    %v8613 = vand.u32 %v8177, 4294901760
    %8614 = vmatpush1.msra.mxu0 %v8613
    %8615 = vmatprep.subr.mxu0 0.0
    %v8616 = vand.u32 %v8178, 4294901760
    %8617 = vmatpush1.msra.mxu0 %v8616
    %8618 = vmatprep.subr.mxu0 0.0
    %v8619 = vand.u32 %v8179, 4294901760
    %8620 = vmatpush1.msra.mxu0 %v8619
    %8621 = vmatprep.subr.mxu0 0.0
    %v8622 = vand.u32 %v8180, 4294901760
    %8623 = vmatpush1.msra.mxu0 %v8622
    %8624 = vmatprep.subr.mxu0 0.0
    %v8625 = vand.u32 %v8181, 4294901760
    %8626 = vmatpush1.msra.mxu0 %v8625
    %8627 = vmatprep.subr.mxu0 0.0
    %v8628 = vand.u32 %v8182, 4294901760
    %8629 = vmatpush1.msra.mxu0 %v8628
    %8630 = vmatprep.subr.mxu0 0.0
    %v8631 = vand.u32 %v8183, 4294901760
    %8632 = vmatpush1.msra.mxu0 %v8631
    %8633 = vmatprep.subr.mxu0 0.0
    %v8634 = vand.u32 %v8184, 4294901760
    %8635 = vmatpush1.msra.mxu0 %v8634
    %8636 = vmatprep.subr.mxu0 0.0
    %v8637 = vand.u32 %v8185, 4294901760
    %8638 = vmatpush1.msra.mxu0 %v8637
    %8639 = vmatprep.subr.mxu0 0.0
    %v8640 = vand.u32 %v8186, 4294901760
    %8641 = vmatpush1.msra.mxu0 %v8640
    %8642 = vmatprep.subr.mxu0 0.0
    %v8643 = vand.u32 %v8187, 4294901760
    %8644 = vmatpush1.msra.mxu0 %v8643
    %8645 = vmatprep.subr.mxu0 0.0
    %v8646 = vand.u32 %v8188, 4294901760
    %8647 = vmatpush1.msra.mxu0 %v8646
    %8648 = vmatprep.subr.mxu0 0.0
    %v8649 = vand.u32 %v8189, 4294901760
    %8650 = vmatpush1.msra.mxu0 %v8649
    %8651 = vmatprep.subr.mxu0 0.0
    %v8652 = vand.u32 %v8190, 4294901760
    %8653 = vmatpush1.msra.mxu0 %v8652
    %8654 = vmatprep.subr.mxu0 0.0
    %8655 = vmatpush1.msra.mxu0 0.0
    %8656 = vmatprep.subr.mxu0 0.0
    %8657 = vmatpush1.msra.mxu0 0.0
    %8658 = vmatprep.subr.mxu0 0.0
    %8659 = vmatpush1.msra.mxu0 0.0
    %8660 = vmatprep.subr.mxu0 0.0
    %8661 = vmatpush1.msra.mxu0 0.0
    %8662 = vmatprep.subr.mxu0 0.0
    %8663 = vmatpush1.msra.mxu0 0.0
    %8664 = vmatprep.subr.mxu0 0.0
    %8665 = vmatpush1.msra.mxu0 0.0
    %8666 = vmatprep.subr.mxu0 0.0
    %8667 = vmatpush1.msra.mxu0 0.0
    %8668 = vmatprep.subr.mxu0 0.0
    %8669 = vmatpush1.msra.mxu0 0.0
    %8670 = vmatprep.subr.mxu0 0.0
    %8671 = vmatpush1.msra.mxu0 0.0
    %8672 = vmatprep.subr.mxu0 0.0
    %8673 = vmatpush1.msra.mxu0 0.0
    %8674 = vmatprep.subr.mxu0 0.0
    %8675 = vmatpush1.msra.mxu0 0.0
    %8676 = vmatprep.subr.mxu0 0.0
    %8677 = vmatpush1.msra.mxu0 0.0
    %8678 = vmatprep.subr.mxu0 0.0
    %8679 = vmatpush1.msra.mxu0 0.0
    %8680 = vmatprep.subr.mxu0 0.0
    %8681 = vmatpush1.msra.mxu0 0.0
    %8682 = vmatprep.subr.mxu0 0.0
    %8683 = vmatpush1.msra.mxu0 0.0
    %8684 = vmatprep.subr.mxu0 0.0
    %8685 = vmatpush1.msra.mxu0 0.0
    %8686 = vmatprep.mubr.f32.mxu0 0.0
    %v8687 = vand.u32 %v8153, 4294901760
    %v8688 = vsub.f32 %v8153, %v8687
    %v8689 = vand.u32 %v8688, 4294901760
    %8690 = vmatmul.mubr.f32.gmra.mrb[0].mxu0 %v8689
    %v8691 = vpop.f32.mrb[0].mxu0
    %v8692 = vadd.f32 %v8582, %v8691
    %v8693 = vpop.f32.mrb[0].mxu0
    %8694 = vmatprep.mubr.f32.mxu0 0.0
    %v8695 = vand.u32 %v8159, 4294901760
    %v8696 = vsub.f32 %v8159, %v8695
    %v8697 = vand.u32 %v8696, 4294901760
    %8698 = vmatmul.mubr.f32.gmra.mrb[0].mxu0 %v8697
    %v8699 = vpop.f32.mrb[0].mxu0
    %v8700 = vadd.f32 %v8589, %v8699
    %v8701 = vpop.f32.mrb[0].mxu0
    %8702 = vmatprep.mubr.f32.mxu0 0.0
    %v8703 = vand.u32 %v8165, 4294901760
    %v8704 = vsub.f32 %v8165, %v8703
    %v8705 = vand.u32 %v8704, 4294901760
    %8706 = vmatmul.mubr.f32.gmra.mrb[0].mxu0 %v8705
    %v8707 = vpop.f32.mrb[0].mxu0
    %v8708 = vadd.f32 %v8596, %v8707
    %v8709 = vpop.f32.mrb[0].mxu0
    %8710 = vmatprep.mubr.f32.mxu0 0.0
    %v8711 = vand.u32 %v8171, 4294901760
    %v8712 = vsub.f32 %v8171, %v8711
    %v8713 = vand.u32 %v8712, 4294901760
    %8714 = vmatmul.mubr.f32.gmra.mrb[0].mxu0 %v8713
    %v8715 = vpop.f32.mrb[0].mxu0
    %v8716 = vadd.f32 %v8603, %v8715
    %v8717 = vpop.f32.mrb[0].mxu0
    %8718 = vdwg.mxu0
    %8719 = vmatprep.subr.mxu0 0.0
    %v8720 = vand.u32 %v8175, 4294901760
    %v8721 = vsub.f32 %v8175, %v8720
    %v8722 = vand.u32 %v8721, 4294901760
    %8723 = vmatpush1.msra.mxu0 %v8722
    %8724 = vmatprep.subr.mxu0 0.0
    %v8725 = vand.u32 %v8176, 4294901760
    %v8726 = vsub.f32 %v8176, %v8725
    %v8727 = vand.u32 %v8726, 4294901760
    %8728 = vmatpush1.msra.mxu0 %v8727
    %8729 = vmatprep.subr.mxu0 0.0
    %v8730 = vand.u32 %v8177, 4294901760
    %v8731 = vsub.f32 %v8177, %v8730
    %v8732 = vand.u32 %v8731, 4294901760
    %8733 = vmatpush1.msra.mxu0 %v8732
    %8734 = vmatprep.subr.mxu0 0.0
    %v8735 = vand.u32 %v8178, 4294901760
    %v8736 = vsub.f32 %v8178, %v8735
    %v8737 = vand.u32 %v8736, 4294901760
    %8738 = vmatpush1.msra.mxu0 %v8737
    %8739 = vmatprep.subr.mxu0 0.0
    %v8740 = vand.u32 %v8179, 4294901760
    %v8741 = vsub.f32 %v8179, %v8740
    %v8742 = vand.u32 %v8741, 4294901760
    %8743 = vmatpush1.msra.mxu0 %v8742
    %8744 = vmatprep.subr.mxu0 0.0
    %v8745 = vand.u32 %v8180, 4294901760
    %v8746 = vsub.f32 %v8180, %v8745
    %v8747 = vand.u32 %v8746, 4294901760
    %8748 = vmatpush1.msra.mxu0 %v8747
    %8749 = vmatprep.subr.mxu0 0.0
    %v8750 = vand.u32 %v8181, 4294901760
    %v8751 = vsub.f32 %v8181, %v8750
    %v8752 = vand.u32 %v8751, 4294901760
    %8753 = vmatpush1.msra.mxu0 %v8752
    %8754 = vmatprep.subr.mxu0 0.0
    %v8755 = vand.u32 %v8182, 4294901760
    %v8756 = vsub.f32 %v8182, %v8755
    %v8757 = vand.u32 %v8756, 4294901760
    %8758 = vmatpush1.msra.mxu0 %v8757
    %8759 = vmatprep.subr.mxu0 0.0
    %v8760 = vand.u32 %v8183, 4294901760
    %v8761 = vsub.f32 %v8183, %v8760
    %v8762 = vand.u32 %v8761, 4294901760
    %8763 = vmatpush1.msra.mxu0 %v8762
    %8764 = vmatprep.subr.mxu0 0.0
    %v8765 = vand.u32 %v8184, 4294901760
    %v8766 = vsub.f32 %v8184, %v8765
    %v8767 = vand.u32 %v8766, 4294901760
    %8768 = vmatpush1.msra.mxu0 %v8767
    %8769 = vmatprep.subr.mxu0 0.0
    %v8770 = vand.u32 %v8185, 4294901760
    %v8771 = vsub.f32 %v8185, %v8770
    %v8772 = vand.u32 %v8771, 4294901760
    %8773 = vmatpush1.msra.mxu0 %v8772
    %8774 = vmatprep.subr.mxu0 0.0
    %v8775 = vand.u32 %v8186, 4294901760
    %v8776 = vsub.f32 %v8186, %v8775
    %v8777 = vand.u32 %v8776, 4294901760
    %8778 = vmatpush1.msra.mxu0 %v8777
    %8779 = vmatprep.subr.mxu0 0.0
    %v8780 = vand.u32 %v8187, 4294901760
    %v8781 = vsub.f32 %v8187, %v8780
    %v8782 = vand.u32 %v8781, 4294901760
    %8783 = vmatpush1.msra.mxu0 %v8782
    %8784 = vmatprep.subr.mxu0 0.0
    %v8785 = vand.u32 %v8188, 4294901760
    %v8786 = vsub.f32 %v8188, %v8785
    %v8787 = vand.u32 %v8786, 4294901760
    %8788 = vmatpush1.msra.mxu0 %v8787
    %8789 = vmatprep.subr.mxu0 0.0
    %v8790 = vand.u32 %v8189, 4294901760
    %v8791 = vsub.f32 %v8189, %v8790
    %v8792 = vand.u32 %v8791, 4294901760
    %8793 = vmatpush1.msra.mxu0 %v8792
    %8794 = vmatprep.subr.mxu0 0.0
    %v8795 = vand.u32 %v8190, 4294901760
    %v8796 = vsub.f32 %v8190, %v8795
    %v8797 = vand.u32 %v8796, 4294901760
    %8798 = vmatpush1.msra.mxu0 %v8797
    %8799 = vmatprep.subr.mxu0 0.0
    %8800 = vmatpush1.msra.mxu0 0.0
    %8801 = vmatprep.subr.mxu0 0.0
    %8802 = vmatpush1.msra.mxu0 0.0
    %8803 = vmatprep.subr.mxu0 0.0
    %8804 = vmatpush1.msra.mxu0 0.0
    %8805 = vmatprep.subr.mxu0 0.0
    %8806 = vmatpush1.msra.mxu0 0.0
    %8807 = vmatprep.subr.mxu0 0.0
    %8808 = vmatpush1.msra.mxu0 0.0
    %8809 = vmatprep.subr.mxu0 0.0
    %8810 = vmatpush1.msra.mxu0 0.0
    %8811 = vmatprep.subr.mxu0 0.0
    %8812 = vmatpush1.msra.mxu0 0.0
    %8813 = vmatprep.subr.mxu0 0.0
    %8814 = vmatpush1.msra.mxu0 0.0
    %8815 = vmatprep.subr.mxu0 0.0
    %8816 = vmatpush1.msra.mxu0 0.0
    %8817 = vmatprep.subr.mxu0 0.0
    %8818 = vmatpush1.msra.mxu0 0.0
    %8819 = vmatprep.subr.mxu0 0.0
    %8820 = vmatpush1.msra.mxu0 0.0
    %8821 = vmatprep.subr.mxu0 0.0
    %8822 = vmatpush1.msra.mxu0 0.0
    %8823 = vmatprep.subr.mxu0 0.0
    %8824 = vmatpush1.msra.mxu0 0.0
    %8825 = vmatprep.subr.mxu0 0.0
    %8826 = vmatpush1.msra.mxu0 0.0
    %8827 = vmatprep.subr.mxu0 0.0
    %8828 = vmatpush1.msra.mxu0 0.0
    %8829 = vmatprep.subr.mxu0 0.0
    %8830 = vmatpush1.msra.mxu0 0.0
    %8831 = vmatprep.mubr.f32.mxu0 0.0
    %v8832 = vand.u32 %v8153, 4294901760
    %8833 = vmatmul.mubr.f32.gmra.mrb[0].mxu0 %v8832
    %v8834 = vpop.f32.mrb[0].mxu0
    %v8835 = vadd.f32 %v8692, %v8834
    %v8836 = vpop.f32.mrb[0].mxu0
    %8837 = vmatprep.mubr.f32.mxu0 0.0
    %v8838 = vand.u32 %v8159, 4294901760
    %8839 = vmatmul.mubr.f32.gmra.mrb[0].mxu0 %v8838
    %v8840 = vpop.f32.mrb[0].mxu0
    %v8841 = vadd.f32 %v8700, %v8840
    %v8842 = vpop.f32.mrb[0].mxu0
    %8843 = vmatprep.mubr.f32.mxu0 0.0
    %v8844 = vand.u32 %v8165, 4294901760
    %8845 = vmatmul.mubr.f32.gmra.mrb[0].mxu0 %v8844
    %v8846 = vpop.f32.mrb[0].mxu0
    %v8847 = vadd.f32 %v8708, %v8846
    %v8848 = vpop.f32.mrb[0].mxu0
    %8849 = vmatprep.mubr.f32.mxu0 0.0
    %v8850 = vand.u32 %v8171, 4294901760
    %8851 = vmatmul.mubr.f32.gmra.mrb[0].mxu0 %v8850
    %v8852 = vpop.f32.mrb[0].mxu0
    %v8853 = vadd.f32 %v8716, %v8852
    %v8854 = vpop.f32.mrb[0].mxu0
    %8855 = vdwg.mxu0
    %8856 = vmatprep.subr.mxu0 0.0
    %v8857 = vand.u32 %v8175, 4294901760
    %8858 = vmatpush1.msra.mxu0 %v8857
    %8859 = vmatprep.subr.mxu0 0.0
    %v8860 = vand.u32 %v8176, 4294901760
    %8861 = vmatpush1.msra.mxu0 %v8860
    %8862 = vmatprep.subr.mxu0 0.0
    %v8863 = vand.u32 %v8177, 4294901760
    %8864 = vmatpush1.msra.mxu0 %v8863
    %8865 = vmatprep.subr.mxu0 0.0
    %v8866 = vand.u32 %v8178, 4294901760
    %8867 = vmatpush1.msra.mxu0 %v8866
    %8868 = vmatprep.subr.mxu0 0.0
    %v8869 = vand.u32 %v8179, 4294901760
    %8870 = vmatpush1.msra.mxu0 %v8869
    %8871 = vmatprep.subr.mxu0 0.0
    %v8872 = vand.u32 %v8180, 4294901760
    %8873 = vmatpush1.msra.mxu0 %v8872
    %8874 = vmatprep.subr.mxu0 0.0
    %v8875 = vand.u32 %v8181, 4294901760
    %8876 = vmatpush1.msra.mxu0 %v8875
    %8877 = vmatprep.subr.mxu0 0.0
    %v8878 = vand.u32 %v8182, 4294901760
    %8879 = vmatpush1.msra.mxu0 %v8878
    %8880 = vmatprep.subr.mxu0 0.0
    %v8881 = vand.u32 %v8183, 4294901760
    %8882 = vmatpush1.msra.mxu0 %v8881
    %8883 = vmatprep.subr.mxu0 0.0
    %v8884 = vand.u32 %v8184, 4294901760
    %8885 = vmatpush1.msra.mxu0 %v8884
    %8886 = vmatprep.subr.mxu0 0.0
    %v8887 = vand.u32 %v8185, 4294901760
    %8888 = vmatpush1.msra.mxu0 %v8887
    %8889 = vmatprep.subr.mxu0 0.0
    %v8890 = vand.u32 %v8186, 4294901760
    %8891 = vmatpush1.msra.mxu0 %v8890
    %8892 = vmatprep.subr.mxu0 0.0
    %v8893 = vand.u32 %v8187, 4294901760
    %8894 = vmatpush1.msra.mxu0 %v8893
    %8895 = vmatprep.subr.mxu0 0.0
    %v8896 = vand.u32 %v8188, 4294901760
    %8897 = vmatpush1.msra.mxu0 %v8896
    %8898 = vmatprep.subr.mxu0 0.0
    %v8899 = vand.u32 %v8189, 4294901760
    %8900 = vmatpush1.msra.mxu0 %v8899
    %8901 = vmatprep.subr.mxu0 0.0
    %v8902 = vand.u32 %v8190, 4294901760
    %8903 = vmatpush1.msra.mxu0 %v8902
    %8904 = vmatprep.subr.mxu0 0.0
    %8905 = vmatpush1.msra.mxu0 0.0
    %8906 = vmatprep.subr.mxu0 0.0
    %8907 = vmatpush1.msra.mxu0 0.0
    %8908 = vmatprep.subr.mxu0 0.0
    %8909 = vmatpush1.msra.mxu0 0.0
    %8910 = vmatprep.subr.mxu0 0.0
    %8911 = vmatpush1.msra.mxu0 0.0
    %8912 = vmatprep.subr.mxu0 0.0
    %8913 = vmatpush1.msra.mxu0 0.0
    %8914 = vmatprep.subr.mxu0 0.0
    %8915 = vmatpush1.msra.mxu0 0.0
    %8916 = vmatprep.subr.mxu0 0.0
    %8917 = vmatpush1.msra.mxu0 0.0
    %8918 = vmatprep.subr.mxu0 0.0
    %8919 = vmatpush1.msra.mxu0 0.0
    %8920 = vmatprep.subr.mxu0 0.0
    %8921 = vmatpush1.msra.mxu0 0.0
    %8922 = vmatprep.subr.mxu0 0.0
    %8923 = vmatpush1.msra.mxu0 0.0
    %8924 = vmatprep.subr.mxu0 0.0
    %8925 = vmatpush1.msra.mxu0 0.0
    %8926 = vmatprep.subr.mxu0 0.0
    %8927 = vmatpush1.msra.mxu0 0.0
    %8928 = vmatprep.subr.mxu0 0.0
    %8929 = vmatpush1.msra.mxu0 0.0
    %8930 = vmatprep.subr.mxu0 0.0
    %8931 = vmatpush1.msra.mxu0 0.0
    %8932 = vmatprep.subr.mxu0 0.0
    %8933 = vmatpush1.msra.mxu0 0.0
    %8934 = vmatprep.subr.mxu0 0.0
    %8935 = vmatpush1.msra.mxu0 0.0
    %8936 = vmatprep.mubr.f32.mxu0 0.0
    %v8937 = vand.u32 %v8153, 4294901760
    %8938 = vmatmul.mubr.f32.gmra.mrb[0].mxu0 %v8937
    %v8939 = vpop.f32.mrb[0].mxu0
    %v8940 = vadd.f32 %v8835, %v8939
    %v8941 = vpop.f32.mrb[0].mxu0
    %8942 = vmatprep.mubr.f32.mxu0 0.0
    %v8943 = vand.u32 %v8159, 4294901760
    %8944 = vmatmul.mubr.f32.gmra.mrb[0].mxu0 %v8943
    %v8945 = vpop.f32.mrb[0].mxu0
    %v8946 = vadd.f32 %v8841, %v8945
    %v8947 = vpop.f32.mrb[0].mxu0
    %8948 = vmatprep.mubr.f32.mxu0 0.0
    %v8949 = vand.u32 %v8165, 4294901760
    %8950 = vmatmul.mubr.f32.gmra.mrb[0].mxu0 %v8949
    %v8951 = vpop.f32.mrb[0].mxu0
    %v8952 = vadd.f32 %v8847, %v8951
    %v8953 = vpop.f32.mrb[0].mxu0
    %8954 = vmatprep.mubr.f32.mxu0 0.0
    %v8955 = vand.u32 %v8171, 4294901760
    %8956 = vmatmul.mubr.f32.gmra.mrb[0].mxu0 %v8955
    %v8957 = vpop.f32.mrb[0].mxu0
    %v8958 = vadd.f32 %v8853, %v8957
    %v8959 = vpop.f32.mrb[0].mxu0
    %8960 = vdwg.mxu0
    %v8961 = vadd.f32 %v7539, %v8940
    %v8962 = vadd.f32 %v7545, %v8946
    %v8963 = vadd.f32 %v7551, %v8952
    %v8964 = vadd.f32 %v7557, %v8958
    %8965 = vmatprep.subr.mxu0 0.0
    %v8966 = vand.u32 %v131, 4294901760
    %8967 = vmatpush1.msra.mxu0 %v8966
    %8968 = vmatprep.subr.mxu0 0.0
    %v8969 = vand.u32 %v132, 4294901760
    %8970 = vmatpush1.msra.mxu0 %v8969
    %8971 = vmatprep.subr.mxu0 0.0
    %v8972 = vand.u32 %v133, 4294901760
    %8973 = vmatpush1.msra.mxu0 %v8972
    %8974 = vmatprep.subr.mxu0 0.0
    %v8975 = vand.u32 %v134, 4294901760
    %8976 = vmatpush1.msra.mxu0 %v8975
    %8977 = vmatprep.subr.mxu0 0.0
    %v8978 = vand.u32 %v135, 4294901760
    %8979 = vmatpush1.msra.mxu0 %v8978
    %8980 = vmatprep.subr.mxu0 0.0
    %v8981 = vand.u32 %v136, 4294901760
    %8982 = vmatpush1.msra.mxu0 %v8981
    %8983 = vmatprep.subr.mxu0 0.0
    %v8984 = vand.u32 %v137, 4294901760
    %8985 = vmatpush1.msra.mxu0 %v8984
    %8986 = vmatprep.subr.mxu0 0.0
    %v8987 = vand.u32 %v138, 4294901760
    %8988 = vmatpush1.msra.mxu0 %v8987
    %8989 = vmatprep.subr.mxu0 0.0
    %v8990 = vand.u32 %v139, 4294901760
    %8991 = vmatpush1.msra.mxu0 %v8990
    %8992 = vmatprep.subr.mxu0 0.0
    %v8993 = vand.u32 %v140, 4294901760
    %8994 = vmatpush1.msra.mxu0 %v8993
    %8995 = vmatprep.subr.mxu0 0.0
    %v8996 = vand.u32 %v141, 4294901760
    %8997 = vmatpush1.msra.mxu0 %v8996
    %8998 = vmatprep.subr.mxu0 0.0
    %v8999 = vand.u32 %v142, 4294901760
    %9000 = vmatpush1.msra.mxu0 %v8999
    %9001 = vmatprep.subr.mxu0 0.0
    %v9002 = vand.u32 %v143, 4294901760
    %9003 = vmatpush1.msra.mxu0 %v9002
    %9004 = vmatprep.subr.mxu0 0.0
    %v9005 = vand.u32 %v144, 4294901760
    %9006 = vmatpush1.msra.mxu0 %v9005
    %9007 = vmatprep.subr.mxu0 0.0
    %v9008 = vand.u32 %v145, 4294901760
    %9009 = vmatpush1.msra.mxu0 %v9008
    %9010 = vmatprep.subr.mxu0 0.0
    %v9011 = vand.u32 %v146, 4294901760
    %9012 = vmatpush1.msra.mxu0 %v9011
    %9013 = vmatprep.subr.mxu0 0.0
    %9014 = vmatpush1.msra.mxu0 0.0
    %9015 = vmatprep.subr.mxu0 0.0
    %9016 = vmatpush1.msra.mxu0 0.0
    %9017 = vmatprep.subr.mxu0 0.0
    %9018 = vmatpush1.msra.mxu0 0.0
    %9019 = vmatprep.subr.mxu0 0.0
    %9020 = vmatpush1.msra.mxu0 0.0
    %9021 = vmatprep.subr.mxu0 0.0
    %9022 = vmatpush1.msra.mxu0 0.0
    %9023 = vmatprep.subr.mxu0 0.0
    %9024 = vmatpush1.msra.mxu0 0.0
    %9025 = vmatprep.subr.mxu0 0.0
    %9026 = vmatpush1.msra.mxu0 0.0
    %9027 = vmatprep.subr.mxu0 0.0
    %9028 = vmatpush1.msra.mxu0 0.0
    %9029 = vmatprep.subr.mxu0 0.0
    %9030 = vmatpush1.msra.mxu0 0.0
    %9031 = vmatprep.subr.mxu0 0.0
    %9032 = vmatpush1.msra.mxu0 0.0
    %9033 = vmatprep.subr.mxu0 0.0
    %9034 = vmatpush1.msra.mxu0 0.0
    %9035 = vmatprep.subr.mxu0 0.0
    %9036 = vmatpush1.msra.mxu0 0.0
    %9037 = vmatprep.subr.mxu0 0.0
    %9038 = vmatpush1.msra.mxu0 0.0
    %9039 = vmatprep.subr.mxu0 0.0
    %9040 = vmatpush1.msra.mxu0 0.0
    %9041 = vmatprep.subr.mxu0 0.0
    %9042 = vmatpush1.msra.mxu0 0.0
    %9043 = vmatprep.subr.mxu0 0.0
    %9044 = vmatpush1.msra.mxu0 0.0
    %9045 = vmatprep.mubr.f32.mxu0 0.0
    %v9046 = vand.u32 %v8961, 4294901760
    %v9047 = vsub.f32 %v8961, %v9046
    %v9048 = vand.u32 %v9047, 4294901760
    %v9049 = vsub.f32 %v9047, %v9048
    %v9050 = vand.u32 %v9049, 4294901760
    %9051 = vmatmul.mubr.f32.gmra.mrb[0].mxu0 %v9050
    %v9052 = vpop.f32.mrb[0].mxu0
    %v9053 = vadd.f32 0.0, %v9052
    %v9054 = vpop.f32.mrb[0].mxu0
    %9055 = vmatprep.mubr.f32.mxu0 0.0
    %v9056 = vand.u32 %v8962, 4294901760
    %v9057 = vsub.f32 %v8962, %v9056
    %v9058 = vand.u32 %v9057, 4294901760
    %v9059 = vsub.f32 %v9057, %v9058
    %v9060 = vand.u32 %v9059, 4294901760
    %9061 = vmatmul.mubr.f32.gmra.mrb[0].mxu0 %v9060
    %v9062 = vpop.f32.mrb[0].mxu0
    %v9063 = vadd.f32 0.0, %v9062
    %v9064 = vpop.f32.mrb[0].mxu0
    %9065 = vmatprep.mubr.f32.mxu0 0.0
    %v9066 = vand.u32 %v8963, 4294901760
    %v9067 = vsub.f32 %v8963, %v9066
    %v9068 = vand.u32 %v9067, 4294901760
    %v9069 = vsub.f32 %v9067, %v9068
    %v9070 = vand.u32 %v9069, 4294901760
    %9071 = vmatmul.mubr.f32.gmra.mrb[0].mxu0 %v9070
    %v9072 = vpop.f32.mrb[0].mxu0
    %v9073 = vadd.f32 0.0, %v9072
    %v9074 = vpop.f32.mrb[0].mxu0
    %9075 = vmatprep.mubr.f32.mxu0 0.0
    %v9076 = vand.u32 %v8964, 4294901760
    %v9077 = vsub.f32 %v8964, %v9076
    %v9078 = vand.u32 %v9077, 4294901760
    %v9079 = vsub.f32 %v9077, %v9078
    %v9080 = vand.u32 %v9079, 4294901760
    %9081 = vmatmul.mubr.f32.gmra.mrb[0].mxu0 %v9080
    %v9082 = vpop.f32.mrb[0].mxu0
    %v9083 = vadd.f32 0.0, %v9082
    %v9084 = vpop.f32.mrb[0].mxu0
    %9085 = vdwg.mxu0
    %9086 = vmatprep.subr.mxu0 0.0
    %v9087 = vand.u32 %v131, 4294901760
    %v9088 = vsub.f32 %v131, %v9087
    %v9089 = vand.u32 %v9088, 4294901760
    %v9090 = vsub.f32 %v9088, %v9089
    %v9091 = vand.u32 %v9090, 4294901760
    %9092 = vmatpush1.msra.mxu0 %v9091
    %9093 = vmatprep.subr.mxu0 0.0
    %v9094 = vand.u32 %v132, 4294901760
    %v9095 = vsub.f32 %v132, %v9094
    %v9096 = vand.u32 %v9095, 4294901760
    %v9097 = vsub.f32 %v9095, %v9096
    %v9098 = vand.u32 %v9097, 4294901760
    %9099 = vmatpush1.msra.mxu0 %v9098
    %9100 = vmatprep.subr.mxu0 0.0
    %v9101 = vand.u32 %v133, 4294901760
    %v9102 = vsub.f32 %v133, %v9101
    %v9103 = vand.u32 %v9102, 4294901760
    %v9104 = vsub.f32 %v9102, %v9103
    %v9105 = vand.u32 %v9104, 4294901760
    %9106 = vmatpush1.msra.mxu0 %v9105
    %9107 = vmatprep.subr.mxu0 0.0
    %v9108 = vand.u32 %v134, 4294901760
    %v9109 = vsub.f32 %v134, %v9108
    %v9110 = vand.u32 %v9109, 4294901760
    %v9111 = vsub.f32 %v9109, %v9110
    %v9112 = vand.u32 %v9111, 4294901760
    %9113 = vmatpush1.msra.mxu0 %v9112
    %9114 = vmatprep.subr.mxu0 0.0
    %v9115 = vand.u32 %v135, 4294901760
    %v9116 = vsub.f32 %v135, %v9115
    %v9117 = vand.u32 %v9116, 4294901760
    %v9118 = vsub.f32 %v9116, %v9117
    %v9119 = vand.u32 %v9118, 4294901760
    %9120 = vmatpush1.msra.mxu0 %v9119
    %9121 = vmatprep.subr.mxu0 0.0
    %v9122 = vand.u32 %v136, 4294901760
    %v9123 = vsub.f32 %v136, %v9122
    %v9124 = vand.u32 %v9123, 4294901760
    %v9125 = vsub.f32 %v9123, %v9124
    %v9126 = vand.u32 %v9125, 4294901760
    %9127 = vmatpush1.msra.mxu0 %v9126
    %9128 = vmatprep.subr.mxu0 0.0
    %v9129 = vand.u32 %v137, 4294901760
    %v9130 = vsub.f32 %v137, %v9129
    %v9131 = vand.u32 %v9130, 4294901760
    %v9132 = vsub.f32 %v9130, %v9131
    %v9133 = vand.u32 %v9132, 4294901760
    %9134 = vmatpush1.msra.mxu0 %v9133
    %9135 = vmatprep.subr.mxu0 0.0
    %v9136 = vand.u32 %v138, 4294901760
    %v9137 = vsub.f32 %v138, %v9136
    %v9138 = vand.u32 %v9137, 4294901760
    %v9139 = vsub.f32 %v9137, %v9138
    %v9140 = vand.u32 %v9139, 4294901760
    %9141 = vmatpush1.msra.mxu0 %v9140
    %9142 = vmatprep.subr.mxu0 0.0
    %v9143 = vand.u32 %v139, 4294901760
    %v9144 = vsub.f32 %v139, %v9143
    %v9145 = vand.u32 %v9144, 4294901760
    %v9146 = vsub.f32 %v9144, %v9145
    %v9147 = vand.u32 %v9146, 4294901760
    %9148 = vmatpush1.msra.mxu0 %v9147
    %9149 = vmatprep.subr.mxu0 0.0
    %v9150 = vand.u32 %v140, 4294901760
    %v9151 = vsub.f32 %v140, %v9150
    %v9152 = vand.u32 %v9151, 4294901760
    %v9153 = vsub.f32 %v9151, %v9152
    %v9154 = vand.u32 %v9153, 4294901760
    %9155 = vmatpush1.msra.mxu0 %v9154
    %9156 = vmatprep.subr.mxu0 0.0
    %v9157 = vand.u32 %v141, 4294901760
    %v9158 = vsub.f32 %v141, %v9157
    %v9159 = vand.u32 %v9158, 4294901760
    %v9160 = vsub.f32 %v9158, %v9159
    %v9161 = vand.u32 %v9160, 4294901760
    %9162 = vmatpush1.msra.mxu0 %v9161
    %9163 = vmatprep.subr.mxu0 0.0
    %v9164 = vand.u32 %v142, 4294901760
    %v9165 = vsub.f32 %v142, %v9164
    %v9166 = vand.u32 %v9165, 4294901760
    %v9167 = vsub.f32 %v9165, %v9166
    %v9168 = vand.u32 %v9167, 4294901760
    %9169 = vmatpush1.msra.mxu0 %v9168
    %9170 = vmatprep.subr.mxu0 0.0
    %v9171 = vand.u32 %v143, 4294901760
    %v9172 = vsub.f32 %v143, %v9171
    %v9173 = vand.u32 %v9172, 4294901760
    %v9174 = vsub.f32 %v9172, %v9173
    %v9175 = vand.u32 %v9174, 4294901760
    %9176 = vmatpush1.msra.mxu0 %v9175
    %9177 = vmatprep.subr.mxu0 0.0
    %v9178 = vand.u32 %v144, 4294901760
    %v9179 = vsub.f32 %v144, %v9178
    %v9180 = vand.u32 %v9179, 4294901760
    %v9181 = vsub.f32 %v9179, %v9180
    %v9182 = vand.u32 %v9181, 4294901760
    %9183 = vmatpush1.msra.mxu0 %v9182
    %9184 = vmatprep.subr.mxu0 0.0
    %v9185 = vand.u32 %v145, 4294901760
    %v9186 = vsub.f32 %v145, %v9185
    %v9187 = vand.u32 %v9186, 4294901760
    %v9188 = vsub.f32 %v9186, %v9187
    %v9189 = vand.u32 %v9188, 4294901760
    %9190 = vmatpush1.msra.mxu0 %v9189
    %9191 = vmatprep.subr.mxu0 0.0
    %v9192 = vand.u32 %v146, 4294901760
    %v9193 = vsub.f32 %v146, %v9192
    %v9194 = vand.u32 %v9193, 4294901760
    %v9195 = vsub.f32 %v9193, %v9194
    %v9196 = vand.u32 %v9195, 4294901760
    %9197 = vmatpush1.msra.mxu0 %v9196
    %9198 = vmatprep.subr.mxu0 0.0
    %9199 = vmatpush1.msra.mxu0 0.0
    %9200 = vmatprep.subr.mxu0 0.0
    %9201 = vmatpush1.msra.mxu0 0.0
    %9202 = vmatprep.subr.mxu0 0.0
    %9203 = vmatpush1.msra.mxu0 0.0
    %9204 = vmatprep.subr.mxu0 0.0
    %9205 = vmatpush1.msra.mxu0 0.0
    %9206 = vmatprep.subr.mxu0 0.0
    %9207 = vmatpush1.msra.mxu0 0.0
    %9208 = vmatprep.subr.mxu0 0.0
    %9209 = vmatpush1.msra.mxu0 0.0
    %9210 = vmatprep.subr.mxu0 0.0
    %9211 = vmatpush1.msra.mxu0 0.0
    %9212 = vmatprep.subr.mxu0 0.0
    %9213 = vmatpush1.msra.mxu0 0.0
    %9214 = vmatprep.subr.mxu0 0.0
    %9215 = vmatpush1.msra.mxu0 0.0
    %9216 = vmatprep.subr.mxu0 0.0
    %9217 = vmatpush1.msra.mxu0 0.0
    %9218 = vmatprep.subr.mxu0 0.0
    %9219 = vmatpush1.msra.mxu0 0.0
    %9220 = vmatprep.subr.mxu0 0.0
    %9221 = vmatpush1.msra.mxu0 0.0
    %9222 = vmatprep.subr.mxu0 0.0
    %9223 = vmatpush1.msra.mxu0 0.0
    %9224 = vmatprep.subr.mxu0 0.0
    %9225 = vmatpush1.msra.mxu0 0.0
    %9226 = vmatprep.subr.mxu0 0.0
    %9227 = vmatpush1.msra.mxu0 0.0
    %9228 = vmatprep.subr.mxu0 0.0
    %9229 = vmatpush1.msra.mxu0 0.0
    %9230 = vmatprep.mubr.f32.mxu0 0.0
    %v9231 = vand.u32 %v8961, 4294901760
    %9232 = vmatmul.mubr.f32.gmra.mrb[0].mxu0 %v9231
    %v9233 = vpop.f32.mrb[0].mxu0
    %v9234 = vadd.f32 %v9053, %v9233
    %v9235 = vpop.f32.mrb[0].mxu0
    %9236 = vmatprep.mubr.f32.mxu0 0.0
    %v9237 = vand.u32 %v8962, 4294901760
    %9238 = vmatmul.mubr.f32.gmra.mrb[0].mxu0 %v9237
    %v9239 = vpop.f32.mrb[0].mxu0
    %v9240 = vadd.f32 %v9063, %v9239
    %v9241 = vpop.f32.mrb[0].mxu0
    %9242 = vmatprep.mubr.f32.mxu0 0.0
    %v9243 = vand.u32 %v8963, 4294901760
    %9244 = vmatmul.mubr.f32.gmra.mrb[0].mxu0 %v9243
    %v9245 = vpop.f32.mrb[0].mxu0
    %v9246 = vadd.f32 %v9073, %v9245
    %v9247 = vpop.f32.mrb[0].mxu0
    %9248 = vmatprep.mubr.f32.mxu0 0.0
    %v9249 = vand.u32 %v8964, 4294901760
    %9250 = vmatmul.mubr.f32.gmra.mrb[0].mxu0 %v9249
    %v9251 = vpop.f32.mrb[0].mxu0
    %v9252 = vadd.f32 %v9083, %v9251
    %v9253 = vpop.f32.mrb[0].mxu0
    %9254 = vdwg.mxu0
    %9255 = vmatprep.subr.mxu0 0.0
    %v9256 = vand.u32 %v131, 4294901760
    %v9257 = vsub.f32 %v131, %v9256
    %9258 = vmatpush1.msra.mxu0 %v9257
    %9259 = vmatprep.subr.mxu0 0.0
    %v9260 = vand.u32 %v132, 4294901760
    %v9261 = vsub.f32 %v132, %v9260
    %9262 = vmatpush1.msra.mxu0 %v9261
    %9263 = vmatprep.subr.mxu0 0.0
    %v9264 = vand.u32 %v133, 4294901760
    %v9265 = vsub.f32 %v133, %v9264
    %9266 = vmatpush1.msra.mxu0 %v9265
    %9267 = vmatprep.subr.mxu0 0.0
    %v9268 = vand.u32 %v134, 4294901760
    %v9269 = vsub.f32 %v134, %v9268
    %9270 = vmatpush1.msra.mxu0 %v9269
    %9271 = vmatprep.subr.mxu0 0.0
    %v9272 = vand.u32 %v135, 4294901760
    %v9273 = vsub.f32 %v135, %v9272
    %9274 = vmatpush1.msra.mxu0 %v9273
    %9275 = vmatprep.subr.mxu0 0.0
    %v9276 = vand.u32 %v136, 4294901760
    %v9277 = vsub.f32 %v136, %v9276
    %9278 = vmatpush1.msra.mxu0 %v9277
    %9279 = vmatprep.subr.mxu0 0.0
    %v9280 = vand.u32 %v137, 4294901760
    %v9281 = vsub.f32 %v137, %v9280
    %9282 = vmatpush1.msra.mxu0 %v9281
    %9283 = vmatprep.subr.mxu0 0.0
    %v9284 = vand.u32 %v138, 4294901760
    %v9285 = vsub.f32 %v138, %v9284
    %9286 = vmatpush1.msra.mxu0 %v9285
    %9287 = vmatprep.subr.mxu0 0.0
    %v9288 = vand.u32 %v139, 4294901760
    %v9289 = vsub.f32 %v139, %v9288
    %9290 = vmatpush1.msra.mxu0 %v9289
    %9291 = vmatprep.subr.mxu0 0.0
    %v9292 = vand.u32 %v140, 4294901760
    %v9293 = vsub.f32 %v140, %v9292
    %9294 = vmatpush1.msra.mxu0 %v9293
    %9295 = vmatprep.subr.mxu0 0.0
    %v9296 = vand.u32 %v141, 4294901760
    %v9297 = vsub.f32 %v141, %v9296
    %9298 = vmatpush1.msra.mxu0 %v9297
    %9299 = vmatprep.subr.mxu0 0.0
    %v9300 = vand.u32 %v142, 4294901760
    %v9301 = vsub.f32 %v142, %v9300
    %9302 = vmatpush1.msra.mxu0 %v9301
    %9303 = vmatprep.subr.mxu0 0.0
    %v9304 = vand.u32 %v143, 4294901760
    %v9305 = vsub.f32 %v143, %v9304
    %9306 = vmatpush1.msra.mxu0 %v9305
    %9307 = vmatprep.subr.mxu0 0.0
    %v9308 = vand.u32 %v144, 4294901760
    %v9309 = vsub.f32 %v144, %v9308
    %9310 = vmatpush1.msra.mxu0 %v9309
    %9311 = vmatprep.subr.mxu0 0.0
    %v9312 = vand.u32 %v145, 4294901760
    %v9313 = vsub.f32 %v145, %v9312
    %9314 = vmatpush1.msra.mxu0 %v9313
    %9315 = vmatprep.subr.mxu0 0.0
    %v9316 = vand.u32 %v146, 4294901760
    %v9317 = vsub.f32 %v146, %v9316
    %9318 = vmatpush1.msra.mxu0 %v9317
    %9319 = vmatprep.subr.mxu0 0.0
    %9320 = vmatpush1.msra.mxu0 0.0
    %9321 = vmatprep.subr.mxu0 0.0
    %9322 = vmatpush1.msra.mxu0 0.0
    %9323 = vmatprep.subr.mxu0 0.0
    %9324 = vmatpush1.msra.mxu0 0.0
    %9325 = vmatprep.subr.mxu0 0.0
    %9326 = vmatpush1.msra.mxu0 0.0
    %9327 = vmatprep.subr.mxu0 0.0
    %9328 = vmatpush1.msra.mxu0 0.0
    %9329 = vmatprep.subr.mxu0 0.0
    %9330 = vmatpush1.msra.mxu0 0.0
    %9331 = vmatprep.subr.mxu0 0.0
    %9332 = vmatpush1.msra.mxu0 0.0
    %9333 = vmatprep.subr.mxu0 0.0
    %9334 = vmatpush1.msra.mxu0 0.0
    %9335 = vmatprep.subr.mxu0 0.0
    %9336 = vmatpush1.msra.mxu0 0.0
    %9337 = vmatprep.subr.mxu0 0.0
    %9338 = vmatpush1.msra.mxu0 0.0
    %9339 = vmatprep.subr.mxu0 0.0
    %9340 = vmatpush1.msra.mxu0 0.0
    %9341 = vmatprep.subr.mxu0 0.0
    %9342 = vmatpush1.msra.mxu0 0.0
    %9343 = vmatprep.subr.mxu0 0.0
    %9344 = vmatpush1.msra.mxu0 0.0
    %9345 = vmatprep.subr.mxu0 0.0
    %9346 = vmatpush1.msra.mxu0 0.0
    %9347 = vmatprep.subr.mxu0 0.0
    %9348 = vmatpush1.msra.mxu0 0.0
    %9349 = vmatprep.subr.mxu0 0.0
    %9350 = vmatpush1.msra.mxu0 0.0
    %9351 = vmatprep.mubr.f32.mxu0 0.0
    %v9352 = vand.u32 %v8961, 4294901760
    %v9353 = vsub.f32 %v8961, %v9352
    %9354 = vmatmul.mubr.f32.gmra.mrb[0].mxu0 %v9353
    %v9355 = vpop.f32.mrb[0].mxu0
    %v9356 = vadd.f32 %v9234, %v9355
    %v9357 = vpop.f32.mrb[0].mxu0
    %9358 = vmatprep.mubr.f32.mxu0 0.0
    %v9359 = vand.u32 %v8962, 4294901760
    %v9360 = vsub.f32 %v8962, %v9359
    %9361 = vmatmul.mubr.f32.gmra.mrb[0].mxu0 %v9360
    %v9362 = vpop.f32.mrb[0].mxu0
    %v9363 = vadd.f32 %v9240, %v9362
    %v9364 = vpop.f32.mrb[0].mxu0
    %9365 = vmatprep.mubr.f32.mxu0 0.0
    %v9366 = vand.u32 %v8963, 4294901760
    %v9367 = vsub.f32 %v8963, %v9366
    %9368 = vmatmul.mubr.f32.gmra.mrb[0].mxu0 %v9367
    %v9369 = vpop.f32.mrb[0].mxu0
    %v9370 = vadd.f32 %v9246, %v9369
    %v9371 = vpop.f32.mrb[0].mxu0
    %9372 = vmatprep.mubr.f32.mxu0 0.0
    %v9373 = vand.u32 %v8964, 4294901760
    %v9374 = vsub.f32 %v8964, %v9373
    %9375 = vmatmul.mubr.f32.gmra.mrb[0].mxu0 %v9374
    %v9376 = vpop.f32.mrb[0].mxu0
    %v9377 = vadd.f32 %v9252, %v9376
    %v9378 = vpop.f32.mrb[0].mxu0
    %9379 = vdwg.mxu0
    %9380 = vmatprep.subr.mxu0 0.0
    %v9381 = vand.u32 %v131, 4294901760
    %9382 = vmatpush1.msra.mxu0 %v9381
    %9383 = vmatprep.subr.mxu0 0.0
    %v9384 = vand.u32 %v132, 4294901760
    %9385 = vmatpush1.msra.mxu0 %v9384
    %9386 = vmatprep.subr.mxu0 0.0
    %v9387 = vand.u32 %v133, 4294901760
    %9388 = vmatpush1.msra.mxu0 %v9387
    %9389 = vmatprep.subr.mxu0 0.0
    %v9390 = vand.u32 %v134, 4294901760
    %9391 = vmatpush1.msra.mxu0 %v9390
    %9392 = vmatprep.subr.mxu0 0.0
    %v9393 = vand.u32 %v135, 4294901760
    %9394 = vmatpush1.msra.mxu0 %v9393
    %9395 = vmatprep.subr.mxu0 0.0
    %v9396 = vand.u32 %v136, 4294901760
    %9397 = vmatpush1.msra.mxu0 %v9396
    %9398 = vmatprep.subr.mxu0 0.0
    %v9399 = vand.u32 %v137, 4294901760
    %9400 = vmatpush1.msra.mxu0 %v9399
    %9401 = vmatprep.subr.mxu0 0.0
    %v9402 = vand.u32 %v138, 4294901760
    %9403 = vmatpush1.msra.mxu0 %v9402
    %9404 = vmatprep.subr.mxu0 0.0
    %v9405 = vand.u32 %v139, 4294901760
    %9406 = vmatpush1.msra.mxu0 %v9405
    %9407 = vmatprep.subr.mxu0 0.0
    %v9408 = vand.u32 %v140, 4294901760
    %9409 = vmatpush1.msra.mxu0 %v9408
    %9410 = vmatprep.subr.mxu0 0.0
    %v9411 = vand.u32 %v141, 4294901760
    %9412 = vmatpush1.msra.mxu0 %v9411
    %9413 = vmatprep.subr.mxu0 0.0
    %v9414 = vand.u32 %v142, 4294901760
    %9415 = vmatpush1.msra.mxu0 %v9414
    %9416 = vmatprep.subr.mxu0 0.0
    %v9417 = vand.u32 %v143, 4294901760
    %9418 = vmatpush1.msra.mxu0 %v9417
    %9419 = vmatprep.subr.mxu0 0.0
    %v9420 = vand.u32 %v144, 4294901760
    %9421 = vmatpush1.msra.mxu0 %v9420
    %9422 = vmatprep.subr.mxu0 0.0
    %v9423 = vand.u32 %v145, 4294901760
    %9424 = vmatpush1.msra.mxu0 %v9423
    %9425 = vmatprep.subr.mxu0 0.0
    %v9426 = vand.u32 %v146, 4294901760
    %9427 = vmatpush1.msra.mxu0 %v9426
    %9428 = vmatprep.subr.mxu0 0.0
    %9429 = vmatpush1.msra.mxu0 0.0
    %9430 = vmatprep.subr.mxu0 0.0
    %9431 = vmatpush1.msra.mxu0 0.0
    %9432 = vmatprep.subr.mxu0 0.0
    %9433 = vmatpush1.msra.mxu0 0.0
    %9434 = vmatprep.subr.mxu0 0.0
    %9435 = vmatpush1.msra.mxu0 0.0
    %9436 = vmatprep.subr.mxu0 0.0
    %9437 = vmatpush1.msra.mxu0 0.0
    %9438 = vmatprep.subr.mxu0 0.0
    %9439 = vmatpush1.msra.mxu0 0.0
    %9440 = vmatprep.subr.mxu0 0.0
    %9441 = vmatpush1.msra.mxu0 0.0
    %9442 = vmatprep.subr.mxu0 0.0
    %9443 = vmatpush1.msra.mxu0 0.0
    %9444 = vmatprep.subr.mxu0 0.0
    %9445 = vmatpush1.msra.mxu0 0.0
    %9446 = vmatprep.subr.mxu0 0.0
    %9447 = vmatpush1.msra.mxu0 0.0
    %9448 = vmatprep.subr.mxu0 0.0
    %9449 = vmatpush1.msra.mxu0 0.0
    %9450 = vmatprep.subr.mxu0 0.0
    %9451 = vmatpush1.msra.mxu0 0.0
    %9452 = vmatprep.subr.mxu0 0.0
    %9453 = vmatpush1.msra.mxu0 0.0
    %9454 = vmatprep.subr.mxu0 0.0
    %9455 = vmatpush1.msra.mxu0 0.0
    %9456 = vmatprep.subr.mxu0 0.0
    %9457 = vmatpush1.msra.mxu0 0.0
    %9458 = vmatprep.subr.mxu0 0.0
    %9459 = vmatpush1.msra.mxu0 0.0
    %9460 = vmatprep.mubr.f32.mxu0 0.0
    %v9461 = vand.u32 %v8961, 4294901760
    %v9462 = vsub.f32 %v8961, %v9461
    %v9463 = vand.u32 %v9462, 4294901760
    %9464 = vmatmul.mubr.f32.gmra.mrb[0].mxu0 %v9463
    %v9465 = vpop.f32.mrb[0].mxu0
    %v9466 = vadd.f32 %v9356, %v9465
    %v9467 = vpop.f32.mrb[0].mxu0
    %9468 = vmatprep.mubr.f32.mxu0 0.0
    %v9469 = vand.u32 %v8962, 4294901760
    %v9470 = vsub.f32 %v8962, %v9469
    %v9471 = vand.u32 %v9470, 4294901760
    %9472 = vmatmul.mubr.f32.gmra.mrb[0].mxu0 %v9471
    %v9473 = vpop.f32.mrb[0].mxu0
    %v9474 = vadd.f32 %v9363, %v9473
    %v9475 = vpop.f32.mrb[0].mxu0
    %9476 = vmatprep.mubr.f32.mxu0 0.0
    %v9477 = vand.u32 %v8963, 4294901760
    %v9478 = vsub.f32 %v8963, %v9477
    %v9479 = vand.u32 %v9478, 4294901760
    %9480 = vmatmul.mubr.f32.gmra.mrb[0].mxu0 %v9479
    %v9481 = vpop.f32.mrb[0].mxu0
    %v9482 = vadd.f32 %v9370, %v9481
    %v9483 = vpop.f32.mrb[0].mxu0
    %9484 = vmatprep.mubr.f32.mxu0 0.0
    %v9485 = vand.u32 %v8964, 4294901760
    %v9486 = vsub.f32 %v8964, %v9485
    %v9487 = vand.u32 %v9486, 4294901760
    %9488 = vmatmul.mubr.f32.gmra.mrb[0].mxu0 %v9487
    %v9489 = vpop.f32.mrb[0].mxu0
    %v9490 = vadd.f32 %v9377, %v9489
    %v9491 = vpop.f32.mrb[0].mxu0
    %9492 = vdwg.mxu0
    %9493 = vmatprep.subr.mxu0 0.0
    %v9494 = vand.u32 %v131, 4294901760
    %v9495 = vsub.f32 %v131, %v9494
    %v9496 = vand.u32 %v9495, 4294901760
    %9497 = vmatpush1.msra.mxu0 %v9496
    %9498 = vmatprep.subr.mxu0 0.0
    %v9499 = vand.u32 %v132, 4294901760
    %v9500 = vsub.f32 %v132, %v9499
    %v9501 = vand.u32 %v9500, 4294901760
    %9502 = vmatpush1.msra.mxu0 %v9501
    %9503 = vmatprep.subr.mxu0 0.0
    %v9504 = vand.u32 %v133, 4294901760
    %v9505 = vsub.f32 %v133, %v9504
    %v9506 = vand.u32 %v9505, 4294901760
    %9507 = vmatpush1.msra.mxu0 %v9506
    %9508 = vmatprep.subr.mxu0 0.0
    %v9509 = vand.u32 %v134, 4294901760
    %v9510 = vsub.f32 %v134, %v9509
    %v9511 = vand.u32 %v9510, 4294901760
    %9512 = vmatpush1.msra.mxu0 %v9511
    %9513 = vmatprep.subr.mxu0 0.0
    %v9514 = vand.u32 %v135, 4294901760
    %v9515 = vsub.f32 %v135, %v9514
    %v9516 = vand.u32 %v9515, 4294901760
    %9517 = vmatpush1.msra.mxu0 %v9516
    %9518 = vmatprep.subr.mxu0 0.0
    %v9519 = vand.u32 %v136, 4294901760
    %v9520 = vsub.f32 %v136, %v9519
    %v9521 = vand.u32 %v9520, 4294901760
    %9522 = vmatpush1.msra.mxu0 %v9521
    %9523 = vmatprep.subr.mxu0 0.0
    %v9524 = vand.u32 %v137, 4294901760
    %v9525 = vsub.f32 %v137, %v9524
    %v9526 = vand.u32 %v9525, 4294901760
    %9527 = vmatpush1.msra.mxu0 %v9526
    %9528 = vmatprep.subr.mxu0 0.0
    %v9529 = vand.u32 %v138, 4294901760
    %v9530 = vsub.f32 %v138, %v9529
    %v9531 = vand.u32 %v9530, 4294901760
    %9532 = vmatpush1.msra.mxu0 %v9531
    %9533 = vmatprep.subr.mxu0 0.0
    %v9534 = vand.u32 %v139, 4294901760
    %v9535 = vsub.f32 %v139, %v9534
    %v9536 = vand.u32 %v9535, 4294901760
    %9537 = vmatpush1.msra.mxu0 %v9536
    %9538 = vmatprep.subr.mxu0 0.0
    %v9539 = vand.u32 %v140, 4294901760
    %v9540 = vsub.f32 %v140, %v9539
    %v9541 = vand.u32 %v9540, 4294901760
    %9542 = vmatpush1.msra.mxu0 %v9541
    %9543 = vmatprep.subr.mxu0 0.0
    %v9544 = vand.u32 %v141, 4294901760
    %v9545 = vsub.f32 %v141, %v9544
    %v9546 = vand.u32 %v9545, 4294901760
    %9547 = vmatpush1.msra.mxu0 %v9546
    %9548 = vmatprep.subr.mxu0 0.0
    %v9549 = vand.u32 %v142, 4294901760
    %v9550 = vsub.f32 %v142, %v9549
    %v9551 = vand.u32 %v9550, 4294901760
    %9552 = vmatpush1.msra.mxu0 %v9551
    %9553 = vmatprep.subr.mxu0 0.0
    %v9554 = vand.u32 %v143, 4294901760
    %v9555 = vsub.f32 %v143, %v9554
    %v9556 = vand.u32 %v9555, 4294901760
    %9557 = vmatpush1.msra.mxu0 %v9556
    %9558 = vmatprep.subr.mxu0 0.0
    %v9559 = vand.u32 %v144, 4294901760
    %v9560 = vsub.f32 %v144, %v9559
    %v9561 = vand.u32 %v9560, 4294901760
    %9562 = vmatpush1.msra.mxu0 %v9561
    %9563 = vmatprep.subr.mxu0 0.0
    %v9564 = vand.u32 %v145, 4294901760
    %v9565 = vsub.f32 %v145, %v9564
    %v9566 = vand.u32 %v9565, 4294901760
    %9567 = vmatpush1.msra.mxu0 %v9566
    %9568 = vmatprep.subr.mxu0 0.0
    %v9569 = vand.u32 %v146, 4294901760
    %v9570 = vsub.f32 %v146, %v9569
    %v9571 = vand.u32 %v9570, 4294901760
    %9572 = vmatpush1.msra.mxu0 %v9571
    %9573 = vmatprep.subr.mxu0 0.0
    %9574 = vmatpush1.msra.mxu0 0.0
    %9575 = vmatprep.subr.mxu0 0.0
    %9576 = vmatpush1.msra.mxu0 0.0
    %9577 = vmatprep.subr.mxu0 0.0
    %9578 = vmatpush1.msra.mxu0 0.0
    %9579 = vmatprep.subr.mxu0 0.0
    %9580 = vmatpush1.msra.mxu0 0.0
    %9581 = vmatprep.subr.mxu0 0.0
    %9582 = vmatpush1.msra.mxu0 0.0
    %9583 = vmatprep.subr.mxu0 0.0
    %9584 = vmatpush1.msra.mxu0 0.0
    %9585 = vmatprep.subr.mxu0 0.0
    %9586 = vmatpush1.msra.mxu0 0.0
    %9587 = vmatprep.subr.mxu0 0.0
    %9588 = vmatpush1.msra.mxu0 0.0
    %9589 = vmatprep.subr.mxu0 0.0
    %9590 = vmatpush1.msra.mxu0 0.0
    %9591 = vmatprep.subr.mxu0 0.0
    %9592 = vmatpush1.msra.mxu0 0.0
    %9593 = vmatprep.subr.mxu0 0.0
    %9594 = vmatpush1.msra.mxu0 0.0
    %9595 = vmatprep.subr.mxu0 0.0
    %9596 = vmatpush1.msra.mxu0 0.0
    %9597 = vmatprep.subr.mxu0 0.0
    %9598 = vmatpush1.msra.mxu0 0.0
    %9599 = vmatprep.subr.mxu0 0.0
    %9600 = vmatpush1.msra.mxu0 0.0
    %9601 = vmatprep.subr.mxu0 0.0
    %9602 = vmatpush1.msra.mxu0 0.0
    %9603 = vmatprep.subr.mxu0 0.0
    %9604 = vmatpush1.msra.mxu0 0.0
    %9605 = vmatprep.mubr.f32.mxu0 0.0
    %v9606 = vand.u32 %v8961, 4294901760
    %9607 = vmatmul.mubr.f32.gmra.mrb[0].mxu0 %v9606
    %v9608 = vpop.f32.mrb[0].mxu0
    %v9609 = vadd.f32 %v9466, %v9608
    %v9610 = vpop.f32.mrb[0].mxu0
    %9611 = vmatprep.mubr.f32.mxu0 0.0
    %v9612 = vand.u32 %v8962, 4294901760
    %9613 = vmatmul.mubr.f32.gmra.mrb[0].mxu0 %v9612
    %v9614 = vpop.f32.mrb[0].mxu0
    %v9615 = vadd.f32 %v9474, %v9614
    %v9616 = vpop.f32.mrb[0].mxu0
    %9617 = vmatprep.mubr.f32.mxu0 0.0
    %v9618 = vand.u32 %v8963, 4294901760
    %9619 = vmatmul.mubr.f32.gmra.mrb[0].mxu0 %v9618
    %v9620 = vpop.f32.mrb[0].mxu0
    %v9621 = vadd.f32 %v9482, %v9620
    %v9622 = vpop.f32.mrb[0].mxu0
    %9623 = vmatprep.mubr.f32.mxu0 0.0
    %v9624 = vand.u32 %v8964, 4294901760
    %9625 = vmatmul.mubr.f32.gmra.mrb[0].mxu0 %v9624
    %v9626 = vpop.f32.mrb[0].mxu0
    %v9627 = vadd.f32 %v9490, %v9626
    %v9628 = vpop.f32.mrb[0].mxu0
    %9629 = vdwg.mxu0
    %9630 = vmatprep.subr.mxu0 0.0
    %v9631 = vand.u32 %v131, 4294901760
    %9632 = vmatpush1.msra.mxu0 %v9631
    %9633 = vmatprep.subr.mxu0 0.0
    %v9634 = vand.u32 %v132, 4294901760
    %9635 = vmatpush1.msra.mxu0 %v9634
    %9636 = vmatprep.subr.mxu0 0.0
    %v9637 = vand.u32 %v133, 4294901760
    %9638 = vmatpush1.msra.mxu0 %v9637
    %9639 = vmatprep.subr.mxu0 0.0
    %v9640 = vand.u32 %v134, 4294901760
    %9641 = vmatpush1.msra.mxu0 %v9640
    %9642 = vmatprep.subr.mxu0 0.0
    %v9643 = vand.u32 %v135, 4294901760
    %9644 = vmatpush1.msra.mxu0 %v9643
    %9645 = vmatprep.subr.mxu0 0.0
    %v9646 = vand.u32 %v136, 4294901760
    %9647 = vmatpush1.msra.mxu0 %v9646
    %9648 = vmatprep.subr.mxu0 0.0
    %v9649 = vand.u32 %v137, 4294901760
    %9650 = vmatpush1.msra.mxu0 %v9649
    %9651 = vmatprep.subr.mxu0 0.0
    %v9652 = vand.u32 %v138, 4294901760
    %9653 = vmatpush1.msra.mxu0 %v9652
    %9654 = vmatprep.subr.mxu0 0.0
    %v9655 = vand.u32 %v139, 4294901760
    %9656 = vmatpush1.msra.mxu0 %v9655
    %9657 = vmatprep.subr.mxu0 0.0
    %v9658 = vand.u32 %v140, 4294901760
    %9659 = vmatpush1.msra.mxu0 %v9658
    %9660 = vmatprep.subr.mxu0 0.0
    %v9661 = vand.u32 %v141, 4294901760
    %9662 = vmatpush1.msra.mxu0 %v9661
    %9663 = vmatprep.subr.mxu0 0.0
    %v9664 = vand.u32 %v142, 4294901760
    %9665 = vmatpush1.msra.mxu0 %v9664
    %9666 = vmatprep.subr.mxu0 0.0
    %v9667 = vand.u32 %v143, 4294901760
    %9668 = vmatpush1.msra.mxu0 %v9667
    %9669 = vmatprep.subr.mxu0 0.0
    %v9670 = vand.u32 %v144, 4294901760
    %9671 = vmatpush1.msra.mxu0 %v9670
    %9672 = vmatprep.subr.mxu0 0.0
    %v9673 = vand.u32 %v145, 4294901760
    %9674 = vmatpush1.msra.mxu0 %v9673
    %9675 = vmatprep.subr.mxu0 0.0
    %v9676 = vand.u32 %v146, 4294901760
    %9677 = vmatpush1.msra.mxu0 %v9676
    %9678 = vmatprep.subr.mxu0 0.0
    %9679 = vmatpush1.msra.mxu0 0.0
    %9680 = vmatprep.subr.mxu0 0.0
    %9681 = vmatpush1.msra.mxu0 0.0
    %9682 = vmatprep.subr.mxu0 0.0
    %9683 = vmatpush1.msra.mxu0 0.0
    %9684 = vmatprep.subr.mxu0 0.0
    %9685 = vmatpush1.msra.mxu0 0.0
    %9686 = vmatprep.subr.mxu0 0.0
    %9687 = vmatpush1.msra.mxu0 0.0
    %9688 = vmatprep.subr.mxu0 0.0
    %9689 = vmatpush1.msra.mxu0 0.0
    %9690 = vmatprep.subr.mxu0 0.0
    %9691 = vmatpush1.msra.mxu0 0.0
    %9692 = vmatprep.subr.mxu0 0.0
    %9693 = vmatpush1.msra.mxu0 0.0
    %9694 = vmatprep.subr.mxu0 0.0
    %9695 = vmatpush1.msra.mxu0 0.0
    %9696 = vmatprep.subr.mxu0 0.0
    %9697 = vmatpush1.msra.mxu0 0.0
    %9698 = vmatprep.subr.mxu0 0.0
    %9699 = vmatpush1.msra.mxu0 0.0
    %9700 = vmatprep.subr.mxu0 0.0
    %9701 = vmatpush1.msra.mxu0 0.0
    %9702 = vmatprep.subr.mxu0 0.0
    %9703 = vmatpush1.msra.mxu0 0.0
    %9704 = vmatprep.subr.mxu0 0.0
    %9705 = vmatpush1.msra.mxu0 0.0
    %9706 = vmatprep.subr.mxu0 0.0
    %9707 = vmatpush1.msra.mxu0 0.0
    %9708 = vmatprep.subr.mxu0 0.0
    %9709 = vmatpush1.msra.mxu0 0.0
    %9710 = vmatprep.mubr.f32.mxu0 0.0
    %v9711 = vand.u32 %v8961, 4294901760
    %9712 = vmatmul.mubr.f32.gmra.mrb[0].mxu0 %v9711
    %v9713 = vpop.f32.mrb[0].mxu0
    %v9714 = vadd.f32 %v9609, %v9713
    %v9715 = vpop.f32.mrb[0].mxu0
    %9716 = vmatprep.mubr.f32.mxu0 0.0
    %v9717 = vand.u32 %v8962, 4294901760
    %9718 = vmatmul.mubr.f32.gmra.mrb[0].mxu0 %v9717
    %v9719 = vpop.f32.mrb[0].mxu0
    %v9720 = vadd.f32 %v9615, %v9719
    %v9721 = vpop.f32.mrb[0].mxu0
    %9722 = vmatprep.mubr.f32.mxu0 0.0
    %v9723 = vand.u32 %v8963, 4294901760
    %9724 = vmatmul.mubr.f32.gmra.mrb[0].mxu0 %v9723
    %v9725 = vpop.f32.mrb[0].mxu0
    %v9726 = vadd.f32 %v9621, %v9725
    %v9727 = vpop.f32.mrb[0].mxu0
    %9728 = vmatprep.mubr.f32.mxu0 0.0
    %v9729 = vand.u32 %v8964, 4294901760
    %9730 = vmatmul.mubr.f32.gmra.mrb[0].mxu0 %v9729
    %v9731 = vpop.f32.mrb[0].mxu0
    %v9732 = vadd.f32 %v9627, %v9731
    %v9733 = vpop.f32.mrb[0].mxu0
    %9734 = vdwg.mxu0
    %v9735 = vadd.f32 %v9714, %v9720
    %v9736 = vadd.f32 %v9735, %v9726
    %v9737 = vadd.f32 %v9736, %v9732
    %v9738 = vrot.slane %v9737, 4
    %v9739 = vadd.f32 %v9737, %v9738
    %v9740 = vrot.slane %v9739, 2
    %v9741 = vadd.f32 %v9739, %v9740
    %v9742 = vrot.slane %v9741, 1
    %v9743 = vadd.f32 %v9741, %v9742
    %v9744 = vmul.f32 %v9743, %v4551
    %v9745 = vsub.f32 %v8961, %v9744
    %v9746 = vsub.f32 %v8962, %v9744
    %v9747 = vsub.f32 %v8963, %v9744
    %v9748 = vsub.f32 %v8964, %v9744
    %v9749 = vmul.f32 %v9745, %v9745
    %v9750 = vmul.f32 %v9746, %v9746
    %v9751 = vmul.f32 %v9747, %v9747
    %v9752 = vmul.f32 %v9748, %v9748
    %9753 = vmatprep.subr.mxu0 0.0
    %v9754 = vand.u32 %v131, 4294901760
    %9755 = vmatpush1.msra.mxu0 %v9754
    %9756 = vmatprep.subr.mxu0 0.0
    %v9757 = vand.u32 %v132, 4294901760
    %9758 = vmatpush1.msra.mxu0 %v9757
    %9759 = vmatprep.subr.mxu0 0.0
    %v9760 = vand.u32 %v133, 4294901760
    %9761 = vmatpush1.msra.mxu0 %v9760
    %9762 = vmatprep.subr.mxu0 0.0
    %v9763 = vand.u32 %v134, 4294901760
    %9764 = vmatpush1.msra.mxu0 %v9763
    %9765 = vmatprep.subr.mxu0 0.0
    %v9766 = vand.u32 %v135, 4294901760
    %9767 = vmatpush1.msra.mxu0 %v9766
    %9768 = vmatprep.subr.mxu0 0.0
    %v9769 = vand.u32 %v136, 4294901760
    %9770 = vmatpush1.msra.mxu0 %v9769
    %9771 = vmatprep.subr.mxu0 0.0
    %v9772 = vand.u32 %v137, 4294901760
    %9773 = vmatpush1.msra.mxu0 %v9772
    %9774 = vmatprep.subr.mxu0 0.0
    %v9775 = vand.u32 %v138, 4294901760
    %9776 = vmatpush1.msra.mxu0 %v9775
    %9777 = vmatprep.subr.mxu0 0.0
    %v9778 = vand.u32 %v139, 4294901760
    %9779 = vmatpush1.msra.mxu0 %v9778
    %9780 = vmatprep.subr.mxu0 0.0
    %v9781 = vand.u32 %v140, 4294901760
    %9782 = vmatpush1.msra.mxu0 %v9781
    %9783 = vmatprep.subr.mxu0 0.0
    %v9784 = vand.u32 %v141, 4294901760
    %9785 = vmatpush1.msra.mxu0 %v9784
    %9786 = vmatprep.subr.mxu0 0.0
    %v9787 = vand.u32 %v142, 4294901760
    %9788 = vmatpush1.msra.mxu0 %v9787
    %9789 = vmatprep.subr.mxu0 0.0
    %v9790 = vand.u32 %v143, 4294901760
    %9791 = vmatpush1.msra.mxu0 %v9790
    %9792 = vmatprep.subr.mxu0 0.0
    %v9793 = vand.u32 %v144, 4294901760
    %9794 = vmatpush1.msra.mxu0 %v9793
    %9795 = vmatprep.subr.mxu0 0.0
    %v9796 = vand.u32 %v145, 4294901760
    %9797 = vmatpush1.msra.mxu0 %v9796
    %9798 = vmatprep.subr.mxu0 0.0
    %v9799 = vand.u32 %v146, 4294901760
    %9800 = vmatpush1.msra.mxu0 %v9799
    %9801 = vmatprep.subr.mxu0 0.0
    %9802 = vmatpush1.msra.mxu0 0.0
    %9803 = vmatprep.subr.mxu0 0.0
    %9804 = vmatpush1.msra.mxu0 0.0
    %9805 = vmatprep.subr.mxu0 0.0
    %9806 = vmatpush1.msra.mxu0 0.0
    %9807 = vmatprep.subr.mxu0 0.0
    %9808 = vmatpush1.msra.mxu0 0.0
    %9809 = vmatprep.subr.mxu0 0.0
    %9810 = vmatpush1.msra.mxu0 0.0
    %9811 = vmatprep.subr.mxu0 0.0
    %9812 = vmatpush1.msra.mxu0 0.0
    %9813 = vmatprep.subr.mxu0 0.0
    %9814 = vmatpush1.msra.mxu0 0.0
    %9815 = vmatprep.subr.mxu0 0.0
    %9816 = vmatpush1.msra.mxu0 0.0
    %9817 = vmatprep.subr.mxu0 0.0
    %9818 = vmatpush1.msra.mxu0 0.0
    %9819 = vmatprep.subr.mxu0 0.0
    %9820 = vmatpush1.msra.mxu0 0.0
    %9821 = vmatprep.subr.mxu0 0.0
    %9822 = vmatpush1.msra.mxu0 0.0
    %9823 = vmatprep.subr.mxu0 0.0
    %9824 = vmatpush1.msra.mxu0 0.0
    %9825 = vmatprep.subr.mxu0 0.0
    %9826 = vmatpush1.msra.mxu0 0.0
    %9827 = vmatprep.subr.mxu0 0.0
    %9828 = vmatpush1.msra.mxu0 0.0
    %9829 = vmatprep.subr.mxu0 0.0
    %9830 = vmatpush1.msra.mxu0 0.0
    %9831 = vmatprep.subr.mxu0 0.0
    %9832 = vmatpush1.msra.mxu0 0.0
    %9833 = vmatprep.mubr.f32.mxu0 0.0
    %v9834 = vand.u32 %v9749, 4294901760
    %v9835 = vsub.f32 %v9749, %v9834
    %v9836 = vand.u32 %v9835, 4294901760
    %v9837 = vsub.f32 %v9835, %v9836
    %v9838 = vand.u32 %v9837, 4294901760
    %9839 = vmatmul.mubr.f32.gmra.mrb[0].mxu0 %v9838
    %v9840 = vpop.f32.mrb[0].mxu0
    %v9841 = vadd.f32 0.0, %v9840
    %v9842 = vpop.f32.mrb[0].mxu0
    %9843 = vmatprep.mubr.f32.mxu0 0.0
    %v9844 = vand.u32 %v9750, 4294901760
    %v9845 = vsub.f32 %v9750, %v9844
    %v9846 = vand.u32 %v9845, 4294901760
    %v9847 = vsub.f32 %v9845, %v9846
    %v9848 = vand.u32 %v9847, 4294901760
    %9849 = vmatmul.mubr.f32.gmra.mrb[0].mxu0 %v9848
    %v9850 = vpop.f32.mrb[0].mxu0
    %v9851 = vadd.f32 0.0, %v9850
    %v9852 = vpop.f32.mrb[0].mxu0
    %9853 = vmatprep.mubr.f32.mxu0 0.0
    %v9854 = vand.u32 %v9751, 4294901760
    %v9855 = vsub.f32 %v9751, %v9854
    %v9856 = vand.u32 %v9855, 4294901760
    %v9857 = vsub.f32 %v9855, %v9856
    %v9858 = vand.u32 %v9857, 4294901760
    %9859 = vmatmul.mubr.f32.gmra.mrb[0].mxu0 %v9858
    %v9860 = vpop.f32.mrb[0].mxu0
    %v9861 = vadd.f32 0.0, %v9860
    %v9862 = vpop.f32.mrb[0].mxu0
    %9863 = vmatprep.mubr.f32.mxu0 0.0
    %v9864 = vand.u32 %v9752, 4294901760
    %v9865 = vsub.f32 %v9752, %v9864
    %v9866 = vand.u32 %v9865, 4294901760
    %v9867 = vsub.f32 %v9865, %v9866
    %v9868 = vand.u32 %v9867, 4294901760
    %9869 = vmatmul.mubr.f32.gmra.mrb[0].mxu0 %v9868
    %v9870 = vpop.f32.mrb[0].mxu0
    %v9871 = vadd.f32 0.0, %v9870
    %v9872 = vpop.f32.mrb[0].mxu0
    %9873 = vdwg.mxu0
    %9874 = vmatprep.subr.mxu0 0.0
    %v9875 = vand.u32 %v131, 4294901760
    %v9876 = vsub.f32 %v131, %v9875
    %v9877 = vand.u32 %v9876, 4294901760
    %v9878 = vsub.f32 %v9876, %v9877
    %v9879 = vand.u32 %v9878, 4294901760
    %9880 = vmatpush1.msra.mxu0 %v9879
    %9881 = vmatprep.subr.mxu0 0.0
    %v9882 = vand.u32 %v132, 4294901760
    %v9883 = vsub.f32 %v132, %v9882
    %v9884 = vand.u32 %v9883, 4294901760
    %v9885 = vsub.f32 %v9883, %v9884
    %v9886 = vand.u32 %v9885, 4294901760
    %9887 = vmatpush1.msra.mxu0 %v9886
    %9888 = vmatprep.subr.mxu0 0.0
    %v9889 = vand.u32 %v133, 4294901760
    %v9890 = vsub.f32 %v133, %v9889
    %v9891 = vand.u32 %v9890, 4294901760
    %v9892 = vsub.f32 %v9890, %v9891
    %v9893 = vand.u32 %v9892, 4294901760
    %9894 = vmatpush1.msra.mxu0 %v9893
    %9895 = vmatprep.subr.mxu0 0.0
    %v9896 = vand.u32 %v134, 4294901760
    %v9897 = vsub.f32 %v134, %v9896
    %v9898 = vand.u32 %v9897, 4294901760
    %v9899 = vsub.f32 %v9897, %v9898
    %v9900 = vand.u32 %v9899, 4294901760
    %9901 = vmatpush1.msra.mxu0 %v9900
    %9902 = vmatprep.subr.mxu0 0.0
    %v9903 = vand.u32 %v135, 4294901760
    %v9904 = vsub.f32 %v135, %v9903
    %v9905 = vand.u32 %v9904, 4294901760
    %v9906 = vsub.f32 %v9904, %v9905
    %v9907 = vand.u32 %v9906, 4294901760
    %9908 = vmatpush1.msra.mxu0 %v9907
    %9909 = vmatprep.subr.mxu0 0.0
    %v9910 = vand.u32 %v136, 4294901760
    %v9911 = vsub.f32 %v136, %v9910
    %v9912 = vand.u32 %v9911, 4294901760
    %v9913 = vsub.f32 %v9911, %v9912
    %v9914 = vand.u32 %v9913, 4294901760
    %9915 = vmatpush1.msra.mxu0 %v9914
    %9916 = vmatprep.subr.mxu0 0.0
    %v9917 = vand.u32 %v137, 4294901760
    %v9918 = vsub.f32 %v137, %v9917
    %v9919 = vand.u32 %v9918, 4294901760
    %v9920 = vsub.f32 %v9918, %v9919
    %v9921 = vand.u32 %v9920, 4294901760
    %9922 = vmatpush1.msra.mxu0 %v9921
    %9923 = vmatprep.subr.mxu0 0.0
    %v9924 = vand.u32 %v138, 4294901760
    %v9925 = vsub.f32 %v138, %v9924
    %v9926 = vand.u32 %v9925, 4294901760
    %v9927 = vsub.f32 %v9925, %v9926
    %v9928 = vand.u32 %v9927, 4294901760
    %9929 = vmatpush1.msra.mxu0 %v9928
    %9930 = vmatprep.subr.mxu0 0.0
    %v9931 = vand.u32 %v139, 4294901760
    %v9932 = vsub.f32 %v139, %v9931
    %v9933 = vand.u32 %v9932, 4294901760
    %v9934 = vsub.f32 %v9932, %v9933
    %v9935 = vand.u32 %v9934, 4294901760
    %9936 = vmatpush1.msra.mxu0 %v9935
    %9937 = vmatprep.subr.mxu0 0.0
    %v9938 = vand.u32 %v140, 4294901760
    %v9939 = vsub.f32 %v140, %v9938
    %v9940 = vand.u32 %v9939, 4294901760
    %v9941 = vsub.f32 %v9939, %v9940
    %v9942 = vand.u32 %v9941, 4294901760
    %9943 = vmatpush1.msra.mxu0 %v9942
    %9944 = vmatprep.subr.mxu0 0.0
    %v9945 = vand.u32 %v141, 4294901760
    %v9946 = vsub.f32 %v141, %v9945
    %v9947 = vand.u32 %v9946, 4294901760
    %v9948 = vsub.f32 %v9946, %v9947
    %v9949 = vand.u32 %v9948, 4294901760
    %9950 = vmatpush1.msra.mxu0 %v9949
    %9951 = vmatprep.subr.mxu0 0.0
    %v9952 = vand.u32 %v142, 4294901760
    %v9953 = vsub.f32 %v142, %v9952
    %v9954 = vand.u32 %v9953, 4294901760
    %v9955 = vsub.f32 %v9953, %v9954
    %v9956 = vand.u32 %v9955, 4294901760
    %9957 = vmatpush1.msra.mxu0 %v9956
    %9958 = vmatprep.subr.mxu0 0.0
    %v9959 = vand.u32 %v143, 4294901760
    %v9960 = vsub.f32 %v143, %v9959
    %v9961 = vand.u32 %v9960, 4294901760
    %v9962 = vsub.f32 %v9960, %v9961
    %v9963 = vand.u32 %v9962, 4294901760
    %9964 = vmatpush1.msra.mxu0 %v9963
    %9965 = vmatprep.subr.mxu0 0.0
    %v9966 = vand.u32 %v144, 4294901760
    %v9967 = vsub.f32 %v144, %v9966
    %v9968 = vand.u32 %v9967, 4294901760
    %v9969 = vsub.f32 %v9967, %v9968
    %v9970 = vand.u32 %v9969, 4294901760
    %9971 = vmatpush1.msra.mxu0 %v9970
    %9972 = vmatprep.subr.mxu0 0.0
    %v9973 = vand.u32 %v145, 4294901760
    %v9974 = vsub.f32 %v145, %v9973
    %v9975 = vand.u32 %v9974, 4294901760
    %v9976 = vsub.f32 %v9974, %v9975
    %v9977 = vand.u32 %v9976, 4294901760
    %9978 = vmatpush1.msra.mxu0 %v9977
    %9979 = vmatprep.subr.mxu0 0.0
    %v9980 = vand.u32 %v146, 4294901760
    %v9981 = vsub.f32 %v146, %v9980
    %v9982 = vand.u32 %v9981, 4294901760
    %v9983 = vsub.f32 %v9981, %v9982
    %v9984 = vand.u32 %v9983, 4294901760
    %9985 = vmatpush1.msra.mxu0 %v9984
    %9986 = vmatprep.subr.mxu0 0.0
    %9987 = vmatpush1.msra.mxu0 0.0
    %9988 = vmatprep.subr.mxu0 0.0
    %9989 = vmatpush1.msra.mxu0 0.0
    %9990 = vmatprep.subr.mxu0 0.0
    %9991 = vmatpush1.msra.mxu0 0.0
    %9992 = vmatprep.subr.mxu0 0.0
    %9993 = vmatpush1.msra.mxu0 0.0
    %9994 = vmatprep.subr.mxu0 0.0
    %9995 = vmatpush1.msra.mxu0 0.0
    %9996 = vmatprep.subr.mxu0 0.0
    %9997 = vmatpush1.msra.mxu0 0.0
    %9998 = vmatprep.subr.mxu0 0.0
    %9999 = vmatpush1.msra.mxu0 0.0
    %10000 = vmatprep.subr.mxu0 0.0
    %10001 = vmatpush1.msra.mxu0 0.0
    %10002 = vmatprep.subr.mxu0 0.0
    %10003 = vmatpush1.msra.mxu0 0.0
    %10004 = vmatprep.subr.mxu0 0.0
    %10005 = vmatpush1.msra.mxu0 0.0
    %10006 = vmatprep.subr.mxu0 0.0
    %10007 = vmatpush1.msra.mxu0 0.0
    %10008 = vmatprep.subr.mxu0 0.0
    %10009 = vmatpush1.msra.mxu0 0.0
    %10010 = vmatprep.subr.mxu0 0.0
    %10011 = vmatpush1.msra.mxu0 0.0
    %10012 = vmatprep.subr.mxu0 0.0
    %10013 = vmatpush1.msra.mxu0 0.0
    %10014 = vmatprep.subr.mxu0 0.0
    %10015 = vmatpush1.msra.mxu0 0.0
    %10016 = vmatprep.subr.mxu0 0.0
    %10017 = vmatpush1.msra.mxu0 0.0
    %10018 = vmatprep.mubr.f32.mxu0 0.0
    %v10019 = vand.u32 %v9749, 4294901760
    %10020 = vmatmul.mubr.f32.gmra.mrb[0].mxu0 %v10019
    %v10021 = vpop.f32.mrb[0].mxu0
    %v10022 = vadd.f32 %v9841, %v10021
    %v10023 = vpop.f32.mrb[0].mxu0
    %10024 = vmatprep.mubr.f32.mxu0 0.0
    %v10025 = vand.u32 %v9750, 4294901760
    %10026 = vmatmul.mubr.f32.gmra.mrb[0].mxu0 %v10025
    %v10027 = vpop.f32.mrb[0].mxu0
    %v10028 = vadd.f32 %v9851, %v10027
    %v10029 = vpop.f32.mrb[0].mxu0
    %10030 = vmatprep.mubr.f32.mxu0 0.0
    %v10031 = vand.u32 %v9751, 4294901760
    %10032 = vmatmul.mubr.f32.gmra.mrb[0].mxu0 %v10031
    %v10033 = vpop.f32.mrb[0].mxu0
    %v10034 = vadd.f32 %v9861, %v10033
    %v10035 = vpop.f32.mrb[0].mxu0
    %10036 = vmatprep.mubr.f32.mxu0 0.0
    %v10037 = vand.u32 %v9752, 4294901760
    %10038 = vmatmul.mubr.f32.gmra.mrb[0].mxu0 %v10037
    %v10039 = vpop.f32.mrb[0].mxu0
    %v10040 = vadd.f32 %v9871, %v10039
    %v10041 = vpop.f32.mrb[0].mxu0
    %10042 = vdwg.mxu0
    %10043 = vmatprep.subr.mxu0 0.0
    %v10044 = vand.u32 %v131, 4294901760
    %v10045 = vsub.f32 %v131, %v10044
    %10046 = vmatpush1.msra.mxu0 %v10045
    %10047 = vmatprep.subr.mxu0 0.0
    %v10048 = vand.u32 %v132, 4294901760
    %v10049 = vsub.f32 %v132, %v10048
    %10050 = vmatpush1.msra.mxu0 %v10049
    %10051 = vmatprep.subr.mxu0 0.0
    %v10052 = vand.u32 %v133, 4294901760
    %v10053 = vsub.f32 %v133, %v10052
    %10054 = vmatpush1.msra.mxu0 %v10053
    %10055 = vmatprep.subr.mxu0 0.0
    %v10056 = vand.u32 %v134, 4294901760
    %v10057 = vsub.f32 %v134, %v10056
    %10058 = vmatpush1.msra.mxu0 %v10057
    %10059 = vmatprep.subr.mxu0 0.0
    %v10060 = vand.u32 %v135, 4294901760
    %v10061 = vsub.f32 %v135, %v10060
    %10062 = vmatpush1.msra.mxu0 %v10061
    %10063 = vmatprep.subr.mxu0 0.0
    %v10064 = vand.u32 %v136, 4294901760
    %v10065 = vsub.f32 %v136, %v10064
    %10066 = vmatpush1.msra.mxu0 %v10065
    %10067 = vmatprep.subr.mxu0 0.0
    %v10068 = vand.u32 %v137, 4294901760
    %v10069 = vsub.f32 %v137, %v10068
    %10070 = vmatpush1.msra.mxu0 %v10069
    %10071 = vmatprep.subr.mxu0 0.0
    %v10072 = vand.u32 %v138, 4294901760
    %v10073 = vsub.f32 %v138, %v10072
    %10074 = vmatpush1.msra.mxu0 %v10073
    %10075 = vmatprep.subr.mxu0 0.0
    %v10076 = vand.u32 %v139, 4294901760
    %v10077 = vsub.f32 %v139, %v10076
    %10078 = vmatpush1.msra.mxu0 %v10077
    %10079 = vmatprep.subr.mxu0 0.0
    %v10080 = vand.u32 %v140, 4294901760
    %v10081 = vsub.f32 %v140, %v10080
    %10082 = vmatpush1.msra.mxu0 %v10081
    %10083 = vmatprep.subr.mxu0 0.0
    %v10084 = vand.u32 %v141, 4294901760
    %v10085 = vsub.f32 %v141, %v10084
    %10086 = vmatpush1.msra.mxu0 %v10085
    %10087 = vmatprep.subr.mxu0 0.0
    %v10088 = vand.u32 %v142, 4294901760
    %v10089 = vsub.f32 %v142, %v10088
    %10090 = vmatpush1.msra.mxu0 %v10089
    %10091 = vmatprep.subr.mxu0 0.0
    %v10092 = vand.u32 %v143, 4294901760
    %v10093 = vsub.f32 %v143, %v10092
    %10094 = vmatpush1.msra.mxu0 %v10093
    %10095 = vmatprep.subr.mxu0 0.0
    %v10096 = vand.u32 %v144, 4294901760
    %v10097 = vsub.f32 %v144, %v10096
    %10098 = vmatpush1.msra.mxu0 %v10097
    %10099 = vmatprep.subr.mxu0 0.0
    %v10100 = vand.u32 %v145, 4294901760
    %v10101 = vsub.f32 %v145, %v10100
    %10102 = vmatpush1.msra.mxu0 %v10101
    %10103 = vmatprep.subr.mxu0 0.0
    %v10104 = vand.u32 %v146, 4294901760
    %v10105 = vsub.f32 %v146, %v10104
    %10106 = vmatpush1.msra.mxu0 %v10105
    %10107 = vmatprep.subr.mxu0 0.0
    %10108 = vmatpush1.msra.mxu0 0.0
    %10109 = vmatprep.subr.mxu0 0.0
    %10110 = vmatpush1.msra.mxu0 0.0
    %10111 = vmatprep.subr.mxu0 0.0
    %10112 = vmatpush1.msra.mxu0 0.0
    %10113 = vmatprep.subr.mxu0 0.0
    %10114 = vmatpush1.msra.mxu0 0.0
    %10115 = vmatprep.subr.mxu0 0.0
    %10116 = vmatpush1.msra.mxu0 0.0
    %10117 = vmatprep.subr.mxu0 0.0
    %10118 = vmatpush1.msra.mxu0 0.0
    %10119 = vmatprep.subr.mxu0 0.0
    %10120 = vmatpush1.msra.mxu0 0.0
    %10121 = vmatprep.subr.mxu0 0.0
    %10122 = vmatpush1.msra.mxu0 0.0
    %10123 = vmatprep.subr.mxu0 0.0
    %10124 = vmatpush1.msra.mxu0 0.0
    %10125 = vmatprep.subr.mxu0 0.0
    %10126 = vmatpush1.msra.mxu0 0.0
    %10127 = vmatprep.subr.mxu0 0.0
    %10128 = vmatpush1.msra.mxu0 0.0
    %10129 = vmatprep.subr.mxu0 0.0
    %10130 = vmatpush1.msra.mxu0 0.0
    %10131 = vmatprep.subr.mxu0 0.0
    %10132 = vmatpush1.msra.mxu0 0.0
    %10133 = vmatprep.subr.mxu0 0.0
    %10134 = vmatpush1.msra.mxu0 0.0
    %10135 = vmatprep.subr.mxu0 0.0
    %10136 = vmatpush1.msra.mxu0 0.0
    %10137 = vmatprep.subr.mxu0 0.0
    %10138 = vmatpush1.msra.mxu0 0.0
    %10139 = vmatprep.mubr.f32.mxu0 0.0
    %v10140 = vand.u32 %v9749, 4294901760
    %v10141 = vsub.f32 %v9749, %v10140
    %10142 = vmatmul.mubr.f32.gmra.mrb[0].mxu0 %v10141
    %v10143 = vpop.f32.mrb[0].mxu0
    %v10144 = vadd.f32 %v10022, %v10143
    %v10145 = vpop.f32.mrb[0].mxu0
    %10146 = vmatprep.mubr.f32.mxu0 0.0
    %v10147 = vand.u32 %v9750, 4294901760
    %v10148 = vsub.f32 %v9750, %v10147
    %10149 = vmatmul.mubr.f32.gmra.mrb[0].mxu0 %v10148
    %v10150 = vpop.f32.mrb[0].mxu0
    %v10151 = vadd.f32 %v10028, %v10150
    %v10152 = vpop.f32.mrb[0].mxu0
    %10153 = vmatprep.mubr.f32.mxu0 0.0
    %v10154 = vand.u32 %v9751, 4294901760
    %v10155 = vsub.f32 %v9751, %v10154
    %10156 = vmatmul.mubr.f32.gmra.mrb[0].mxu0 %v10155
    %v10157 = vpop.f32.mrb[0].mxu0
    %v10158 = vadd.f32 %v10034, %v10157
    %v10159 = vpop.f32.mrb[0].mxu0
    %10160 = vmatprep.mubr.f32.mxu0 0.0
    %v10161 = vand.u32 %v9752, 4294901760
    %v10162 = vsub.f32 %v9752, %v10161
    %10163 = vmatmul.mubr.f32.gmra.mrb[0].mxu0 %v10162
    %v10164 = vpop.f32.mrb[0].mxu0
    %v10165 = vadd.f32 %v10040, %v10164
    %v10166 = vpop.f32.mrb[0].mxu0
    %10167 = vdwg.mxu0
    %10168 = vmatprep.subr.mxu0 0.0
    %v10169 = vand.u32 %v131, 4294901760
    %10170 = vmatpush1.msra.mxu0 %v10169
    %10171 = vmatprep.subr.mxu0 0.0
    %v10172 = vand.u32 %v132, 4294901760
    %10173 = vmatpush1.msra.mxu0 %v10172
    %10174 = vmatprep.subr.mxu0 0.0
    %v10175 = vand.u32 %v133, 4294901760
    %10176 = vmatpush1.msra.mxu0 %v10175
    %10177 = vmatprep.subr.mxu0 0.0
    %v10178 = vand.u32 %v134, 4294901760
    %10179 = vmatpush1.msra.mxu0 %v10178
    %10180 = vmatprep.subr.mxu0 0.0
    %v10181 = vand.u32 %v135, 4294901760
    %10182 = vmatpush1.msra.mxu0 %v10181
    %10183 = vmatprep.subr.mxu0 0.0
    %v10184 = vand.u32 %v136, 4294901760
    %10185 = vmatpush1.msra.mxu0 %v10184
    %10186 = vmatprep.subr.mxu0 0.0
    %v10187 = vand.u32 %v137, 4294901760
    %10188 = vmatpush1.msra.mxu0 %v10187
    %10189 = vmatprep.subr.mxu0 0.0
    %v10190 = vand.u32 %v138, 4294901760
    %10191 = vmatpush1.msra.mxu0 %v10190
    %10192 = vmatprep.subr.mxu0 0.0
    %v10193 = vand.u32 %v139, 4294901760
    %10194 = vmatpush1.msra.mxu0 %v10193
    %10195 = vmatprep.subr.mxu0 0.0
    %v10196 = vand.u32 %v140, 4294901760
    %10197 = vmatpush1.msra.mxu0 %v10196
    %10198 = vmatprep.subr.mxu0 0.0
    %v10199 = vand.u32 %v141, 4294901760
    %10200 = vmatpush1.msra.mxu0 %v10199
    %10201 = vmatprep.subr.mxu0 0.0
    %v10202 = vand.u32 %v142, 4294901760
    %10203 = vmatpush1.msra.mxu0 %v10202
    %10204 = vmatprep.subr.mxu0 0.0
    %v10205 = vand.u32 %v143, 4294901760
    %10206 = vmatpush1.msra.mxu0 %v10205
    %10207 = vmatprep.subr.mxu0 0.0
    %v10208 = vand.u32 %v144, 4294901760
    %10209 = vmatpush1.msra.mxu0 %v10208
    %10210 = vmatprep.subr.mxu0 0.0
    %v10211 = vand.u32 %v145, 4294901760
    %10212 = vmatpush1.msra.mxu0 %v10211
    %10213 = vmatprep.subr.mxu0 0.0
    %v10214 = vand.u32 %v146, 4294901760
    %10215 = vmatpush1.msra.mxu0 %v10214
    %10216 = vmatprep.subr.mxu0 0.0
    %10217 = vmatpush1.msra.mxu0 0.0
    %10218 = vmatprep.subr.mxu0 0.0
    %10219 = vmatpush1.msra.mxu0 0.0
    %10220 = vmatprep.subr.mxu0 0.0
    %10221 = vmatpush1.msra.mxu0 0.0
    %10222 = vmatprep.subr.mxu0 0.0
    %10223 = vmatpush1.msra.mxu0 0.0
    %10224 = vmatprep.subr.mxu0 0.0
    %10225 = vmatpush1.msra.mxu0 0.0
    %10226 = vmatprep.subr.mxu0 0.0
    %10227 = vmatpush1.msra.mxu0 0.0
    %10228 = vmatprep.subr.mxu0 0.0
    %10229 = vmatpush1.msra.mxu0 0.0
    %10230 = vmatprep.subr.mxu0 0.0
    %10231 = vmatpush1.msra.mxu0 0.0
    %10232 = vmatprep.subr.mxu0 0.0
    %10233 = vmatpush1.msra.mxu0 0.0
    %10234 = vmatprep.subr.mxu0 0.0
    %10235 = vmatpush1.msra.mxu0 0.0
    %10236 = vmatprep.subr.mxu0 0.0
    %10237 = vmatpush1.msra.mxu0 0.0
    %10238 = vmatprep.subr.mxu0 0.0
    %10239 = vmatpush1.msra.mxu0 0.0
    %10240 = vmatprep.subr.mxu0 0.0
    %10241 = vmatpush1.msra.mxu0 0.0
    %10242 = vmatprep.subr.mxu0 0.0
    %10243 = vmatpush1.msra.mxu0 0.0
    %10244 = vmatprep.subr.mxu0 0.0
    %10245 = vmatpush1.msra.mxu0 0.0
    %10246 = vmatprep.subr.mxu0 0.0
    %10247 = vmatpush1.msra.mxu0 0.0
    %10248 = vmatprep.mubr.f32.mxu0 0.0
    %v10249 = vand.u32 %v9749, 4294901760
    %v10250 = vsub.f32 %v9749, %v10249
    %v10251 = vand.u32 %v10250, 4294901760
    %10252 = vmatmul.mubr.f32.gmra.mrb[0].mxu0 %v10251
    %v10253 = vpop.f32.mrb[0].mxu0
    %v10254 = vadd.f32 %v10144, %v10253
    %v10255 = vpop.f32.mrb[0].mxu0
    %10256 = vmatprep.mubr.f32.mxu0 0.0
    %v10257 = vand.u32 %v9750, 4294901760
    %v10258 = vsub.f32 %v9750, %v10257
    %v10259 = vand.u32 %v10258, 4294901760
    %10260 = vmatmul.mubr.f32.gmra.mrb[0].mxu0 %v10259
    %v10261 = vpop.f32.mrb[0].mxu0
    %v10262 = vadd.f32 %v10151, %v10261
    %v10263 = vpop.f32.mrb[0].mxu0
    %10264 = vmatprep.mubr.f32.mxu0 0.0
    %v10265 = vand.u32 %v9751, 4294901760
    %v10266 = vsub.f32 %v9751, %v10265
    %v10267 = vand.u32 %v10266, 4294901760
    %10268 = vmatmul.mubr.f32.gmra.mrb[0].mxu0 %v10267
    %v10269 = vpop.f32.mrb[0].mxu0
    %v10270 = vadd.f32 %v10158, %v10269
    %v10271 = vpop.f32.mrb[0].mxu0
    %10272 = vmatprep.mubr.f32.mxu0 0.0
    %v10273 = vand.u32 %v9752, 4294901760
    %v10274 = vsub.f32 %v9752, %v10273
    %v10275 = vand.u32 %v10274, 4294901760
    %10276 = vmatmul.mubr.f32.gmra.mrb[0].mxu0 %v10275
    %v10277 = vpop.f32.mrb[0].mxu0
    %v10278 = vadd.f32 %v10165, %v10277
    %v10279 = vpop.f32.mrb[0].mxu0
    %10280 = vdwg.mxu0
    %10281 = vmatprep.subr.mxu0 0.0
    %v10282 = vand.u32 %v131, 4294901760
    %v10283 = vsub.f32 %v131, %v10282
    %v10284 = vand.u32 %v10283, 4294901760
    %10285 = vmatpush1.msra.mxu0 %v10284
    %10286 = vmatprep.subr.mxu0 0.0
    %v10287 = vand.u32 %v132, 4294901760
    %v10288 = vsub.f32 %v132, %v10287
    %v10289 = vand.u32 %v10288, 4294901760
    %10290 = vmatpush1.msra.mxu0 %v10289
    %10291 = vmatprep.subr.mxu0 0.0
    %v10292 = vand.u32 %v133, 4294901760
    %v10293 = vsub.f32 %v133, %v10292
    %v10294 = vand.u32 %v10293, 4294901760
    %10295 = vmatpush1.msra.mxu0 %v10294
    %10296 = vmatprep.subr.mxu0 0.0
    %v10297 = vand.u32 %v134, 4294901760
    %v10298 = vsub.f32 %v134, %v10297
    %v10299 = vand.u32 %v10298, 4294901760
    %10300 = vmatpush1.msra.mxu0 %v10299
    %10301 = vmatprep.subr.mxu0 0.0
    %v10302 = vand.u32 %v135, 4294901760
    %v10303 = vsub.f32 %v135, %v10302
    %v10304 = vand.u32 %v10303, 4294901760
    %10305 = vmatpush1.msra.mxu0 %v10304
    %10306 = vmatprep.subr.mxu0 0.0
    %v10307 = vand.u32 %v136, 4294901760
    %v10308 = vsub.f32 %v136, %v10307
    %v10309 = vand.u32 %v10308, 4294901760
    %10310 = vmatpush1.msra.mxu0 %v10309
    %10311 = vmatprep.subr.mxu0 0.0
    %v10312 = vand.u32 %v137, 4294901760
    %v10313 = vsub.f32 %v137, %v10312
    %v10314 = vand.u32 %v10313, 4294901760
    %10315 = vmatpush1.msra.mxu0 %v10314
    %10316 = vmatprep.subr.mxu0 0.0
    %v10317 = vand.u32 %v138, 4294901760
    %v10318 = vsub.f32 %v138, %v10317
    %v10319 = vand.u32 %v10318, 4294901760
    %10320 = vmatpush1.msra.mxu0 %v10319
    %10321 = vmatprep.subr.mxu0 0.0
    %v10322 = vand.u32 %v139, 4294901760
    %v10323 = vsub.f32 %v139, %v10322
    %v10324 = vand.u32 %v10323, 4294901760
    %10325 = vmatpush1.msra.mxu0 %v10324
    %10326 = vmatprep.subr.mxu0 0.0
    %v10327 = vand.u32 %v140, 4294901760
    %v10328 = vsub.f32 %v140, %v10327
    %v10329 = vand.u32 %v10328, 4294901760
    %10330 = vmatpush1.msra.mxu0 %v10329
    %10331 = vmatprep.subr.mxu0 0.0
    %v10332 = vand.u32 %v141, 4294901760
    %v10333 = vsub.f32 %v141, %v10332
    %v10334 = vand.u32 %v10333, 4294901760
    %10335 = vmatpush1.msra.mxu0 %v10334
    %10336 = vmatprep.subr.mxu0 0.0
    %v10337 = vand.u32 %v142, 4294901760
    %v10338 = vsub.f32 %v142, %v10337
    %v10339 = vand.u32 %v10338, 4294901760
    %10340 = vmatpush1.msra.mxu0 %v10339
    %10341 = vmatprep.subr.mxu0 0.0
    %v10342 = vand.u32 %v143, 4294901760
    %v10343 = vsub.f32 %v143, %v10342
    %v10344 = vand.u32 %v10343, 4294901760
    %10345 = vmatpush1.msra.mxu0 %v10344
    %10346 = vmatprep.subr.mxu0 0.0
    %v10347 = vand.u32 %v144, 4294901760
    %v10348 = vsub.f32 %v144, %v10347
    %v10349 = vand.u32 %v10348, 4294901760
    %10350 = vmatpush1.msra.mxu0 %v10349
    %10351 = vmatprep.subr.mxu0 0.0
    %v10352 = vand.u32 %v145, 4294901760
    %v10353 = vsub.f32 %v145, %v10352
    %v10354 = vand.u32 %v10353, 4294901760
    %10355 = vmatpush1.msra.mxu0 %v10354
    %10356 = vmatprep.subr.mxu0 0.0
    %v10357 = vand.u32 %v146, 4294901760
    %v10358 = vsub.f32 %v146, %v10357
    %v10359 = vand.u32 %v10358, 4294901760
    %10360 = vmatpush1.msra.mxu0 %v10359
    %10361 = vmatprep.subr.mxu0 0.0
    %10362 = vmatpush1.msra.mxu0 0.0
    %10363 = vmatprep.subr.mxu0 0.0
    %10364 = vmatpush1.msra.mxu0 0.0
    %10365 = vmatprep.subr.mxu0 0.0
    %10366 = vmatpush1.msra.mxu0 0.0
    %10367 = vmatprep.subr.mxu0 0.0
    %10368 = vmatpush1.msra.mxu0 0.0
    %10369 = vmatprep.subr.mxu0 0.0
    %10370 = vmatpush1.msra.mxu0 0.0
    %10371 = vmatprep.subr.mxu0 0.0
    %10372 = vmatpush1.msra.mxu0 0.0
    %10373 = vmatprep.subr.mxu0 0.0
    %10374 = vmatpush1.msra.mxu0 0.0
    %10375 = vmatprep.subr.mxu0 0.0
    %10376 = vmatpush1.msra.mxu0 0.0
    %10377 = vmatprep.subr.mxu0 0.0
    %10378 = vmatpush1.msra.mxu0 0.0
    %10379 = vmatprep.subr.mxu0 0.0
    %10380 = vmatpush1.msra.mxu0 0.0
    %10381 = vmatprep.subr.mxu0 0.0
    %10382 = vmatpush1.msra.mxu0 0.0
    %10383 = vmatprep.subr.mxu0 0.0
    %10384 = vmatpush1.msra.mxu0 0.0
    %10385 = vmatprep.subr.mxu0 0.0
    %10386 = vmatpush1.msra.mxu0 0.0
    %10387 = vmatprep.subr.mxu0 0.0
    %10388 = vmatpush1.msra.mxu0 0.0
    %10389 = vmatprep.subr.mxu0 0.0
    %10390 = vmatpush1.msra.mxu0 0.0
    %10391 = vmatprep.subr.mxu0 0.0
    %10392 = vmatpush1.msra.mxu0 0.0
    %10393 = vmatprep.mubr.f32.mxu0 0.0
    %v10394 = vand.u32 %v9749, 4294901760
    %10395 = vmatmul.mubr.f32.gmra.mrb[0].mxu0 %v10394
    %v10396 = vpop.f32.mrb[0].mxu0
    %v10397 = vadd.f32 %v10254, %v10396
    %v10398 = vpop.f32.mrb[0].mxu0
    %10399 = vmatprep.mubr.f32.mxu0 0.0
    %v10400 = vand.u32 %v9750, 4294901760
    %10401 = vmatmul.mubr.f32.gmra.mrb[0].mxu0 %v10400
    %v10402 = vpop.f32.mrb[0].mxu0
    %v10403 = vadd.f32 %v10262, %v10402
    %v10404 = vpop.f32.mrb[0].mxu0
    %10405 = vmatprep.mubr.f32.mxu0 0.0
    %v10406 = vand.u32 %v9751, 4294901760
    %10407 = vmatmul.mubr.f32.gmra.mrb[0].mxu0 %v10406
    %v10408 = vpop.f32.mrb[0].mxu0
    %v10409 = vadd.f32 %v10270, %v10408
    %v10410 = vpop.f32.mrb[0].mxu0
    %10411 = vmatprep.mubr.f32.mxu0 0.0
    %v10412 = vand.u32 %v9752, 4294901760
    %10413 = vmatmul.mubr.f32.gmra.mrb[0].mxu0 %v10412
    %v10414 = vpop.f32.mrb[0].mxu0
    %v10415 = vadd.f32 %v10278, %v10414
    %v10416 = vpop.f32.mrb[0].mxu0
    %10417 = vdwg.mxu0
    %10418 = vmatprep.subr.mxu0 0.0
    %v10419 = vand.u32 %v131, 4294901760
    %10420 = vmatpush1.msra.mxu0 %v10419
    %10421 = vmatprep.subr.mxu0 0.0
    %v10422 = vand.u32 %v132, 4294901760
    %10423 = vmatpush1.msra.mxu0 %v10422
    %10424 = vmatprep.subr.mxu0 0.0
    %v10425 = vand.u32 %v133, 4294901760
    %10426 = vmatpush1.msra.mxu0 %v10425
    %10427 = vmatprep.subr.mxu0 0.0
    %v10428 = vand.u32 %v134, 4294901760
    %10429 = vmatpush1.msra.mxu0 %v10428
    %10430 = vmatprep.subr.mxu0 0.0
    %v10431 = vand.u32 %v135, 4294901760
    %10432 = vmatpush1.msra.mxu0 %v10431
    %10433 = vmatprep.subr.mxu0 0.0
    %v10434 = vand.u32 %v136, 4294901760
    %10435 = vmatpush1.msra.mxu0 %v10434
    %10436 = vmatprep.subr.mxu0 0.0
    %v10437 = vand.u32 %v137, 4294901760
    %10438 = vmatpush1.msra.mxu0 %v10437
    %10439 = vmatprep.subr.mxu0 0.0
    %v10440 = vand.u32 %v138, 4294901760
    %10441 = vmatpush1.msra.mxu0 %v10440
    %10442 = vmatprep.subr.mxu0 0.0
    %v10443 = vand.u32 %v139, 4294901760
    %10444 = vmatpush1.msra.mxu0 %v10443
    %10445 = vmatprep.subr.mxu0 0.0
    %v10446 = vand.u32 %v140, 4294901760
    %10447 = vmatpush1.msra.mxu0 %v10446
    %10448 = vmatprep.subr.mxu0 0.0
    %v10449 = vand.u32 %v141, 4294901760
    %10450 = vmatpush1.msra.mxu0 %v10449
    %10451 = vmatprep.subr.mxu0 0.0
    %v10452 = vand.u32 %v142, 4294901760
    %10453 = vmatpush1.msra.mxu0 %v10452
    %10454 = vmatprep.subr.mxu0 0.0
    %v10455 = vand.u32 %v143, 4294901760
    %10456 = vmatpush1.msra.mxu0 %v10455
    %10457 = vmatprep.subr.mxu0 0.0
    %v10458 = vand.u32 %v144, 4294901760
    %10459 = vmatpush1.msra.mxu0 %v10458
    %10460 = vmatprep.subr.mxu0 0.0
    %v10461 = vand.u32 %v145, 4294901760
    %10462 = vmatpush1.msra.mxu0 %v10461
    %10463 = vmatprep.subr.mxu0 0.0
    %v10464 = vand.u32 %v146, 4294901760
    %10465 = vmatpush1.msra.mxu0 %v10464
    %10466 = vmatprep.subr.mxu0 0.0
    %10467 = vmatpush1.msra.mxu0 0.0
    %10468 = vmatprep.subr.mxu0 0.0
    %10469 = vmatpush1.msra.mxu0 0.0
    %10470 = vmatprep.subr.mxu0 0.0
    %10471 = vmatpush1.msra.mxu0 0.0
    %10472 = vmatprep.subr.mxu0 0.0
    %10473 = vmatpush1.msra.mxu0 0.0
    %10474 = vmatprep.subr.mxu0 0.0
    %10475 = vmatpush1.msra.mxu0 0.0
    %10476 = vmatprep.subr.mxu0 0.0
    %10477 = vmatpush1.msra.mxu0 0.0
    %10478 = vmatprep.subr.mxu0 0.0
    %10479 = vmatpush1.msra.mxu0 0.0
    %10480 = vmatprep.subr.mxu0 0.0
    %10481 = vmatpush1.msra.mxu0 0.0
    %10482 = vmatprep.subr.mxu0 0.0
    %10483 = vmatpush1.msra.mxu0 0.0
    %10484 = vmatprep.subr.mxu0 0.0
    %10485 = vmatpush1.msra.mxu0 0.0
    %10486 = vmatprep.subr.mxu0 0.0
    %10487 = vmatpush1.msra.mxu0 0.0
    %10488 = vmatprep.subr.mxu0 0.0
    %10489 = vmatpush1.msra.mxu0 0.0
    %10490 = vmatprep.subr.mxu0 0.0
    %10491 = vmatpush1.msra.mxu0 0.0
    %10492 = vmatprep.subr.mxu0 0.0
    %10493 = vmatpush1.msra.mxu0 0.0
    %10494 = vmatprep.subr.mxu0 0.0
    %10495 = vmatpush1.msra.mxu0 0.0
    %10496 = vmatprep.subr.mxu0 0.0
    %10497 = vmatpush1.msra.mxu0 0.0
    %10498 = vmatprep.mubr.f32.mxu0 0.0
    %v10499 = vand.u32 %v9749, 4294901760
    %10500 = vmatmul.mubr.f32.gmra.mrb[0].mxu0 %v10499
    %v10501 = vpop.f32.mrb[0].mxu0
    %v10502 = vadd.f32 %v10397, %v10501
    %v10503 = vpop.f32.mrb[0].mxu0
    %10504 = vmatprep.mubr.f32.mxu0 0.0
    %v10505 = vand.u32 %v9750, 4294901760
    %10506 = vmatmul.mubr.f32.gmra.mrb[0].mxu0 %v10505
    %v10507 = vpop.f32.mrb[0].mxu0
    %v10508 = vadd.f32 %v10403, %v10507
    %v10509 = vpop.f32.mrb[0].mxu0
    %10510 = vmatprep.mubr.f32.mxu0 0.0
    %v10511 = vand.u32 %v9751, 4294901760
    %10512 = vmatmul.mubr.f32.gmra.mrb[0].mxu0 %v10511
    %v10513 = vpop.f32.mrb[0].mxu0
    %v10514 = vadd.f32 %v10409, %v10513
    %v10515 = vpop.f32.mrb[0].mxu0
    %10516 = vmatprep.mubr.f32.mxu0 0.0
    %v10517 = vand.u32 %v9752, 4294901760
    %10518 = vmatmul.mubr.f32.gmra.mrb[0].mxu0 %v10517
    %v10519 = vpop.f32.mrb[0].mxu0
    %v10520 = vadd.f32 %v10415, %v10519
    %v10521 = vpop.f32.mrb[0].mxu0
    %10522 = vdwg.mxu0
    %v10523 = vadd.f32 %v10502, %v10508
    %v10524 = vadd.f32 %v10523, %v10514
    %v10525 = vadd.f32 %v10524, %v10520
    %v10526 = vrot.slane %v10525, 4
    %v10527 = vadd.f32 %v10525, %v10526
    %v10528 = vrot.slane %v10527, 2
    %v10529 = vadd.f32 %v10527, %v10528
    %v10530 = vrot.slane %v10529, 1
    %v10531 = vadd.f32 %v10529, %v10530
    %v10532 = vmul.f32 %v10531, %v4551
    %v10533 = vadd.f32 %v10532, 1e-05
    %v10534 = vrsqrt.pop %v10533
    %v10535 = vmul.f32 %v9745, %v10534
    %v10536 = vmul.f32 %v9746, %v10534
    %v10537 = vmul.f32 %v9747, %v10534
    %v10538 = vmul.f32 %v9748, %v10534
    %v10539 = vld [vmem:[#allocation8] sm:$0x1]
    %v10541 = vlaneseq
    %v10542 = vshrl.u32 %v10541, 7
    %v10543 = vsub.s32 0, %v10542
    %v10544 = vrot.slane %v10539, %v10543
    %v10546 = vmul.f32 %v10535, %v10544
    %v10547 = vmul.f32 %v10536, %v10544
    %v10548 = vmul.f32 %v10537, %v10544
    %v10549 = vmul.f32 %v10538, %v10544
    %v10550 = vld [vmem:[#allocation10] sm:$0x1]
    %v10552 = vlaneseq
    %v10553 = vshrl.u32 %v10552, 7
    %v10554 = vsub.s32 0, %v10553
    %v10555 = vrot.slane %v10550, %v10554
    %v10557 = vadd.f32 %v10546, %v10555
    %v10558 = vadd.f32 %v10547, %v10555
    %v10559 = vadd.f32 %v10548, %v10555
    %v10560 = vadd.f32 %v10549, %v10555
    %v10561 = vadd.f32 %v10557, %v127
    %v10562 = vadd.f32 %v10558, %v128
    %v10563 = vadd.f32 %v10559, %v129
    %v10564 = vadd.f32 %v10560, %v130
    %v10565 = vmax.f32 %v10561, 0.0
    %v10566 = vmax.f32 %v10562, 0.0
    %v10567 = vmax.f32 %v10563, 0.0
    %v10568 = vmax.f32 %v10564, 0.0
    %10569 = vst [vmem:[#allocation14] sm:$0xff] %v10565
    %10570 = vst [vmem:[#allocation14 + $0x8] sm:$0xff] %v10566
    %10571 = vst [vmem:[#allocation14 + $0x10] sm:$0xff] %v10567
    %10572 = vst [vmem:[#allocation14 + $0x18] sm:$0xff] %v10568
    // Predicated region
    $region70: #{tpu_custom_call.1} parent=1 // pred_check
      _
    $region71: #{tpu_custom_call.1} parent=1 // pred_check_branch
      %10574 = sbr.rel (0) target = $region73
    $region72: #{tpu_custom_call.1} parent=1 // pred_region
      %s10576 = ssub.s32 512, 512
      %10577 = vsyncadd [#allocation4], %s10576
      %s10578 = sshll.u32 [#allocation14], 4
      %s10579 = int_to_ptr.vmem [resolvable:$true] %s10578
      %10584 = dma.vmem_to_hbm [thread:$0]  %s10579, 512, %s10, [#allocation4], 128, 128, 8
    $region73: #{tpu_custom_call.1} parent=1 // pred_fallthru
      _
    // Predicated region
    $region74: #{tpu_custom_call.1} parent=1 // pred_check
      _
    $region75: #{tpu_custom_call.1} parent=1 // pred_check_branch
      %10586 = sbr.rel (0) target = $region77
    $region76: #{tpu_custom_call.1} parent=1 // pred_region
      %10587 = dma.done [#allocation4], 512
    $region77: #{tpu_custom_call.1} parent=1 // pred_fallthru
      _
    %10588 = vsyncpa [#allocation3], 1
    %10589 = vsyncpa [#allocation6], 1
    %10590 = vsyncpa [#allocation9], 1
    %10591 = vsyncpa [#allocation12], 1
    %10592 = vsyncpa [#allocation4], 1

</llo_original>
